<compile_context>
chip_gen: v5e
topology: v5e:2x2
jax: 0.10.0
libtpu: 0.0.40
codegen_flags: <defaults>
</compile_context>

<pallas_src>
import functools

import jax
import jax.numpy as jnp
from jax.experimental import pallas as pl
from jax.experimental.pallas import tpu as pltpu

NEG_SLOPE = 0.01  # F.leaky_relu default


def _leaky(y):
    # 2 VALU ops (mul + max) instead of 3 (cmp + mul + select); valid for 0<slope<1.
    return jnp.maximum(y, NEG_SLOPE * y)


def _round_up(x, m):
    return (x + m - 1) // m * m


# ----------------------------------------------------------------------------
# Fused encoder + multi-head decoder kernel (one batch tile per grid step).
# Weights pre-transposed to (in, out) and pre-padded/fused in the wrapper:
#   ew*: encoder weights (bf16), eb*: encoder biases (f32)
#   dw1: (zp, H*stripe) bf16 fused layer-1, db1: (1, H*stripe) f32
#   dw2/dw3: (H, stripe, stripe) bf16, db2/db3: (H, 1, stripe) f32
#   dw4: (H*stripe, f_pad) bf16 with 1/H folded in, db4: (1, f_pad) f32 summed
# ----------------------------------------------------------------------------
def sae_fused_kernel(x_ref,
                     ew1, eb1, ew2, eb2, ew3, eb3, ew4, eb4,
                     dw1, db1, dw2, db2, dw3, db3, dw4, db4,
                     o_ref):
    f32 = jnp.float32
    bf16 = jnp.bfloat16

    x = x_ref[...].astype(bf16)

    # ---- encoder (f32 element-wise math, bf16 MXU operands) ----
    h1 = _leaky(jnp.dot(x, ew1[...], preferred_element_type=f32) + eb1[...])
    h2 = _leaky(jnp.dot(h1.astype(bf16), ew2[...], preferred_element_type=f32) + eb2[...])
    s12 = h1 + h2                                   # reused residual sum
    h3 = _leaky(jnp.dot(s12.astype(bf16), ew3[...], preferred_element_type=f32) + eb3[...])
    z = jnp.dot((s12 + h3).astype(bf16), ew4[...], preferred_element_type=f32) + eb4[...]

    # ---- decoder layer 1: fused across heads (one wide matmul) ----
    h4_all = _leaky(jnp.dot(z.astype(bf16), dw1[...],
                            preferred_element_type=f32) + db1[...])

    n_heads = dw2.shape[0]
    stripe = dw2.shape[1]                           # 256 (200 padded to lanes)
    s_parts = []
    for h in range(n_heads):                        # static unroll
        h4 = h4_all[:, h * stripe:(h + 1) * stripe]           # lane-aligned slice
        h5 = _leaky(jnp.dot(h4.astype(bf16), dw2[h],
                            preferred_element_type=f32) + db2[h])
        s45 = h4 + h5                               # reused residual sum
        h6 = _leaky(jnp.dot(s45.astype(bf16), dw3[h],
                            preferred_element_type=f32) + db3[h])
        s_parts.append((s45 + h6).astype(bf16))

    s_all = jnp.concatenate(s_parts, axis=-1)       # (tm, H*stripe), lane-aligned

    # ---- decoder layer 4 + head mean fused: head-sum in the MXU accumulator ----
    o_ref[...] = (jnp.dot(s_all, dw4[...], preferred_element_type=f32)
                  + db4[...]).astype(o_ref.dtype)   # single lane-dense store


# ----------------------------------------------------------------------------
# Wrapper: lane padding, head fusion prep, batch tiling, resident-weight specs.
# ----------------------------------------------------------------------------
@functools.partial(jax.jit, static_argnames=("n_features", "tm_max"))
def sae_forward(x, enc_params, dec_params, n_features, tm_max=128):
    ew1, eb1, ew2, eb2, ew3, eb3, ew4, eb4 = enc_params
    dw1, db1, dw2, db2, dw3, db3, dw4, db4 = dec_params

    B, nf = x.shape
    hid = ew2.shape[0]                      # 200
    z_dim = ew4.shape[1]
    H = dw1.shape[0]

    bf16, f32 = jnp.bfloat16, jnp.float32
    nf_pad = _round_up(nf, 128)
    zp = _round_up(z_dim, 128)
    stripe = _round_up(hid, 128)            # 256-lane per-head stripe
    f_pad = _round_up(n_features, 128)

    # ---- input: pad feature axis so the x block load is a full-lane vld ----
    if nf_pad != nf:
        x = jnp.pad(x, ((0, 0), (0, nf_pad - nf)))

    # ---- batch tiling: >=2 tiles (v7x megacore), bounded padding waste ----
    tm_max = max(8, (tm_max // 8) * 8)      # enforce (8,128) divisibility
    if B <= 8:
        tm = 8
    else:
        k = max(2, -(-B // tm_max))         # ceil(B / tm_max), at least 2 tiles
        tm = min(tm_max, _round_up(-(-B // k), 8))
    b_pad = _round_up(B, tm)
    if b_pad != B:
        x = jnp.pad(x, ((0, b_pad - B), (0, 0)))

    # ---- encoder weights (bf16), biases f32 ----
    ew1_p = jnp.pad(ew1, ((0, nf_pad - nf), (0, 0))).astype(bf16)
    ew2_p = ew2.astype(bf16)
    ew3_p = ew3.astype(bf16)
    ew4_p = jnp.pad(ew4, ((0, 0), (0, zp - z_dim))).astype(bf16)
    eb4_p = jnp.pad(eb4, ((0, 0), (0, zp - z_dim))).astype(f32)

    # ---- decoder layer 1: concat heads into zero-padded 256-lane stripes ----
    DW1 = jnp.concatenate(
        [jnp.pad(dw1[h], ((0, zp - z_dim), (0, stripe - hid))) for h in range(H)],
        axis=1).astype(bf16)                                   # (zp, H*stripe)
    DB1 = jnp.concatenate(
        [jnp.pad(db1[h], ((0, 0), (0, stripe - hid))) for h in range(H)],
        axis=1).astype(f32)                                    # (1, H*stripe)

    # ---- decoder layers 2/3: per-head, zero-padded to stripe x stripe ----
    dw2_p = jnp.pad(dw2, ((0, 0), (0, stripe - hid), (0, stripe - hid))).astype(bf16)
    db2_p = jnp.pad(db2, ((0, 0), (0, 0), (0, stripe - hid))).astype(f32)
    dw3_p = jnp.pad(dw3, ((0, 0), (0, stripe - hid), (0, stripe - hid))).astype(bf16)
    db3_p = jnp.pad(db3, ((0, 0), (0, 0), (0, stripe - hid))).astype(f32)

    # ---- decoder layer 4 + mean: fold 1/H into weights, pre-sum the bias ----
    DW4 = (jnp.concatenate(
        [jnp.pad(dw4[h], ((0, stripe - hid), (0, f_pad - n_features)))
         for h in range(H)], axis=0) / H).astype(bf16)         # (H*stripe, f_pad)
    DB4 = (jnp.pad(jnp.sum(db4, axis=0),
                   ((0, 0), (0, f_pad - n_features))) / H).astype(f32)

    weights = (ew1_p, eb1.astype(f32), ew2_p, eb2.astype(f32),
               ew3_p, eb3.astype(f32), ew4_p, eb4_p,
               DW1, DB1, dw2_p, db2_p, dw3_p, db3_p, DW4, DB4)

    def resident(a):                        # whole array, same block every step
        nd = a.ndim
        return pl.BlockSpec(a.shape, lambda b: (0,) * nd)

    in_specs = [pl.BlockSpec((tm, nf_pad), lambda b: (b, 0))]
    in_specs += [resident(w) for w in weights]

    # advisory cost estimate for XLA scheduling around the custom call
    flops = 2 * b_pad * (nf_pad * hid + 2 * hid * hid + hid * zp
                         + zp * H * stripe + 2 * H * stripe * stripe
                         + H * stripe * f_pad)
    bytes_accessed = int(
        x.size * 4
        + sum(w.size * jnp.dtype(w.dtype).itemsize for w in weights)
        + b_pad * f_pad * 4)
    cost = pl.CostEstimate(flops=int(flops), transcendentals=0,
                           bytes_accessed=bytes_accessed)

    out = pl.pallas_call(
        sae_fused_kernel,
        out_shape=jax.ShapeDtypeStruct((b_pad, f_pad), jnp.float32),
        grid=(b_pad // tm,),
        in_specs=in_specs,
        out_specs=pl.BlockSpec((tm, f_pad), lambda b: (b, 0)),
        compiler_params=pltpu.CompilerParams(
            dimension_semantics=("parallel",),       # shards batch tiles on v7x
            vmem_limit_bytes=32 * 1024 * 1024,       # footprint is ~4 MiB (bf16)
        ),
        cost_estimate=cost,
    )(x, *weights)

    return out[:B, :n_features]


# ----------------------------------------------------------------------------
# Deterministic parameter construction (PyTorch nn.Linear default init:
# U(-1/sqrt(fan_in), 1/sqrt(fan_in)) for both W and b).  Weights stored
# pre-transposed as (in, out) so x @ W_t + b == x @ W.T + b.
# ----------------------------------------------------------------------------
def make_linear(key, fan_in, fan_out):
    kw, kb = jax.random.split(key)
    bound = 1.0 / jnp.sqrt(float(fan_in))
    w_t = jax.random.uniform(kw, (fan_in, fan_out), jnp.float32, -bound, bound)
    b = jax.random.uniform(kb, (1, fan_out), jnp.float32, -bound, bound)
    return w_t, b


def make_params(key, n_features, z_dim, n_heads):
    keys = jax.random.split(key, 4 + 4 * n_heads)
    # encoder
    ew1, eb1 = make_linear(keys[0], n_features, 200)
    ew2, eb2 = make_linear(keys[1], 200, 200)
    ew3, eb3 = make_linear(keys[2], 200, 200)
    ew4, eb4 = make_linear(keys[3], 200, z_dim)
    enc = (ew1, eb1, ew2, eb2, ew3, eb3, ew4, eb4)

    # decoder heads, stacked along axis 0
    d = {1: [], 2: [], 3: [], 4: []}
    dims = {1: (z_dim, 200), 2: (200, 200), 3: (200, 200), 4: (200, n_features)}
    for h in range(n_heads):
        for layer in (1, 2, 3, 4):
            w, b = make_linear(keys[4 + 4 * h + (layer - 1)], *dims[layer])
            d[layer].append((w, b))
    dec = []
    for layer in (1, 2, 3, 4):
        ws = jnp.stack([wb[0] for wb in d[layer]], axis=0)          # (H, in, out)
        bs = jnp.stack([wb[1] for wb in d[layer]], axis=0)          # (H, 1, out)
        dec += [ws, bs]
    return enc, tuple(dec)


# ----------------------------------------------------------------------------
# Pure-JAX f32 reference for verification.
# ----------------------------------------------------------------------------
def reference_forward(x, enc, dec, n_heads):
    ew1, eb1, ew2, eb2, ew3, eb3, ew4, eb4 = enc
    h1 = jnp.where(x @ ew1 + eb1 >= 0, x @ ew1 + eb1, NEG_SLOPE * (x @ ew1 + eb1))
    a2 = h1 @ ew2 + eb2
    h2 = jnp.where(a2 >= 0, a2, NEG_SLOPE * a2)
    a3 = (h2 + h1) @ ew3 + eb3
    h3 = jnp.where(a3 >= 0, a3, NEG_SLOPE * a3)
    z = (h3 + h2 + h1) @ ew4 + eb4

    w1, b1, w2, b2, w3, b3, w4, b4 = dec
    outs = []
    for h in range(n_heads):
        a4 = z @ w1[h] + b1[h]
        h4 = jnp.where(a4 >= 0, a4, NEG_SLOPE * a4)
        a5 = h4 @ w2[h] + b2[h]
        h5 = jnp.where(a5 >= 0, a5, NEG_SLOPE * a5)
        a6 = (h5 + h4) @ w3[h] + b3[h]
        h6 = jnp.where(a6 >= 0, a6, NEG_SLOPE * a6)
        outs.append((h6 + h5 + h4) @ w4[h] + b4[h])
    return jnp.mean(jnp.stack(outs), axis=0)


if __name__ == "__main__":
    n_features, z_dim, n_heads, batch = 32, 16, 5, 256

    key = jax.random.PRNGKey(0)
    kx, kp = jax.random.split(key)
    x = jax.random.normal(kx, (batch, n_features), dtype=jnp.float32)
    enc_params, dec_params = make_params(kp, n_features, z_dim, n_heads)

    out = sae_forward(x, enc_params, dec_params, n_features, tm_max=128)
    out = jax.block_until_ready(out)

    ref = reference_forward(x, enc_params, dec_params, n_heads)
    assert out.shape == (batch, n_features)
    # bf16 MXU operands -> loosened tolerance vs the f32 reference.
    assert jnp.allclose(out, ref, atol=3e-2, rtol=3e-2), "mismatch vs reference"

    print("KERNEL_OK")
</pallas_src>

<mosaic_0001>
module attributes {stable_mosaic.version = 11 : i64} {
  func.func @sae_fused_kernel(%arg0: i32, %arg1: memref<128x128xf32, #tpu.memory_space<vmem>>, %arg2: memref<128x200xbf16, #tpu.memory_space<vmem>>, %arg3: memref<1x200xf32, #tpu.memory_space<vmem>>, %arg4: memref<200x200xbf16, #tpu.memory_space<vmem>>, %arg5: memref<1x200xf32, #tpu.memory_space<vmem>>, %arg6: memref<200x200xbf16, #tpu.memory_space<vmem>>, %arg7: memref<1x200xf32, #tpu.memory_space<vmem>>, %arg8: memref<200x128xbf16, #tpu.memory_space<vmem>>, %arg9: memref<1x128xf32, #tpu.memory_space<vmem>>, %arg10: memref<128x1280xbf16, #tpu.memory_space<vmem>>, %arg11: memref<1x1280xf32, #tpu.memory_space<vmem>>, %arg12: memref<5x256x256xbf16, #tpu.memory_space<vmem>>, %arg13: memref<5x1x256xf32, #tpu.memory_space<vmem>>, %arg14: memref<5x256x256xbf16, #tpu.memory_space<vmem>>, %arg15: memref<5x1x256xf32, #tpu.memory_space<vmem>>, %arg16: memref<1280x128xbf16, #tpu.memory_space<vmem>>, %arg17: memref<1x128xf32, #tpu.memory_space<vmem>>, %arg18: memref<128x128xf32, #tpu.memory_space<vmem>>) attributes {dimension_semantics = [#tpu.dimension_semantics<parallel>], iteration_bounds = array<i64: 2>, scalar_prefetch = 0 : i64, scratch_operands = 0 : i64, tpu.core_type = #tpu.core_type<tc>, window_params = [{transform_indices = @transform_0, window_bounds = array<i64: 128, 128>}, {pipeline_mode = #tpu.pipeline_mode<synchronous>, transform_indices = @transform_1, window_bounds = array<i64: 128, 200>}, {pipeline_mode = #tpu.pipeline_mode<synchronous>, transform_indices = @transform_2, window_bounds = array<i64: 1, 200>}, {pipeline_mode = #tpu.pipeline_mode<synchronous>, transform_indices = @transform_3, window_bounds = array<i64: 200, 200>}, {pipeline_mode = #tpu.pipeline_mode<synchronous>, transform_indices = @transform_4, window_bounds = array<i64: 1, 200>}, {pipeline_mode = #tpu.pipeline_mode<synchronous>, transform_indices = @transform_5, window_bounds = array<i64: 200, 200>}, {pipeline_mode = #tpu.pipeline_mode<synchronous>, transform_indices = @transform_6, window_bounds = array<i64: 1, 200>}, {pipeline_mode = #tpu.pipeline_mode<synchronous>, transform_indices = @transform_7, window_bounds = array<i64: 200, 128>}, {pipeline_mode = #tpu.pipeline_mode<synchronous>, transform_indices = @transform_8, window_bounds = array<i64: 1, 128>}, {pipeline_mode = #tpu.pipeline_mode<synchronous>, transform_indices = @transform_9, window_bounds = array<i64: 128, 1280>}, {pipeline_mode = #tpu.pipeline_mode<synchronous>, transform_indices = @transform_10, window_bounds = array<i64: 1, 1280>}, {pipeline_mode = #tpu.pipeline_mode<synchronous>, transform_indices = @transform_11, window_bounds = array<i64: 5, 256, 256>}, {pipeline_mode = #tpu.pipeline_mode<synchronous>, transform_indices = @transform_12, window_bounds = array<i64: 5, 1, 256>}, {pipeline_mode = #tpu.pipeline_mode<synchronous>, transform_indices = @transform_13, window_bounds = array<i64: 5, 256, 256>}, {pipeline_mode = #tpu.pipeline_mode<synchronous>, transform_indices = @transform_14, window_bounds = array<i64: 5, 1, 256>}, {pipeline_mode = #tpu.pipeline_mode<synchronous>, transform_indices = @transform_15, window_bounds = array<i64: 1280, 128>}, {pipeline_mode = #tpu.pipeline_mode<synchronous>, transform_indices = @transform_16, window_bounds = array<i64: 1, 128>}, {transform_indices = @transform_17, window_bounds = array<i64: 128, 128>}]} {
    %c0 = arith.constant 0 : index
    %c0_0 = arith.constant 0 : index
    %0 = vector.load %arg1[%c0, %c0_0] : memref<128x128xf32, #tpu.memory_space<vmem>>, vector<128x128xf32>
    %1 = arith.truncf %0 : vector<128x128xf32> to vector<128x128xbf16>
    %c0_1 = arith.constant 0 : index
    %c0_2 = arith.constant 0 : index
    %2 = vector.load %arg2[%c0_1, %c0_2] : memref<128x200xbf16, #tpu.memory_space<vmem>>, vector<128x200xbf16>
    %cst = arith.constant dense<0.000000e+00> : vector<128x200xf32>
    %3 = tpu.matmul %1, %2, %cst {dimension_numbers = #tpu.dot_dimension_numbers<[1], [0], [0], [1], [0, 0, 1, 1], [], []>} : vector<128x128xbf16>, vector<128x200xbf16>, vector<128x200xf32> -> vector<128x200xf32>
    %c0_3 = arith.constant 0 : index
    %c0_4 = arith.constant 0 : index
    %4 = vector.load %arg3[%c0_3, %c0_4] : memref<1x200xf32, #tpu.memory_space<vmem>>, vector<1x200xf32>
    %5 = vector.broadcast %4 : vector<1x200xf32> to vector<128x200xf32>
    %6 = arith.addf %3, %5 : vector<128x200xf32>
    %cst_5 = arith.constant 0.00999999977 : f32
    %7 = vector.broadcast %cst_5 : f32 to vector<128x200xf32>
    %8 = arith.mulf %7, %6 : vector<128x200xf32>
    %9 = arith.maximumf %6, %8 : vector<128x200xf32>
    %10 = arith.truncf %9 : vector<128x200xf32> to vector<128x200xbf16>
    %c0_6 = arith.constant 0 : index
    %c0_7 = arith.constant 0 : index
    %11 = vector.load %arg4[%c0_6, %c0_7] : memref<200x200xbf16, #tpu.memory_space<vmem>>, vector<200x200xbf16>
    %cst_8 = arith.constant dense<0.000000e+00> : vector<128x200xf32>
    %12 = tpu.matmul %10, %11, %cst_8 {dimension_numbers = #tpu.dot_dimension_numbers<[1], [0], [0], [1], [0, 0, 1, 1], [], []>} : vector<128x200xbf16>, vector<200x200xbf16>, vector<128x200xf32> -> vector<128x200xf32>
    %c0_9 = arith.constant 0 : index
    %c0_10 = arith.constant 0 : index
    %13 = vector.load %arg5[%c0_9, %c0_10] : memref<1x200xf32, #tpu.memory_space<vmem>>, vector<1x200xf32>
    %14 = vector.broadcast %13 : vector<1x200xf32> to vector<128x200xf32>
    %15 = arith.addf %12, %14 : vector<128x200xf32>
    %cst_11 = arith.constant 0.00999999977 : f32
    %16 = vector.broadcast %cst_11 : f32 to vector<128x200xf32>
    %17 = arith.mulf %16, %15 : vector<128x200xf32>
    %18 = arith.maximumf %15, %17 : vector<128x200xf32>
    %19 = arith.addf %9, %18 : vector<128x200xf32>
    %20 = arith.truncf %19 : vector<128x200xf32> to vector<128x200xbf16>
    %c0_12 = arith.constant 0 : index
    %c0_13 = arith.constant 0 : index
    %21 = vector.load %arg6[%c0_12, %c0_13] : memref<200x200xbf16, #tpu.memory_space<vmem>>, vector<200x200xbf16>
    %cst_14 = arith.constant dense<0.000000e+00> : vector<128x200xf32>
    %22 = tpu.matmul %20, %21, %cst_14 {dimension_numbers = #tpu.dot_dimension_numbers<[1], [0], [0], [1], [0, 0, 1, 1], [], []>} : vector<128x200xbf16>, vector<200x200xbf16>, vector<128x200xf32> -> vector<128x200xf32>
    %c0_15 = arith.constant 0 : index
    %c0_16 = arith.constant 0 : index
    %23 = vector.load %arg7[%c0_15, %c0_16] : memref<1x200xf32, #tpu.memory_space<vmem>>, vector<1x200xf32>
    %24 = vector.broadcast %23 : vector<1x200xf32> to vector<128x200xf32>
    %25 = arith.addf %22, %24 : vector<128x200xf32>
    %cst_17 = arith.constant 0.00999999977 : f32
    %26 = vector.broadcast %cst_17 : f32 to vector<128x200xf32>
    %27 = arith.mulf %26, %25 : vector<128x200xf32>
    %28 = arith.maximumf %25, %27 : vector<128x200xf32>
    %29 = arith.addf %19, %28 : vector<128x200xf32>
    %30 = arith.truncf %29 : vector<128x200xf32> to vector<128x200xbf16>
    %c0_18 = arith.constant 0 : index
    %c0_19 = arith.constant 0 : index
    %31 = vector.load %arg8[%c0_18, %c0_19] : memref<200x128xbf16, #tpu.memory_space<vmem>>, vector<200x128xbf16>
    %cst_20 = arith.constant dense<0.000000e+00> : vector<128x128xf32>
    %32 = tpu.matmul %30, %31, %cst_20 {dimension_numbers = #tpu.dot_dimension_numbers<[1], [0], [0], [1], [0, 0, 1, 1], [], []>} : vector<128x200xbf16>, vector<200x128xbf16>, vector<128x128xf32> -> vector<128x128xf32>
    %c0_21 = arith.constant 0 : index
    %c0_22 = arith.constant 0 : index
    %33 = vector.load %arg9[%c0_21, %c0_22] : memref<1x128xf32, #tpu.memory_space<vmem>>, vector<1x128xf32>
    %34 = vector.broadcast %33 : vector<1x128xf32> to vector<128x128xf32>
    %35 = arith.addf %32, %34 : vector<128x128xf32>
    %36 = arith.truncf %35 : vector<128x128xf32> to vector<128x128xbf16>
    %c0_23 = arith.constant 0 : index
    %c0_24 = arith.constant 0 : index
    %37 = vector.load %arg10[%c0_23, %c0_24] : memref<128x1280xbf16, #tpu.memory_space<vmem>>, vector<128x1280xbf16>
    %cst_25 = arith.constant dense<0.000000e+00> : vector<128x1280xf32>
    %38 = tpu.matmul %36, %37, %cst_25 {dimension_numbers = #tpu.dot_dimension_numbers<[1], [0], [0], [1], [0, 0, 1, 1], [], []>} : vector<128x128xbf16>, vector<128x1280xbf16>, vector<128x1280xf32> -> vector<128x1280xf32>
    %c0_26 = arith.constant 0 : index
    %c0_27 = arith.constant 0 : index
    %39 = vector.load %arg11[%c0_26, %c0_27] : memref<1x1280xf32, #tpu.memory_space<vmem>>, vector<1x1280xf32>
    %40 = vector.broadcast %39 : vector<1x1280xf32> to vector<128x1280xf32>
    %41 = arith.addf %38, %40 : vector<128x1280xf32>
    %cst_28 = arith.constant 0.00999999977 : f32
    %42 = vector.broadcast %cst_28 : f32 to vector<128x1280xf32>
    %43 = arith.mulf %42, %41 : vector<128x1280xf32>
    %44 = arith.maximumf %41, %43 : vector<128x1280xf32>
    %45 = vector.extract_strided_slice %44 {offsets = [0, 0], sizes = [128, 256], strides = [1, 1]} : vector<128x1280xf32> to vector<128x256xf32>
    %46 = arith.truncf %45 : vector<128x256xf32> to vector<128x256xbf16>
    %c0_29 = arith.constant 0 : index
    %c0_30 = arith.constant 0 : index
    %c0_31 = arith.constant 0 : index
    %47 = vector.load %arg12[%c0_29, %c0_30, %c0_31] : memref<5x256x256xbf16, #tpu.memory_space<vmem>>, vector<1x256x256xbf16>
    %48 = vector.shape_cast %47 : vector<1x256x256xbf16> to vector<256x256xbf16>
    %cst_32 = arith.constant dense<0.000000e+00> : vector<128x256xf32>
    %49 = tpu.matmul %46, %48, %cst_32 {dimension_numbers = #tpu.dot_dimension_numbers<[1], [0], [0], [1], [0, 0, 1, 1], [], []>} : vector<128x256xbf16>, vector<256x256xbf16>, vector<128x256xf32> -> vector<128x256xf32>
    %c0_33 = arith.constant 0 : index
    %c0_34 = arith.constant 0 : index
    %c0_35 = arith.constant 0 : index
    %50 = vector.load %arg13[%c0_33, %c0_34, %c0_35] : memref<5x1x256xf32, #tpu.memory_space<vmem>>, vector<1x1x256xf32>
    %51 = vector.shape_cast %50 : vector<1x1x256xf32> to vector<1x256xf32>
    %52 = vector.broadcast %51 : vector<1x256xf32> to vector<128x256xf32>
    %53 = arith.addf %49, %52 : vector<128x256xf32>
    %cst_36 = arith.constant 0.00999999977 : f32
    %54 = vector.broadcast %cst_36 : f32 to vector<128x256xf32>
    %55 = arith.mulf %54, %53 : vector<128x256xf32>
    %56 = arith.maximumf %53, %55 : vector<128x256xf32>
    %57 = arith.addf %45, %56 : vector<128x256xf32>
    %58 = arith.truncf %57 : vector<128x256xf32> to vector<128x256xbf16>
    %c0_37 = arith.constant 0 : index
    %c0_38 = arith.constant 0 : index
    %c0_39 = arith.constant 0 : index
    %59 = vector.load %arg14[%c0_37, %c0_38, %c0_39] : memref<5x256x256xbf16, #tpu.memory_space<vmem>>, vector<1x256x256xbf16>
    %60 = vector.shape_cast %59 : vector<1x256x256xbf16> to vector<256x256xbf16>
    %cst_40 = arith.constant dense<0.000000e+00> : vector<128x256xf32>
    %61 = tpu.matmul %58, %60, %cst_40 {dimension_numbers = #tpu.dot_dimension_numbers<[1], [0], [0], [1], [0, 0, 1, 1], [], []>} : vector<128x256xbf16>, vector<256x256xbf16>, vector<128x256xf32> -> vector<128x256xf32>
    %c0_41 = arith.constant 0 : index
    %c0_42 = arith.constant 0 : index
    %c0_43 = arith.constant 0 : index
    %62 = vector.load %arg15[%c0_41, %c0_42, %c0_43] : memref<5x1x256xf32, #tpu.memory_space<vmem>>, vector<1x1x256xf32>
    %63 = vector.shape_cast %62 : vector<1x1x256xf32> to vector<1x256xf32>
    %64 = vector.broadcast %63 : vector<1x256xf32> to vector<128x256xf32>
    %65 = arith.addf %61, %64 : vector<128x256xf32>
    %cst_44 = arith.constant 0.00999999977 : f32
    %66 = vector.broadcast %cst_44 : f32 to vector<128x256xf32>
    %67 = arith.mulf %66, %65 : vector<128x256xf32>
    %68 = arith.maximumf %65, %67 : vector<128x256xf32>
    %69 = arith.addf %57, %68 : vector<128x256xf32>
    %70 = arith.truncf %69 : vector<128x256xf32> to vector<128x256xbf16>
    %71 = vector.extract_strided_slice %44 {offsets = [0, 256], sizes = [128, 256], strides = [1, 1]} : vector<128x1280xf32> to vector<128x256xf32>
    %72 = arith.truncf %71 : vector<128x256xf32> to vector<128x256xbf16>
    %c1 = arith.constant 1 : index
    %c0_45 = arith.constant 0 : index
    %c0_46 = arith.constant 0 : index
    %73 = vector.load %arg12[%c1, %c0_45, %c0_46] : memref<5x256x256xbf16, #tpu.memory_space<vmem>>, vector<1x256x256xbf16>
    %74 = vector.shape_cast %73 : vector<1x256x256xbf16> to vector<256x256xbf16>
    %cst_47 = arith.constant dense<0.000000e+00> : vector<128x256xf32>
    %75 = tpu.matmul %72, %74, %cst_47 {dimension_numbers = #tpu.dot_dimension_numbers<[1], [0], [0], [1], [0, 0, 1, 1], [], []>} : vector<128x256xbf16>, vector<256x256xbf16>, vector<128x256xf32> -> vector<128x256xf32>
    %c1_48 = arith.constant 1 : index
    %c0_49 = arith.constant 0 : index
    %c0_50 = arith.constant 0 : index
    %76 = vector.load %arg13[%c1_48, %c0_49, %c0_50] : memref<5x1x256xf32, #tpu.memory_space<vmem>>, vector<1x1x256xf32>
    %77 = vector.shape_cast %76 : vector<1x1x256xf32> to vector<1x256xf32>
    %78 = vector.broadcast %77 : vector<1x256xf32> to vector<128x256xf32>
    %79 = arith.addf %75, %78 : vector<128x256xf32>
    %cst_51 = arith.constant 0.00999999977 : f32
    %80 = vector.broadcast %cst_51 : f32 to vector<128x256xf32>
    %81 = arith.mulf %80, %79 : vector<128x256xf32>
    %82 = arith.maximumf %79, %81 : vector<128x256xf32>
    %83 = arith.addf %71, %82 : vector<128x256xf32>
    %84 = arith.truncf %83 : vector<128x256xf32> to vector<128x256xbf16>
    %c1_52 = arith.constant 1 : index
    %c0_53 = arith.constant 0 : index
    %c0_54 = arith.constant 0 : index
    %85 = vector.load %arg14[%c1_52, %c0_53, %c0_54] : memref<5x256x256xbf16, #tpu.memory_space<vmem>>, vector<1x256x256xbf16>
    %86 = vector.shape_cast %85 : vector<1x256x256xbf16> to vector<256x256xbf16>
    %cst_55 = arith.constant dense<0.000000e+00> : vector<128x256xf32>
    %87 = tpu.matmul %84, %86, %cst_55 {dimension_numbers = #tpu.dot_dimension_numbers<[1], [0], [0], [1], [0, 0, 1, 1], [], []>} : vector<128x256xbf16>, vector<256x256xbf16>, vector<128x256xf32> -> vector<128x256xf32>
    %c1_56 = arith.constant 1 : index
    %c0_57 = arith.constant 0 : index
    %c0_58 = arith.constant 0 : index
    %88 = vector.load %arg15[%c1_56, %c0_57, %c0_58] : memref<5x1x256xf32, #tpu.memory_space<vmem>>, vector<1x1x256xf32>
    %89 = vector.shape_cast %88 : vector<1x1x256xf32> to vector<1x256xf32>
    %90 = vector.broadcast %89 : vector<1x256xf32> to vector<128x256xf32>
    %91 = arith.addf %87, %90 : vector<128x256xf32>
    %cst_59 = arith.constant 0.00999999977 : f32
    %92 = vector.broadcast %cst_59 : f32 to vector<128x256xf32>
    %93 = arith.mulf %92, %91 : vector<128x256xf32>
    %94 = arith.maximumf %91, %93 : vector<128x256xf32>
    %95 = arith.addf %83, %94 : vector<128x256xf32>
    %96 = arith.truncf %95 : vector<128x256xf32> to vector<128x256xbf16>
    %97 = vector.extract_strided_slice %44 {offsets = [0, 512], sizes = [128, 256], strides = [1, 1]} : vector<128x1280xf32> to vector<128x256xf32>
    %98 = arith.truncf %97 : vector<128x256xf32> to vector<128x256xbf16>
    %c2 = arith.constant 2 : index
    %c0_60 = arith.constant 0 : index
    %c0_61 = arith.constant 0 : index
    %99 = vector.load %arg12[%c2, %c0_60, %c0_61] : memref<5x256x256xbf16, #tpu.memory_space<vmem>>, vector<1x256x256xbf16>
    %100 = vector.shape_cast %99 : vector<1x256x256xbf16> to vector<256x256xbf16>
    %cst_62 = arith.constant dense<0.000000e+00> : vector<128x256xf32>
    %101 = tpu.matmul %98, %100, %cst_62 {dimension_numbers = #tpu.dot_dimension_numbers<[1], [0], [0], [1], [0, 0, 1, 1], [], []>} : vector<128x256xbf16>, vector<256x256xbf16>, vector<128x256xf32> -> vector<128x256xf32>
    %c2_63 = arith.constant 2 : index
    %c0_64 = arith.constant 0 : index
    %c0_65 = arith.constant 0 : index
    %102 = vector.load %arg13[%c2_63, %c0_64, %c0_65] : memref<5x1x256xf32, #tpu.memory_space<vmem>>, vector<1x1x256xf32>
    %103 = vector.shape_cast %102 : vector<1x1x256xf32> to vector<1x256xf32>
    %104 = vector.broadcast %103 : vector<1x256xf32> to vector<128x256xf32>
    %105 = arith.addf %101, %104 : vector<128x256xf32>
    %cst_66 = arith.constant 0.00999999977 : f32
    %106 = vector.broadcast %cst_66 : f32 to vector<128x256xf32>
    %107 = arith.mulf %106, %105 : vector<128x256xf32>
    %108 = arith.maximumf %105, %107 : vector<128x256xf32>
    %109 = arith.addf %97, %108 : vector<128x256xf32>
    %110 = arith.truncf %109 : vector<128x256xf32> to vector<128x256xbf16>
    %c2_67 = arith.constant 2 : index
    %c0_68 = arith.constant 0 : index
    %c0_69 = arith.constant 0 : index
    %111 = vector.load %arg14[%c2_67, %c0_68, %c0_69] : memref<5x256x256xbf16, #tpu.memory_space<vmem>>, vector<1x256x256xbf16>
    %112 = vector.shape_cast %111 : vector<1x256x256xbf16> to vector<256x256xbf16>
    %cst_70 = arith.constant dense<0.000000e+00> : vector<128x256xf32>
    %113 = tpu.matmul %110, %112, %cst_70 {dimension_numbers = #tpu.dot_dimension_numbers<[1], [0], [0], [1], [0, 0, 1, 1], [], []>} : vector<128x256xbf16>, vector<256x256xbf16>, vector<128x256xf32> -> vector<128x256xf32>
    %c2_71 = arith.constant 2 : index
    %c0_72 = arith.constant 0 : index
    %c0_73 = arith.constant 0 : index
    %114 = vector.load %arg15[%c2_71, %c0_72, %c0_73] : memref<5x1x256xf32, #tpu.memory_space<vmem>>, vector<1x1x256xf32>
    %115 = vector.shape_cast %114 : vector<1x1x256xf32> to vector<1x256xf32>
    %116 = vector.broadcast %115 : vector<1x256xf32> to vector<128x256xf32>
    %117 = arith.addf %113, %116 : vector<128x256xf32>
    %cst_74 = arith.constant 0.00999999977 : f32
    %118 = vector.broadcast %cst_74 : f32 to vector<128x256xf32>
    %119 = arith.mulf %118, %117 : vector<128x256xf32>
    %120 = arith.maximumf %117, %119 : vector<128x256xf32>
    %121 = arith.addf %109, %120 : vector<128x256xf32>
    %122 = arith.truncf %121 : vector<128x256xf32> to vector<128x256xbf16>
    %123 = vector.extract_strided_slice %44 {offsets = [0, 768], sizes = [128, 256], strides = [1, 1]} : vector<128x1280xf32> to vector<128x256xf32>
    %124 = arith.truncf %123 : vector<128x256xf32> to vector<128x256xbf16>
    %c3 = arith.constant 3 : index
    %c0_75 = arith.constant 0 : index
    %c0_76 = arith.constant 0 : index
    %125 = vector.load %arg12[%c3, %c0_75, %c0_76] : memref<5x256x256xbf16, #tpu.memory_space<vmem>>, vector<1x256x256xbf16>
    %126 = vector.shape_cast %125 : vector<1x256x256xbf16> to vector<256x256xbf16>
    %cst_77 = arith.constant dense<0.000000e+00> : vector<128x256xf32>
    %127 = tpu.matmul %124, %126, %cst_77 {dimension_numbers = #tpu.dot_dimension_numbers<[1], [0], [0], [1], [0, 0, 1, 1], [], []>} : vector<128x256xbf16>, vector<256x256xbf16>, vector<128x256xf32> -> vector<128x256xf32>
    %c3_78 = arith.constant 3 : index
    %c0_79 = arith.constant 0 : index
    %c0_80 = arith.constant 0 : index
    %128 = vector.load %arg13[%c3_78, %c0_79, %c0_80] : memref<5x1x256xf32, #tpu.memory_space<vmem>>, vector<1x1x256xf32>
    %129 = vector.shape_cast %128 : vector<1x1x256xf32> to vector<1x256xf32>
    %130 = vector.broadcast %129 : vector<1x256xf32> to vector<128x256xf32>
    %131 = arith.addf %127, %130 : vector<128x256xf32>
    %cst_81 = arith.constant 0.00999999977 : f32
    %132 = vector.broadcast %cst_81 : f32 to vector<128x256xf32>
    %133 = arith.mulf %132, %131 : vector<128x256xf32>
    %134 = arith.maximumf %131, %133 : vector<128x256xf32>
    %135 = arith.addf %123, %134 : vector<128x256xf32>
    %136 = arith.truncf %135 : vector<128x256xf32> to vector<128x256xbf16>
    %c3_82 = arith.constant 3 : index
    %c0_83 = arith.constant 0 : index
    %c0_84 = arith.constant 0 : index
    %137 = vector.load %arg14[%c3_82, %c0_83, %c0_84] : memref<5x256x256xbf16, #tpu.memory_space<vmem>>, vector<1x256x256xbf16>
    %138 = vector.shape_cast %137 : vector<1x256x256xbf16> to vector<256x256xbf16>
    %cst_85 = arith.constant dense<0.000000e+00> : vector<128x256xf32>
    %139 = tpu.matmul %136, %138, %cst_85 {dimension_numbers = #tpu.dot_dimension_numbers<[1], [0], [0], [1], [0, 0, 1, 1], [], []>} : vector<128x256xbf16>, vector<256x256xbf16>, vector<128x256xf32> -> vector<128x256xf32>
    %c3_86 = arith.constant 3 : index
    %c0_87 = arith.constant 0 : index
    %c0_88 = arith.constant 0 : index
    %140 = vector.load %arg15[%c3_86, %c0_87, %c0_88] : memref<5x1x256xf32, #tpu.memory_space<vmem>>, vector<1x1x256xf32>
    %141 = vector.shape_cast %140 : vector<1x1x256xf32> to vector<1x256xf32>
    %142 = vector.broadcast %141 : vector<1x256xf32> to vector<128x256xf32>
    %143 = arith.addf %139, %142 : vector<128x256xf32>
    %cst_89 = arith.constant 0.00999999977 : f32
    %144 = vector.broadcast %cst_89 : f32 to vector<128x256xf32>
    %145 = arith.mulf %144, %143 : vector<128x256xf32>
    %146 = arith.maximumf %143, %145 : vector<128x256xf32>
    %147 = arith.addf %135, %146 : vector<128x256xf32>
    %148 = arith.truncf %147 : vector<128x256xf32> to vector<128x256xbf16>
    %149 = vector.extract_strided_slice %44 {offsets = [0, 1024], sizes = [128, 256], strides = [1, 1]} : vector<128x1280xf32> to vector<128x256xf32>
    %150 = arith.truncf %149 : vector<128x256xf32> to vector<128x256xbf16>
    %c4 = arith.constant 4 : index
    %c0_90 = arith.constant 0 : index
    %c0_91 = arith.constant 0 : index
    %151 = vector.load %arg12[%c4, %c0_90, %c0_91] : memref<5x256x256xbf16, #tpu.memory_space<vmem>>, vector<1x256x256xbf16>
    %152 = vector.shape_cast %151 : vector<1x256x256xbf16> to vector<256x256xbf16>
    %cst_92 = arith.constant dense<0.000000e+00> : vector<128x256xf32>
    %153 = tpu.matmul %150, %152, %cst_92 {dimension_numbers = #tpu.dot_dimension_numbers<[1], [0], [0], [1], [0, 0, 1, 1], [], []>} : vector<128x256xbf16>, vector<256x256xbf16>, vector<128x256xf32> -> vector<128x256xf32>
    %c4_93 = arith.constant 4 : index
    %c0_94 = arith.constant 0 : index
    %c0_95 = arith.constant 0 : index
    %154 = vector.load %arg13[%c4_93, %c0_94, %c0_95] : memref<5x1x256xf32, #tpu.memory_space<vmem>>, vector<1x1x256xf32>
    %155 = vector.shape_cast %154 : vector<1x1x256xf32> to vector<1x256xf32>
    %156 = vector.broadcast %155 : vector<1x256xf32> to vector<128x256xf32>
    %157 = arith.addf %153, %156 : vector<128x256xf32>
    %cst_96 = arith.constant 0.00999999977 : f32
    %158 = vector.broadcast %cst_96 : f32 to vector<128x256xf32>
    %159 = arith.mulf %158, %157 : vector<128x256xf32>
    %160 = arith.maximumf %157, %159 : vector<128x256xf32>
    %161 = arith.addf %149, %160 : vector<128x256xf32>
    %162 = arith.truncf %161 : vector<128x256xf32> to vector<128x256xbf16>
    %c4_97 = arith.constant 4 : index
    %c0_98 = arith.constant 0 : index
    %c0_99 = arith.constant 0 : index
    %163 = vector.load %arg14[%c4_97, %c0_98, %c0_99] : memref<5x256x256xbf16, #tpu.memory_space<vmem>>, vector<1x256x256xbf16>
    %164 = vector.shape_cast %163 : vector<1x256x256xbf16> to vector<256x256xbf16>
    %cst_100 = arith.constant dense<0.000000e+00> : vector<128x256xf32>
    %165 = tpu.matmul %162, %164, %cst_100 {dimension_numbers = #tpu.dot_dimension_numbers<[1], [0], [0], [1], [0, 0, 1, 1], [], []>} : vector<128x256xbf16>, vector<256x256xbf16>, vector<128x256xf32> -> vector<128x256xf32>
    %c4_101 = arith.constant 4 : index
    %c0_102 = arith.constant 0 : index
    %c0_103 = arith.constant 0 : index
    %166 = vector.load %arg15[%c4_101, %c0_102, %c0_103] : memref<5x1x256xf32, #tpu.memory_space<vmem>>, vector<1x1x256xf32>
    %167 = vector.shape_cast %166 : vector<1x1x256xf32> to vector<1x256xf32>
    %168 = vector.broadcast %167 : vector<1x256xf32> to vector<128x256xf32>
    %169 = arith.addf %165, %168 : vector<128x256xf32>
    %cst_104 = arith.constant 0.00999999977 : f32
    %170 = vector.broadcast %cst_104 : f32 to vector<128x256xf32>
    %171 = arith.mulf %170, %169 : vector<128x256xf32>
    %172 = arith.maximumf %169, %171 : vector<128x256xf32>
    %173 = arith.addf %161, %172 : vector<128x256xf32>
    %174 = arith.truncf %173 : vector<128x256xf32> to vector<128x256xbf16>
    %175 = tpu.concatenate %70, %96, %122, %148, %174 in 1 : vector<128x256xbf16>, vector<128x256xbf16>, vector<128x256xbf16>, vector<128x256xbf16>, vector<128x256xbf16> -> vector<128x1280xbf16>
    %c0_105 = arith.constant 0 : index
    %c0_106 = arith.constant 0 : index
    %176 = vector.load %arg16[%c0_105, %c0_106] : memref<1280x128xbf16, #tpu.memory_space<vmem>>, vector<1280x128xbf16>
    %cst_107 = arith.constant dense<0.000000e+00> : vector<128x128xf32>
    %177 = tpu.matmul %175, %176, %cst_107 {dimension_numbers = #tpu.dot_dimension_numbers<[1], [0], [0], [1], [0, 0, 1, 1], [], []>} : vector<128x1280xbf16>, vector<1280x128xbf16>, vector<128x128xf32> -> vector<128x128xf32>
    %c0_108 = arith.constant 0 : index
    %c0_109 = arith.constant 0 : index
    %178 = vector.load %arg17[%c0_108, %c0_109] : memref<1x128xf32, #tpu.memory_space<vmem>>, vector<1x128xf32>
    %179 = vector.broadcast %178 : vector<1x128xf32> to vector<128x128xf32>
    %180 = arith.addf %177, %179 : vector<128x128xf32>
    %c0_110 = arith.constant 0 : index
    %c0_111 = arith.constant 0 : index
    %181 = vector.load %arg18[%c0_110, %c0_111] : memref<128x128xf32, #tpu.memory_space<vmem>>, vector<128x128xf32>
    tpu.vector_store %arg18[%c0_110, %c0_111], %180 {strides = array<i32>} : memref<128x128xf32, #tpu.memory_space<vmem>>, vector<128x128xf32>,
    return
  }
  func.func @transform_0(%arg0: i32) -> (i32, i32) {
    %c0_i32 = arith.constant 0 : i32
    %c0_i32_0 = arith.constant 0 : i32
    return %arg0, %c0_i32 : i32, i32
  }
  func.func @transform_1(%arg0: i32) -> (i32, i32) {
    %c0_i32 = arith.constant 0 : i32
    %c0_i32_0 = arith.constant 0 : i32
    %c0_i32_1 = arith.constant 0 : i32
    return %c0_i32, %c0_i32_0 : i32, i32
  }
  func.func @transform_2(%arg0: i32) -> (i32, i32) {
    %c0_i32 = arith.constant 0 : i32
    %c0_i32_0 = arith.constant 0 : i32
    %c0_i32_1 = arith.constant 0 : i32
    return %c0_i32, %c0_i32_0 : i32, i32
  }
  func.func @transform_3(%arg0: i32) -> (i32, i32) {
    %c0_i32 = arith.constant 0 : i32
    %c0_i32_0 = arith.constant 0 : i32
    %c0_i32_1 = arith.constant 0 : i32
    return %c0_i32, %c0_i32_0 : i32, i32
  }
  func.func @transform_4(%arg0: i32) -> (i32, i32) {
    %c0_i32 = arith.constant 0 : i32
    %c0_i32_0 = arith.constant 0 : i32
    %c0_i32_1 = arith.constant 0 : i32
    return %c0_i32, %c0_i32_0 : i32, i32
  }
  func.func @transform_5(%arg0: i32) -> (i32, i32) {
    %c0_i32 = arith.constant 0 : i32
    %c0_i32_0 = arith.constant 0 : i32
    %c0_i32_1 = arith.constant 0 : i32
    return %c0_i32, %c0_i32_0 : i32, i32
  }
  func.func @transform_6(%arg0: i32) -> (i32, i32) {
    %c0_i32 = arith.constant 0 : i32
    %c0_i32_0 = arith.constant 0 : i32
    %c0_i32_1 = arith.constant 0 : i32
    return %c0_i32, %c0_i32_0 : i32, i32
  }
  func.func @transform_7(%arg0: i32) -> (i32, i32) {
    %c0_i32 = arith.constant 0 : i32
    %c0_i32_0 = arith.constant 0 : i32
    %c0_i32_1 = arith.constant 0 : i32
    return %c0_i32, %c0_i32_0 : i32, i32
  }
  func.func @transform_8(%arg0: i32) -> (i32, i32) {
    %c0_i32 = arith.constant 0 : i32
    %c0_i32_0 = arith.constant 0 : i32
    %c0_i32_1 = arith.constant 0 : i32
    return %c0_i32, %c0_i32_0 : i32, i32
  }
  func.func @transform_9(%arg0: i32) -> (i32, i32) {
    %c0_i32 = arith.constant 0 : i32
    %c0_i32_0 = arith.constant 0 : i32
    %c0_i32_1 = arith.constant 0 : i32
    return %c0_i32, %c0_i32_0 : i32, i32
  }
  func.func @transform_10(%arg0: i32) -> (i32, i32) {
    %c0_i32 = arith.constant 0 : i32
    %c0_i32_0 = arith.constant 0 : i32
    %c0_i32_1 = arith.constant 0 : i32
    return %c0_i32, %c0_i32_0 : i32, i32
  }
  func.func @transform_11(%arg0: i32) -> (i32, i32, i32) {
    %c0_i32 = arith.constant 0 : i32
    %c0_i32_0 = arith.constant 0 : i32
    %c0_i32_1 = arith.constant 0 : i32
    %c0_i32_2 = arith.constant 0 : i32
    return %c0_i32, %c0_i32_0, %c0_i32_1 : i32, i32, i32
  }
  func.func @transform_12(%arg0: i32) -> (i32, i32, i32) {
    %c0_i32 = arith.constant 0 : i32
    %c0_i32_0 = arith.constant 0 : i32
    %c0_i32_1 = arith.constant 0 : i32
    %c0_i32_2 = arith.constant 0 : i32
    return %c0_i32, %c0_i32_0, %c0_i32_1 : i32, i32, i32
  }
  func.func @transform_13(%arg0: i32) -> (i32, i32, i32) {
    %c0_i32 = arith.constant 0 : i32
    %c0_i32_0 = arith.constant 0 : i32
    %c0_i32_1 = arith.constant 0 : i32
    %c0_i32_2 = arith.constant 0 : i32
    return %c0_i32, %c0_i32_0, %c0_i32_1 : i32, i32, i32
  }
  func.func @transform_14(%arg0: i32) -> (i32, i32, i32) {
    %c0_i32 = arith.constant 0 : i32
    %c0_i32_0 = arith.constant 0 : i32
    %c0_i32_1 = arith.constant 0 : i32
    %c0_i32_2 = arith.constant 0 : i32
    return %c0_i32, %c0_i32_0, %c0_i32_1 : i32, i32, i32
  }
  func.func @transform_15(%arg0: i32) -> (i32, i32) {
    %c0_i32 = arith.constant 0 : i32
    %c0_i32_0 = arith.constant 0 : i32
    %c0_i32_1 = arith.constant 0 : i32
    return %c0_i32, %c0_i32_0 : i32, i32
  }
  func.func @transform_16(%arg0: i32) -> (i32, i32) {
    %c0_i32 = arith.constant 0 : i32
    %c0_i32_0 = arith.constant 0 : i32
    %c0_i32_1 = arith.constant 0 : i32
    return %c0_i32, %c0_i32_0 : i32, i32
  }
  func.func @transform_17(%arg0: i32) -> (i32, i32) {
    %c0_i32 = arith.constant 0 : i32
    %c0_i32_0 = arith.constant 0 : i32
    return %arg0, %c0_i32 : i32, i32
  }
}

</mosaic_0001>

<llo_original>
// kernel: sae_forward.1
$region0: #{sae_forward.1}
  #allocation0 [shape = 'u32[]', space=smem, size = 0x4, offset = 0x4, fixed_abs, tag = 'smem constant byte address 0x4 - core index']
  #allocation1 [shape = 'u32[72,128]{1,0:T(1,128)}', space=vmem, size = 0x9000, scoped, tag = 'internal scratch']
  %s0 = inlined_call_operand.vmem [shape: f32[256,128], index: 0, kind: input, shape index: {}]
  %s1 = inlined_call_operand.vmem [shape: bf16[128,200], index: 1, kind: input, shape index: {}]
  %s2 = inlined_call_operand.vmem [shape: f32[1,200], index: 2, kind: input, shape index: {}]
  %s3 = inlined_call_operand.vmem [shape: bf16[200,200], index: 3, kind: input, shape index: {}]
  %s4 = inlined_call_operand.vmem [shape: f32[1,200], index: 4, kind: input, shape index: {}]
  %s5 = inlined_call_operand.vmem [shape: bf16[200,200], index: 5, kind: input, shape index: {}]
  %s6 = inlined_call_operand.vmem [shape: f32[1,200], index: 6, kind: input, shape index: {}]
  %s7 = inlined_call_operand.vmem [shape: bf16[200,128], index: 7, kind: input, shape index: {}]
  %s8 = inlined_call_operand.vmem [shape: f32[1,128], index: 8, kind: input, shape index: {}]
  %s9 = inlined_call_operand.vmem [shape: bf16[128,1280], index: 9, kind: input, shape index: {}]
  %s10 = inlined_call_operand.vmem [shape: f32[1,1280], index: 10, kind: input, shape index: {}]
  %s11 = inlined_call_operand.vmem [shape: bf16[5,256,256], index: 11, kind: input, shape index: {}]
  %s12 = inlined_call_operand.vmem [shape: f32[5,1,256], index: 12, kind: input, shape index: {}]
  %s13 = inlined_call_operand.vmem [shape: bf16[5,256,256], index: 13, kind: input, shape index: {}]
  %s14 = inlined_call_operand.vmem [shape: f32[5,1,256], index: 14, kind: input, shape index: {}]
  %s15 = inlined_call_operand.vmem [shape: bf16[1280,128], index: 15, kind: input, shape index: {}]
  %s16 = inlined_call_operand.vmem [shape: f32[1,128], index: 16, kind: input, shape index: {}]
  %s17 = inlined_call_operand.vmem [shape: f32[256,128], index: 17, kind: output, shape index: {}]
  %s18 = sld [smem:[#allocation0]]
  $region101: #{sae_forward.1} parent=0
    _
  %s20 = ssub.s32 1, %s18
  %s21 = scalar_select 0, %s20, %s18
  loop: start=0, step=1, limit=4
  $region2: #{sae_forward.1} parent=0 // loop_pre_header
    _
  $region3: #{sae_forward.1} parent=0 // loop_header
    %s23 = sphi 0, %s27
    %p24 = scmp.ge.s32.totalorder %s23, 4
    %s33 = sphi 0, %s35
    %s36 = sphi 0, %s33
    %s37 = sphi 0, %s36
    %s53 = sphi 0, %s37
    %s57 = sphi 0, %s57
    %s59 = sphi 0, %s57
    %s60 = sphi 0, %s59
    %s74 = sphi 0, %s60
    %s78 = sphi 0, %s78
    %s80 = sphi 0, %s78
    %s81 = sphi 0, %s80
    %s95 = sphi 0, %s81
    %s99 = sphi 0, %s99
    %s101 = sphi 0, %s99
    %s102 = sphi 0, %s101
    %s116 = sphi 0, %s102
    %s120 = sphi 0, %s120
    %s122 = sphi 0, %s120
    %s123 = sphi 0, %s122
    %s137 = sphi 0, %s123
    %s141 = sphi 0, %s141
    %s143 = sphi 0, %s141
    %s144 = sphi 0, %s143
    %s158 = sphi 0, %s144
    %s162 = sphi 0, %s162
    %s164 = sphi 0, %s162
    %s165 = sphi 0, %s164
    %s179 = sphi 0, %s165
    %s183 = sphi 0, %s183
    %s185 = sphi 0, %s183
    %s186 = sphi 0, %s185
    %s200 = sphi 0, %s186
    %s204 = sphi 0, %s204
    %s206 = sphi 0, %s204
    %s207 = sphi 0, %s206
    %s221 = sphi 0, %s207
    %s225 = sphi 0, %s225
    %s227 = sphi 0, %s225
    %s228 = sphi 0, %s227
    %s242 = sphi 0, %s228
    %s246 = sphi 0, %s246
    %s248 = sphi 0, %s246
    %s249 = sphi 0, %s248
    %s263 = sphi 0, %s249
    %s267 = sphi 0, %s267
    %s269 = sphi 0, %s267
    %s270 = sphi 0, %s269
    %s284 = sphi 0, %s270
    %s288 = sphi 0, %s288
    %s290 = sphi 0, %s288
    %s291 = sphi 0, %s290
    %s305 = sphi 0, %s291
    %s309 = sphi 0, %s309
    %s311 = sphi 0, %s309
    %s312 = sphi 0, %s311
    %s326 = sphi 0, %s312
    %s330 = sphi 0, %s330
    %s332 = sphi 0, %s330
    %s333 = sphi 0, %s332
    %s347 = sphi 0, %s333
    %s351 = sphi 0, %s351
    %s353 = sphi 0, %s351
    %s354 = sphi 0, %s353
    %s368 = sphi 0, %s354
    %s372 = sphi 0, %s372
    %s374 = sphi 0, %s372
    %s375 = sphi 0, %s374
    %s389 = sphi 0, %s375
    %s395 = sphi 0, %s397
    %s398 = sphi 0, %s395
    %s399 = sphi 0, %s398
    %s415 = sphi 0, %s399
  $region4: #{sae_forward.1} parent=0 // loop_header_branch
    %26 = sbr.rel (%p24) target = $region8
  $region5: #{sae_forward.1} parent=0 // loop_body
    %s28 = ssub.s32 %s23, 1
    %s29 = ssub.s32 %s23, 2
    %s30 = sadd.s32 %s23, 1
    %s31 = ssub.s32 %s23, %s30
    %p32 = scmp.eq.s32.totalorder %s31, 0
    %s34 = sadd.s32 %s33, 1
    %s35 = scalar_select %p32, %s33, %s34
    %p38 = pneg %p32
    %p39 = scmp.eq.s32.totalorder %s23, 1
    %p40 = por %p38, %p39
    %p41 = scmp.ne.s32.totalorder %s33, %s36
    %p42 = scmp.eq.s32.totalorder %s23, 0
    %p43 = por %p41, %p42
    %p44 = scmp.ne.s32.totalorder %s33, %s36
    %p45 = scmp.eq.s32.totalorder %s28, 1
    %p46 = por %p44, %p45
    %p47 = scmp.ne.s32.totalorder %s36, %s37
    %p48 = scmp.eq.s32.totalorder %s28, 0
    %p49 = por %p47, %p48
    %p50 = scmp.ne.s32.totalorder %s36, %s37
    %p51 = scmp.eq.s32.totalorder %s29, 1
    %p52 = por %p50, %p51
    %p54 = scmp.ne.s32.totalorder %s37, %s53
    %p55 = scmp.eq.s32.totalorder %s29, 0
    %p56 = por %p54, %p55
    %s58 = sadd.s32 %s57, 1
    %p61 = scmp.eq.s32.totalorder %s23, 1
    %p62 = scmp.ne.s32.totalorder %s57, %s59
    %p63 = scmp.eq.s32.totalorder %s23, 0
    %p64 = por %p62, %p63
    %p65 = scmp.ne.s32.totalorder %s57, %s59
    %p66 = scmp.eq.s32.totalorder %s28, 1
    %p67 = por %p65, %p66
    %p68 = scmp.ne.s32.totalorder %s59, %s60
    %p69 = scmp.eq.s32.totalorder %s28, 0
    %p70 = por %p68, %p69
    %p71 = scmp.ne.s32.totalorder %s59, %s60
    %p72 = scmp.eq.s32.totalorder %s29, 1
    %p73 = por %p71, %p72
    %p75 = scmp.ne.s32.totalorder %s60, %s74
    %p76 = scmp.eq.s32.totalorder %s29, 0
    %p77 = por %p75, %p76
    %s79 = sadd.s32 %s78, 1
    %p82 = scmp.eq.s32.totalorder %s23, 1
    %p83 = scmp.ne.s32.totalorder %s78, %s80
    %p84 = scmp.eq.s32.totalorder %s23, 0
    %p85 = por %p83, %p84
    %p86 = scmp.ne.s32.totalorder %s78, %s80
    %p87 = scmp.eq.s32.totalorder %s28, 1
    %p88 = por %p86, %p87
    %p89 = scmp.ne.s32.totalorder %s80, %s81
    %p90 = scmp.eq.s32.totalorder %s28, 0
    %p91 = por %p89, %p90
    %p92 = scmp.ne.s32.totalorder %s80, %s81
    %p93 = scmp.eq.s32.totalorder %s29, 1
    %p94 = por %p92, %p93
    %p96 = scmp.ne.s32.totalorder %s81, %s95
    %p97 = scmp.eq.s32.totalorder %s29, 0
    %p98 = por %p96, %p97
    %s100 = sadd.s32 %s99, 1
    %p103 = scmp.eq.s32.totalorder %s23, 1
    %p104 = scmp.ne.s32.totalorder %s99, %s101
    %p105 = scmp.eq.s32.totalorder %s23, 0
    %p106 = por %p104, %p105
    %p107 = scmp.ne.s32.totalorder %s99, %s101
    %p108 = scmp.eq.s32.totalorder %s28, 1
    %p109 = por %p107, %p108
    %p110 = scmp.ne.s32.totalorder %s101, %s102
    %p111 = scmp.eq.s32.totalorder %s28, 0
    %p112 = por %p110, %p111
    %p113 = scmp.ne.s32.totalorder %s101, %s102
    %p114 = scmp.eq.s32.totalorder %s29, 1
    %p115 = por %p113, %p114
    %p117 = scmp.ne.s32.totalorder %s102, %s116
    %p118 = scmp.eq.s32.totalorder %s29, 0
    %p119 = por %p117, %p118
    %s121 = sadd.s32 %s120, 1
    %p124 = scmp.eq.s32.totalorder %s23, 1
    %p125 = scmp.ne.s32.totalorder %s120, %s122
    %p126 = scmp.eq.s32.totalorder %s23, 0
    %p127 = por %p125, %p126
    %p128 = scmp.ne.s32.totalorder %s120, %s122
    %p129 = scmp.eq.s32.totalorder %s28, 1
    %p130 = por %p128, %p129
    %p131 = scmp.ne.s32.totalorder %s122, %s123
    %p132 = scmp.eq.s32.totalorder %s28, 0
    %p133 = por %p131, %p132
    %p134 = scmp.ne.s32.totalorder %s122, %s123
    %p135 = scmp.eq.s32.totalorder %s29, 1
    %p136 = por %p134, %p135
    %p138 = scmp.ne.s32.totalorder %s123, %s137
    %p139 = scmp.eq.s32.totalorder %s29, 0
    %p140 = por %p138, %p139
    %s142 = sadd.s32 %s141, 1
    %p145 = scmp.eq.s32.totalorder %s23, 1
    %p146 = scmp.ne.s32.totalorder %s141, %s143
    %p147 = scmp.eq.s32.totalorder %s23, 0
    %p148 = por %p146, %p147
    %p149 = scmp.ne.s32.totalorder %s141, %s143
    %p150 = scmp.eq.s32.totalorder %s28, 1
    %p151 = por %p149, %p150
    %p152 = scmp.ne.s32.totalorder %s143, %s144
    %p153 = scmp.eq.s32.totalorder %s28, 0
    %p154 = por %p152, %p153
    %p155 = scmp.ne.s32.totalorder %s143, %s144
    %p156 = scmp.eq.s32.totalorder %s29, 1
    %p157 = por %p155, %p156
    %p159 = scmp.ne.s32.totalorder %s144, %s158
    %p160 = scmp.eq.s32.totalorder %s29, 0
    %p161 = por %p159, %p160
    %s163 = sadd.s32 %s162, 1
    %p166 = scmp.eq.s32.totalorder %s23, 1
    %p167 = scmp.ne.s32.totalorder %s162, %s164
    %p168 = scmp.eq.s32.totalorder %s23, 0
    %p169 = por %p167, %p168
    %p170 = scmp.ne.s32.totalorder %s162, %s164
    %p171 = scmp.eq.s32.totalorder %s28, 1
    %p172 = por %p170, %p171
    %p173 = scmp.ne.s32.totalorder %s164, %s165
    %p174 = scmp.eq.s32.totalorder %s28, 0
    %p175 = por %p173, %p174
    %p176 = scmp.ne.s32.totalorder %s164, %s165
    %p177 = scmp.eq.s32.totalorder %s29, 1
    %p178 = por %p176, %p177
    %p180 = scmp.ne.s32.totalorder %s165, %s179
    %p181 = scmp.eq.s32.totalorder %s29, 0
    %p182 = por %p180, %p181
    %s184 = sadd.s32 %s183, 1
    %p187 = scmp.eq.s32.totalorder %s23, 1
    %p188 = scmp.ne.s32.totalorder %s183, %s185
    %p189 = scmp.eq.s32.totalorder %s23, 0
    %p190 = por %p188, %p189
    %p191 = scmp.ne.s32.totalorder %s183, %s185
    %p192 = scmp.eq.s32.totalorder %s28, 1
    %p193 = por %p191, %p192
    %p194 = scmp.ne.s32.totalorder %s185, %s186
    %p195 = scmp.eq.s32.totalorder %s28, 0
    %p196 = por %p194, %p195
    %p197 = scmp.ne.s32.totalorder %s185, %s186
    %p198 = scmp.eq.s32.totalorder %s29, 1
    %p199 = por %p197, %p198
    %p201 = scmp.ne.s32.totalorder %s186, %s200
    %p202 = scmp.eq.s32.totalorder %s29, 0
    %p203 = por %p201, %p202
    %s205 = sadd.s32 %s204, 1
    %p208 = scmp.eq.s32.totalorder %s23, 1
    %p209 = scmp.ne.s32.totalorder %s204, %s206
    %p210 = scmp.eq.s32.totalorder %s23, 0
    %p211 = por %p209, %p210
    %p212 = scmp.ne.s32.totalorder %s204, %s206
    %p213 = scmp.eq.s32.totalorder %s28, 1
    %p214 = por %p212, %p213
    %p215 = scmp.ne.s32.totalorder %s206, %s207
    %p216 = scmp.eq.s32.totalorder %s28, 0
    %p217 = por %p215, %p216
    %p218 = scmp.ne.s32.totalorder %s206, %s207
    %p219 = scmp.eq.s32.totalorder %s29, 1
    %p220 = por %p218, %p219
    %p222 = scmp.ne.s32.totalorder %s207, %s221
    %p223 = scmp.eq.s32.totalorder %s29, 0
    %p224 = por %p222, %p223
    %s226 = sadd.s32 %s225, 1
    %p229 = scmp.eq.s32.totalorder %s23, 1
    %p230 = scmp.ne.s32.totalorder %s225, %s227
    %p231 = scmp.eq.s32.totalorder %s23, 0
    %p232 = por %p230, %p231
    %p233 = scmp.ne.s32.totalorder %s225, %s227
    %p234 = scmp.eq.s32.totalorder %s28, 1
    %p235 = por %p233, %p234
    %p236 = scmp.ne.s32.totalorder %s227, %s228
    %p237 = scmp.eq.s32.totalorder %s28, 0
    %p238 = por %p236, %p237
    %p239 = scmp.ne.s32.totalorder %s227, %s228
    %p240 = scmp.eq.s32.totalorder %s29, 1
    %p241 = por %p239, %p240
    %p243 = scmp.ne.s32.totalorder %s228, %s242
    %p244 = scmp.eq.s32.totalorder %s29, 0
    %p245 = por %p243, %p244
    %s247 = sadd.s32 %s246, 1
    %p250 = scmp.eq.s32.totalorder %s23, 1
    %p251 = scmp.ne.s32.totalorder %s246, %s248
    %p252 = scmp.eq.s32.totalorder %s23, 0
    %p253 = por %p251, %p252
    %p254 = scmp.ne.s32.totalorder %s246, %s248
    %p255 = scmp.eq.s32.totalorder %s28, 1
    %p256 = por %p254, %p255
    %p257 = scmp.ne.s32.totalorder %s248, %s249
    %p258 = scmp.eq.s32.totalorder %s28, 0
    %p259 = por %p257, %p258
    %p260 = scmp.ne.s32.totalorder %s248, %s249
    %p261 = scmp.eq.s32.totalorder %s29, 1
    %p262 = por %p260, %p261
    %p264 = scmp.ne.s32.totalorder %s249, %s263
    %p265 = scmp.eq.s32.totalorder %s29, 0
    %p266 = por %p264, %p265
    %s268 = sadd.s32 %s267, 1
    %p271 = scmp.eq.s32.totalorder %s23, 1
    %p272 = scmp.ne.s32.totalorder %s267, %s269
    %p273 = scmp.eq.s32.totalorder %s23, 0
    %p274 = por %p272, %p273
    %p275 = scmp.ne.s32.totalorder %s267, %s269
    %p276 = scmp.eq.s32.totalorder %s28, 1
    %p277 = por %p275, %p276
    %p278 = scmp.ne.s32.totalorder %s269, %s270
    %p279 = scmp.eq.s32.totalorder %s28, 0
    %p280 = por %p278, %p279
    %p281 = scmp.ne.s32.totalorder %s269, %s270
    %p282 = scmp.eq.s32.totalorder %s29, 1
    %p283 = por %p281, %p282
    %p285 = scmp.ne.s32.totalorder %s270, %s284
    %p286 = scmp.eq.s32.totalorder %s29, 0
    %p287 = por %p285, %p286
    %s289 = sadd.s32 %s288, 1
    %p292 = scmp.eq.s32.totalorder %s23, 1
    %p293 = scmp.ne.s32.totalorder %s288, %s290
    %p294 = scmp.eq.s32.totalorder %s23, 0
    %p295 = por %p293, %p294
    %p296 = scmp.ne.s32.totalorder %s288, %s290
    %p297 = scmp.eq.s32.totalorder %s28, 1
    %p298 = por %p296, %p297
    %p299 = scmp.ne.s32.totalorder %s290, %s291
    %p300 = scmp.eq.s32.totalorder %s28, 0
    %p301 = por %p299, %p300
    %p302 = scmp.ne.s32.totalorder %s290, %s291
    %p303 = scmp.eq.s32.totalorder %s29, 1
    %p304 = por %p302, %p303
    %p306 = scmp.ne.s32.totalorder %s291, %s305
    %p307 = scmp.eq.s32.totalorder %s29, 0
    %p308 = por %p306, %p307
    %s310 = sadd.s32 %s309, 1
    %p313 = scmp.eq.s32.totalorder %s23, 1
    %p314 = scmp.ne.s32.totalorder %s309, %s311
    %p315 = scmp.eq.s32.totalorder %s23, 0
    %p316 = por %p314, %p315
    %p317 = scmp.ne.s32.totalorder %s309, %s311
    %p318 = scmp.eq.s32.totalorder %s28, 1
    %p319 = por %p317, %p318
    %p320 = scmp.ne.s32.totalorder %s311, %s312
    %p321 = scmp.eq.s32.totalorder %s28, 0
    %p322 = por %p320, %p321
    %p323 = scmp.ne.s32.totalorder %s311, %s312
    %p324 = scmp.eq.s32.totalorder %s29, 1
    %p325 = por %p323, %p324
    %p327 = scmp.ne.s32.totalorder %s312, %s326
    %p328 = scmp.eq.s32.totalorder %s29, 0
    %p329 = por %p327, %p328
    %s331 = sadd.s32 %s330, 1
    %p334 = scmp.eq.s32.totalorder %s23, 1
    %p335 = scmp.ne.s32.totalorder %s330, %s332
    %p336 = scmp.eq.s32.totalorder %s23, 0
    %p337 = por %p335, %p336
    %p338 = scmp.ne.s32.totalorder %s330, %s332
    %p339 = scmp.eq.s32.totalorder %s28, 1
    %p340 = por %p338, %p339
    %p341 = scmp.ne.s32.totalorder %s332, %s333
    %p342 = scmp.eq.s32.totalorder %s28, 0
    %p343 = por %p341, %p342
    %p344 = scmp.ne.s32.totalorder %s332, %s333
    %p345 = scmp.eq.s32.totalorder %s29, 1
    %p346 = por %p344, %p345
    %p348 = scmp.ne.s32.totalorder %s333, %s347
    %p349 = scmp.eq.s32.totalorder %s29, 0
    %p350 = por %p348, %p349
    %s352 = sadd.s32 %s351, 1
    %p355 = scmp.eq.s32.totalorder %s23, 1
    %p356 = scmp.ne.s32.totalorder %s351, %s353
    %p357 = scmp.eq.s32.totalorder %s23, 0
    %p358 = por %p356, %p357
    %p359 = scmp.ne.s32.totalorder %s351, %s353
    %p360 = scmp.eq.s32.totalorder %s28, 1
    %p361 = por %p359, %p360
    %p362 = scmp.ne.s32.totalorder %s353, %s354
    %p363 = scmp.eq.s32.totalorder %s28, 0
    %p364 = por %p362, %p363
    %p365 = scmp.ne.s32.totalorder %s353, %s354
    %p366 = scmp.eq.s32.totalorder %s29, 1
    %p367 = por %p365, %p366
    %p369 = scmp.ne.s32.totalorder %s354, %s368
    %p370 = scmp.eq.s32.totalorder %s29, 0
    %p371 = por %p369, %p370
    %s373 = sadd.s32 %s372, 1
    %p376 = scmp.eq.s32.totalorder %s23, 1
    %p377 = scmp.ne.s32.totalorder %s372, %s374
    %p378 = scmp.eq.s32.totalorder %s23, 0
    %p379 = por %p377, %p378
    %p380 = scmp.ne.s32.totalorder %s372, %s374
    %p381 = scmp.eq.s32.totalorder %s28, 1
    %p382 = por %p380, %p381
    %p383 = scmp.ne.s32.totalorder %s374, %s375
    %p384 = scmp.eq.s32.totalorder %s28, 0
    %p385 = por %p383, %p384
    %p386 = scmp.ne.s32.totalorder %s374, %s375
    %p387 = scmp.eq.s32.totalorder %s29, 1
    %p388 = por %p386, %p387
    %p390 = scmp.ne.s32.totalorder %s375, %s389
    %p391 = scmp.eq.s32.totalorder %s29, 0
    %p392 = por %p390, %p391
    %s393 = ssub.s32 %s23, %s30
    %p394 = scmp.eq.s32.totalorder %s393, 0
    %s396 = sadd.s32 %s395, 1
    %s397 = scalar_select %p394, %s395, %s396
    %p400 = pneg %p394
    %p401 = scmp.eq.s32.totalorder %s23, 1
    %p402 = por %p400, %p401
    %p403 = scmp.ne.s32.totalorder %s395, %s398
    %p404 = scmp.eq.s32.totalorder %s23, 0
    %p405 = por %p403, %p404
    %p406 = scmp.ne.s32.totalorder %s395, %s398
    %p407 = scmp.eq.s32.totalorder %s28, 1
    %p408 = por %p406, %p407
    %p409 = scmp.ne.s32.totalorder %s398, %s399
    %p410 = scmp.eq.s32.totalorder %s28, 0
    %p411 = por %p409, %p410
    %p412 = scmp.ne.s32.totalorder %s398, %s399
    %p413 = scmp.eq.s32.totalorder %s29, 1
    %p414 = por %p412, %p413
    %p416 = scmp.ne.s32.totalorder %s399, %s415
    %p417 = scmp.eq.s32.totalorder %s29, 0
    %p418 = por %p416, %p417
    %p419 = scmp.le.s32.totalorder 1, %s23
    %p420 = scmp.lt.s32.totalorder %s23, 3
    %p421 = pnand %p419, %p420
    %p422 = pneg %p421
    // Predicated region
    $region9: #{sae_forward.1} parent=5 // pred_check
      _
    $region10: #{sae_forward.1} parent=5 // pred_check_branch
      %424 = sbr.rel (%p421) target = $region12
    $region11: #{sae_forward.1} parent=5 // pred_region
      %s425 = ssub.s32 %s23, 1
      // Predicated region
      $region13: #{sae_forward.1} parent=11 // pred_check
        %p426 = pneg %p70
      $region14: #{sae_forward.1} parent=11 // pred_check_branch
        %428 = sbr.rel (%p426) target = $region16
      $region15: #{sae_forward.1} parent=11 // pred_region
        _
      $region16: #{sae_forward.1} parent=11 // pred_fallthru
        _
      // Predicated region
      $region17: #{sae_forward.1} parent=11 // pred_check
        %p429 = pneg %p91
      $region18: #{sae_forward.1} parent=11 // pred_check_branch
        %431 = sbr.rel (%p429) target = $region20
      $region19: #{sae_forward.1} parent=11 // pred_region
        _
      $region20: #{sae_forward.1} parent=11 // pred_fallthru
        _
      // Predicated region
      $region21: #{sae_forward.1} parent=11 // pred_check
        %p432 = pneg %p112
      $region22: #{sae_forward.1} parent=11 // pred_check_branch
        %434 = sbr.rel (%p432) target = $region24
      $region23: #{sae_forward.1} parent=11 // pred_region
        _
      $region24: #{sae_forward.1} parent=11 // pred_fallthru
        _
      // Predicated region
      $region25: #{sae_forward.1} parent=11 // pred_check
        %p435 = pneg %p133
      $region26: #{sae_forward.1} parent=11 // pred_check_branch
        %437 = sbr.rel (%p435) target = $region28
      $region27: #{sae_forward.1} parent=11 // pred_region
        _
      $region28: #{sae_forward.1} parent=11 // pred_fallthru
        _
      // Predicated region
      $region29: #{sae_forward.1} parent=11 // pred_check
        %p438 = pneg %p154
      $region30: #{sae_forward.1} parent=11 // pred_check_branch
        %440 = sbr.rel (%p438) target = $region32
      $region31: #{sae_forward.1} parent=11 // pred_region
        _
      $region32: #{sae_forward.1} parent=11 // pred_fallthru
        _
      // Predicated region
      $region33: #{sae_forward.1} parent=11 // pred_check
        %p441 = pneg %p175
      $region34: #{sae_forward.1} parent=11 // pred_check_branch
        %443 = sbr.rel (%p441) target = $region36
      $region35: #{sae_forward.1} parent=11 // pred_region
        _
      $region36: #{sae_forward.1} parent=11 // pred_fallthru
        _
      // Predicated region
      $region37: #{sae_forward.1} parent=11 // pred_check
        %p444 = pneg %p196
      $region38: #{sae_forward.1} parent=11 // pred_check_branch
        %446 = sbr.rel (%p444) target = $region40
      $region39: #{sae_forward.1} parent=11 // pred_region
        _
      $region40: #{sae_forward.1} parent=11 // pred_fallthru
        _
      // Predicated region
      $region41: #{sae_forward.1} parent=11 // pred_check
        %p447 = pneg %p217
      $region42: #{sae_forward.1} parent=11 // pred_check_branch
        %449 = sbr.rel (%p447) target = $region44
      $region43: #{sae_forward.1} parent=11 // pred_region
        _
      $region44: #{sae_forward.1} parent=11 // pred_fallthru
        _
      // Predicated region
      $region45: #{sae_forward.1} parent=11 // pred_check
        %p450 = pneg %p238
      $region46: #{sae_forward.1} parent=11 // pred_check_branch
        %452 = sbr.rel (%p450) target = $region48
      $region47: #{sae_forward.1} parent=11 // pred_region
        _
      $region48: #{sae_forward.1} parent=11 // pred_fallthru
        _
      // Predicated region
      $region49: #{sae_forward.1} parent=11 // pred_check
        %p453 = pneg %p259
      $region50: #{sae_forward.1} parent=11 // pred_check_branch
        %455 = sbr.rel (%p453) target = $region52
      $region51: #{sae_forward.1} parent=11 // pred_region
        _
      $region52: #{sae_forward.1} parent=11 // pred_fallthru
        _
      // Predicated region
      $region53: #{sae_forward.1} parent=11 // pred_check
        %p456 = pneg %p280
      $region54: #{sae_forward.1} parent=11 // pred_check_branch
        %458 = sbr.rel (%p456) target = $region56
      $region55: #{sae_forward.1} parent=11 // pred_region
        _
      $region56: #{sae_forward.1} parent=11 // pred_fallthru
        _
      // Predicated region
      $region57: #{sae_forward.1} parent=11 // pred_check
        %p459 = pneg %p301
      $region58: #{sae_forward.1} parent=11 // pred_check_branch
        %461 = sbr.rel (%p459) target = $region60
      $region59: #{sae_forward.1} parent=11 // pred_region
        _
      $region60: #{sae_forward.1} parent=11 // pred_fallthru
        _
      // Predicated region
      $region61: #{sae_forward.1} parent=11 // pred_check
        %p462 = pneg %p322
      $region62: #{sae_forward.1} parent=11 // pred_check_branch
        %464 = sbr.rel (%p462) target = $region64
      $region63: #{sae_forward.1} parent=11 // pred_region
        _
      $region64: #{sae_forward.1} parent=11 // pred_fallthru
        _
      // Predicated region
      $region65: #{sae_forward.1} parent=11 // pred_check
        %p465 = pneg %p343
      $region66: #{sae_forward.1} parent=11 // pred_check_branch
        %467 = sbr.rel (%p465) target = $region68
      $region67: #{sae_forward.1} parent=11 // pred_region
        _
      $region68: #{sae_forward.1} parent=11 // pred_fallthru
        _
      // Predicated region
      $region69: #{sae_forward.1} parent=11 // pred_check
        %p468 = pneg %p364
      $region70: #{sae_forward.1} parent=11 // pred_check_branch
        %470 = sbr.rel (%p468) target = $region72
      $region71: #{sae_forward.1} parent=11 // pred_region
        _
      $region72: #{sae_forward.1} parent=11 // pred_fallthru
        _
      // Predicated region
      $region73: #{sae_forward.1} parent=11 // pred_check
        %p471 = pneg %p385
      $region74: #{sae_forward.1} parent=11 // pred_check_branch
        %473 = sbr.rel (%p471) target = $region76
      $region75: #{sae_forward.1} parent=11 // pred_region
        _
      $region76: #{sae_forward.1} parent=11 // pred_fallthru
        _
    $region12: #{sae_forward.1} parent=5 // pred_fallthru
      _
    %p474 = scmp.lt.s32.totalorder %s23, 2
    // Predicated region
    $region77: #{sae_forward.1} parent=5 // pred_check
      %p475 = pneg %p474
    $region78: #{sae_forward.1} parent=5 // pred_check_branch
      %477 = sbr.rel (%p475) target = $region80
    $region79: #{sae_forward.1} parent=5 // pred_region
      // Predicated region
      $region81: #{sae_forward.1} parent=79 // pred_check
        %p478 = pneg %p43
      $region82: #{sae_forward.1} parent=79 // pred_check_branch
        %480 = sbr.rel (%p478) target = $region84
      $region83: #{sae_forward.1} parent=79 // pred_region
        %s481 = smul.u32 16, %s23
        %p482 = scmp.lt.s32.totalorder %s481, 31
        %s483 = scalar_select %p482, %s481, 31
        %s484 = smul.addr %s483, 8
        %s485 = scalar_lea.vmem %s0, %s484
        %s486 = smul.u32 16, %s23
      $region84: #{sae_forward.1} parent=79 // pred_fallthru
        _
    $region80: #{sae_forward.1} parent=5 // pred_fallthru
      _
    %p487 = scmp.le.s32.totalorder 1, %s23
    %p488 = scmp.lt.s32.totalorder %s23, 3
    %p489 = pnand %p487, %p488
    %p490 = pneg %p489
    // Predicated region
    $region85: #{sae_forward.1} parent=5 // pred_check
      _
    $region86: #{sae_forward.1} parent=5 // pred_check_branch
      %492 = sbr.rel (%p489) target = $region88
    $region87: #{sae_forward.1} parent=5 // pred_region
      %s493 = ssub.s32 %s23, 1
      %s494 = smul.u32 16, %s28
      %p495 = scmp.lt.s32.totalorder %s494, 31
      %s496 = scalar_select %p495, %s494, 31
      %s497 = smul.addr %s496, 8
      %s498 = scalar_lea.vmem %s0, %s497
      %p499 = pneg %p49
      %p500 = pneg %p46
      %p501 = pneg %p70
      %p502 = pneg %p67
      %p503 = pneg %p91
      %p504 = pneg %p88
      %p505 = pneg %p112
      %p506 = pneg %p109
      %p507 = pneg %p133
      %p508 = pneg %p130
      %p509 = pneg %p154
      %p510 = pneg %p151
      %p511 = pneg %p175
      %p512 = pneg %p172
      %p513 = pneg %p196
      %p514 = pneg %p193
      %p515 = pneg %p217
      %p516 = pneg %p214
      %p517 = pneg %p238
      %p518 = pneg %p235
      %p519 = pneg %p259
      %p520 = pneg %p256
      %p521 = pneg %p280
      %p522 = pneg %p277
      %p523 = pneg %p301
      %p524 = pneg %p298
      %p525 = pneg %p322
      %p526 = pneg %p319
      %p527 = pneg %p343
      %p528 = pneg %p340
      %p529 = pneg %p364
      %p530 = pneg %p361
      %p531 = pneg %p385
      %p532 = pneg %p382
      %p533 = pneg %p411
      %p534 = pneg %p408
      %s535 = smul.u32 16, %s28
      %p536 = scmp.lt.s32.totalorder %s535, 31
      %s537 = scalar_select %p536, %s535, 31
      %s538 = smul.addr %s537, 8
      %s539 = scalar_lea.vmem %s17, %s538
      %s540 = smul.u32 16, %s28
      %p541 = scmp.lt.s32.totalorder %s540, 31
      %s542 = scalar_select %p541, %s540, 31
      %s543 = smul.addr %s542, 8
      %s544 = scalar_lea.vmem %s0, %s543
      %s545 = smul.u32 16, %s28
      %s546 = smul.u32 16, %s28
      %p547 = scmp.lt.s32.totalorder %s546, 31
      %s548 = scalar_select %p547, %s546, 31
      %s549 = smul.addr %s548, 8
      %s550 = scalar_lea.vmem %s17, %s549
      %s551 = smul.u32 16, %s28
      %v553 = vld [vmem:[%s544] sm:$0xff]
      %v554 = vld [vmem:[%s544 + $0x8] sm:$0xff]
      %v555 = vld [vmem:[%s544 + $0x10] sm:$0xff]
      %v556 = vld [vmem:[%s544 + $0x18] sm:$0xff]
      %v557 = vld [vmem:[%s544 + $0x20] sm:$0xff]
      %v558 = vld [vmem:[%s544 + $0x28] sm:$0xff]
      %v559 = vld [vmem:[%s544 + $0x30] sm:$0xff]
      %v560 = vld [vmem:[%s544 + $0x38] sm:$0xff]
      %v561 = vld [vmem:[%s544 + $0x40] sm:$0xff]
      %v562 = vld [vmem:[%s544 + $0x48] sm:$0xff]
      %v563 = vld [vmem:[%s544 + $0x50] sm:$0xff]
      %v564 = vld [vmem:[%s544 + $0x58] sm:$0xff]
      %v565 = vld [vmem:[%s544 + $0x60] sm:$0xff]
      %v566 = vld [vmem:[%s544 + $0x68] sm:$0xff]
      %v567 = vld [vmem:[%s544 + $0x70] sm:$0xff]
      %v568 = vld [vmem:[%s544 + $0x78] sm:$0xff]
      %v569 = vpack.c.bf16 %v554, %v553
      %v570 = vpack.c.bf16 %v556, %v555
      %v571 = vpack.c.bf16 %v558, %v557
      %v572 = vpack.c.bf16 %v560, %v559
      %v573 = vpack.c.bf16 %v562, %v561
      %v574 = vpack.c.bf16 %v564, %v563
      %v575 = vpack.c.bf16 %v566, %v565
      %v576 = vpack.c.bf16 %v568, %v567
      %v577 = vld [vmem:[%s1] sm:$0xff]
      %v578 = vld [vmem:[%s1 + $0x8] sm:$0xff]
      %v579 = vld [vmem:[%s1 + $0x10] sm:$0xff]
      %v580 = vld [vmem:[%s1 + $0x18] sm:$0xff]
      %v581 = vld [vmem:[%s1 + $0x20] sm:$0xff]
      %v582 = vld [vmem:[%s1 + $0x28] sm:$0xff]
      %v583 = vld [vmem:[%s1 + $0x30] sm:$0xff]
      %v584 = vld [vmem:[%s1 + $0x38] sm:$0xff]
      %v585 = vld [vmem:[%s1 + $0x40] sm:$0xff]
      %v586 = vld [vmem:[%s1 + $0x48] sm:$0xff]
      %v587 = vld [vmem:[%s1 + $0x50] sm:$0xff]
      %v588 = vld [vmem:[%s1 + $0x58] sm:$0xff]
      %v589 = vld [vmem:[%s1 + $0x60] sm:$0xff]
      %v590 = vld [vmem:[%s1 + $0x68] sm:$0xff]
      %v591 = vld [vmem:[%s1 + $0x70] sm:$0xff]
      %v592 = vld [vmem:[%s1 + $0x78] sm:$0xff]
      %v593 = vld [vmem:[%s2] sm:$0x3]
      %v595 = vperm.slane %v593, 0
      %v596 = vperm.slane %v593, 1
      %v615 = vunpack.c.l.b16 %v577
      %v616 = vunpack.c.h.b16 %v577
      %v617 = vunpack.c.l.b16 %v578
      %v618 = vunpack.c.h.b16 %v578
      %v619 = vunpack.c.l.b16 %v579
      %v620 = vunpack.c.h.b16 %v579
      %v621 = vunpack.c.l.b16 %v580
      %v622 = vunpack.c.h.b16 %v580
      %v623 = vunpack.c.l.b16 %v581
      %v624 = vunpack.c.h.b16 %v581
      %v625 = vunpack.c.l.b16 %v582
      %v626 = vunpack.c.h.b16 %v582
      %v627 = vunpack.c.l.b16 %v583
      %v628 = vunpack.c.h.b16 %v583
      %v629 = vunpack.c.l.b16 %v584
      %v630 = vunpack.c.h.b16 %v584
      %v631 = vunpack.c.l.b16 %v585
      %v632 = vunpack.c.h.b16 %v585
      %v633 = vunpack.c.l.b16 %v586
      %v634 = vunpack.c.h.b16 %v586
      %v635 = vunpack.c.l.b16 %v587
      %v636 = vunpack.c.h.b16 %v587
      %v637 = vunpack.c.l.b16 %v588
      %v638 = vunpack.c.h.b16 %v588
      %v639 = vunpack.c.l.b16 %v589
      %v640 = vunpack.c.h.b16 %v589
      %v641 = vunpack.c.l.b16 %v590
      %v642 = vunpack.c.h.b16 %v590
      %v643 = vunpack.c.l.b16 %v591
      %v644 = vunpack.c.h.b16 %v591
      %v645 = vunpack.c.l.b16 %v592
      %v646 = vunpack.c.h.b16 %v592
      %v647 = vpack.c.b16 %v617, %v615
      %v648 = vpack.c.b16 %v618, %v616
      %v649 = vpack.c.b16 %v621, %v619
      %v650 = vpack.c.b16 %v622, %v620
      %v651 = vpack.c.b16 %v625, %v623
      %v652 = vpack.c.b16 %v626, %v624
      %v653 = vpack.c.b16 %v629, %v627
      %v654 = vpack.c.b16 %v630, %v628
      %v655 = vpack.c.b16 %v633, %v631
      %v656 = vpack.c.b16 %v634, %v632
      %v657 = vpack.c.b16 %v637, %v635
      %v658 = vpack.c.b16 %v638, %v636
      %v659 = vpack.c.b16 %v641, %v639
      %v660 = vpack.c.b16 %v642, %v640
      %v661 = vpack.c.b16 %v645, %v643
      %v662 = vpack.c.b16 %v646, %v644
      %679 = vmatpush.bf16.msra.mxu0 %v661
      %680 = vmatpush.bf16.msra.mxu0 %v659
      %681 = vmatpush.bf16.msra.mxu0 %v657
      %682 = vmatpush.bf16.msra.mxu0 %v655
      %683 = vmatpush.bf16.msra.mxu0 %v653
      %684 = vmatpush.bf16.msra.mxu0 %v651
      %685 = vmatpush.bf16.msra.mxu0 %v649
      %686 = vmatpush.bf16.msra.mxu0 %v647
      %687 = vmatmul.bf16.gmra.mxu0 %v569
      %v688 = vpop.f32.mrf.mxu0
      %v689 = vadd.f32 %v595, %v688
      %v690 = vpop.f32.mrf.mxu0
      %v691 = vadd.f32 %v595, %v690
      %692 = vmatmul.bf16.gmra.mxu0 %v570
      %v693 = vpop.f32.mrf.mxu0
      %v694 = vadd.f32 %v595, %v693
      %v695 = vpop.f32.mrf.mxu0
      %v696 = vadd.f32 %v595, %v695
      %697 = vmatmul.bf16.gmra.mxu0 %v571
      %v698 = vpop.f32.mrf.mxu0
      %v699 = vadd.f32 %v595, %v698
      %v700 = vpop.f32.mrf.mxu0
      %v701 = vadd.f32 %v595, %v700
      %702 = vmatmul.bf16.gmra.mxu0 %v572
      %v703 = vpop.f32.mrf.mxu0
      %v704 = vadd.f32 %v595, %v703
      %v705 = vpop.f32.mrf.mxu0
      %v706 = vadd.f32 %v595, %v705
      %707 = vmatmul.bf16.gmra.mxu0 %v573
      %v708 = vpop.f32.mrf.mxu0
      %v709 = vadd.f32 %v595, %v708
      %v710 = vpop.f32.mrf.mxu0
      %v711 = vadd.f32 %v595, %v710
      %712 = vmatmul.bf16.gmra.mxu0 %v574
      %v713 = vpop.f32.mrf.mxu0
      %v714 = vadd.f32 %v595, %v713
      %v715 = vpop.f32.mrf.mxu0
      %v716 = vadd.f32 %v595, %v715
      %717 = vmatmul.bf16.gmra.mxu0 %v575
      %v718 = vpop.f32.mrf.mxu0
      %v719 = vadd.f32 %v595, %v718
      %v720 = vpop.f32.mrf.mxu0
      %v721 = vadd.f32 %v595, %v720
      %722 = vmatmul.bf16.gmra.mxu0 %v576
      %v723 = vpop.f32.mrf.mxu0
      %v724 = vadd.f32 %v595, %v723
      %v725 = vpop.f32.mrf.mxu0
      %v726 = vadd.f32 %v595, %v725
      %727 = vdwg.mxu0
      %728 = vmatpush.bf16.msra.mxu0 %v662
      %729 = vmatpush.bf16.msra.mxu0 %v660
      %730 = vmatpush.bf16.msra.mxu0 %v658
      %731 = vmatpush.bf16.msra.mxu0 %v656
      %732 = vmatpush.bf16.msra.mxu0 %v654
      %733 = vmatpush.bf16.msra.mxu0 %v652
      %734 = vmatpush.bf16.msra.mxu0 %v650
      %735 = vmatpush.bf16.msra.mxu0 %v648
      %736 = vmatmul.bf16.gmra.mxu0 %v569
      %v737 = vpop.f32.mrf.mxu0
      %v738 = vadd.f32 %v596, %v737
      %v739 = vpop.f32.mrf.mxu0
      %v740 = vadd.f32 %v596, %v739
      %741 = vmatmul.bf16.gmra.mxu0 %v570
      %v742 = vpop.f32.mrf.mxu0
      %v743 = vadd.f32 %v596, %v742
      %v744 = vpop.f32.mrf.mxu0
      %v745 = vadd.f32 %v596, %v744
      %746 = vmatmul.bf16.gmra.mxu0 %v571
      %v747 = vpop.f32.mrf.mxu0
      %v748 = vadd.f32 %v596, %v747
      %v749 = vpop.f32.mrf.mxu0
      %v750 = vadd.f32 %v596, %v749
      %751 = vmatmul.bf16.gmra.mxu0 %v572
      %v752 = vpop.f32.mrf.mxu0
      %v753 = vadd.f32 %v596, %v752
      %v754 = vpop.f32.mrf.mxu0
      %v755 = vadd.f32 %v596, %v754
      %756 = vmatmul.bf16.gmra.mxu0 %v573
      %v757 = vpop.f32.mrf.mxu0
      %v758 = vadd.f32 %v596, %v757
      %v759 = vpop.f32.mrf.mxu0
      %v760 = vadd.f32 %v596, %v759
      %761 = vmatmul.bf16.gmra.mxu0 %v574
      %v762 = vpop.f32.mrf.mxu0
      %v763 = vadd.f32 %v596, %v762
      %v764 = vpop.f32.mrf.mxu0
      %v765 = vadd.f32 %v596, %v764
      %766 = vmatmul.bf16.gmra.mxu0 %v575
      %v767 = vpop.f32.mrf.mxu0
      %v768 = vadd.f32 %v596, %v767
      %v769 = vpop.f32.mrf.mxu0
      %v770 = vadd.f32 %v596, %v769
      %771 = vmatmul.bf16.gmra.mxu0 %v576
      %v772 = vpop.f32.mrf.mxu0
      %v773 = vadd.f32 %v596, %v772
      %v774 = vpop.f32.mrf.mxu0
      %v775 = vadd.f32 %v596, %v774
      %776 = vdwg.mxu0
      %v777 = vmul.f32 %v689, 0.01
      %v778 = vmul.f32 %v738, 0.01
      %v779 = vmul.f32 %v691, 0.01
      %v780 = vmul.f32 %v740, 0.01
      %v781 = vmul.f32 %v694, 0.01
      %v782 = vmul.f32 %v743, 0.01
      %v783 = vmul.f32 %v696, 0.01
      %v784 = vmul.f32 %v745, 0.01
      %v785 = vmul.f32 %v699, 0.01
      %v786 = vmul.f32 %v748, 0.01
      %v787 = vmul.f32 %v701, 0.01
      %v788 = vmul.f32 %v750, 0.01
      %v789 = vmul.f32 %v704, 0.01
      %v790 = vmul.f32 %v753, 0.01
      %v791 = vmul.f32 %v706, 0.01
      %v792 = vmul.f32 %v755, 0.01
      %v793 = vmul.f32 %v709, 0.01
      %v794 = vmul.f32 %v758, 0.01
      %v795 = vmul.f32 %v711, 0.01
      %v796 = vmul.f32 %v760, 0.01
      %v797 = vmul.f32 %v714, 0.01
      %v798 = vmul.f32 %v763, 0.01
      %v799 = vmul.f32 %v716, 0.01
      %v800 = vmul.f32 %v765, 0.01
      %v801 = vmul.f32 %v719, 0.01
      %v802 = vmul.f32 %v768, 0.01
      %v803 = vmul.f32 %v721, 0.01
      %v804 = vmul.f32 %v770, 0.01
      %v805 = vmul.f32 %v724, 0.01
      %v806 = vmul.f32 %v773, 0.01
      %v807 = vmul.f32 %v726, 0.01
      %v808 = vmul.f32 %v775, 0.01
      %v809 = vmax.f32 %v689, %v777
      %v810 = vmax.f32 %v738, %v778
      %v811 = vmax.f32 %v691, %v779
      %v812 = vmax.f32 %v740, %v780
      %v813 = vmax.f32 %v694, %v781
      %v814 = vmax.f32 %v743, %v782
      %v815 = vmax.f32 %v696, %v783
      %v816 = vmax.f32 %v745, %v784
      %v817 = vmax.f32 %v699, %v785
      %v818 = vmax.f32 %v748, %v786
      %v819 = vmax.f32 %v701, %v787
      %v820 = vmax.f32 %v750, %v788
      %v821 = vmax.f32 %v704, %v789
      %v822 = vmax.f32 %v753, %v790
      %v823 = vmax.f32 %v706, %v791
      %v824 = vmax.f32 %v755, %v792
      %v825 = vmax.f32 %v709, %v793
      %v826 = vmax.f32 %v758, %v794
      %v827 = vmax.f32 %v711, %v795
      %v828 = vmax.f32 %v760, %v796
      %v829 = vmax.f32 %v714, %v797
      %v830 = vmax.f32 %v763, %v798
      %v831 = vmax.f32 %v716, %v799
      %v832 = vmax.f32 %v765, %v800
      %v833 = vmax.f32 %v719, %v801
      %v834 = vmax.f32 %v768, %v802
      %v835 = vmax.f32 %v721, %v803
      %v836 = vmax.f32 %v770, %v804
      %v837 = vmax.f32 %v724, %v805
      %v838 = vmax.f32 %v773, %v806
      %v839 = vmax.f32 %v726, %v807
      %v840 = vmax.f32 %v775, %v808
      %v841 = vpack.c.bf16 %v811, %v809
      %v842 = vpack.c.bf16 %v812, %v810
      %v843 = vpack.c.bf16 %v815, %v813
      %v844 = vpack.c.bf16 %v816, %v814
      %v845 = vpack.c.bf16 %v819, %v817
      %v846 = vpack.c.bf16 %v820, %v818
      %v847 = vpack.c.bf16 %v823, %v821
      %v848 = vpack.c.bf16 %v824, %v822
      %v849 = vpack.c.bf16 %v827, %v825
      %v850 = vpack.c.bf16 %v828, %v826
      %v851 = vpack.c.bf16 %v831, %v829
      %v852 = vpack.c.bf16 %v832, %v830
      %v853 = vpack.c.bf16 %v835, %v833
      %v854 = vpack.c.bf16 %v836, %v834
      %v855 = vpack.c.bf16 %v839, %v837
      %v856 = vpack.c.bf16 %v840, %v838
      %v857 = vld [vmem:[%s3] sm:$0xff]
      %v858 = vld [vmem:[%s3 + $0x8] sm:$0xff]
      %v859 = vld [vmem:[%s3 + $0x10] sm:$0xff]
      %v860 = vld [vmem:[%s3 + $0x18] sm:$0xff]
      %v861 = vld [vmem:[%s3 + $0x20] sm:$0xff]
      %v862 = vld [vmem:[%s3 + $0x28] sm:$0xff]
      %v863 = vld [vmem:[%s3 + $0x30] sm:$0xff]
      %v864 = vld [vmem:[%s3 + $0x38] sm:$0xff]
      %v865 = vld [vmem:[%s3 + $0x40] sm:$0xff]
      %v866 = vld [vmem:[%s3 + $0x48] sm:$0xff]
      %v867 = vld [vmem:[%s3 + $0x50] sm:$0xff]
      %v868 = vld [vmem:[%s3 + $0x58] sm:$0xff]
      %v869 = vld [vmem:[%s3 + $0x60] sm:$0xff]
      %v870 = vld [vmem:[%s3 + $0x68] sm:$0xff]
      %v871 = vld [vmem:[%s3 + $0x70] sm:$0xff]
      %v872 = vld [vmem:[%s3 + $0x78] sm:$0xff]
      %v873 = vld [vmem:[%s3 + $0x80] sm:$0xff]
      %v874 = vld [vmem:[%s3 + $0x88] sm:$0xff]
      %v875 = vld [vmem:[%s3 + $0x90] sm:$0xff]
      %v876 = vld [vmem:[%s3 + $0x98] sm:$0xff]
      %v877 = vld [vmem:[%s3 + $0xa0] sm:$0xff]
      %v878 = vld [vmem:[%s3 + $0xa8] sm:$0xff]
      %v879 = vld [vmem:[%s3 + $0xb0] sm:$0xff]
      %v880 = vld [vmem:[%s3 + $0xb8] sm:$0xff]
      %v881 = vld [vmem:[%s3 + $0xc0] sm:$0xff]
      %v882 = vld [vmem:[%s4] sm:$0x3]
      %v884 = vperm.slane %v882, 0
      %v885 = vperm.slane %v882, 1
      %v913 = vunpack.c.l.b16 %v857
      %v914 = vunpack.c.h.b16 %v857
      %v915 = vunpack.c.l.b16 %v858
      %v916 = vunpack.c.h.b16 %v858
      %v917 = vunpack.c.l.b16 %v859
      %v918 = vunpack.c.h.b16 %v859
      %v919 = vunpack.c.l.b16 %v860
      %v920 = vunpack.c.h.b16 %v860
      %v921 = vunpack.c.l.b16 %v861
      %v922 = vunpack.c.h.b16 %v861
      %v923 = vunpack.c.l.b16 %v862
      %v924 = vunpack.c.h.b16 %v862
      %v925 = vunpack.c.l.b16 %v863
      %v926 = vunpack.c.h.b16 %v863
      %v927 = vunpack.c.l.b16 %v864
      %v928 = vunpack.c.h.b16 %v864
      %v929 = vunpack.c.l.b16 %v865
      %v930 = vunpack.c.h.b16 %v865
      %v931 = vunpack.c.l.b16 %v866
      %v932 = vunpack.c.h.b16 %v866
      %v933 = vunpack.c.l.b16 %v867
      %v934 = vunpack.c.h.b16 %v867
      %v935 = vunpack.c.l.b16 %v868
      %v936 = vunpack.c.h.b16 %v868
      %v937 = vunpack.c.l.b16 %v869
      %v938 = vunpack.c.h.b16 %v869
      %v939 = vunpack.c.l.b16 %v870
      %v940 = vunpack.c.h.b16 %v870
      %v941 = vunpack.c.l.b16 %v871
      %v942 = vunpack.c.h.b16 %v871
      %v943 = vunpack.c.l.b16 %v872
      %v944 = vunpack.c.h.b16 %v872
      %v945 = vunpack.c.l.b16 %v873
      %v946 = vunpack.c.h.b16 %v873
      %v947 = vunpack.c.l.b16 %v874
      %v948 = vunpack.c.h.b16 %v874
      %v949 = vunpack.c.l.b16 %v875
      %v950 = vunpack.c.h.b16 %v875
      %v951 = vunpack.c.l.b16 %v876
      %v952 = vunpack.c.h.b16 %v876
      %v953 = vunpack.c.l.b16 %v877
      %v954 = vunpack.c.h.b16 %v877
      %v955 = vunpack.c.l.b16 %v878
      %v956 = vunpack.c.h.b16 %v878
      %v957 = vunpack.c.l.b16 %v879
      %v958 = vunpack.c.h.b16 %v879
      %v959 = vunpack.c.l.b16 %v880
      %v960 = vunpack.c.h.b16 %v880
      %v961 = vunpack.c.l.b16 %v881
      %v962 = vunpack.c.h.b16 %v881
      %v963 = vpack.c.b16 %v915, %v913
      %v964 = vpack.c.b16 %v916, %v914
      %v965 = vpack.c.b16 %v919, %v917
      %v966 = vpack.c.b16 %v920, %v918
      %v967 = vpack.c.b16 %v923, %v921
      %v968 = vpack.c.b16 %v924, %v922
      %v969 = vpack.c.b16 %v927, %v925
      %v970 = vpack.c.b16 %v928, %v926
      %v971 = vpack.c.b16 %v931, %v929
      %v972 = vpack.c.b16 %v932, %v930
      %v973 = vpack.c.b16 %v935, %v933
      %v974 = vpack.c.b16 %v936, %v934
      %v975 = vpack.c.b16 %v939, %v937
      %v976 = vpack.c.b16 %v940, %v938
      %v977 = vpack.c.b16 %v943, %v941
      %v978 = vpack.c.b16 %v944, %v942
      %v979 = vpack.c.b16 %v947, %v945
      %v980 = vpack.c.b16 %v948, %v946
      %v981 = vpack.c.b16 %v951, %v949
      %v982 = vpack.c.b16 %v952, %v950
      %v983 = vpack.c.b16 %v955, %v953
      %v984 = vpack.c.b16 %v956, %v954
      %v985 = vpack.c.b16 %v959, %v957
      %v986 = vpack.c.b16 %v960, %v958
      %v987 = vpack.c.b16 %v961, %v961
      %v988 = vpack.c.b16 %v962, %v962
      %vm1013 = vcmask 588800
      %v1015 = vsel %vm1013, %v842, 0
      %v1018 = vsel %vm1013, %v844, 0
      %v1021 = vsel %vm1013, %v846, 0
      %v1024 = vsel %vm1013, %v848, 0
      %v1027 = vsel %vm1013, %v850, 0
      %v1030 = vsel %vm1013, %v852, 0
      %v1033 = vsel %vm1013, %v854, 0
      %v1036 = vsel %vm1013, %v856, 0
      %vm1038 = vcmask 1043456
      %v1040 = vsel %vm1038, %v987, 0
      %v1043 = vsel %vm1038, %v988, 0
      %1045 = vmatpush.bf16.msra.mxu0 %v977
      %1046 = vmatpush.bf16.msra.mxu0 %v975
      %1047 = vmatpush.bf16.msra.mxu0 %v973
      %1048 = vmatpush.bf16.msra.mxu0 %v971
      %1049 = vmatpush.bf16.msra.mxu0 %v969
      %1050 = vmatpush.bf16.msra.mxu0 %v967
      %1051 = vmatpush.bf16.msra.mxu0 %v965
      %1052 = vmatpush.bf16.msra.mxu0 %v963
      %1053 = vmatmul.bf16.gmra.mxu0 %v841
      %v1054 = vpop.f32.mrf.mxu0
      %v1055 = vadd.f32 %v884, %v1054
      %v1056 = vpop.f32.mrf.mxu0
      %v1057 = vadd.f32 %v884, %v1056
      %1058 = vmatmul.bf16.gmra.mxu0 %v843
      %v1059 = vpop.f32.mrf.mxu0
      %v1060 = vadd.f32 %v884, %v1059
      %v1061 = vpop.f32.mrf.mxu0
      %v1062 = vadd.f32 %v884, %v1061
      %1063 = vmatmul.bf16.gmra.mxu0 %v845
      %v1064 = vpop.f32.mrf.mxu0
      %v1065 = vadd.f32 %v884, %v1064
      %v1066 = vpop.f32.mrf.mxu0
      %v1067 = vadd.f32 %v884, %v1066
      %1068 = vmatmul.bf16.gmra.mxu0 %v847
      %v1069 = vpop.f32.mrf.mxu0
      %v1070 = vadd.f32 %v884, %v1069
      %v1071 = vpop.f32.mrf.mxu0
      %v1072 = vadd.f32 %v884, %v1071
      %1073 = vmatmul.bf16.gmra.mxu0 %v849
      %v1074 = vpop.f32.mrf.mxu0
      %v1075 = vadd.f32 %v884, %v1074
      %v1076 = vpop.f32.mrf.mxu0
      %v1077 = vadd.f32 %v884, %v1076
      %1078 = vmatmul.bf16.gmra.mxu0 %v851
      %v1079 = vpop.f32.mrf.mxu0
      %v1080 = vadd.f32 %v884, %v1079
      %v1081 = vpop.f32.mrf.mxu0
      %v1082 = vadd.f32 %v884, %v1081
      %1083 = vmatmul.bf16.gmra.mxu0 %v853
      %v1084 = vpop.f32.mrf.mxu0
      %v1085 = vadd.f32 %v884, %v1084
      %v1086 = vpop.f32.mrf.mxu0
      %v1087 = vadd.f32 %v884, %v1086
      %1088 = vmatmul.bf16.gmra.mxu0 %v855
      %v1089 = vpop.f32.mrf.mxu0
      %v1090 = vadd.f32 %v884, %v1089
      %v1091 = vpop.f32.mrf.mxu0
      %v1092 = vadd.f32 %v884, %v1091
      %1093 = vdwg.mxu0
      %1094 = vmatpush.bf16.msra.mxu0 0
      %1095 = vmatpush.bf16.msra.mxu0 0
      %1096 = vmatpush.bf16.msra.mxu0 0
      %1097 = vmatpush.bf16.msra.mxu0 %v1040
      %1098 = vmatpush.bf16.msra.mxu0 %v985
      %1099 = vmatpush.bf16.msra.mxu0 %v983
      %1100 = vmatpush.bf16.msra.mxu0 %v981
      %1101 = vmatpush.bf16.msra.mxu0 %v979
      %1102 = vmatmul.bf16.gmra.mxu0 %v1015
      %v1103 = vpop.f32.mrf.mxu0
      %v1104 = vadd.f32 %v1055, %v1103
      %v1105 = vpop.f32.mrf.mxu0
      %v1106 = vadd.f32 %v1057, %v1105
      %1107 = vmatmul.bf16.gmra.mxu0 %v1018
      %v1108 = vpop.f32.mrf.mxu0
      %v1109 = vadd.f32 %v1060, %v1108
      %v1110 = vpop.f32.mrf.mxu0
      %v1111 = vadd.f32 %v1062, %v1110
      %1112 = vmatmul.bf16.gmra.mxu0 %v1021
      %v1113 = vpop.f32.mrf.mxu0
      %v1114 = vadd.f32 %v1065, %v1113
      %v1115 = vpop.f32.mrf.mxu0
      %v1116 = vadd.f32 %v1067, %v1115
      %1117 = vmatmul.bf16.gmra.mxu0 %v1024
      %v1118 = vpop.f32.mrf.mxu0
      %v1119 = vadd.f32 %v1070, %v1118
      %v1120 = vpop.f32.mrf.mxu0
      %v1121 = vadd.f32 %v1072, %v1120
      %1122 = vmatmul.bf16.gmra.mxu0 %v1027
      %v1123 = vpop.f32.mrf.mxu0
      %v1124 = vadd.f32 %v1075, %v1123
      %v1125 = vpop.f32.mrf.mxu0
      %v1126 = vadd.f32 %v1077, %v1125
      %1127 = vmatmul.bf16.gmra.mxu0 %v1030
      %v1128 = vpop.f32.mrf.mxu0
      %v1129 = vadd.f32 %v1080, %v1128
      %v1130 = vpop.f32.mrf.mxu0
      %v1131 = vadd.f32 %v1082, %v1130
      %1132 = vmatmul.bf16.gmra.mxu0 %v1033
      %v1133 = vpop.f32.mrf.mxu0
      %v1134 = vadd.f32 %v1085, %v1133
      %v1135 = vpop.f32.mrf.mxu0
      %v1136 = vadd.f32 %v1087, %v1135
      %1137 = vmatmul.bf16.gmra.mxu0 %v1036
      %v1138 = vpop.f32.mrf.mxu0
      %v1139 = vadd.f32 %v1090, %v1138
      %v1140 = vpop.f32.mrf.mxu0
      %v1141 = vadd.f32 %v1092, %v1140
      %1142 = vdwg.mxu0
      %1143 = vmatpush.bf16.msra.mxu0 %v978
      %1144 = vmatpush.bf16.msra.mxu0 %v976
      %1145 = vmatpush.bf16.msra.mxu0 %v974
      %1146 = vmatpush.bf16.msra.mxu0 %v972
      %1147 = vmatpush.bf16.msra.mxu0 %v970
      %1148 = vmatpush.bf16.msra.mxu0 %v968
      %1149 = vmatpush.bf16.msra.mxu0 %v966
      %1150 = vmatpush.bf16.msra.mxu0 %v964
      %1151 = vmatmul.bf16.gmra.mxu0 %v841
      %v1152 = vpop.f32.mrf.mxu0
      %v1153 = vadd.f32 %v885, %v1152
      %v1154 = vpop.f32.mrf.mxu0
      %v1155 = vadd.f32 %v885, %v1154
      %1156 = vmatmul.bf16.gmra.mxu0 %v843
      %v1157 = vpop.f32.mrf.mxu0
      %v1158 = vadd.f32 %v885, %v1157
      %v1159 = vpop.f32.mrf.mxu0
      %v1160 = vadd.f32 %v885, %v1159
      %1161 = vmatmul.bf16.gmra.mxu0 %v845
      %v1162 = vpop.f32.mrf.mxu0
      %v1163 = vadd.f32 %v885, %v1162
      %v1164 = vpop.f32.mrf.mxu0
      %v1165 = vadd.f32 %v885, %v1164
      %1166 = vmatmul.bf16.gmra.mxu0 %v847
      %v1167 = vpop.f32.mrf.mxu0
      %v1168 = vadd.f32 %v885, %v1167
      %v1169 = vpop.f32.mrf.mxu0
      %v1170 = vadd.f32 %v885, %v1169
      %1171 = vmatmul.bf16.gmra.mxu0 %v849
      %v1172 = vpop.f32.mrf.mxu0
      %v1173 = vadd.f32 %v885, %v1172
      %v1174 = vpop.f32.mrf.mxu0
      %v1175 = vadd.f32 %v885, %v1174
      %1176 = vmatmul.bf16.gmra.mxu0 %v851
      %v1177 = vpop.f32.mrf.mxu0
      %v1178 = vadd.f32 %v885, %v1177
      %v1179 = vpop.f32.mrf.mxu0
      %v1180 = vadd.f32 %v885, %v1179
      %1181 = vmatmul.bf16.gmra.mxu0 %v853
      %v1182 = vpop.f32.mrf.mxu0
      %v1183 = vadd.f32 %v885, %v1182
      %v1184 = vpop.f32.mrf.mxu0
      %v1185 = vadd.f32 %v885, %v1184
      %1186 = vmatmul.bf16.gmra.mxu0 %v855
      %v1187 = vpop.f32.mrf.mxu0
      %v1188 = vadd.f32 %v885, %v1187
      %v1189 = vpop.f32.mrf.mxu0
      %v1190 = vadd.f32 %v885, %v1189
      %1191 = vdwg.mxu0
      %1192 = vmatpush.bf16.msra.mxu0 0
      %1193 = vmatpush.bf16.msra.mxu0 0
      %1194 = vmatpush.bf16.msra.mxu0 0
      %1195 = vmatpush.bf16.msra.mxu0 %v1043
      %1196 = vmatpush.bf16.msra.mxu0 %v986
      %1197 = vmatpush.bf16.msra.mxu0 %v984
      %1198 = vmatpush.bf16.msra.mxu0 %v982
      %1199 = vmatpush.bf16.msra.mxu0 %v980
      %1200 = vmatmul.bf16.gmra.mxu0 %v1015
      %v1201 = vpop.f32.mrf.mxu0
      %v1202 = vadd.f32 %v1153, %v1201
      %v1203 = vpop.f32.mrf.mxu0
      %v1204 = vadd.f32 %v1155, %v1203
      %1205 = vmatmul.bf16.gmra.mxu0 %v1018
      %v1206 = vpop.f32.mrf.mxu0
      %v1207 = vadd.f32 %v1158, %v1206
      %v1208 = vpop.f32.mrf.mxu0
      %v1209 = vadd.f32 %v1160, %v1208
      %1210 = vmatmul.bf16.gmra.mxu0 %v1021
      %v1211 = vpop.f32.mrf.mxu0
      %v1212 = vadd.f32 %v1163, %v1211
      %v1213 = vpop.f32.mrf.mxu0
      %v1214 = vadd.f32 %v1165, %v1213
      %1215 = vmatmul.bf16.gmra.mxu0 %v1024
      %v1216 = vpop.f32.mrf.mxu0
      %v1217 = vadd.f32 %v1168, %v1216
      %v1218 = vpop.f32.mrf.mxu0
      %v1219 = vadd.f32 %v1170, %v1218
      %1220 = vmatmul.bf16.gmra.mxu0 %v1027
      %v1221 = vpop.f32.mrf.mxu0
      %v1222 = vadd.f32 %v1173, %v1221
      %v1223 = vpop.f32.mrf.mxu0
      %v1224 = vadd.f32 %v1175, %v1223
      %1225 = vmatmul.bf16.gmra.mxu0 %v1030
      %v1226 = vpop.f32.mrf.mxu0
      %v1227 = vadd.f32 %v1178, %v1226
      %v1228 = vpop.f32.mrf.mxu0
      %v1229 = vadd.f32 %v1180, %v1228
      %1230 = vmatmul.bf16.gmra.mxu0 %v1033
      %v1231 = vpop.f32.mrf.mxu0
      %v1232 = vadd.f32 %v1183, %v1231
      %v1233 = vpop.f32.mrf.mxu0
      %v1234 = vadd.f32 %v1185, %v1233
      %1235 = vmatmul.bf16.gmra.mxu0 %v1036
      %v1236 = vpop.f32.mrf.mxu0
      %v1237 = vadd.f32 %v1188, %v1236
      %v1238 = vpop.f32.mrf.mxu0
      %v1239 = vadd.f32 %v1190, %v1238
      %1240 = vdwg.mxu0
      %v1241 = vmul.f32 %v1104, 0.01
      %v1242 = vmul.f32 %v1202, 0.01
      %v1243 = vmul.f32 %v1106, 0.01
      %v1244 = vmul.f32 %v1204, 0.01
      %v1245 = vmul.f32 %v1109, 0.01
      %v1246 = vmul.f32 %v1207, 0.01
      %v1247 = vmul.f32 %v1111, 0.01
      %v1248 = vmul.f32 %v1209, 0.01
      %v1249 = vmul.f32 %v1114, 0.01
      %v1250 = vmul.f32 %v1212, 0.01
      %v1251 = vmul.f32 %v1116, 0.01
      %v1252 = vmul.f32 %v1214, 0.01
      %v1253 = vmul.f32 %v1119, 0.01
      %v1254 = vmul.f32 %v1217, 0.01
      %v1255 = vmul.f32 %v1121, 0.01
      %v1256 = vmul.f32 %v1219, 0.01
      %v1257 = vmul.f32 %v1124, 0.01
      %v1258 = vmul.f32 %v1222, 0.01
      %v1259 = vmul.f32 %v1126, 0.01
      %v1260 = vmul.f32 %v1224, 0.01
      %v1261 = vmul.f32 %v1129, 0.01
      %v1262 = vmul.f32 %v1227, 0.01
      %v1263 = vmul.f32 %v1131, 0.01
      %v1264 = vmul.f32 %v1229, 0.01
      %v1265 = vmul.f32 %v1134, 0.01
      %v1266 = vmul.f32 %v1232, 0.01
      %v1267 = vmul.f32 %v1136, 0.01
      %v1268 = vmul.f32 %v1234, 0.01
      %v1269 = vmul.f32 %v1139, 0.01
      %v1270 = vmul.f32 %v1237, 0.01
      %v1271 = vmul.f32 %v1141, 0.01
      %v1272 = vmul.f32 %v1239, 0.01
      %v1273 = vmax.f32 %v1104, %v1241
      %v1274 = vmax.f32 %v1202, %v1242
      %v1275 = vmax.f32 %v1106, %v1243
      %v1276 = vmax.f32 %v1204, %v1244
      %v1277 = vmax.f32 %v1109, %v1245
      %v1278 = vmax.f32 %v1207, %v1246
      %v1279 = vmax.f32 %v1111, %v1247
      %v1280 = vmax.f32 %v1209, %v1248
      %v1281 = vmax.f32 %v1114, %v1249
      %v1282 = vmax.f32 %v1212, %v1250
      %v1283 = vmax.f32 %v1116, %v1251
      %v1284 = vmax.f32 %v1214, %v1252
      %v1285 = vmax.f32 %v1119, %v1253
      %v1286 = vmax.f32 %v1217, %v1254
      %v1287 = vmax.f32 %v1121, %v1255
      %v1288 = vmax.f32 %v1219, %v1256
      %v1289 = vmax.f32 %v1124, %v1257
      %v1290 = vmax.f32 %v1222, %v1258
      %v1291 = vmax.f32 %v1126, %v1259
      %v1292 = vmax.f32 %v1224, %v1260
      %v1293 = vmax.f32 %v1129, %v1261
      %v1294 = vmax.f32 %v1227, %v1262
      %v1295 = vmax.f32 %v1131, %v1263
      %v1296 = vmax.f32 %v1229, %v1264
      %v1297 = vmax.f32 %v1134, %v1265
      %v1298 = vmax.f32 %v1232, %v1266
      %v1299 = vmax.f32 %v1136, %v1267
      %v1300 = vmax.f32 %v1234, %v1268
      %v1301 = vmax.f32 %v1139, %v1269
      %v1302 = vmax.f32 %v1237, %v1270
      %v1303 = vmax.f32 %v1141, %v1271
      %v1304 = vmax.f32 %v1239, %v1272
      %v1305 = vadd.f32 %v809, %v1273
      %v1306 = vadd.f32 %v810, %v1274
      %v1307 = vadd.f32 %v811, %v1275
      %v1308 = vadd.f32 %v812, %v1276
      %v1309 = vadd.f32 %v813, %v1277
      %v1310 = vadd.f32 %v814, %v1278
      %v1311 = vadd.f32 %v815, %v1279
      %v1312 = vadd.f32 %v816, %v1280
      %v1313 = vadd.f32 %v817, %v1281
      %v1314 = vadd.f32 %v818, %v1282
      %v1315 = vadd.f32 %v819, %v1283
      %v1316 = vadd.f32 %v820, %v1284
      %v1317 = vadd.f32 %v821, %v1285
      %v1318 = vadd.f32 %v822, %v1286
      %v1319 = vadd.f32 %v823, %v1287
      %v1320 = vadd.f32 %v824, %v1288
      %v1321 = vadd.f32 %v825, %v1289
      %v1322 = vadd.f32 %v826, %v1290
      %v1323 = vadd.f32 %v827, %v1291
      %v1324 = vadd.f32 %v828, %v1292
      %v1325 = vadd.f32 %v829, %v1293
      %v1326 = vadd.f32 %v830, %v1294
      %v1327 = vadd.f32 %v831, %v1295
      %v1328 = vadd.f32 %v832, %v1296
      %v1329 = vadd.f32 %v833, %v1297
      %v1330 = vadd.f32 %v834, %v1298
      %v1331 = vadd.f32 %v835, %v1299
      %v1332 = vadd.f32 %v836, %v1300
      %v1333 = vadd.f32 %v837, %v1301
      %v1334 = vadd.f32 %v838, %v1302
      %v1335 = vadd.f32 %v839, %v1303
      %v1336 = vadd.f32 %v840, %v1304
      %v1337 = vpack.c.bf16 %v1307, %v1305
      %v1338 = vpack.c.bf16 %v1308, %v1306
      %v1339 = vpack.c.bf16 %v1311, %v1309
      %v1340 = vpack.c.bf16 %v1312, %v1310
      %v1341 = vpack.c.bf16 %v1315, %v1313
      %v1342 = vpack.c.bf16 %v1316, %v1314
      %v1343 = vpack.c.bf16 %v1319, %v1317
      %v1344 = vpack.c.bf16 %v1320, %v1318
      %v1345 = vpack.c.bf16 %v1323, %v1321
      %v1346 = vpack.c.bf16 %v1324, %v1322
      %v1347 = vpack.c.bf16 %v1327, %v1325
      %v1348 = vpack.c.bf16 %v1328, %v1326
      %v1349 = vpack.c.bf16 %v1331, %v1329
      %v1350 = vpack.c.bf16 %v1332, %v1330
      %v1351 = vpack.c.bf16 %v1335, %v1333
      %v1352 = vpack.c.bf16 %v1336, %v1334
      %v1353 = vld [vmem:[%s5] sm:$0xff]
      %v1354 = vld [vmem:[%s5 + $0x8] sm:$0xff]
      %v1355 = vld [vmem:[%s5 + $0x10] sm:$0xff]
      %v1356 = vld [vmem:[%s5 + $0x18] sm:$0xff]
      %v1357 = vld [vmem:[%s5 + $0x20] sm:$0xff]
      %v1358 = vld [vmem:[%s5 + $0x28] sm:$0xff]
      %v1359 = vld [vmem:[%s5 + $0x30] sm:$0xff]
      %v1360 = vld [vmem:[%s5 + $0x38] sm:$0xff]
      %v1361 = vld [vmem:[%s5 + $0x40] sm:$0xff]
      %v1362 = vld [vmem:[%s5 + $0x48] sm:$0xff]
      %v1363 = vld [vmem:[%s5 + $0x50] sm:$0xff]
      %v1364 = vld [vmem:[%s5 + $0x58] sm:$0xff]
      %v1365 = vld [vmem:[%s5 + $0x60] sm:$0xff]
      %v1366 = vld [vmem:[%s5 + $0x68] sm:$0xff]
      %v1367 = vld [vmem:[%s5 + $0x70] sm:$0xff]
      %v1368 = vld [vmem:[%s5 + $0x78] sm:$0xff]
      %v1369 = vld [vmem:[%s5 + $0x80] sm:$0xff]
      %v1370 = vld [vmem:[%s5 + $0x88] sm:$0xff]
      %v1371 = vld [vmem:[%s5 + $0x90] sm:$0xff]
      %v1372 = vld [vmem:[%s5 + $0x98] sm:$0xff]
      %v1373 = vld [vmem:[%s5 + $0xa0] sm:$0xff]
      %v1374 = vld [vmem:[%s5 + $0xa8] sm:$0xff]
      %v1375 = vld [vmem:[%s5 + $0xb0] sm:$0xff]
      %v1376 = vld [vmem:[%s5 + $0xb8] sm:$0xff]
      %v1377 = vld [vmem:[%s5 + $0xc0] sm:$0xff]
      %v1378 = vld [vmem:[%s6] sm:$0x3]
      %v1380 = vperm.slane %v1378, 0
      %v1381 = vperm.slane %v1378, 1
      %v1409 = vunpack.c.l.b16 %v1353
      %v1410 = vunpack.c.h.b16 %v1353
      %v1411 = vunpack.c.l.b16 %v1354
      %v1412 = vunpack.c.h.b16 %v1354
      %v1413 = vunpack.c.l.b16 %v1355
      %v1414 = vunpack.c.h.b16 %v1355
      %v1415 = vunpack.c.l.b16 %v1356
      %v1416 = vunpack.c.h.b16 %v1356
      %v1417 = vunpack.c.l.b16 %v1357
      %v1418 = vunpack.c.h.b16 %v1357
      %v1419 = vunpack.c.l.b16 %v1358
      %v1420 = vunpack.c.h.b16 %v1358
      %v1421 = vunpack.c.l.b16 %v1359
      %v1422 = vunpack.c.h.b16 %v1359
      %v1423 = vunpack.c.l.b16 %v1360
      %v1424 = vunpack.c.h.b16 %v1360
      %v1425 = vunpack.c.l.b16 %v1361
      %v1426 = vunpack.c.h.b16 %v1361
      %v1427 = vunpack.c.l.b16 %v1362
      %v1428 = vunpack.c.h.b16 %v1362
      %v1429 = vunpack.c.l.b16 %v1363
      %v1430 = vunpack.c.h.b16 %v1363
      %v1431 = vunpack.c.l.b16 %v1364
      %v1432 = vunpack.c.h.b16 %v1364
      %v1433 = vunpack.c.l.b16 %v1365
      %v1434 = vunpack.c.h.b16 %v1365
      %v1435 = vunpack.c.l.b16 %v1366
      %v1436 = vunpack.c.h.b16 %v1366
      %v1437 = vunpack.c.l.b16 %v1367
      %v1438 = vunpack.c.h.b16 %v1367
      %v1439 = vunpack.c.l.b16 %v1368
      %v1440 = vunpack.c.h.b16 %v1368
      %v1441 = vunpack.c.l.b16 %v1369
      %v1442 = vunpack.c.h.b16 %v1369
      %v1443 = vunpack.c.l.b16 %v1370
      %v1444 = vunpack.c.h.b16 %v1370
      %v1445 = vunpack.c.l.b16 %v1371
      %v1446 = vunpack.c.h.b16 %v1371
      %v1447 = vunpack.c.l.b16 %v1372
      %v1448 = vunpack.c.h.b16 %v1372
      %v1449 = vunpack.c.l.b16 %v1373
      %v1450 = vunpack.c.h.b16 %v1373
      %v1451 = vunpack.c.l.b16 %v1374
      %v1452 = vunpack.c.h.b16 %v1374
      %v1453 = vunpack.c.l.b16 %v1375
      %v1454 = vunpack.c.h.b16 %v1375
      %v1455 = vunpack.c.l.b16 %v1376
      %v1456 = vunpack.c.h.b16 %v1376
      %v1457 = vunpack.c.l.b16 %v1377
      %v1458 = vunpack.c.h.b16 %v1377
      %v1459 = vpack.c.b16 %v1411, %v1409
      %v1460 = vpack.c.b16 %v1412, %v1410
      %v1461 = vpack.c.b16 %v1415, %v1413
      %v1462 = vpack.c.b16 %v1416, %v1414
      %v1463 = vpack.c.b16 %v1419, %v1417
      %v1464 = vpack.c.b16 %v1420, %v1418
      %v1465 = vpack.c.b16 %v1423, %v1421
      %v1466 = vpack.c.b16 %v1424, %v1422
      %v1467 = vpack.c.b16 %v1427, %v1425
      %v1468 = vpack.c.b16 %v1428, %v1426
      %v1469 = vpack.c.b16 %v1431, %v1429
      %v1470 = vpack.c.b16 %v1432, %v1430
      %v1471 = vpack.c.b16 %v1435, %v1433
      %v1472 = vpack.c.b16 %v1436, %v1434
      %v1473 = vpack.c.b16 %v1439, %v1437
      %v1474 = vpack.c.b16 %v1440, %v1438
      %v1475 = vpack.c.b16 %v1443, %v1441
      %v1476 = vpack.c.b16 %v1444, %v1442
      %v1477 = vpack.c.b16 %v1447, %v1445
      %v1478 = vpack.c.b16 %v1448, %v1446
      %v1479 = vpack.c.b16 %v1451, %v1449
      %v1480 = vpack.c.b16 %v1452, %v1450
      %v1481 = vpack.c.b16 %v1455, %v1453
      %v1482 = vpack.c.b16 %v1456, %v1454
      %v1483 = vpack.c.b16 %v1457, %v1457
      %v1484 = vpack.c.b16 %v1458, %v1458
      %v1510 = vsel %vm1013, %v1338, 0
      %v1513 = vsel %vm1013, %v1340, 0
      %v1516 = vsel %vm1013, %v1342, 0
      %v1519 = vsel %vm1013, %v1344, 0
      %v1522 = vsel %vm1013, %v1346, 0
      %v1525 = vsel %vm1013, %v1348, 0
      %v1528 = vsel %vm1013, %v1350, 0
      %v1531 = vsel %vm1013, %v1352, 0
      %v1534 = vsel %vm1038, %v1483, 0
      %v1537 = vsel %vm1038, %v1484, 0
      %1539 = vmatpush.bf16.msra.mxu0 %v1473
      %1540 = vmatpush.bf16.msra.mxu0 %v1471
      %1541 = vmatpush.bf16.msra.mxu0 %v1469
      %1542 = vmatpush.bf16.msra.mxu0 %v1467
      %1543 = vmatpush.bf16.msra.mxu0 %v1465
      %1544 = vmatpush.bf16.msra.mxu0 %v1463
      %1545 = vmatpush.bf16.msra.mxu0 %v1461
      %1546 = vmatpush.bf16.msra.mxu0 %v1459
      %1547 = vmatmul.bf16.gmra.mxu0 %v1337
      %v1548 = vpop.f32.mrf.mxu0
      %v1549 = vadd.f32 %v1380, %v1548
      %v1550 = vpop.f32.mrf.mxu0
      %v1551 = vadd.f32 %v1380, %v1550
      %1552 = vmatmul.bf16.gmra.mxu0 %v1339
      %v1553 = vpop.f32.mrf.mxu0
      %v1554 = vadd.f32 %v1380, %v1553
      %v1555 = vpop.f32.mrf.mxu0
      %v1556 = vadd.f32 %v1380, %v1555
      %1557 = vmatmul.bf16.gmra.mxu0 %v1341
      %v1558 = vpop.f32.mrf.mxu0
      %v1559 = vadd.f32 %v1380, %v1558
      %v1560 = vpop.f32.mrf.mxu0
      %v1561 = vadd.f32 %v1380, %v1560
      %1562 = vmatmul.bf16.gmra.mxu0 %v1343
      %v1563 = vpop.f32.mrf.mxu0
      %v1564 = vadd.f32 %v1380, %v1563
      %v1565 = vpop.f32.mrf.mxu0
      %v1566 = vadd.f32 %v1380, %v1565
      %1567 = vmatmul.bf16.gmra.mxu0 %v1345
      %v1568 = vpop.f32.mrf.mxu0
      %v1569 = vadd.f32 %v1380, %v1568
      %v1570 = vpop.f32.mrf.mxu0
      %v1571 = vadd.f32 %v1380, %v1570
      %1572 = vmatmul.bf16.gmra.mxu0 %v1347
      %v1573 = vpop.f32.mrf.mxu0
      %v1574 = vadd.f32 %v1380, %v1573
      %v1575 = vpop.f32.mrf.mxu0
      %v1576 = vadd.f32 %v1380, %v1575
      %1577 = vmatmul.bf16.gmra.mxu0 %v1349
      %v1578 = vpop.f32.mrf.mxu0
      %v1579 = vadd.f32 %v1380, %v1578
      %v1580 = vpop.f32.mrf.mxu0
      %v1581 = vadd.f32 %v1380, %v1580
      %1582 = vmatmul.bf16.gmra.mxu0 %v1351
      %v1583 = vpop.f32.mrf.mxu0
      %v1584 = vadd.f32 %v1380, %v1583
      %v1585 = vpop.f32.mrf.mxu0
      %v1586 = vadd.f32 %v1380, %v1585
      %1587 = vdwg.mxu0
      %1588 = vmatpush.bf16.msra.mxu0 0
      %1589 = vmatpush.bf16.msra.mxu0 0
      %1590 = vmatpush.bf16.msra.mxu0 0
      %1591 = vmatpush.bf16.msra.mxu0 %v1534
      %1592 = vmatpush.bf16.msra.mxu0 %v1481
      %1593 = vmatpush.bf16.msra.mxu0 %v1479
      %1594 = vmatpush.bf16.msra.mxu0 %v1477
      %1595 = vmatpush.bf16.msra.mxu0 %v1475
      %1596 = vmatmul.bf16.gmra.mxu0 %v1510
      %v1597 = vpop.f32.mrf.mxu0
      %v1598 = vadd.f32 %v1549, %v1597
      %v1599 = vpop.f32.mrf.mxu0
      %v1600 = vadd.f32 %v1551, %v1599
      %1601 = vmatmul.bf16.gmra.mxu0 %v1513
      %v1602 = vpop.f32.mrf.mxu0
      %v1603 = vadd.f32 %v1554, %v1602
      %v1604 = vpop.f32.mrf.mxu0
      %v1605 = vadd.f32 %v1556, %v1604
      %1606 = vmatmul.bf16.gmra.mxu0 %v1516
      %v1607 = vpop.f32.mrf.mxu0
      %v1608 = vadd.f32 %v1559, %v1607
      %v1609 = vpop.f32.mrf.mxu0
      %v1610 = vadd.f32 %v1561, %v1609
      %1611 = vmatmul.bf16.gmra.mxu0 %v1519
      %v1612 = vpop.f32.mrf.mxu0
      %v1613 = vadd.f32 %v1564, %v1612
      %v1614 = vpop.f32.mrf.mxu0
      %v1615 = vadd.f32 %v1566, %v1614
      %1616 = vmatmul.bf16.gmra.mxu0 %v1522
      %v1617 = vpop.f32.mrf.mxu0
      %v1618 = vadd.f32 %v1569, %v1617
      %v1619 = vpop.f32.mrf.mxu0
      %v1620 = vadd.f32 %v1571, %v1619
      %1621 = vmatmul.bf16.gmra.mxu0 %v1525
      %v1622 = vpop.f32.mrf.mxu0
      %v1623 = vadd.f32 %v1574, %v1622
      %v1624 = vpop.f32.mrf.mxu0
      %v1625 = vadd.f32 %v1576, %v1624
      %1626 = vmatmul.bf16.gmra.mxu0 %v1528
      %v1627 = vpop.f32.mrf.mxu0
      %v1628 = vadd.f32 %v1579, %v1627
      %v1629 = vpop.f32.mrf.mxu0
      %v1630 = vadd.f32 %v1581, %v1629
      %1631 = vmatmul.bf16.gmra.mxu0 %v1531
      %v1632 = vpop.f32.mrf.mxu0
      %v1633 = vadd.f32 %v1584, %v1632
      %v1634 = vpop.f32.mrf.mxu0
      %v1635 = vadd.f32 %v1586, %v1634
      %1636 = vdwg.mxu0
      %1637 = vmatpush.bf16.msra.mxu0 %v1474
      %1638 = vmatpush.bf16.msra.mxu0 %v1472
      %1639 = vmatpush.bf16.msra.mxu0 %v1470
      %1640 = vmatpush.bf16.msra.mxu0 %v1468
      %1641 = vmatpush.bf16.msra.mxu0 %v1466
      %1642 = vmatpush.bf16.msra.mxu0 %v1464
      %1643 = vmatpush.bf16.msra.mxu0 %v1462
      %1644 = vmatpush.bf16.msra.mxu0 %v1460
      %1645 = vmatmul.bf16.gmra.mxu0 %v1337
      %v1646 = vpop.f32.mrf.mxu0
      %v1647 = vadd.f32 %v1381, %v1646
      %v1648 = vpop.f32.mrf.mxu0
      %v1649 = vadd.f32 %v1381, %v1648
      %1650 = vmatmul.bf16.gmra.mxu0 %v1339
      %v1651 = vpop.f32.mrf.mxu0
      %v1652 = vadd.f32 %v1381, %v1651
      %v1653 = vpop.f32.mrf.mxu0
      %v1654 = vadd.f32 %v1381, %v1653
      %1655 = vmatmul.bf16.gmra.mxu0 %v1341
      %v1656 = vpop.f32.mrf.mxu0
      %v1657 = vadd.f32 %v1381, %v1656
      %v1658 = vpop.f32.mrf.mxu0
      %v1659 = vadd.f32 %v1381, %v1658
      %1660 = vmatmul.bf16.gmra.mxu0 %v1343
      %v1661 = vpop.f32.mrf.mxu0
      %v1662 = vadd.f32 %v1381, %v1661
      %v1663 = vpop.f32.mrf.mxu0
      %v1664 = vadd.f32 %v1381, %v1663
      %1665 = vmatmul.bf16.gmra.mxu0 %v1345
      %v1666 = vpop.f32.mrf.mxu0
      %v1667 = vadd.f32 %v1381, %v1666
      %v1668 = vpop.f32.mrf.mxu0
      %v1669 = vadd.f32 %v1381, %v1668
      %1670 = vmatmul.bf16.gmra.mxu0 %v1347
      %v1671 = vpop.f32.mrf.mxu0
      %v1672 = vadd.f32 %v1381, %v1671
      %v1673 = vpop.f32.mrf.mxu0
      %v1674 = vadd.f32 %v1381, %v1673
      %1675 = vmatmul.bf16.gmra.mxu0 %v1349
      %v1676 = vpop.f32.mrf.mxu0
      %v1677 = vadd.f32 %v1381, %v1676
      %v1678 = vpop.f32.mrf.mxu0
      %v1679 = vadd.f32 %v1381, %v1678
      %1680 = vmatmul.bf16.gmra.mxu0 %v1351
      %v1681 = vpop.f32.mrf.mxu0
      %v1682 = vadd.f32 %v1381, %v1681
      %v1683 = vpop.f32.mrf.mxu0
      %v1684 = vadd.f32 %v1381, %v1683
      %1685 = vdwg.mxu0
      %1686 = vmatpush.bf16.msra.mxu0 0
      %1687 = vmatpush.bf16.msra.mxu0 0
      %1688 = vmatpush.bf16.msra.mxu0 0
      %1689 = vmatpush.bf16.msra.mxu0 %v1537
      %1690 = vmatpush.bf16.msra.mxu0 %v1482
      %1691 = vmatpush.bf16.msra.mxu0 %v1480
      %1692 = vmatpush.bf16.msra.mxu0 %v1478
      %1693 = vmatpush.bf16.msra.mxu0 %v1476
      %1694 = vmatmul.bf16.gmra.mxu0 %v1510
      %v1695 = vpop.f32.mrf.mxu0
      %v1696 = vadd.f32 %v1647, %v1695
      %v1697 = vpop.f32.mrf.mxu0
      %v1698 = vadd.f32 %v1649, %v1697
      %1699 = vmatmul.bf16.gmra.mxu0 %v1513
      %v1700 = vpop.f32.mrf.mxu0
      %v1701 = vadd.f32 %v1652, %v1700
      %v1702 = vpop.f32.mrf.mxu0
      %v1703 = vadd.f32 %v1654, %v1702
      %1704 = vmatmul.bf16.gmra.mxu0 %v1516
      %v1705 = vpop.f32.mrf.mxu0
      %v1706 = vadd.f32 %v1657, %v1705
      %v1707 = vpop.f32.mrf.mxu0
      %v1708 = vadd.f32 %v1659, %v1707
      %1709 = vmatmul.bf16.gmra.mxu0 %v1519
      %v1710 = vpop.f32.mrf.mxu0
      %v1711 = vadd.f32 %v1662, %v1710
      %v1712 = vpop.f32.mrf.mxu0
      %v1713 = vadd.f32 %v1664, %v1712
      %1714 = vmatmul.bf16.gmra.mxu0 %v1522
      %v1715 = vpop.f32.mrf.mxu0
      %v1716 = vadd.f32 %v1667, %v1715
      %v1717 = vpop.f32.mrf.mxu0
      %v1718 = vadd.f32 %v1669, %v1717
      %1719 = vmatmul.bf16.gmra.mxu0 %v1525
      %v1720 = vpop.f32.mrf.mxu0
      %v1721 = vadd.f32 %v1672, %v1720
      %v1722 = vpop.f32.mrf.mxu0
      %v1723 = vadd.f32 %v1674, %v1722
      %1724 = vmatmul.bf16.gmra.mxu0 %v1528
      %v1725 = vpop.f32.mrf.mxu0
      %v1726 = vadd.f32 %v1677, %v1725
      %v1727 = vpop.f32.mrf.mxu0
      %v1728 = vadd.f32 %v1679, %v1727
      %1729 = vmatmul.bf16.gmra.mxu0 %v1531
      %v1730 = vpop.f32.mrf.mxu0
      %v1731 = vadd.f32 %v1682, %v1730
      %v1732 = vpop.f32.mrf.mxu0
      %v1733 = vadd.f32 %v1684, %v1732
      %1734 = vdwg.mxu0
      %v1735 = vmul.f32 %v1598, 0.01
      %v1736 = vmul.f32 %v1696, 0.01
      %v1737 = vmul.f32 %v1600, 0.01
      %v1738 = vmul.f32 %v1698, 0.01
      %v1739 = vmul.f32 %v1603, 0.01
      %v1740 = vmul.f32 %v1701, 0.01
      %v1741 = vmul.f32 %v1605, 0.01
      %v1742 = vmul.f32 %v1703, 0.01
      %v1743 = vmul.f32 %v1608, 0.01
      %v1744 = vmul.f32 %v1706, 0.01
      %v1745 = vmul.f32 %v1610, 0.01
      %v1746 = vmul.f32 %v1708, 0.01
      %v1747 = vmul.f32 %v1613, 0.01
      %v1748 = vmul.f32 %v1711, 0.01
      %v1749 = vmul.f32 %v1615, 0.01
      %v1750 = vmul.f32 %v1713, 0.01
      %v1751 = vmul.f32 %v1618, 0.01
      %v1752 = vmul.f32 %v1716, 0.01
      %v1753 = vmul.f32 %v1620, 0.01
      %v1754 = vmul.f32 %v1718, 0.01
      %v1755 = vmul.f32 %v1623, 0.01
      %v1756 = vmul.f32 %v1721, 0.01
      %v1757 = vmul.f32 %v1625, 0.01
      %v1758 = vmul.f32 %v1723, 0.01
      %v1759 = vmul.f32 %v1628, 0.01
      %v1760 = vmul.f32 %v1726, 0.01
      %v1761 = vmul.f32 %v1630, 0.01
      %v1762 = vmul.f32 %v1728, 0.01
      %v1763 = vmul.f32 %v1633, 0.01
      %v1764 = vmul.f32 %v1731, 0.01
      %v1765 = vmul.f32 %v1635, 0.01
      %v1766 = vmul.f32 %v1733, 0.01
      %v1767 = vmax.f32 %v1598, %v1735
      %v1768 = vmax.f32 %v1696, %v1736
      %v1769 = vmax.f32 %v1600, %v1737
      %v1770 = vmax.f32 %v1698, %v1738
      %v1771 = vmax.f32 %v1603, %v1739
      %v1772 = vmax.f32 %v1701, %v1740
      %v1773 = vmax.f32 %v1605, %v1741
      %v1774 = vmax.f32 %v1703, %v1742
      %v1775 = vmax.f32 %v1608, %v1743
      %v1776 = vmax.f32 %v1706, %v1744
      %v1777 = vmax.f32 %v1610, %v1745
      %v1778 = vmax.f32 %v1708, %v1746
      %v1779 = vmax.f32 %v1613, %v1747
      %v1780 = vmax.f32 %v1711, %v1748
      %v1781 = vmax.f32 %v1615, %v1749
      %v1782 = vmax.f32 %v1713, %v1750
      %v1783 = vmax.f32 %v1618, %v1751
      %v1784 = vmax.f32 %v1716, %v1752
      %v1785 = vmax.f32 %v1620, %v1753
      %v1786 = vmax.f32 %v1718, %v1754
      %v1787 = vmax.f32 %v1623, %v1755
      %v1788 = vmax.f32 %v1721, %v1756
      %v1789 = vmax.f32 %v1625, %v1757
      %v1790 = vmax.f32 %v1723, %v1758
      %v1791 = vmax.f32 %v1628, %v1759
      %v1792 = vmax.f32 %v1726, %v1760
      %v1793 = vmax.f32 %v1630, %v1761
      %v1794 = vmax.f32 %v1728, %v1762
      %v1795 = vmax.f32 %v1633, %v1763
      %v1796 = vmax.f32 %v1731, %v1764
      %v1797 = vmax.f32 %v1635, %v1765
      %v1798 = vmax.f32 %v1733, %v1766
      %v1799 = vadd.f32 %v1305, %v1767
      %v1800 = vadd.f32 %v1306, %v1768
      %v1801 = vadd.f32 %v1307, %v1769
      %v1802 = vadd.f32 %v1308, %v1770
      %v1803 = vadd.f32 %v1309, %v1771
      %v1804 = vadd.f32 %v1310, %v1772
      %v1805 = vadd.f32 %v1311, %v1773
      %v1806 = vadd.f32 %v1312, %v1774
      %v1807 = vadd.f32 %v1313, %v1775
      %v1808 = vadd.f32 %v1314, %v1776
      %v1809 = vadd.f32 %v1315, %v1777
      %v1810 = vadd.f32 %v1316, %v1778
      %v1811 = vadd.f32 %v1317, %v1779
      %v1812 = vadd.f32 %v1318, %v1780
      %v1813 = vadd.f32 %v1319, %v1781
      %v1814 = vadd.f32 %v1320, %v1782
      %v1815 = vadd.f32 %v1321, %v1783
      %v1816 = vadd.f32 %v1322, %v1784
      %v1817 = vadd.f32 %v1323, %v1785
      %v1818 = vadd.f32 %v1324, %v1786
      %v1819 = vadd.f32 %v1325, %v1787
      %v1820 = vadd.f32 %v1326, %v1788
      %v1821 = vadd.f32 %v1327, %v1789
      %v1822 = vadd.f32 %v1328, %v1790
      %v1823 = vadd.f32 %v1329, %v1791
      %v1824 = vadd.f32 %v1330, %v1792
      %v1825 = vadd.f32 %v1331, %v1793
      %v1826 = vadd.f32 %v1332, %v1794
      %v1827 = vadd.f32 %v1333, %v1795
      %v1828 = vadd.f32 %v1334, %v1796
      %v1829 = vadd.f32 %v1335, %v1797
      %v1830 = vadd.f32 %v1336, %v1798
      %v1831 = vpack.c.bf16 %v1801, %v1799
      %v1832 = vpack.c.bf16 %v1802, %v1800
      %v1833 = vpack.c.bf16 %v1805, %v1803
      %v1834 = vpack.c.bf16 %v1806, %v1804
      %v1835 = vpack.c.bf16 %v1809, %v1807
      %v1836 = vpack.c.bf16 %v1810, %v1808
      %v1837 = vpack.c.bf16 %v1813, %v1811
      %v1838 = vpack.c.bf16 %v1814, %v1812
      %v1839 = vpack.c.bf16 %v1817, %v1815
      %v1840 = vpack.c.bf16 %v1818, %v1816
      %v1841 = vpack.c.bf16 %v1821, %v1819
      %v1842 = vpack.c.bf16 %v1822, %v1820
      %v1843 = vpack.c.bf16 %v1825, %v1823
      %v1844 = vpack.c.bf16 %v1826, %v1824
      %v1845 = vpack.c.bf16 %v1829, %v1827
      %v1846 = vpack.c.bf16 %v1830, %v1828
      %v1847 = vld [vmem:[%s7] sm:$0xf]
      %v1848 = vld [vmem:[%s7 + $0x4] sm:$0xf]
      %v1849 = vld [vmem:[%s7 + $0x8] sm:$0xf]
      %v1850 = vld [vmem:[%s7 + $0xc] sm:$0xf]
      %v1851 = vld [vmem:[%s7 + $0x10] sm:$0xf]
      %v1852 = vld [vmem:[%s7 + $0x14] sm:$0xf]
      %v1853 = vld [vmem:[%s7 + $0x18] sm:$0xf]
      %v1854 = vld [vmem:[%s7 + $0x1c] sm:$0xf]
      %v1855 = vld [vmem:[%s7 + $0x20] sm:$0xf]
      %v1856 = vld [vmem:[%s7 + $0x24] sm:$0xf]
      %v1857 = vld [vmem:[%s7 + $0x28] sm:$0xf]
      %v1858 = vld [vmem:[%s7 + $0x2c] sm:$0xf]
      %v1859 = vld [vmem:[%s7 + $0x30] sm:$0xf]
      %v1860 = vld [vmem:[%s7 + $0x34] sm:$0xf]
      %v1861 = vld [vmem:[%s7 + $0x38] sm:$0xf]
      %v1862 = vld [vmem:[%s7 + $0x3c] sm:$0xf]
      %v1863 = vld [vmem:[%s7 + $0x40] sm:$0xf]
      %v1864 = vld [vmem:[%s7 + $0x44] sm:$0xf]
      %v1865 = vld [vmem:[%s7 + $0x48] sm:$0xf]
      %v1866 = vld [vmem:[%s7 + $0x4c] sm:$0xf]
      %v1867 = vld [vmem:[%s7 + $0x50] sm:$0xf]
      %v1868 = vld [vmem:[%s7 + $0x54] sm:$0xf]
      %v1869 = vld [vmem:[%s7 + $0x58] sm:$0xf]
      %v1870 = vld [vmem:[%s7 + $0x5c] sm:$0xf]
      %v1871 = vld [vmem:[%s7 + $0x60] sm:$0xf]
      %v1872 = vld [vmem:[%s8] sm:$0x1]
      %v1874 = vperm.slane %v1872, 0
      %v1901 = vunpack.c.l.b16 %v1847
      %v1902 = vunpack.c.l.b16 %v1848
      %v1903 = vunpack.c.l.b16 %v1849
      %v1904 = vunpack.c.l.b16 %v1850
      %v1905 = vunpack.c.l.b16 %v1851
      %v1906 = vunpack.c.l.b16 %v1852
      %v1907 = vunpack.c.l.b16 %v1853
      %v1908 = vunpack.c.l.b16 %v1854
      %v1909 = vunpack.c.l.b16 %v1855
      %v1910 = vunpack.c.l.b16 %v1856
      %v1911 = vunpack.c.l.b16 %v1857
      %v1912 = vunpack.c.l.b16 %v1858
      %v1913 = vunpack.c.l.b16 %v1859
      %v1914 = vunpack.c.l.b16 %v1860
      %v1915 = vunpack.c.l.b16 %v1861
      %v1916 = vunpack.c.l.b16 %v1862
      %v1917 = vunpack.c.l.b16 %v1863
      %v1918 = vunpack.c.l.b16 %v1864
      %v1919 = vunpack.c.l.b16 %v1865
      %v1920 = vunpack.c.l.b16 %v1866
      %v1921 = vunpack.c.l.b16 %v1867
      %v1922 = vunpack.c.l.b16 %v1868
      %v1923 = vunpack.c.l.b16 %v1869
      %v1924 = vunpack.c.l.b16 %v1870
      %v1925 = vunpack.c.l.b16 %v1871
      %v1926 = vpack.c.b16 %v1902, %v1901
      %v1927 = vpack.c.b16 %v1904, %v1903
      %v1928 = vpack.c.b16 %v1906, %v1905
      %v1929 = vpack.c.b16 %v1908, %v1907
      %v1930 = vpack.c.b16 %v1910, %v1909
      %v1931 = vpack.c.b16 %v1912, %v1911
      %v1932 = vpack.c.b16 %v1914, %v1913
      %v1933 = vpack.c.b16 %v1916, %v1915
      %v1934 = vpack.c.b16 %v1918, %v1917
      %v1935 = vpack.c.b16 %v1920, %v1919
      %v1936 = vpack.c.b16 %v1922, %v1921
      %v1937 = vpack.c.b16 %v1924, %v1923
      %v1938 = vpack.c.b16 %v1925, %v1925
      %v1952 = vsel %vm1013, %v1832, 0
      %v1955 = vsel %vm1013, %v1834, 0
      %v1958 = vsel %vm1013, %v1836, 0
      %v1961 = vsel %vm1013, %v1838, 0
      %v1964 = vsel %vm1013, %v1840, 0
      %v1967 = vsel %vm1013, %v1842, 0
      %v1970 = vsel %vm1013, %v1844, 0
      %v1973 = vsel %vm1013, %v1846, 0
      %v1976 = vsel %vm1038, %v1938, 0
      %1978 = vmatpush.bf16.msra.mxu0 %v1933
      %1979 = vmatpush.bf16.msra.mxu0 %v1932
      %1980 = vmatpush.bf16.msra.mxu0 %v1931
      %1981 = vmatpush.bf16.msra.mxu0 %v1930
      %1982 = vmatpush.bf16.msra.mxu0 %v1929
      %1983 = vmatpush.bf16.msra.mxu0 %v1928
      %1984 = vmatpush.bf16.msra.mxu0 %v1927
      %1985 = vmatpush.bf16.msra.mxu0 %v1926
      %1986 = vmatmul.bf16.gmra.mxu0 %v1831
      %v1987 = vpop.f32.mrf.mxu0
      %v1988 = vadd.f32 %v1874, %v1987
      %v1989 = vpop.f32.mrf.mxu0
      %v1990 = vadd.f32 %v1874, %v1989
      %1991 = vmatmul.bf16.gmra.mxu0 %v1833
      %v1992 = vpop.f32.mrf.mxu0
      %v1993 = vadd.f32 %v1874, %v1992
      %v1994 = vpop.f32.mrf.mxu0
      %v1995 = vadd.f32 %v1874, %v1994
      %1996 = vmatmul.bf16.gmra.mxu0 %v1835
      %v1997 = vpop.f32.mrf.mxu0
      %v1998 = vadd.f32 %v1874, %v1997
      %v1999 = vpop.f32.mrf.mxu0
      %v2000 = vadd.f32 %v1874, %v1999
      %2001 = vmatmul.bf16.gmra.mxu0 %v1837
      %v2002 = vpop.f32.mrf.mxu0
      %v2003 = vadd.f32 %v1874, %v2002
      %v2004 = vpop.f32.mrf.mxu0
      %v2005 = vadd.f32 %v1874, %v2004
      %2006 = vmatmul.bf16.gmra.mxu0 %v1839
      %v2007 = vpop.f32.mrf.mxu0
      %v2008 = vadd.f32 %v1874, %v2007
      %v2009 = vpop.f32.mrf.mxu0
      %v2010 = vadd.f32 %v1874, %v2009
      %2011 = vmatmul.bf16.gmra.mxu0 %v1841
      %v2012 = vpop.f32.mrf.mxu0
      %v2013 = vadd.f32 %v1874, %v2012
      %v2014 = vpop.f32.mrf.mxu0
      %v2015 = vadd.f32 %v1874, %v2014
      %2016 = vmatmul.bf16.gmra.mxu0 %v1843
      %v2017 = vpop.f32.mrf.mxu0
      %v2018 = vadd.f32 %v1874, %v2017
      %v2019 = vpop.f32.mrf.mxu0
      %v2020 = vadd.f32 %v1874, %v2019
      %2021 = vmatmul.bf16.gmra.mxu0 %v1845
      %v2022 = vpop.f32.mrf.mxu0
      %v2023 = vadd.f32 %v1874, %v2022
      %v2024 = vpop.f32.mrf.mxu0
      %v2025 = vadd.f32 %v1874, %v2024
      %2026 = vdwg.mxu0
      %2027 = vmatpush.bf16.msra.mxu0 0
      %2028 = vmatpush.bf16.msra.mxu0 0
      %2029 = vmatpush.bf16.msra.mxu0 0
      %2030 = vmatpush.bf16.msra.mxu0 %v1976
      %2031 = vmatpush.bf16.msra.mxu0 %v1937
      %2032 = vmatpush.bf16.msra.mxu0 %v1936
      %2033 = vmatpush.bf16.msra.mxu0 %v1935
      %2034 = vmatpush.bf16.msra.mxu0 %v1934
      %2035 = vmatmul.bf16.gmra.mxu0 %v1952
      %v2036 = vpop.f32.mrf.mxu0
      %v2037 = vadd.f32 %v1988, %v2036
      %v2038 = vpop.f32.mrf.mxu0
      %v2039 = vadd.f32 %v1990, %v2038
      %2040 = vmatmul.bf16.gmra.mxu0 %v1955
      %v2041 = vpop.f32.mrf.mxu0
      %v2042 = vadd.f32 %v1993, %v2041
      %v2043 = vpop.f32.mrf.mxu0
      %v2044 = vadd.f32 %v1995, %v2043
      %2045 = vmatmul.bf16.gmra.mxu0 %v1958
      %v2046 = vpop.f32.mrf.mxu0
      %v2047 = vadd.f32 %v1998, %v2046
      %v2048 = vpop.f32.mrf.mxu0
      %v2049 = vadd.f32 %v2000, %v2048
      %2050 = vmatmul.bf16.gmra.mxu0 %v1961
      %v2051 = vpop.f32.mrf.mxu0
      %v2052 = vadd.f32 %v2003, %v2051
      %v2053 = vpop.f32.mrf.mxu0
      %v2054 = vadd.f32 %v2005, %v2053
      %2055 = vmatmul.bf16.gmra.mxu0 %v1964
      %v2056 = vpop.f32.mrf.mxu0
      %v2057 = vadd.f32 %v2008, %v2056
      %v2058 = vpop.f32.mrf.mxu0
      %v2059 = vadd.f32 %v2010, %v2058
      %2060 = vmatmul.bf16.gmra.mxu0 %v1967
      %v2061 = vpop.f32.mrf.mxu0
      %v2062 = vadd.f32 %v2013, %v2061
      %v2063 = vpop.f32.mrf.mxu0
      %v2064 = vadd.f32 %v2015, %v2063
      %2065 = vmatmul.bf16.gmra.mxu0 %v1970
      %v2066 = vpop.f32.mrf.mxu0
      %v2067 = vadd.f32 %v2018, %v2066
      %v2068 = vpop.f32.mrf.mxu0
      %v2069 = vadd.f32 %v2020, %v2068
      %2070 = vmatmul.bf16.gmra.mxu0 %v1973
      %v2071 = vpop.f32.mrf.mxu0
      %v2072 = vadd.f32 %v2023, %v2071
      %v2073 = vpop.f32.mrf.mxu0
      %v2074 = vadd.f32 %v2025, %v2073
      %2075 = vdwg.mxu0
      %v2076 = vpack.c.bf16 %v2039, %v2037
      %v2077 = vpack.c.bf16 %v2044, %v2042
      %v2078 = vpack.c.bf16 %v2049, %v2047
      %v2079 = vpack.c.bf16 %v2054, %v2052
      %v2080 = vpack.c.bf16 %v2059, %v2057
      %v2081 = vpack.c.bf16 %v2064, %v2062
      %v2082 = vpack.c.bf16 %v2069, %v2067
      %v2083 = vpack.c.bf16 %v2074, %v2072
      %v2084 = vld [vmem:[%s9] sm:$0xff]
      %v2085 = vld [vmem:[%s9 + $0x8] sm:$0xff]
      %v2086 = vld [vmem:[%s9 + $0x10] sm:$0xff]
      %v2087 = vld [vmem:[%s9 + $0x18] sm:$0xff]
      %v2088 = vld [vmem:[%s9 + $0x20] sm:$0xff]
      %v2089 = vld [vmem:[%s9 + $0x28] sm:$0xff]
      %v2090 = vld [vmem:[%s9 + $0x30] sm:$0xff]
      %v2091 = vld [vmem:[%s9 + $0x38] sm:$0xff]
      %v2092 = vld [vmem:[%s9 + $0x40] sm:$0xff]
      %v2093 = vld [vmem:[%s9 + $0x48] sm:$0xff]
      %v2094 = vld [vmem:[%s9 + $0x50] sm:$0xff]
      %v2095 = vld [vmem:[%s9 + $0x58] sm:$0xff]
      %v2096 = vld [vmem:[%s9 + $0x60] sm:$0xff]
      %v2097 = vld [vmem:[%s9 + $0x68] sm:$0xff]
      %v2098 = vld [vmem:[%s9 + $0x70] sm:$0xff]
      %v2099 = vld [vmem:[%s9 + $0x78] sm:$0xff]
      %v2100 = vld [vmem:[%s9 + $0x80] sm:$0xff]
      %v2101 = vld [vmem:[%s9 + $0x88] sm:$0xff]
      %v2102 = vld [vmem:[%s9 + $0x90] sm:$0xff]
      %v2103 = vld [vmem:[%s9 + $0x98] sm:$0xff]
      %v2104 = vld [vmem:[%s9 + $0xa0] sm:$0xff]
      %v2105 = vld [vmem:[%s9 + $0xa8] sm:$0xff]
      %v2106 = vld [vmem:[%s9 + $0xb0] sm:$0xff]
      %v2107 = vld [vmem:[%s9 + $0xb8] sm:$0xff]
      %v2108 = vld [vmem:[%s9 + $0xc0] sm:$0xff]
      %v2109 = vld [vmem:[%s9 + $0xc8] sm:$0xff]
      %v2110 = vld [vmem:[%s9 + $0xd0] sm:$0xff]
      %v2111 = vld [vmem:[%s9 + $0xd8] sm:$0xff]
      %v2112 = vld [vmem:[%s9 + $0xe0] sm:$0xff]
      %v2113 = vld [vmem:[%s9 + $0xe8] sm:$0xff]
      %v2114 = vld [vmem:[%s9 + $0xf0] sm:$0xff]
      %v2115 = vld [vmem:[%s9 + $0xf8] sm:$0xff]
      %v2116 = vld [vmem:[%s9 + $0x100] sm:$0xff]
      %v2117 = vld [vmem:[%s9 + $0x108] sm:$0xff]
      %v2118 = vld [vmem:[%s9 + $0x110] sm:$0xff]
      %v2119 = vld [vmem:[%s9 + $0x118] sm:$0xff]
      %v2120 = vld [vmem:[%s9 + $0x120] sm:$0xff]
      %v2121 = vld [vmem:[%s9 + $0x128] sm:$0xff]
      %v2122 = vld [vmem:[%s9 + $0x130] sm:$0xff]
      %v2123 = vld [vmem:[%s9 + $0x138] sm:$0xff]
      %v2124 = vld [vmem:[%s9 + $0x140] sm:$0xff]
      %v2125 = vld [vmem:[%s9 + $0x148] sm:$0xff]
      %v2126 = vld [vmem:[%s9 + $0x150] sm:$0xff]
      %v2127 = vld [vmem:[%s9 + $0x158] sm:$0xff]
      %v2128 = vld [vmem:[%s9 + $0x160] sm:$0xff]
      %v2129 = vld [vmem:[%s9 + $0x168] sm:$0xff]
      %v2130 = vld [vmem:[%s9 + $0x170] sm:$0xff]
      %v2131 = vld [vmem:[%s9 + $0x178] sm:$0xff]
      %v2132 = vld [vmem:[%s9 + $0x180] sm:$0xff]
      %v2133 = vld [vmem:[%s9 + $0x188] sm:$0xff]
      %v2134 = vld [vmem:[%s9 + $0x190] sm:$0xff]
      %v2135 = vld [vmem:[%s9 + $0x198] sm:$0xff]
      %v2136 = vld [vmem:[%s9 + $0x1a0] sm:$0xff]
      %v2137 = vld [vmem:[%s9 + $0x1a8] sm:$0xff]
      %v2138 = vld [vmem:[%s9 + $0x1b0] sm:$0xff]
      %v2139 = vld [vmem:[%s9 + $0x1b8] sm:$0xff]
      %v2140 = vld [vmem:[%s9 + $0x1c0] sm:$0xff]
      %v2141 = vld [vmem:[%s9 + $0x1c8] sm:$0xff]
      %v2142 = vld [vmem:[%s9 + $0x1d0] sm:$0xff]
      %v2143 = vld [vmem:[%s9 + $0x1d8] sm:$0xff]
      %v2144 = vld [vmem:[%s9 + $0x1e0] sm:$0xff]
      %v2145 = vld [vmem:[%s9 + $0x1e8] sm:$0xff]
      %v2146 = vld [vmem:[%s9 + $0x1f0] sm:$0xff]
      %v2147 = vld [vmem:[%s9 + $0x1f8] sm:$0xff]
      %v2148 = vld [vmem:[%s9 + $0x200] sm:$0xff]
      %v2149 = vld [vmem:[%s9 + $0x208] sm:$0xff]
      %v2150 = vld [vmem:[%s9 + $0x210] sm:$0xff]
      %v2151 = vld [vmem:[%s9 + $0x218] sm:$0xff]
      %v2152 = vld [vmem:[%s9 + $0x220] sm:$0xff]
      %v2153 = vld [vmem:[%s9 + $0x228] sm:$0xff]
      %v2154 = vld [vmem:[%s9 + $0x230] sm:$0xff]
      %v2155 = vld [vmem:[%s9 + $0x238] sm:$0xff]
      %v2156 = vld [vmem:[%s9 + $0x240] sm:$0xff]
      %v2157 = vld [vmem:[%s9 + $0x248] sm:$0xff]
      %v2158 = vld [vmem:[%s9 + $0x250] sm:$0xff]
      %v2159 = vld [vmem:[%s9 + $0x258] sm:$0xff]
      %v2160 = vld [vmem:[%s9 + $0x260] sm:$0xff]
      %v2161 = vld [vmem:[%s9 + $0x268] sm:$0xff]
      %v2162 = vld [vmem:[%s9 + $0x270] sm:$0xff]
      %v2163 = vld [vmem:[%s9 + $0x278] sm:$0xff]
      %v2164 = vld [vmem:[%s10] sm:$0xff]
      %v2165 = vld [vmem:[%s10 + $0x8] sm:$0x3]
      %v2168 = vperm.slane %v2164, 0
      %v2169 = vperm.slane %v2164, 1
      %v2170 = vperm.slane %v2164, 2
      %v2171 = vperm.slane %v2164, 3
      %v2172 = vperm.slane %v2164, 4
      %v2173 = vperm.slane %v2164, 5
      %v2174 = vperm.slane %v2164, 6
      %v2175 = vperm.slane %v2164, 7
      %v2176 = vperm.slane %v2165, 0
      %v2177 = vperm.slane %v2165, 1
      %v2268 = vunpack.c.l.b16 %v2084
      %v2269 = vunpack.c.h.b16 %v2084
      %v2270 = vunpack.c.l.b16 %v2085
      %v2271 = vunpack.c.h.b16 %v2085
      %v2272 = vunpack.c.l.b16 %v2086
      %v2273 = vunpack.c.h.b16 %v2086
      %v2274 = vunpack.c.l.b16 %v2087
      %v2275 = vunpack.c.h.b16 %v2087
      %v2276 = vunpack.c.l.b16 %v2088
      %v2277 = vunpack.c.h.b16 %v2088
      %v2278 = vunpack.c.l.b16 %v2089
      %v2279 = vunpack.c.h.b16 %v2089
      %v2280 = vunpack.c.l.b16 %v2090
      %v2281 = vunpack.c.h.b16 %v2090
      %v2282 = vunpack.c.l.b16 %v2091
      %v2283 = vunpack.c.h.b16 %v2091
      %v2284 = vunpack.c.l.b16 %v2092
      %v2285 = vunpack.c.h.b16 %v2092
      %v2286 = vunpack.c.l.b16 %v2093
      %v2287 = vunpack.c.h.b16 %v2093
      %v2288 = vunpack.c.l.b16 %v2094
      %v2289 = vunpack.c.h.b16 %v2094
      %v2290 = vunpack.c.l.b16 %v2095
      %v2291 = vunpack.c.h.b16 %v2095
      %v2292 = vunpack.c.l.b16 %v2096
      %v2293 = vunpack.c.h.b16 %v2096
      %v2294 = vunpack.c.l.b16 %v2097
      %v2295 = vunpack.c.h.b16 %v2097
      %v2296 = vunpack.c.l.b16 %v2098
      %v2297 = vunpack.c.h.b16 %v2098
      %v2298 = vunpack.c.l.b16 %v2099
      %v2299 = vunpack.c.h.b16 %v2099
      %v2300 = vunpack.c.l.b16 %v2100
      %v2301 = vunpack.c.h.b16 %v2100
      %v2302 = vunpack.c.l.b16 %v2101
      %v2303 = vunpack.c.h.b16 %v2101
      %v2304 = vunpack.c.l.b16 %v2102
      %v2305 = vunpack.c.h.b16 %v2102
      %v2306 = vunpack.c.l.b16 %v2103
      %v2307 = vunpack.c.h.b16 %v2103
      %v2308 = vunpack.c.l.b16 %v2104
      %v2309 = vunpack.c.h.b16 %v2104
      %v2310 = vunpack.c.l.b16 %v2105
      %v2311 = vunpack.c.h.b16 %v2105
      %v2312 = vunpack.c.l.b16 %v2106
      %v2313 = vunpack.c.h.b16 %v2106
      %v2314 = vunpack.c.l.b16 %v2107
      %v2315 = vunpack.c.h.b16 %v2107
      %v2316 = vunpack.c.l.b16 %v2108
      %v2317 = vunpack.c.h.b16 %v2108
      %v2318 = vunpack.c.l.b16 %v2109
      %v2319 = vunpack.c.h.b16 %v2109
      %v2320 = vunpack.c.l.b16 %v2110
      %v2321 = vunpack.c.h.b16 %v2110
      %v2322 = vunpack.c.l.b16 %v2111
      %v2323 = vunpack.c.h.b16 %v2111
      %v2324 = vunpack.c.l.b16 %v2112
      %v2325 = vunpack.c.h.b16 %v2112
      %v2326 = vunpack.c.l.b16 %v2113
      %v2327 = vunpack.c.h.b16 %v2113
      %v2328 = vunpack.c.l.b16 %v2114
      %v2329 = vunpack.c.h.b16 %v2114
      %v2330 = vunpack.c.l.b16 %v2115
      %v2331 = vunpack.c.h.b16 %v2115
      %v2332 = vunpack.c.l.b16 %v2116
      %v2333 = vunpack.c.h.b16 %v2116
      %v2334 = vunpack.c.l.b16 %v2117
      %v2335 = vunpack.c.h.b16 %v2117
      %v2336 = vunpack.c.l.b16 %v2118
      %v2337 = vunpack.c.h.b16 %v2118
      %v2338 = vunpack.c.l.b16 %v2119
      %v2339 = vunpack.c.h.b16 %v2119
      %v2340 = vunpack.c.l.b16 %v2120
      %v2341 = vunpack.c.h.b16 %v2120
      %v2342 = vunpack.c.l.b16 %v2121
      %v2343 = vunpack.c.h.b16 %v2121
      %v2344 = vunpack.c.l.b16 %v2122
      %v2345 = vunpack.c.h.b16 %v2122
      %v2346 = vunpack.c.l.b16 %v2123
      %v2347 = vunpack.c.h.b16 %v2123
      %v2348 = vunpack.c.l.b16 %v2124
      %v2349 = vunpack.c.h.b16 %v2124
      %v2350 = vunpack.c.l.b16 %v2125
      %v2351 = vunpack.c.h.b16 %v2125
      %v2352 = vunpack.c.l.b16 %v2126
      %v2353 = vunpack.c.h.b16 %v2126
      %v2354 = vunpack.c.l.b16 %v2127
      %v2355 = vunpack.c.h.b16 %v2127
      %v2356 = vunpack.c.l.b16 %v2128
      %v2357 = vunpack.c.h.b16 %v2128
      %v2358 = vunpack.c.l.b16 %v2129
      %v2359 = vunpack.c.h.b16 %v2129
      %v2360 = vunpack.c.l.b16 %v2130
      %v2361 = vunpack.c.h.b16 %v2130
      %v2362 = vunpack.c.l.b16 %v2131
      %v2363 = vunpack.c.h.b16 %v2131
      %v2364 = vunpack.c.l.b16 %v2132
      %v2365 = vunpack.c.h.b16 %v2132
      %v2366 = vunpack.c.l.b16 %v2133
      %v2367 = vunpack.c.h.b16 %v2133
      %v2368 = vunpack.c.l.b16 %v2134
      %v2369 = vunpack.c.h.b16 %v2134
      %v2370 = vunpack.c.l.b16 %v2135
      %v2371 = vunpack.c.h.b16 %v2135
      %v2372 = vunpack.c.l.b16 %v2136
      %v2373 = vunpack.c.h.b16 %v2136
      %v2374 = vunpack.c.l.b16 %v2137
      %v2375 = vunpack.c.h.b16 %v2137
      %v2376 = vunpack.c.l.b16 %v2138
      %v2377 = vunpack.c.h.b16 %v2138
      %v2378 = vunpack.c.l.b16 %v2139
      %v2379 = vunpack.c.h.b16 %v2139
      %v2380 = vunpack.c.l.b16 %v2140
      %v2381 = vunpack.c.h.b16 %v2140
      %v2382 = vunpack.c.l.b16 %v2141
      %v2383 = vunpack.c.h.b16 %v2141
      %v2384 = vunpack.c.l.b16 %v2142
      %v2385 = vunpack.c.h.b16 %v2142
      %v2386 = vunpack.c.l.b16 %v2143
      %v2387 = vunpack.c.h.b16 %v2143
      %v2388 = vunpack.c.l.b16 %v2144
      %v2389 = vunpack.c.h.b16 %v2144
      %v2390 = vunpack.c.l.b16 %v2145
      %v2391 = vunpack.c.h.b16 %v2145
      %v2392 = vunpack.c.l.b16 %v2146
      %v2393 = vunpack.c.h.b16 %v2146
      %v2394 = vunpack.c.l.b16 %v2147
      %v2395 = vunpack.c.h.b16 %v2147
      %v2396 = vunpack.c.l.b16 %v2148
      %v2397 = vunpack.c.h.b16 %v2148
      %v2398 = vunpack.c.l.b16 %v2149
      %v2399 = vunpack.c.h.b16 %v2149
      %v2400 = vunpack.c.l.b16 %v2150
      %v2401 = vunpack.c.h.b16 %v2150
      %v2402 = vunpack.c.l.b16 %v2151
      %v2403 = vunpack.c.h.b16 %v2151
      %v2404 = vunpack.c.l.b16 %v2152
      %v2405 = vunpack.c.h.b16 %v2152
      %v2406 = vunpack.c.l.b16 %v2153
      %v2407 = vunpack.c.h.b16 %v2153
      %v2408 = vunpack.c.l.b16 %v2154
      %v2409 = vunpack.c.h.b16 %v2154
      %v2410 = vunpack.c.l.b16 %v2155
      %v2411 = vunpack.c.h.b16 %v2155
      %v2412 = vunpack.c.l.b16 %v2156
      %v2413 = vunpack.c.h.b16 %v2156
      %v2414 = vunpack.c.l.b16 %v2157
      %v2415 = vunpack.c.h.b16 %v2157
      %v2416 = vunpack.c.l.b16 %v2158
      %v2417 = vunpack.c.h.b16 %v2158
      %v2418 = vunpack.c.l.b16 %v2159
      %v2419 = vunpack.c.h.b16 %v2159
      %v2420 = vunpack.c.l.b16 %v2160
      %v2421 = vunpack.c.h.b16 %v2160
      %v2422 = vunpack.c.l.b16 %v2161
      %v2423 = vunpack.c.h.b16 %v2161
      %v2424 = vunpack.c.l.b16 %v2162
      %v2425 = vunpack.c.h.b16 %v2162
      %v2426 = vunpack.c.l.b16 %v2163
      %v2427 = vunpack.c.h.b16 %v2163
      %v2428 = vpack.c.b16 %v2278, %v2268
      %v2429 = vpack.c.b16 %v2279, %v2269
      %v2430 = vpack.c.b16 %v2280, %v2270
      %v2431 = vpack.c.b16 %v2281, %v2271
      %v2432 = vpack.c.b16 %v2282, %v2272
      %v2433 = vpack.c.b16 %v2283, %v2273
      %v2434 = vpack.c.b16 %v2284, %v2274
      %v2435 = vpack.c.b16 %v2285, %v2275
      %v2436 = vpack.c.b16 %v2286, %v2276
      %v2437 = vpack.c.b16 %v2287, %v2277
      %v2438 = vpack.c.b16 %v2298, %v2288
      %v2439 = vpack.c.b16 %v2299, %v2289
      %v2440 = vpack.c.b16 %v2300, %v2290
      %v2441 = vpack.c.b16 %v2301, %v2291
      %v2442 = vpack.c.b16 %v2302, %v2292
      %v2443 = vpack.c.b16 %v2303, %v2293
      %v2444 = vpack.c.b16 %v2304, %v2294
      %v2445 = vpack.c.b16 %v2305, %v2295
      %v2446 = vpack.c.b16 %v2306, %v2296
      %v2447 = vpack.c.b16 %v2307, %v2297
      %v2448 = vpack.c.b16 %v2318, %v2308
      %v2449 = vpack.c.b16 %v2319, %v2309
      %v2450 = vpack.c.b16 %v2320, %v2310
      %v2451 = vpack.c.b16 %v2321, %v2311
      %v2452 = vpack.c.b16 %v2322, %v2312
      %v2453 = vpack.c.b16 %v2323, %v2313
      %v2454 = vpack.c.b16 %v2324, %v2314
      %v2455 = vpack.c.b16 %v2325, %v2315
      %v2456 = vpack.c.b16 %v2326, %v2316
      %v2457 = vpack.c.b16 %v2327, %v2317
      %v2458 = vpack.c.b16 %v2338, %v2328
      %v2459 = vpack.c.b16 %v2339, %v2329
      %v2460 = vpack.c.b16 %v2340, %v2330
      %v2461 = vpack.c.b16 %v2341, %v2331
      %v2462 = vpack.c.b16 %v2342, %v2332
      %v2463 = vpack.c.b16 %v2343, %v2333
      %v2464 = vpack.c.b16 %v2344, %v2334
      %v2465 = vpack.c.b16 %v2345, %v2335
      %v2466 = vpack.c.b16 %v2346, %v2336
      %v2467 = vpack.c.b16 %v2347, %v2337
      %v2468 = vpack.c.b16 %v2358, %v2348
      %v2469 = vpack.c.b16 %v2359, %v2349
      %v2470 = vpack.c.b16 %v2360, %v2350
      %v2471 = vpack.c.b16 %v2361, %v2351
      %v2472 = vpack.c.b16 %v2362, %v2352
      %v2473 = vpack.c.b16 %v2363, %v2353
      %v2474 = vpack.c.b16 %v2364, %v2354
      %v2475 = vpack.c.b16 %v2365, %v2355
      %v2476 = vpack.c.b16 %v2366, %v2356
      %v2477 = vpack.c.b16 %v2367, %v2357
      %v2478 = vpack.c.b16 %v2378, %v2368
      %v2479 = vpack.c.b16 %v2379, %v2369
      %v2480 = vpack.c.b16 %v2380, %v2370
      %v2481 = vpack.c.b16 %v2381, %v2371
      %v2482 = vpack.c.b16 %v2382, %v2372
      %v2483 = vpack.c.b16 %v2383, %v2373
      %v2484 = vpack.c.b16 %v2384, %v2374
      %v2485 = vpack.c.b16 %v2385, %v2375
      %v2486 = vpack.c.b16 %v2386, %v2376
      %v2487 = vpack.c.b16 %v2387, %v2377
      %v2488 = vpack.c.b16 %v2398, %v2388
      %v2489 = vpack.c.b16 %v2399, %v2389
      %v2490 = vpack.c.b16 %v2400, %v2390
      %v2491 = vpack.c.b16 %v2401, %v2391
      %v2492 = vpack.c.b16 %v2402, %v2392
      %v2493 = vpack.c.b16 %v2403, %v2393
      %v2494 = vpack.c.b16 %v2404, %v2394
      %v2495 = vpack.c.b16 %v2405, %v2395
      %v2496 = vpack.c.b16 %v2406, %v2396
      %v2497 = vpack.c.b16 %v2407, %v2397
      %v2498 = vpack.c.b16 %v2418, %v2408
      %v2499 = vpack.c.b16 %v2419, %v2409
      %v2500 = vpack.c.b16 %v2420, %v2410
      %v2501 = vpack.c.b16 %v2421, %v2411
      %v2502 = vpack.c.b16 %v2422, %v2412
      %v2503 = vpack.c.b16 %v2423, %v2413
      %v2504 = vpack.c.b16 %v2424, %v2414
      %v2505 = vpack.c.b16 %v2425, %v2415
      %v2506 = vpack.c.b16 %v2426, %v2416
      %v2507 = vpack.c.b16 %v2427, %v2417
      %2588 = vmatpush.bf16.msra.mxu0 %v2498
      %2589 = vmatpush.bf16.msra.mxu0 %v2488
      %2590 = vmatpush.bf16.msra.mxu0 %v2478
      %2591 = vmatpush.bf16.msra.mxu0 %v2468
      %2592 = vmatpush.bf16.msra.mxu0 %v2458
      %2593 = vmatpush.bf16.msra.mxu0 %v2448
      %2594 = vmatpush.bf16.msra.mxu0 %v2438
      %2595 = vmatpush.bf16.msra.mxu0 %v2428
      %2596 = vmatmul.bf16.gmra.mxu0 %v2076
      %v2597 = vpop.f32.mrf.mxu0
      %v2598 = vadd.f32 %v2168, %v2597
      %v2599 = vpop.f32.mrf.mxu0
      %v2600 = vadd.f32 %v2168, %v2599
      %2601 = vmatmul.bf16.gmra.mxu0 %v2077
      %v2602 = vpop.f32.mrf.mxu0
      %v2603 = vadd.f32 %v2168, %v2602
      %v2604 = vpop.f32.mrf.mxu0
      %v2605 = vadd.f32 %v2168, %v2604
      %2606 = vmatmul.bf16.gmra.mxu0 %v2078
      %v2607 = vpop.f32.mrf.mxu0
      %v2608 = vadd.f32 %v2168, %v2607
      %v2609 = vpop.f32.mrf.mxu0
      %v2610 = vadd.f32 %v2168, %v2609
      %2611 = vmatmul.bf16.gmra.mxu0 %v2079
      %v2612 = vpop.f32.mrf.mxu0
      %v2613 = vadd.f32 %v2168, %v2612
      %v2614 = vpop.f32.mrf.mxu0
      %v2615 = vadd.f32 %v2168, %v2614
      %2616 = vmatmul.bf16.gmra.mxu0 %v2080
      %v2617 = vpop.f32.mrf.mxu0
      %v2618 = vadd.f32 %v2168, %v2617
      %v2619 = vpop.f32.mrf.mxu0
      %v2620 = vadd.f32 %v2168, %v2619
      %2621 = vmatmul.bf16.gmra.mxu0 %v2081
      %v2622 = vpop.f32.mrf.mxu0
      %v2623 = vadd.f32 %v2168, %v2622
      %v2624 = vpop.f32.mrf.mxu0
      %v2625 = vadd.f32 %v2168, %v2624
      %2626 = vmatmul.bf16.gmra.mxu0 %v2082
      %v2627 = vpop.f32.mrf.mxu0
      %v2628 = vadd.f32 %v2168, %v2627
      %v2629 = vpop.f32.mrf.mxu0
      %v2630 = vadd.f32 %v2168, %v2629
      %2631 = vmatmul.bf16.gmra.mxu0 %v2083
      %v2632 = vpop.f32.mrf.mxu0
      %v2633 = vadd.f32 %v2168, %v2632
      %v2634 = vpop.f32.mrf.mxu0
      %v2635 = vadd.f32 %v2168, %v2634
      %2636 = vdwg.mxu0
      %2637 = vmatpush.bf16.msra.mxu0 %v2499
      %2638 = vmatpush.bf16.msra.mxu0 %v2489
      %2639 = vmatpush.bf16.msra.mxu0 %v2479
      %2640 = vmatpush.bf16.msra.mxu0 %v2469
      %2641 = vmatpush.bf16.msra.mxu0 %v2459
      %2642 = vmatpush.bf16.msra.mxu0 %v2449
      %2643 = vmatpush.bf16.msra.mxu0 %v2439
      %2644 = vmatpush.bf16.msra.mxu0 %v2429
      %2645 = vmatmul.bf16.gmra.mxu0 %v2076
      %v2646 = vpop.f32.mrf.mxu0
      %v2647 = vadd.f32 %v2169, %v2646
      %v2648 = vpop.f32.mrf.mxu0
      %v2649 = vadd.f32 %v2169, %v2648
      %2650 = vmatmul.bf16.gmra.mxu0 %v2077
      %v2651 = vpop.f32.mrf.mxu0
      %v2652 = vadd.f32 %v2169, %v2651
      %v2653 = vpop.f32.mrf.mxu0
      %v2654 = vadd.f32 %v2169, %v2653
      %2655 = vmatmul.bf16.gmra.mxu0 %v2078
      %v2656 = vpop.f32.mrf.mxu0
      %v2657 = vadd.f32 %v2169, %v2656
      %v2658 = vpop.f32.mrf.mxu0
      %v2659 = vadd.f32 %v2169, %v2658
      %2660 = vmatmul.bf16.gmra.mxu0 %v2079
      %v2661 = vpop.f32.mrf.mxu0
      %v2662 = vadd.f32 %v2169, %v2661
      %v2663 = vpop.f32.mrf.mxu0
      %v2664 = vadd.f32 %v2169, %v2663
      %2665 = vmatmul.bf16.gmra.mxu0 %v2080
      %v2666 = vpop.f32.mrf.mxu0
      %v2667 = vadd.f32 %v2169, %v2666
      %v2668 = vpop.f32.mrf.mxu0
      %v2669 = vadd.f32 %v2169, %v2668
      %2670 = vmatmul.bf16.gmra.mxu0 %v2081
      %v2671 = vpop.f32.mrf.mxu0
      %v2672 = vadd.f32 %v2169, %v2671
      %v2673 = vpop.f32.mrf.mxu0
      %v2674 = vadd.f32 %v2169, %v2673
      %2675 = vmatmul.bf16.gmra.mxu0 %v2082
      %v2676 = vpop.f32.mrf.mxu0
      %v2677 = vadd.f32 %v2169, %v2676
      %v2678 = vpop.f32.mrf.mxu0
      %v2679 = vadd.f32 %v2169, %v2678
      %2680 = vmatmul.bf16.gmra.mxu0 %v2083
      %v2681 = vpop.f32.mrf.mxu0
      %v2682 = vadd.f32 %v2169, %v2681
      %v2683 = vpop.f32.mrf.mxu0
      %v2684 = vadd.f32 %v2169, %v2683
      %2685 = vdwg.mxu0
      %2686 = vmatpush.bf16.msra.mxu0 %v2500
      %2687 = vmatpush.bf16.msra.mxu0 %v2490
      %2688 = vmatpush.bf16.msra.mxu0 %v2480
      %2689 = vmatpush.bf16.msra.mxu0 %v2470
      %2690 = vmatpush.bf16.msra.mxu0 %v2460
      %2691 = vmatpush.bf16.msra.mxu0 %v2450
      %2692 = vmatpush.bf16.msra.mxu0 %v2440
      %2693 = vmatpush.bf16.msra.mxu0 %v2430
      %2694 = vmatmul.bf16.gmra.mxu0 %v2076
      %v2695 = vpop.f32.mrf.mxu0
      %v2696 = vadd.f32 %v2170, %v2695
      %v2697 = vpop.f32.mrf.mxu0
      %v2698 = vadd.f32 %v2170, %v2697
      %2699 = vmatmul.bf16.gmra.mxu0 %v2077
      %v2700 = vpop.f32.mrf.mxu0
      %v2701 = vadd.f32 %v2170, %v2700
      %v2702 = vpop.f32.mrf.mxu0
      %v2703 = vadd.f32 %v2170, %v2702
      %2704 = vmatmul.bf16.gmra.mxu0 %v2078
      %v2705 = vpop.f32.mrf.mxu0
      %v2706 = vadd.f32 %v2170, %v2705
      %v2707 = vpop.f32.mrf.mxu0
      %v2708 = vadd.f32 %v2170, %v2707
      %2709 = vmatmul.bf16.gmra.mxu0 %v2079
      %v2710 = vpop.f32.mrf.mxu0
      %v2711 = vadd.f32 %v2170, %v2710
      %v2712 = vpop.f32.mrf.mxu0
      %v2713 = vadd.f32 %v2170, %v2712
      %2714 = vmatmul.bf16.gmra.mxu0 %v2080
      %v2715 = vpop.f32.mrf.mxu0
      %v2716 = vadd.f32 %v2170, %v2715
      %v2717 = vpop.f32.mrf.mxu0
      %v2718 = vadd.f32 %v2170, %v2717
      %2719 = vmatmul.bf16.gmra.mxu0 %v2081
      %v2720 = vpop.f32.mrf.mxu0
      %v2721 = vadd.f32 %v2170, %v2720
      %v2722 = vpop.f32.mrf.mxu0
      %v2723 = vadd.f32 %v2170, %v2722
      %2724 = vmatmul.bf16.gmra.mxu0 %v2082
      %v2725 = vpop.f32.mrf.mxu0
      %v2726 = vadd.f32 %v2170, %v2725
      %v2727 = vpop.f32.mrf.mxu0
      %v2728 = vadd.f32 %v2170, %v2727
      %2729 = vmatmul.bf16.gmra.mxu0 %v2083
      %v2730 = vpop.f32.mrf.mxu0
      %v2731 = vadd.f32 %v2170, %v2730
      %v2732 = vpop.f32.mrf.mxu0
      %v2733 = vadd.f32 %v2170, %v2732
      %2734 = vdwg.mxu0
      %2735 = vmatpush.bf16.msra.mxu0 %v2501
      %2736 = vmatpush.bf16.msra.mxu0 %v2491
      %2737 = vmatpush.bf16.msra.mxu0 %v2481
      %2738 = vmatpush.bf16.msra.mxu0 %v2471
      %2739 = vmatpush.bf16.msra.mxu0 %v2461
      %2740 = vmatpush.bf16.msra.mxu0 %v2451
      %2741 = vmatpush.bf16.msra.mxu0 %v2441
      %2742 = vmatpush.bf16.msra.mxu0 %v2431
      %2743 = vmatmul.bf16.gmra.mxu0 %v2076
      %v2744 = vpop.f32.mrf.mxu0
      %v2745 = vadd.f32 %v2171, %v2744
      %v2746 = vpop.f32.mrf.mxu0
      %v2747 = vadd.f32 %v2171, %v2746
      %2748 = vmatmul.bf16.gmra.mxu0 %v2077
      %v2749 = vpop.f32.mrf.mxu0
      %v2750 = vadd.f32 %v2171, %v2749
      %v2751 = vpop.f32.mrf.mxu0
      %v2752 = vadd.f32 %v2171, %v2751
      %2753 = vmatmul.bf16.gmra.mxu0 %v2078
      %v2754 = vpop.f32.mrf.mxu0
      %v2755 = vadd.f32 %v2171, %v2754
      %v2756 = vpop.f32.mrf.mxu0
      %v2757 = vadd.f32 %v2171, %v2756
      %2758 = vmatmul.bf16.gmra.mxu0 %v2079
      %v2759 = vpop.f32.mrf.mxu0
      %v2760 = vadd.f32 %v2171, %v2759
      %v2761 = vpop.f32.mrf.mxu0
      %v2762 = vadd.f32 %v2171, %v2761
      %2763 = vmatmul.bf16.gmra.mxu0 %v2080
      %v2764 = vpop.f32.mrf.mxu0
      %v2765 = vadd.f32 %v2171, %v2764
      %v2766 = vpop.f32.mrf.mxu0
      %v2767 = vadd.f32 %v2171, %v2766
      %2768 = vmatmul.bf16.gmra.mxu0 %v2081
      %v2769 = vpop.f32.mrf.mxu0
      %v2770 = vadd.f32 %v2171, %v2769
      %v2771 = vpop.f32.mrf.mxu0
      %v2772 = vadd.f32 %v2171, %v2771
      %2773 = vmatmul.bf16.gmra.mxu0 %v2082
      %v2774 = vpop.f32.mrf.mxu0
      %v2775 = vadd.f32 %v2171, %v2774
      %v2776 = vpop.f32.mrf.mxu0
      %v2777 = vadd.f32 %v2171, %v2776
      %2778 = vmatmul.bf16.gmra.mxu0 %v2083
      %v2779 = vpop.f32.mrf.mxu0
      %v2780 = vadd.f32 %v2171, %v2779
      %v2781 = vpop.f32.mrf.mxu0
      %v2782 = vadd.f32 %v2171, %v2781
      %2783 = vdwg.mxu0
      %2784 = vmatpush.bf16.msra.mxu0 %v2502
      %2785 = vmatpush.bf16.msra.mxu0 %v2492
      %2786 = vmatpush.bf16.msra.mxu0 %v2482
      %2787 = vmatpush.bf16.msra.mxu0 %v2472
      %2788 = vmatpush.bf16.msra.mxu0 %v2462
      %2789 = vmatpush.bf16.msra.mxu0 %v2452
      %2790 = vmatpush.bf16.msra.mxu0 %v2442
      %2791 = vmatpush.bf16.msra.mxu0 %v2432
      %2792 = vmatmul.bf16.gmra.mxu0 %v2076
      %v2793 = vpop.f32.mrf.mxu0
      %v2794 = vadd.f32 %v2172, %v2793
      %v2795 = vpop.f32.mrf.mxu0
      %v2796 = vadd.f32 %v2172, %v2795
      %2797 = vmatmul.bf16.gmra.mxu0 %v2077
      %v2798 = vpop.f32.mrf.mxu0
      %v2799 = vadd.f32 %v2172, %v2798
      %v2800 = vpop.f32.mrf.mxu0
      %v2801 = vadd.f32 %v2172, %v2800
      %2802 = vmatmul.bf16.gmra.mxu0 %v2078
      %v2803 = vpop.f32.mrf.mxu0
      %v2804 = vadd.f32 %v2172, %v2803
      %v2805 = vpop.f32.mrf.mxu0
      %v2806 = vadd.f32 %v2172, %v2805
      %2807 = vmatmul.bf16.gmra.mxu0 %v2079
      %v2808 = vpop.f32.mrf.mxu0
      %v2809 = vadd.f32 %v2172, %v2808
      %v2810 = vpop.f32.mrf.mxu0
      %v2811 = vadd.f32 %v2172, %v2810
      %2812 = vmatmul.bf16.gmra.mxu0 %v2080
      %v2813 = vpop.f32.mrf.mxu0
      %v2814 = vadd.f32 %v2172, %v2813
      %v2815 = vpop.f32.mrf.mxu0
      %v2816 = vadd.f32 %v2172, %v2815
      %2817 = vmatmul.bf16.gmra.mxu0 %v2081
      %v2818 = vpop.f32.mrf.mxu0
      %v2819 = vadd.f32 %v2172, %v2818
      %v2820 = vpop.f32.mrf.mxu0
      %v2821 = vadd.f32 %v2172, %v2820
      %2822 = vmatmul.bf16.gmra.mxu0 %v2082
      %v2823 = vpop.f32.mrf.mxu0
      %v2824 = vadd.f32 %v2172, %v2823
      %v2825 = vpop.f32.mrf.mxu0
      %v2826 = vadd.f32 %v2172, %v2825
      %2827 = vmatmul.bf16.gmra.mxu0 %v2083
      %v2828 = vpop.f32.mrf.mxu0
      %v2829 = vadd.f32 %v2172, %v2828
      %v2830 = vpop.f32.mrf.mxu0
      %v2831 = vadd.f32 %v2172, %v2830
      %2832 = vdwg.mxu0
      %2833 = vmatpush.bf16.msra.mxu0 %v2503
      %2834 = vmatpush.bf16.msra.mxu0 %v2493
      %2835 = vmatpush.bf16.msra.mxu0 %v2483
      %2836 = vmatpush.bf16.msra.mxu0 %v2473
      %2837 = vmatpush.bf16.msra.mxu0 %v2463
      %2838 = vmatpush.bf16.msra.mxu0 %v2453
      %2839 = vmatpush.bf16.msra.mxu0 %v2443
      %2840 = vmatpush.bf16.msra.mxu0 %v2433
      %2841 = vmatmul.bf16.gmra.mxu0 %v2076
      %v2842 = vpop.f32.mrf.mxu0
      %v2843 = vadd.f32 %v2173, %v2842
      %v2844 = vpop.f32.mrf.mxu0
      %v2845 = vadd.f32 %v2173, %v2844
      %2846 = vmatmul.bf16.gmra.mxu0 %v2077
      %v2847 = vpop.f32.mrf.mxu0
      %v2848 = vadd.f32 %v2173, %v2847
      %v2849 = vpop.f32.mrf.mxu0
      %v2850 = vadd.f32 %v2173, %v2849
      %2851 = vmatmul.bf16.gmra.mxu0 %v2078
      %v2852 = vpop.f32.mrf.mxu0
      %v2853 = vadd.f32 %v2173, %v2852
      %v2854 = vpop.f32.mrf.mxu0
      %v2855 = vadd.f32 %v2173, %v2854
      %2856 = vmatmul.bf16.gmra.mxu0 %v2079
      %v2857 = vpop.f32.mrf.mxu0
      %v2858 = vadd.f32 %v2173, %v2857
      %v2859 = vpop.f32.mrf.mxu0
      %v2860 = vadd.f32 %v2173, %v2859
      %2861 = vmatmul.bf16.gmra.mxu0 %v2080
      %v2862 = vpop.f32.mrf.mxu0
      %v2863 = vadd.f32 %v2173, %v2862
      %v2864 = vpop.f32.mrf.mxu0
      %v2865 = vadd.f32 %v2173, %v2864
      %2866 = vmatmul.bf16.gmra.mxu0 %v2081
      %v2867 = vpop.f32.mrf.mxu0
      %v2868 = vadd.f32 %v2173, %v2867
      %v2869 = vpop.f32.mrf.mxu0
      %v2870 = vadd.f32 %v2173, %v2869
      %2871 = vmatmul.bf16.gmra.mxu0 %v2082
      %v2872 = vpop.f32.mrf.mxu0
      %v2873 = vadd.f32 %v2173, %v2872
      %v2874 = vpop.f32.mrf.mxu0
      %v2875 = vadd.f32 %v2173, %v2874
      %2876 = vmatmul.bf16.gmra.mxu0 %v2083
      %v2877 = vpop.f32.mrf.mxu0
      %v2878 = vadd.f32 %v2173, %v2877
      %v2879 = vpop.f32.mrf.mxu0
      %v2880 = vadd.f32 %v2173, %v2879
      %2881 = vdwg.mxu0
      %2882 = vmatpush.bf16.msra.mxu0 %v2504
      %2883 = vmatpush.bf16.msra.mxu0 %v2494
      %2884 = vmatpush.bf16.msra.mxu0 %v2484
      %2885 = vmatpush.bf16.msra.mxu0 %v2474
      %2886 = vmatpush.bf16.msra.mxu0 %v2464
      %2887 = vmatpush.bf16.msra.mxu0 %v2454
      %2888 = vmatpush.bf16.msra.mxu0 %v2444
      %2889 = vmatpush.bf16.msra.mxu0 %v2434
      %2890 = vmatmul.bf16.gmra.mxu0 %v2076
      %v2891 = vpop.f32.mrf.mxu0
      %v2892 = vadd.f32 %v2174, %v2891
      %v2893 = vpop.f32.mrf.mxu0
      %v2894 = vadd.f32 %v2174, %v2893
      %2895 = vmatmul.bf16.gmra.mxu0 %v2077
      %v2896 = vpop.f32.mrf.mxu0
      %v2897 = vadd.f32 %v2174, %v2896
      %v2898 = vpop.f32.mrf.mxu0
      %v2899 = vadd.f32 %v2174, %v2898
      %2900 = vmatmul.bf16.gmra.mxu0 %v2078
      %v2901 = vpop.f32.mrf.mxu0
      %v2902 = vadd.f32 %v2174, %v2901
      %v2903 = vpop.f32.mrf.mxu0
      %v2904 = vadd.f32 %v2174, %v2903
      %2905 = vmatmul.bf16.gmra.mxu0 %v2079
      %v2906 = vpop.f32.mrf.mxu0
      %v2907 = vadd.f32 %v2174, %v2906
      %v2908 = vpop.f32.mrf.mxu0
      %v2909 = vadd.f32 %v2174, %v2908
      %2910 = vmatmul.bf16.gmra.mxu0 %v2080
      %v2911 = vpop.f32.mrf.mxu0
      %v2912 = vadd.f32 %v2174, %v2911
      %v2913 = vpop.f32.mrf.mxu0
      %v2914 = vadd.f32 %v2174, %v2913
      %2915 = vmatmul.bf16.gmra.mxu0 %v2081
      %v2916 = vpop.f32.mrf.mxu0
      %v2917 = vadd.f32 %v2174, %v2916
      %v2918 = vpop.f32.mrf.mxu0
      %v2919 = vadd.f32 %v2174, %v2918
      %2920 = vmatmul.bf16.gmra.mxu0 %v2082
      %v2921 = vpop.f32.mrf.mxu0
      %v2922 = vadd.f32 %v2174, %v2921
      %v2923 = vpop.f32.mrf.mxu0
      %v2924 = vadd.f32 %v2174, %v2923
      %2925 = vmatmul.bf16.gmra.mxu0 %v2083
      %v2926 = vpop.f32.mrf.mxu0
      %v2927 = vadd.f32 %v2174, %v2926
      %v2928 = vpop.f32.mrf.mxu0
      %v2929 = vadd.f32 %v2174, %v2928
      %2930 = vdwg.mxu0
      %2931 = vmatpush.bf16.msra.mxu0 %v2505
      %2932 = vmatpush.bf16.msra.mxu0 %v2495
      %2933 = vmatpush.bf16.msra.mxu0 %v2485
      %2934 = vmatpush.bf16.msra.mxu0 %v2475
      %2935 = vmatpush.bf16.msra.mxu0 %v2465
      %2936 = vmatpush.bf16.msra.mxu0 %v2455
      %2937 = vmatpush.bf16.msra.mxu0 %v2445
      %2938 = vmatpush.bf16.msra.mxu0 %v2435
      %2939 = vmatmul.bf16.gmra.mxu0 %v2076
      %v2940 = vpop.f32.mrf.mxu0
      %v2941 = vadd.f32 %v2175, %v2940
      %v2942 = vpop.f32.mrf.mxu0
      %v2943 = vadd.f32 %v2175, %v2942
      %2944 = vmatmul.bf16.gmra.mxu0 %v2077
      %v2945 = vpop.f32.mrf.mxu0
      %v2946 = vadd.f32 %v2175, %v2945
      %v2947 = vpop.f32.mrf.mxu0
      %v2948 = vadd.f32 %v2175, %v2947
      %2949 = vmatmul.bf16.gmra.mxu0 %v2078
      %v2950 = vpop.f32.mrf.mxu0
      %v2951 = vadd.f32 %v2175, %v2950
      %v2952 = vpop.f32.mrf.mxu0
      %v2953 = vadd.f32 %v2175, %v2952
      %2954 = vmatmul.bf16.gmra.mxu0 %v2079
      %v2955 = vpop.f32.mrf.mxu0
      %v2956 = vadd.f32 %v2175, %v2955
      %v2957 = vpop.f32.mrf.mxu0
      %v2958 = vadd.f32 %v2175, %v2957
      %2959 = vmatmul.bf16.gmra.mxu0 %v2080
      %v2960 = vpop.f32.mrf.mxu0
      %v2961 = vadd.f32 %v2175, %v2960
      %v2962 = vpop.f32.mrf.mxu0
      %v2963 = vadd.f32 %v2175, %v2962
      %2964 = vmatmul.bf16.gmra.mxu0 %v2081
      %v2965 = vpop.f32.mrf.mxu0
      %v2966 = vadd.f32 %v2175, %v2965
      %v2967 = vpop.f32.mrf.mxu0
      %v2968 = vadd.f32 %v2175, %v2967
      %2969 = vmatmul.bf16.gmra.mxu0 %v2082
      %v2970 = vpop.f32.mrf.mxu0
      %v2971 = vadd.f32 %v2175, %v2970
      %v2972 = vpop.f32.mrf.mxu0
      %v2973 = vadd.f32 %v2175, %v2972
      %2974 = vmatmul.bf16.gmra.mxu0 %v2083
      %v2975 = vpop.f32.mrf.mxu0
      %v2976 = vadd.f32 %v2175, %v2975
      %v2977 = vpop.f32.mrf.mxu0
      %v2978 = vadd.f32 %v2175, %v2977
      %2979 = vdwg.mxu0
      %2980 = vmatpush.bf16.msra.mxu0 %v2506
      %2981 = vmatpush.bf16.msra.mxu0 %v2496
      %2982 = vmatpush.bf16.msra.mxu0 %v2486
      %2983 = vmatpush.bf16.msra.mxu0 %v2476
      %2984 = vmatpush.bf16.msra.mxu0 %v2466
      %2985 = vmatpush.bf16.msra.mxu0 %v2456
      %2986 = vmatpush.bf16.msra.mxu0 %v2446
      %2987 = vmatpush.bf16.msra.mxu0 %v2436
      %2988 = vmatmul.bf16.gmra.mxu0 %v2076
      %v2989 = vpop.f32.mrf.mxu0
      %v2990 = vadd.f32 %v2176, %v2989
      %v2991 = vpop.f32.mrf.mxu0
      %v2992 = vadd.f32 %v2176, %v2991
      %2993 = vmatmul.bf16.gmra.mxu0 %v2077
      %v2994 = vpop.f32.mrf.mxu0
      %v2995 = vadd.f32 %v2176, %v2994
      %v2996 = vpop.f32.mrf.mxu0
      %v2997 = vadd.f32 %v2176, %v2996
      %2998 = vmatmul.bf16.gmra.mxu0 %v2078
      %v2999 = vpop.f32.mrf.mxu0
      %v3000 = vadd.f32 %v2176, %v2999
      %v3001 = vpop.f32.mrf.mxu0
      %v3002 = vadd.f32 %v2176, %v3001
      %3003 = vmatmul.bf16.gmra.mxu0 %v2079
      %v3004 = vpop.f32.mrf.mxu0
      %v3005 = vadd.f32 %v2176, %v3004
      %v3006 = vpop.f32.mrf.mxu0
      %v3007 = vadd.f32 %v2176, %v3006
      %3008 = vmatmul.bf16.gmra.mxu0 %v2080
      %v3009 = vpop.f32.mrf.mxu0
      %v3010 = vadd.f32 %v2176, %v3009
      %v3011 = vpop.f32.mrf.mxu0
      %v3012 = vadd.f32 %v2176, %v3011
      %3013 = vmatmul.bf16.gmra.mxu0 %v2081
      %v3014 = vpop.f32.mrf.mxu0
      %v3015 = vadd.f32 %v2176, %v3014
      %v3016 = vpop.f32.mrf.mxu0
      %v3017 = vadd.f32 %v2176, %v3016
      %3018 = vmatmul.bf16.gmra.mxu0 %v2082
      %v3019 = vpop.f32.mrf.mxu0
      %v3020 = vadd.f32 %v2176, %v3019
      %v3021 = vpop.f32.mrf.mxu0
      %v3022 = vadd.f32 %v2176, %v3021
      %3023 = vmatmul.bf16.gmra.mxu0 %v2083
      %v3024 = vpop.f32.mrf.mxu0
      %v3025 = vadd.f32 %v2176, %v3024
      %v3026 = vpop.f32.mrf.mxu0
      %v3027 = vadd.f32 %v2176, %v3026
      %3028 = vdwg.mxu0
      %3029 = vmatpush.bf16.msra.mxu0 %v2507
      %3030 = vmatpush.bf16.msra.mxu0 %v2497
      %3031 = vmatpush.bf16.msra.mxu0 %v2487
      %3032 = vmatpush.bf16.msra.mxu0 %v2477
      %3033 = vmatpush.bf16.msra.mxu0 %v2467
      %3034 = vmatpush.bf16.msra.mxu0 %v2457
      %3035 = vmatpush.bf16.msra.mxu0 %v2447
      %3036 = vmatpush.bf16.msra.mxu0 %v2437
      %3037 = vmatmul.bf16.gmra.mxu0 %v2076
      %v3038 = vpop.f32.mrf.mxu0
      %v3039 = vadd.f32 %v2177, %v3038
      %v3040 = vpop.f32.mrf.mxu0
      %v3041 = vadd.f32 %v2177, %v3040
      %3042 = vmatmul.bf16.gmra.mxu0 %v2077
      %v3043 = vpop.f32.mrf.mxu0
      %v3044 = vadd.f32 %v2177, %v3043
      %v3045 = vpop.f32.mrf.mxu0
      %v3046 = vadd.f32 %v2177, %v3045
      %3047 = vmatmul.bf16.gmra.mxu0 %v2078
      %v3048 = vpop.f32.mrf.mxu0
      %v3049 = vadd.f32 %v2177, %v3048
      %v3050 = vpop.f32.mrf.mxu0
      %v3051 = vadd.f32 %v2177, %v3050
      %3052 = vmatmul.bf16.gmra.mxu0 %v2079
      %v3053 = vpop.f32.mrf.mxu0
      %v3054 = vadd.f32 %v2177, %v3053
      %v3055 = vpop.f32.mrf.mxu0
      %v3056 = vadd.f32 %v2177, %v3055
      %3057 = vmatmul.bf16.gmra.mxu0 %v2080
      %v3058 = vpop.f32.mrf.mxu0
      %v3059 = vadd.f32 %v2177, %v3058
      %v3060 = vpop.f32.mrf.mxu0
      %v3061 = vadd.f32 %v2177, %v3060
      %3062 = vmatmul.bf16.gmra.mxu0 %v2081
      %v3063 = vpop.f32.mrf.mxu0
      %v3064 = vadd.f32 %v2177, %v3063
      %v3065 = vpop.f32.mrf.mxu0
      %v3066 = vadd.f32 %v2177, %v3065
      %3067 = vmatmul.bf16.gmra.mxu0 %v2082
      %v3068 = vpop.f32.mrf.mxu0
      %v3069 = vadd.f32 %v2177, %v3068
      %v3070 = vpop.f32.mrf.mxu0
      %v3071 = vadd.f32 %v2177, %v3070
      %3072 = vmatmul.bf16.gmra.mxu0 %v2083
      %v3073 = vpop.f32.mrf.mxu0
      %v3074 = vadd.f32 %v2177, %v3073
      %v3075 = vpop.f32.mrf.mxu0
      %v3076 = vadd.f32 %v2177, %v3075
      %3077 = vdwg.mxu0
      %v3078 = vmul.f32 %v2598, 0.01
      %v3079 = vmul.f32 %v2647, 0.01
      %v3080 = vmul.f32 %v2696, 0.01
      %v3081 = vmul.f32 %v2745, 0.01
      %v3082 = vmul.f32 %v2794, 0.01
      %v3083 = vmul.f32 %v2843, 0.01
      %v3084 = vmul.f32 %v2892, 0.01
      %v3085 = vmul.f32 %v2941, 0.01
      %v3086 = vmul.f32 %v2990, 0.01
      %v3087 = vmul.f32 %v3039, 0.01
      %v3088 = vmul.f32 %v2600, 0.01
      %v3089 = vmul.f32 %v2649, 0.01
      %v3090 = vmul.f32 %v2698, 0.01
      %v3091 = vmul.f32 %v2747, 0.01
      %v3092 = vmul.f32 %v2796, 0.01
      %v3093 = vmul.f32 %v2845, 0.01
      %v3094 = vmul.f32 %v2894, 0.01
      %v3095 = vmul.f32 %v2943, 0.01
      %v3096 = vmul.f32 %v2992, 0.01
      %v3097 = vmul.f32 %v3041, 0.01
      %v3098 = vmul.f32 %v2603, 0.01
      %v3099 = vmul.f32 %v2652, 0.01
      %v3100 = vmul.f32 %v2701, 0.01
      %v3101 = vmul.f32 %v2750, 0.01
      %v3102 = vmul.f32 %v2799, 0.01
      %v3103 = vmul.f32 %v2848, 0.01
      %v3104 = vmul.f32 %v2897, 0.01
      %v3105 = vmul.f32 %v2946, 0.01
      %v3106 = vmul.f32 %v2995, 0.01
      %v3107 = vmul.f32 %v3044, 0.01
      %v3108 = vmul.f32 %v2605, 0.01
      %v3109 = vmul.f32 %v2654, 0.01
      %v3110 = vmul.f32 %v2703, 0.01
      %v3111 = vmul.f32 %v2752, 0.01
      %v3112 = vmul.f32 %v2801, 0.01
      %v3113 = vmul.f32 %v2850, 0.01
      %v3114 = vmul.f32 %v2899, 0.01
      %v3115 = vmul.f32 %v2948, 0.01
      %v3116 = vmul.f32 %v2997, 0.01
      %v3117 = vmul.f32 %v3046, 0.01
      %v3118 = vmul.f32 %v2608, 0.01
      %v3119 = vmul.f32 %v2657, 0.01
      %v3120 = vmul.f32 %v2706, 0.01
      %v3121 = vmul.f32 %v2755, 0.01
      %v3122 = vmul.f32 %v2804, 0.01
      %v3123 = vmul.f32 %v2853, 0.01
      %v3124 = vmul.f32 %v2902, 0.01
      %v3125 = vmul.f32 %v2951, 0.01
      %v3126 = vmul.f32 %v3000, 0.01
      %v3127 = vmul.f32 %v3049, 0.01
      %v3128 = vmul.f32 %v2610, 0.01
      %v3129 = vmul.f32 %v2659, 0.01
      %v3130 = vmul.f32 %v2708, 0.01
      %v3131 = vmul.f32 %v2757, 0.01
      %v3132 = vmul.f32 %v2806, 0.01
      %v3133 = vmul.f32 %v2855, 0.01
      %v3134 = vmul.f32 %v2904, 0.01
      %v3135 = vmul.f32 %v2953, 0.01
      %v3136 = vmul.f32 %v3002, 0.01
      %v3137 = vmul.f32 %v3051, 0.01
      %v3138 = vmul.f32 %v2613, 0.01
      %v3139 = vmul.f32 %v2662, 0.01
      %v3140 = vmul.f32 %v2711, 0.01
      %v3141 = vmul.f32 %v2760, 0.01
      %v3142 = vmul.f32 %v2809, 0.01
      %v3143 = vmul.f32 %v2858, 0.01
      %v3144 = vmul.f32 %v2907, 0.01
      %v3145 = vmul.f32 %v2956, 0.01
      %v3146 = vmul.f32 %v3005, 0.01
      %v3147 = vmul.f32 %v3054, 0.01
      %v3148 = vmul.f32 %v2615, 0.01
      %v3149 = vmul.f32 %v2664, 0.01
      %v3150 = vmul.f32 %v2713, 0.01
      %v3151 = vmul.f32 %v2762, 0.01
      %v3152 = vmul.f32 %v2811, 0.01
      %v3153 = vmul.f32 %v2860, 0.01
      %v3154 = vmul.f32 %v2909, 0.01
      %v3155 = vmul.f32 %v2958, 0.01
      %v3156 = vmul.f32 %v3007, 0.01
      %v3157 = vmul.f32 %v3056, 0.01
      %v3158 = vmul.f32 %v2618, 0.01
      %v3159 = vmul.f32 %v2667, 0.01
      %v3160 = vmul.f32 %v2716, 0.01
      %v3161 = vmul.f32 %v2765, 0.01
      %v3162 = vmul.f32 %v2814, 0.01
      %v3163 = vmul.f32 %v2863, 0.01
      %v3164 = vmul.f32 %v2912, 0.01
      %v3165 = vmul.f32 %v2961, 0.01
      %v3166 = vmul.f32 %v3010, 0.01
      %v3167 = vmul.f32 %v3059, 0.01
      %v3168 = vmul.f32 %v2620, 0.01
      %v3169 = vmul.f32 %v2669, 0.01
      %v3170 = vmul.f32 %v2718, 0.01
      %v3171 = vmul.f32 %v2767, 0.01
      %v3172 = vmul.f32 %v2816, 0.01
      %v3173 = vmul.f32 %v2865, 0.01
      %v3174 = vmul.f32 %v2914, 0.01
      %v3175 = vmul.f32 %v2963, 0.01
      %v3176 = vmul.f32 %v3012, 0.01
      %v3177 = vmul.f32 %v3061, 0.01
      %v3178 = vmul.f32 %v2623, 0.01
      %v3179 = vmul.f32 %v2672, 0.01
      %v3180 = vmul.f32 %v2721, 0.01
      %v3181 = vmul.f32 %v2770, 0.01
      %v3182 = vmul.f32 %v2819, 0.01
      %v3183 = vmul.f32 %v2868, 0.01
      %v3184 = vmul.f32 %v2917, 0.01
      %v3185 = vmul.f32 %v2966, 0.01
      %v3186 = vmul.f32 %v3015, 0.01
      %v3187 = vmul.f32 %v3064, 0.01
      %v3188 = vmul.f32 %v2625, 0.01
      %v3189 = vmul.f32 %v2674, 0.01
      %v3190 = vmul.f32 %v2723, 0.01
      %v3191 = vmul.f32 %v2772, 0.01
      %v3192 = vmul.f32 %v2821, 0.01
      %v3193 = vmul.f32 %v2870, 0.01
      %v3194 = vmul.f32 %v2919, 0.01
      %v3195 = vmul.f32 %v2968, 0.01
      %v3196 = vmul.f32 %v3017, 0.01
      %v3197 = vmul.f32 %v3066, 0.01
      %v3198 = vmul.f32 %v2628, 0.01
      %v3199 = vmul.f32 %v2677, 0.01
      %v3200 = vmul.f32 %v2726, 0.01
      %v3201 = vmul.f32 %v2775, 0.01
      %v3202 = vmul.f32 %v2824, 0.01
      %v3203 = vmul.f32 %v2873, 0.01
      %v3204 = vmul.f32 %v2922, 0.01
      %v3205 = vmul.f32 %v2971, 0.01
      %v3206 = vmul.f32 %v3020, 0.01
      %v3207 = vmul.f32 %v3069, 0.01
      %v3208 = vmul.f32 %v2630, 0.01
      %v3209 = vmul.f32 %v2679, 0.01
      %v3210 = vmul.f32 %v2728, 0.01
      %v3211 = vmul.f32 %v2777, 0.01
      %v3212 = vmul.f32 %v2826, 0.01
      %v3213 = vmul.f32 %v2875, 0.01
      %v3214 = vmul.f32 %v2924, 0.01
      %v3215 = vmul.f32 %v2973, 0.01
      %v3216 = vmul.f32 %v3022, 0.01
      %v3217 = vmul.f32 %v3071, 0.01
      %v3218 = vmul.f32 %v2633, 0.01
      %v3219 = vmul.f32 %v2682, 0.01
      %v3220 = vmul.f32 %v2731, 0.01
      %v3221 = vmul.f32 %v2780, 0.01
      %v3222 = vmul.f32 %v2829, 0.01
      %v3223 = vmul.f32 %v2878, 0.01
      %v3224 = vmul.f32 %v2927, 0.01
      %v3225 = vmul.f32 %v2976, 0.01
      %v3226 = vmul.f32 %v3025, 0.01
      %v3227 = vmul.f32 %v3074, 0.01
      %v3228 = vmul.f32 %v2635, 0.01
      %v3229 = vmul.f32 %v2684, 0.01
      %v3230 = vmul.f32 %v2733, 0.01
      %v3231 = vmul.f32 %v2782, 0.01
      %v3232 = vmul.f32 %v2831, 0.01
      %v3233 = vmul.f32 %v2880, 0.01
      %v3234 = vmul.f32 %v2929, 0.01
      %v3235 = vmul.f32 %v2978, 0.01
      %v3236 = vmul.f32 %v3027, 0.01
      %v3237 = vmul.f32 %v3076, 0.01
      %v3238 = vmax.f32 %v2598, %v3078
      %v3239 = vmax.f32 %v2647, %v3079
      %v3240 = vmax.f32 %v2696, %v3080
      %v3241 = vmax.f32 %v2745, %v3081
      %v3242 = vmax.f32 %v2794, %v3082
      %v3243 = vmax.f32 %v2843, %v3083
      %v3244 = vmax.f32 %v2892, %v3084
      %v3245 = vmax.f32 %v2941, %v3085
      %v3246 = vmax.f32 %v2990, %v3086
      %v3247 = vmax.f32 %v3039, %v3087
      %v3248 = vmax.f32 %v2600, %v3088
      %v3249 = vmax.f32 %v2649, %v3089
      %v3250 = vmax.f32 %v2698, %v3090
      %v3251 = vmax.f32 %v2747, %v3091
      %v3252 = vmax.f32 %v2796, %v3092
      %v3253 = vmax.f32 %v2845, %v3093
      %v3254 = vmax.f32 %v2894, %v3094
      %v3255 = vmax.f32 %v2943, %v3095
      %v3256 = vmax.f32 %v2992, %v3096
      %v3257 = vmax.f32 %v3041, %v3097
      %v3258 = vmax.f32 %v2603, %v3098
      %v3259 = vmax.f32 %v2652, %v3099
      %v3260 = vmax.f32 %v2701, %v3100
      %v3261 = vmax.f32 %v2750, %v3101
      %v3262 = vmax.f32 %v2799, %v3102
      %v3263 = vmax.f32 %v2848, %v3103
      %v3264 = vmax.f32 %v2897, %v3104
      %v3265 = vmax.f32 %v2946, %v3105
      %v3266 = vmax.f32 %v2995, %v3106
      %v3267 = vmax.f32 %v3044, %v3107
      %v3268 = vmax.f32 %v2605, %v3108
      %v3269 = vmax.f32 %v2654, %v3109
      %v3270 = vmax.f32 %v2703, %v3110
      %v3271 = vmax.f32 %v2752, %v3111
      %v3272 = vmax.f32 %v2801, %v3112
      %v3273 = vmax.f32 %v2850, %v3113
      %v3274 = vmax.f32 %v2899, %v3114
      %v3275 = vmax.f32 %v2948, %v3115
      %v3276 = vmax.f32 %v2997, %v3116
      %v3277 = vmax.f32 %v3046, %v3117
      %v3278 = vmax.f32 %v2608, %v3118
      %v3279 = vmax.f32 %v2657, %v3119
      %v3280 = vmax.f32 %v2706, %v3120
      %v3281 = vmax.f32 %v2755, %v3121
      %v3282 = vmax.f32 %v2804, %v3122
      %v3283 = vmax.f32 %v2853, %v3123
      %v3284 = vmax.f32 %v2902, %v3124
      %v3285 = vmax.f32 %v2951, %v3125
      %v3286 = vmax.f32 %v3000, %v3126
      %v3287 = vmax.f32 %v3049, %v3127
      %v3288 = vmax.f32 %v2610, %v3128
      %v3289 = vmax.f32 %v2659, %v3129
      %v3290 = vmax.f32 %v2708, %v3130
      %v3291 = vmax.f32 %v2757, %v3131
      %v3292 = vmax.f32 %v2806, %v3132
      %v3293 = vmax.f32 %v2855, %v3133
      %v3294 = vmax.f32 %v2904, %v3134
      %v3295 = vmax.f32 %v2953, %v3135
      %v3296 = vmax.f32 %v3002, %v3136
      %v3297 = vmax.f32 %v3051, %v3137
      %v3298 = vmax.f32 %v2613, %v3138
      %v3299 = vmax.f32 %v2662, %v3139
      %v3300 = vmax.f32 %v2711, %v3140
      %v3301 = vmax.f32 %v2760, %v3141
      %v3302 = vmax.f32 %v2809, %v3142
      %v3303 = vmax.f32 %v2858, %v3143
      %v3304 = vmax.f32 %v2907, %v3144
      %v3305 = vmax.f32 %v2956, %v3145
      %v3306 = vmax.f32 %v3005, %v3146
      %v3307 = vmax.f32 %v3054, %v3147
      %v3308 = vmax.f32 %v2615, %v3148
      %v3309 = vmax.f32 %v2664, %v3149
      %v3310 = vmax.f32 %v2713, %v3150
      %v3311 = vmax.f32 %v2762, %v3151
      %v3312 = vmax.f32 %v2811, %v3152
      %v3313 = vmax.f32 %v2860, %v3153
      %v3314 = vmax.f32 %v2909, %v3154
      %v3315 = vmax.f32 %v2958, %v3155
      %v3316 = vmax.f32 %v3007, %v3156
      %v3317 = vmax.f32 %v3056, %v3157
      %v3318 = vmax.f32 %v2618, %v3158
      %v3319 = vmax.f32 %v2667, %v3159
      %v3320 = vmax.f32 %v2716, %v3160
      %v3321 = vmax.f32 %v2765, %v3161
      %v3322 = vmax.f32 %v2814, %v3162
      %v3323 = vmax.f32 %v2863, %v3163
      %v3324 = vmax.f32 %v2912, %v3164
      %v3325 = vmax.f32 %v2961, %v3165
      %v3326 = vmax.f32 %v3010, %v3166
      %v3327 = vmax.f32 %v3059, %v3167
      %v3328 = vmax.f32 %v2620, %v3168
      %v3329 = vmax.f32 %v2669, %v3169
      %v3330 = vmax.f32 %v2718, %v3170
      %v3331 = vmax.f32 %v2767, %v3171
      %v3332 = vmax.f32 %v2816, %v3172
      %v3333 = vmax.f32 %v2865, %v3173
      %v3334 = vmax.f32 %v2914, %v3174
      %v3335 = vmax.f32 %v2963, %v3175
      %v3336 = vmax.f32 %v3012, %v3176
      %v3337 = vmax.f32 %v3061, %v3177
      %v3338 = vmax.f32 %v2623, %v3178
      %v3339 = vmax.f32 %v2672, %v3179
      %v3340 = vmax.f32 %v2721, %v3180
      %v3341 = vmax.f32 %v2770, %v3181
      %v3342 = vmax.f32 %v2819, %v3182
      %v3343 = vmax.f32 %v2868, %v3183
      %v3344 = vmax.f32 %v2917, %v3184
      %v3345 = vmax.f32 %v2966, %v3185
      %v3346 = vmax.f32 %v3015, %v3186
      %v3347 = vmax.f32 %v3064, %v3187
      %v3348 = vmax.f32 %v2625, %v3188
      %v3349 = vmax.f32 %v2674, %v3189
      %v3350 = vmax.f32 %v2723, %v3190
      %v3351 = vmax.f32 %v2772, %v3191
      %v3352 = vmax.f32 %v2821, %v3192
      %v3353 = vmax.f32 %v2870, %v3193
      %v3354 = vmax.f32 %v2919, %v3194
      %v3355 = vmax.f32 %v2968, %v3195
      %v3356 = vmax.f32 %v3017, %v3196
      %v3357 = vmax.f32 %v3066, %v3197
      %v3358 = vmax.f32 %v2628, %v3198
      %v3359 = vmax.f32 %v2677, %v3199
      %v3360 = vmax.f32 %v2726, %v3200
      %v3361 = vmax.f32 %v2775, %v3201
      %v3362 = vmax.f32 %v2824, %v3202
      %v3363 = vmax.f32 %v2873, %v3203
      %v3364 = vmax.f32 %v2922, %v3204
      %v3365 = vmax.f32 %v2971, %v3205
      %v3366 = vmax.f32 %v3020, %v3206
      %v3367 = vmax.f32 %v3069, %v3207
      %v3368 = vmax.f32 %v2630, %v3208
      %v3369 = vmax.f32 %v2679, %v3209
      %v3370 = vmax.f32 %v2728, %v3210
      %v3371 = vmax.f32 %v2777, %v3211
      %v3372 = vmax.f32 %v2826, %v3212
      %v3373 = vmax.f32 %v2875, %v3213
      %v3374 = vmax.f32 %v2924, %v3214
      %v3375 = vmax.f32 %v2973, %v3215
      %v3376 = vmax.f32 %v3022, %v3216
      %v3377 = vmax.f32 %v3071, %v3217
      %v3378 = vmax.f32 %v2633, %v3218
      %v3379 = vmax.f32 %v2682, %v3219
      %v3380 = vmax.f32 %v2731, %v3220
      %v3381 = vmax.f32 %v2780, %v3221
      %v3382 = vmax.f32 %v2829, %v3222
      %v3383 = vmax.f32 %v2878, %v3223
      %v3384 = vmax.f32 %v2927, %v3224
      %v3385 = vmax.f32 %v2976, %v3225
      %v3386 = vmax.f32 %v3025, %v3226
      %v3387 = vmax.f32 %v3074, %v3227
      %v3388 = vmax.f32 %v2635, %v3228
      %v3389 = vmax.f32 %v2684, %v3229
      %v3390 = vmax.f32 %v2733, %v3230
      %v3391 = vmax.f32 %v2782, %v3231
      %v3392 = vmax.f32 %v2831, %v3232
      %v3393 = vmax.f32 %v2880, %v3233
      %v3394 = vmax.f32 %v2929, %v3234
      %v3395 = vmax.f32 %v2978, %v3235
      %v3396 = vmax.f32 %v3027, %v3236
      %v3397 = vmax.f32 %v3076, %v3237
      %v3398 = vpack.c.bf16 %v3248, %v3238
      %v3399 = vpack.c.bf16 %v3249, %v3239
      %v3400 = vpack.c.bf16 %v3268, %v3258
      %v3401 = vpack.c.bf16 %v3269, %v3259
      %v3402 = vpack.c.bf16 %v3288, %v3278
      %v3403 = vpack.c.bf16 %v3289, %v3279
      %v3404 = vpack.c.bf16 %v3308, %v3298
      %v3405 = vpack.c.bf16 %v3309, %v3299
      %v3406 = vpack.c.bf16 %v3328, %v3318
      %v3407 = vpack.c.bf16 %v3329, %v3319
      %v3408 = vpack.c.bf16 %v3348, %v3338
      %v3409 = vpack.c.bf16 %v3349, %v3339
      %v3410 = vpack.c.bf16 %v3368, %v3358
      %v3411 = vpack.c.bf16 %v3369, %v3359
      %v3412 = vpack.c.bf16 %v3388, %v3378
      %v3413 = vpack.c.bf16 %v3389, %v3379
      %v3414 = vld [vmem:[%s11] sm:$0xff]
      %v3415 = vld [vmem:[%s11 + $0x8] sm:$0xff]
      %v3416 = vld [vmem:[%s11 + $0x10] sm:$0xff]
      %v3417 = vld [vmem:[%s11 + $0x18] sm:$0xff]
      %v3418 = vld [vmem:[%s11 + $0x20] sm:$0xff]
      %v3419 = vld [vmem:[%s11 + $0x28] sm:$0xff]
      %v3420 = vld [vmem:[%s11 + $0x30] sm:$0xff]
      %v3421 = vld [vmem:[%s11 + $0x38] sm:$0xff]
      %v3422 = vld [vmem:[%s11 + $0x40] sm:$0xff]
      %v3423 = vld [vmem:[%s11 + $0x48] sm:$0xff]
      %v3424 = vld [vmem:[%s11 + $0x50] sm:$0xff]
      %v3425 = vld [vmem:[%s11 + $0x58] sm:$0xff]
      %v3426 = vld [vmem:[%s11 + $0x60] sm:$0xff]
      %v3427 = vld [vmem:[%s11 + $0x68] sm:$0xff]
      %v3428 = vld [vmem:[%s11 + $0x70] sm:$0xff]
      %v3429 = vld [vmem:[%s11 + $0x78] sm:$0xff]
      %v3430 = vld [vmem:[%s11 + $0x80] sm:$0xff]
      %v3431 = vld [vmem:[%s11 + $0x88] sm:$0xff]
      %v3432 = vld [vmem:[%s11 + $0x90] sm:$0xff]
      %v3433 = vld [vmem:[%s11 + $0x98] sm:$0xff]
      %v3434 = vld [vmem:[%s11 + $0xa0] sm:$0xff]
      %v3435 = vld [vmem:[%s11 + $0xa8] sm:$0xff]
      %v3436 = vld [vmem:[%s11 + $0xb0] sm:$0xff]
      %v3437 = vld [vmem:[%s11 + $0xb8] sm:$0xff]
      %v3438 = vld [vmem:[%s11 + $0xc0] sm:$0xff]
      %v3439 = vld [vmem:[%s11 + $0xc8] sm:$0xff]
      %v3440 = vld [vmem:[%s11 + $0xd0] sm:$0xff]
      %v3441 = vld [vmem:[%s11 + $0xd8] sm:$0xff]
      %v3442 = vld [vmem:[%s11 + $0xe0] sm:$0xff]
      %v3443 = vld [vmem:[%s11 + $0xe8] sm:$0xff]
      %v3444 = vld [vmem:[%s11 + $0xf0] sm:$0xff]
      %v3445 = vld [vmem:[%s11 + $0xf8] sm:$0xff]
      %v3446 = vld [vmem:[%s12] sm:$0x3]
      %v3448 = vperm.slane %v3446, 0
      %v3449 = vperm.slane %v3446, 1
      %v3484 = vunpack.c.l.b16 %v3414
      %v3485 = vunpack.c.h.b16 %v3414
      %v3486 = vunpack.c.l.b16 %v3415
      %v3487 = vunpack.c.h.b16 %v3415
      %v3488 = vunpack.c.l.b16 %v3416
      %v3489 = vunpack.c.h.b16 %v3416
      %v3490 = vunpack.c.l.b16 %v3417
      %v3491 = vunpack.c.h.b16 %v3417
      %v3492 = vunpack.c.l.b16 %v3418
      %v3493 = vunpack.c.h.b16 %v3418
      %v3494 = vunpack.c.l.b16 %v3419
      %v3495 = vunpack.c.h.b16 %v3419
      %v3496 = vunpack.c.l.b16 %v3420
      %v3497 = vunpack.c.h.b16 %v3420
      %v3498 = vunpack.c.l.b16 %v3421
      %v3499 = vunpack.c.h.b16 %v3421
      %v3500 = vunpack.c.l.b16 %v3422
      %v3501 = vunpack.c.h.b16 %v3422
      %v3502 = vunpack.c.l.b16 %v3423
      %v3503 = vunpack.c.h.b16 %v3423
      %v3504 = vunpack.c.l.b16 %v3424
      %v3505 = vunpack.c.h.b16 %v3424
      %v3506 = vunpack.c.l.b16 %v3425
      %v3507 = vunpack.c.h.b16 %v3425
      %v3508 = vunpack.c.l.b16 %v3426
      %v3509 = vunpack.c.h.b16 %v3426
      %v3510 = vunpack.c.l.b16 %v3427
      %v3511 = vunpack.c.h.b16 %v3427
      %v3512 = vunpack.c.l.b16 %v3428
      %v3513 = vunpack.c.h.b16 %v3428
      %v3514 = vunpack.c.l.b16 %v3429
      %v3515 = vunpack.c.h.b16 %v3429
      %v3516 = vunpack.c.l.b16 %v3430
      %v3517 = vunpack.c.h.b16 %v3430
      %v3518 = vunpack.c.l.b16 %v3431
      %v3519 = vunpack.c.h.b16 %v3431
      %v3520 = vunpack.c.l.b16 %v3432
      %v3521 = vunpack.c.h.b16 %v3432
      %v3522 = vunpack.c.l.b16 %v3433
      %v3523 = vunpack.c.h.b16 %v3433
      %v3524 = vunpack.c.l.b16 %v3434
      %v3525 = vunpack.c.h.b16 %v3434
      %v3526 = vunpack.c.l.b16 %v3435
      %v3527 = vunpack.c.h.b16 %v3435
      %v3528 = vunpack.c.l.b16 %v3436
      %v3529 = vunpack.c.h.b16 %v3436
      %v3530 = vunpack.c.l.b16 %v3437
      %v3531 = vunpack.c.h.b16 %v3437
      %v3532 = vunpack.c.l.b16 %v3438
      %v3533 = vunpack.c.h.b16 %v3438
      %v3534 = vunpack.c.l.b16 %v3439
      %v3535 = vunpack.c.h.b16 %v3439
      %v3536 = vunpack.c.l.b16 %v3440
      %v3537 = vunpack.c.h.b16 %v3440
      %v3538 = vunpack.c.l.b16 %v3441
      %v3539 = vunpack.c.h.b16 %v3441
      %v3540 = vunpack.c.l.b16 %v3442
      %v3541 = vunpack.c.h.b16 %v3442
      %v3542 = vunpack.c.l.b16 %v3443
      %v3543 = vunpack.c.h.b16 %v3443
      %v3544 = vunpack.c.l.b16 %v3444
      %v3545 = vunpack.c.h.b16 %v3444
      %v3546 = vunpack.c.l.b16 %v3445
      %v3547 = vunpack.c.h.b16 %v3445
      %v3548 = vpack.c.b16 %v3486, %v3484
      %v3549 = vpack.c.b16 %v3487, %v3485
      %v3550 = vpack.c.b16 %v3490, %v3488
      %v3551 = vpack.c.b16 %v3491, %v3489
      %v3552 = vpack.c.b16 %v3494, %v3492
      %v3553 = vpack.c.b16 %v3495, %v3493
      %v3554 = vpack.c.b16 %v3498, %v3496
      %v3555 = vpack.c.b16 %v3499, %v3497
      %v3556 = vpack.c.b16 %v3502, %v3500
      %v3557 = vpack.c.b16 %v3503, %v3501
      %v3558 = vpack.c.b16 %v3506, %v3504
      %v3559 = vpack.c.b16 %v3507, %v3505
      %v3560 = vpack.c.b16 %v3510, %v3508
      %v3561 = vpack.c.b16 %v3511, %v3509
      %v3562 = vpack.c.b16 %v3514, %v3512
      %v3563 = vpack.c.b16 %v3515, %v3513
      %v3564 = vpack.c.b16 %v3518, %v3516
      %v3565 = vpack.c.b16 %v3519, %v3517
      %v3566 = vpack.c.b16 %v3522, %v3520
      %v3567 = vpack.c.b16 %v3523, %v3521
      %v3568 = vpack.c.b16 %v3526, %v3524
      %v3569 = vpack.c.b16 %v3527, %v3525
      %v3570 = vpack.c.b16 %v3530, %v3528
      %v3571 = vpack.c.b16 %v3531, %v3529
      %v3572 = vpack.c.b16 %v3534, %v3532
      %v3573 = vpack.c.b16 %v3535, %v3533
      %v3574 = vpack.c.b16 %v3538, %v3536
      %v3575 = vpack.c.b16 %v3539, %v3537
      %v3576 = vpack.c.b16 %v3542, %v3540
      %v3577 = vpack.c.b16 %v3543, %v3541
      %v3578 = vpack.c.b16 %v3546, %v3544
      %v3579 = vpack.c.b16 %v3547, %v3545
      %3612 = vmatpush.bf16.msra.mxu0 %v3562
      %3613 = vmatpush.bf16.msra.mxu0 %v3560
      %3614 = vmatpush.bf16.msra.mxu0 %v3558
      %3615 = vmatpush.bf16.msra.mxu0 %v3556
      %3616 = vmatpush.bf16.msra.mxu0 %v3554
      %3617 = vmatpush.bf16.msra.mxu0 %v3552
      %3618 = vmatpush.bf16.msra.mxu0 %v3550
      %3619 = vmatpush.bf16.msra.mxu0 %v3548
      %3620 = vmatmul.bf16.gmra.mxu0 %v3398
      %v3621 = vpop.f32.mrf.mxu0
      %v3622 = vadd.f32 %v3448, %v3621
      %v3623 = vpop.f32.mrf.mxu0
      %v3624 = vadd.f32 %v3448, %v3623
      %3625 = vmatmul.bf16.gmra.mxu0 %v3400
      %v3626 = vpop.f32.mrf.mxu0
      %v3627 = vadd.f32 %v3448, %v3626
      %v3628 = vpop.f32.mrf.mxu0
      %v3629 = vadd.f32 %v3448, %v3628
      %3630 = vmatmul.bf16.gmra.mxu0 %v3402
      %v3631 = vpop.f32.mrf.mxu0
      %v3632 = vadd.f32 %v3448, %v3631
      %v3633 = vpop.f32.mrf.mxu0
      %v3634 = vadd.f32 %v3448, %v3633
      %3635 = vmatmul.bf16.gmra.mxu0 %v3404
      %v3636 = vpop.f32.mrf.mxu0
      %v3637 = vadd.f32 %v3448, %v3636
      %v3638 = vpop.f32.mrf.mxu0
      %v3639 = vadd.f32 %v3448, %v3638
      %3640 = vmatmul.bf16.gmra.mxu0 %v3406
      %v3641 = vpop.f32.mrf.mxu0
      %v3642 = vadd.f32 %v3448, %v3641
      %v3643 = vpop.f32.mrf.mxu0
      %v3644 = vadd.f32 %v3448, %v3643
      %3645 = vmatmul.bf16.gmra.mxu0 %v3408
      %v3646 = vpop.f32.mrf.mxu0
      %v3647 = vadd.f32 %v3448, %v3646
      %v3648 = vpop.f32.mrf.mxu0
      %v3649 = vadd.f32 %v3448, %v3648
      %3650 = vmatmul.bf16.gmra.mxu0 %v3410
      %v3651 = vpop.f32.mrf.mxu0
      %v3652 = vadd.f32 %v3448, %v3651
      %v3653 = vpop.f32.mrf.mxu0
      %v3654 = vadd.f32 %v3448, %v3653
      %3655 = vmatmul.bf16.gmra.mxu0 %v3412
      %v3656 = vpop.f32.mrf.mxu0
      %v3657 = vadd.f32 %v3448, %v3656
      %v3658 = vpop.f32.mrf.mxu0
      %v3659 = vadd.f32 %v3448, %v3658
      %3660 = vdwg.mxu0
      %3661 = vmatpush.bf16.msra.mxu0 %v3578
      %3662 = vmatpush.bf16.msra.mxu0 %v3576
      %3663 = vmatpush.bf16.msra.mxu0 %v3574
      %3664 = vmatpush.bf16.msra.mxu0 %v3572
      %3665 = vmatpush.bf16.msra.mxu0 %v3570
      %3666 = vmatpush.bf16.msra.mxu0 %v3568
      %3667 = vmatpush.bf16.msra.mxu0 %v3566
      %3668 = vmatpush.bf16.msra.mxu0 %v3564
      %3669 = vmatmul.bf16.gmra.mxu0 %v3399
      %v3670 = vpop.f32.mrf.mxu0
      %v3671 = vadd.f32 %v3622, %v3670
      %v3672 = vpop.f32.mrf.mxu0
      %v3673 = vadd.f32 %v3624, %v3672
      %3674 = vmatmul.bf16.gmra.mxu0 %v3401
      %v3675 = vpop.f32.mrf.mxu0
      %v3676 = vadd.f32 %v3627, %v3675
      %v3677 = vpop.f32.mrf.mxu0
      %v3678 = vadd.f32 %v3629, %v3677
      %3679 = vmatmul.bf16.gmra.mxu0 %v3403
      %v3680 = vpop.f32.mrf.mxu0
      %v3681 = vadd.f32 %v3632, %v3680
      %v3682 = vpop.f32.mrf.mxu0
      %v3683 = vadd.f32 %v3634, %v3682
      %3684 = vmatmul.bf16.gmra.mxu0 %v3405
      %v3685 = vpop.f32.mrf.mxu0
      %v3686 = vadd.f32 %v3637, %v3685
      %v3687 = vpop.f32.mrf.mxu0
      %v3688 = vadd.f32 %v3639, %v3687
      %3689 = vmatmul.bf16.gmra.mxu0 %v3407
      %v3690 = vpop.f32.mrf.mxu0
      %v3691 = vadd.f32 %v3642, %v3690
      %v3692 = vpop.f32.mrf.mxu0
      %v3693 = vadd.f32 %v3644, %v3692
      %3694 = vmatmul.bf16.gmra.mxu0 %v3409
      %v3695 = vpop.f32.mrf.mxu0
      %v3696 = vadd.f32 %v3647, %v3695
      %v3697 = vpop.f32.mrf.mxu0
      %v3698 = vadd.f32 %v3649, %v3697
      %3699 = vmatmul.bf16.gmra.mxu0 %v3411
      %v3700 = vpop.f32.mrf.mxu0
      %v3701 = vadd.f32 %v3652, %v3700
      %v3702 = vpop.f32.mrf.mxu0
      %v3703 = vadd.f32 %v3654, %v3702
      %3704 = vmatmul.bf16.gmra.mxu0 %v3413
      %v3705 = vpop.f32.mrf.mxu0
      %v3706 = vadd.f32 %v3657, %v3705
      %v3707 = vpop.f32.mrf.mxu0
      %v3708 = vadd.f32 %v3659, %v3707
      %3709 = vdwg.mxu0
      %3710 = vmatpush.bf16.msra.mxu0 %v3563
      %3711 = vmatpush.bf16.msra.mxu0 %v3561
      %3712 = vmatpush.bf16.msra.mxu0 %v3559
      %3713 = vmatpush.bf16.msra.mxu0 %v3557
      %3714 = vmatpush.bf16.msra.mxu0 %v3555
      %3715 = vmatpush.bf16.msra.mxu0 %v3553
      %3716 = vmatpush.bf16.msra.mxu0 %v3551
      %3717 = vmatpush.bf16.msra.mxu0 %v3549
      %3718 = vmatmul.bf16.gmra.mxu0 %v3398
      %v3719 = vpop.f32.mrf.mxu0
      %v3720 = vadd.f32 %v3449, %v3719
      %v3721 = vpop.f32.mrf.mxu0
      %v3722 = vadd.f32 %v3449, %v3721
      %3723 = vmatmul.bf16.gmra.mxu0 %v3400
      %v3724 = vpop.f32.mrf.mxu0
      %v3725 = vadd.f32 %v3449, %v3724
      %v3726 = vpop.f32.mrf.mxu0
      %v3727 = vadd.f32 %v3449, %v3726
      %3728 = vmatmul.bf16.gmra.mxu0 %v3402
      %v3729 = vpop.f32.mrf.mxu0
      %v3730 = vadd.f32 %v3449, %v3729
      %v3731 = vpop.f32.mrf.mxu0
      %v3732 = vadd.f32 %v3449, %v3731
      %3733 = vmatmul.bf16.gmra.mxu0 %v3404
      %v3734 = vpop.f32.mrf.mxu0
      %v3735 = vadd.f32 %v3449, %v3734
      %v3736 = vpop.f32.mrf.mxu0
      %v3737 = vadd.f32 %v3449, %v3736
      %3738 = vmatmul.bf16.gmra.mxu0 %v3406
      %v3739 = vpop.f32.mrf.mxu0
      %v3740 = vadd.f32 %v3449, %v3739
      %v3741 = vpop.f32.mrf.mxu0
      %v3742 = vadd.f32 %v3449, %v3741
      %3743 = vmatmul.bf16.gmra.mxu0 %v3408
      %v3744 = vpop.f32.mrf.mxu0
      %v3745 = vadd.f32 %v3449, %v3744
      %v3746 = vpop.f32.mrf.mxu0
      %v3747 = vadd.f32 %v3449, %v3746
      %3748 = vmatmul.bf16.gmra.mxu0 %v3410
      %v3749 = vpop.f32.mrf.mxu0
      %v3750 = vadd.f32 %v3449, %v3749
      %v3751 = vpop.f32.mrf.mxu0
      %v3752 = vadd.f32 %v3449, %v3751
      %3753 = vmatmul.bf16.gmra.mxu0 %v3412
      %v3754 = vpop.f32.mrf.mxu0
      %v3755 = vadd.f32 %v3449, %v3754
      %v3756 = vpop.f32.mrf.mxu0
      %v3757 = vadd.f32 %v3449, %v3756
      %3758 = vdwg.mxu0
      %3759 = vmatpush.bf16.msra.mxu0 %v3579
      %3760 = vmatpush.bf16.msra.mxu0 %v3577
      %3761 = vmatpush.bf16.msra.mxu0 %v3575
      %3762 = vmatpush.bf16.msra.mxu0 %v3573
      %3763 = vmatpush.bf16.msra.mxu0 %v3571
      %3764 = vmatpush.bf16.msra.mxu0 %v3569
      %3765 = vmatpush.bf16.msra.mxu0 %v3567
      %3766 = vmatpush.bf16.msra.mxu0 %v3565
      %3767 = vmatmul.bf16.gmra.mxu0 %v3399
      %v3768 = vpop.f32.mrf.mxu0
      %v3769 = vadd.f32 %v3720, %v3768
      %v3770 = vpop.f32.mrf.mxu0
      %v3771 = vadd.f32 %v3722, %v3770
      %3772 = vmatmul.bf16.gmra.mxu0 %v3401
      %v3773 = vpop.f32.mrf.mxu0
      %v3774 = vadd.f32 %v3725, %v3773
      %v3775 = vpop.f32.mrf.mxu0
      %v3776 = vadd.f32 %v3727, %v3775
      %3777 = vmatmul.bf16.gmra.mxu0 %v3403
      %v3778 = vpop.f32.mrf.mxu0
      %v3779 = vadd.f32 %v3730, %v3778
      %v3780 = vpop.f32.mrf.mxu0
      %v3781 = vadd.f32 %v3732, %v3780
      %3782 = vmatmul.bf16.gmra.mxu0 %v3405
      %v3783 = vpop.f32.mrf.mxu0
      %v3784 = vadd.f32 %v3735, %v3783
      %v3785 = vpop.f32.mrf.mxu0
      %v3786 = vadd.f32 %v3737, %v3785
      %3787 = vmatmul.bf16.gmra.mxu0 %v3407
      %v3788 = vpop.f32.mrf.mxu0
      %v3789 = vadd.f32 %v3740, %v3788
      %v3790 = vpop.f32.mrf.mxu0
      %v3791 = vadd.f32 %v3742, %v3790
      %3792 = vmatmul.bf16.gmra.mxu0 %v3409
      %v3793 = vpop.f32.mrf.mxu0
      %v3794 = vadd.f32 %v3745, %v3793
      %v3795 = vpop.f32.mrf.mxu0
      %v3796 = vadd.f32 %v3747, %v3795
      %3797 = vmatmul.bf16.gmra.mxu0 %v3411
      %v3798 = vpop.f32.mrf.mxu0
      %v3799 = vadd.f32 %v3750, %v3798
      %v3800 = vpop.f32.mrf.mxu0
      %v3801 = vadd.f32 %v3752, %v3800
      %3802 = vmatmul.bf16.gmra.mxu0 %v3413
      %v3803 = vpop.f32.mrf.mxu0
      %v3804 = vadd.f32 %v3755, %v3803
      %v3805 = vpop.f32.mrf.mxu0
      %v3806 = vadd.f32 %v3757, %v3805
      %3807 = vdwg.mxu0
      %v3808 = vmul.f32 %v3671, 0.01
      %v3809 = vmul.f32 %v3769, 0.01
      %v3810 = vmul.f32 %v3673, 0.01
      %v3811 = vmul.f32 %v3771, 0.01
      %v3812 = vmul.f32 %v3676, 0.01
      %v3813 = vmul.f32 %v3774, 0.01
      %v3814 = vmul.f32 %v3678, 0.01
      %v3815 = vmul.f32 %v3776, 0.01
      %v3816 = vmul.f32 %v3681, 0.01
      %v3817 = vmul.f32 %v3779, 0.01
      %v3818 = vmul.f32 %v3683, 0.01
      %v3819 = vmul.f32 %v3781, 0.01
      %v3820 = vmul.f32 %v3686, 0.01
      %v3821 = vmul.f32 %v3784, 0.01
      %v3822 = vmul.f32 %v3688, 0.01
      %v3823 = vmul.f32 %v3786, 0.01
      %v3824 = vmul.f32 %v3691, 0.01
      %v3825 = vmul.f32 %v3789, 0.01
      %v3826 = vmul.f32 %v3693, 0.01
      %v3827 = vmul.f32 %v3791, 0.01
      %v3828 = vmul.f32 %v3696, 0.01
      %v3829 = vmul.f32 %v3794, 0.01
      %v3830 = vmul.f32 %v3698, 0.01
      %v3831 = vmul.f32 %v3796, 0.01
      %v3832 = vmul.f32 %v3701, 0.01
      %v3833 = vmul.f32 %v3799, 0.01
      %v3834 = vmul.f32 %v3703, 0.01
      %v3835 = vmul.f32 %v3801, 0.01
      %v3836 = vmul.f32 %v3706, 0.01
      %v3837 = vmul.f32 %v3804, 0.01
      %v3838 = vmul.f32 %v3708, 0.01
      %v3839 = vmul.f32 %v3806, 0.01
      %v3840 = vmax.f32 %v3671, %v3808
      %v3841 = vmax.f32 %v3769, %v3809
      %v3842 = vmax.f32 %v3673, %v3810
      %v3843 = vmax.f32 %v3771, %v3811
      %v3844 = vmax.f32 %v3676, %v3812
      %v3845 = vmax.f32 %v3774, %v3813
      %v3846 = vmax.f32 %v3678, %v3814
      %v3847 = vmax.f32 %v3776, %v3815
      %v3848 = vmax.f32 %v3681, %v3816
      %v3849 = vmax.f32 %v3779, %v3817
      %v3850 = vmax.f32 %v3683, %v3818
      %v3851 = vmax.f32 %v3781, %v3819
      %v3852 = vmax.f32 %v3686, %v3820
      %v3853 = vmax.f32 %v3784, %v3821
      %v3854 = vmax.f32 %v3688, %v3822
      %v3855 = vmax.f32 %v3786, %v3823
      %v3856 = vmax.f32 %v3691, %v3824
      %v3857 = vmax.f32 %v3789, %v3825
      %v3858 = vmax.f32 %v3693, %v3826
      %v3859 = vmax.f32 %v3791, %v3827
      %v3860 = vmax.f32 %v3696, %v3828
      %v3861 = vmax.f32 %v3794, %v3829
      %v3862 = vmax.f32 %v3698, %v3830
      %v3863 = vmax.f32 %v3796, %v3831
      %v3864 = vmax.f32 %v3701, %v3832
      %v3865 = vmax.f32 %v3799, %v3833
      %v3866 = vmax.f32 %v3703, %v3834
      %v3867 = vmax.f32 %v3801, %v3835
      %v3868 = vmax.f32 %v3706, %v3836
      %v3869 = vmax.f32 %v3804, %v3837
      %v3870 = vmax.f32 %v3708, %v3838
      %v3871 = vmax.f32 %v3806, %v3839
      %v3872 = vadd.f32 %v3238, %v3840
      %v3873 = vadd.f32 %v3239, %v3841
      %v3874 = vadd.f32 %v3248, %v3842
      %v3875 = vadd.f32 %v3249, %v3843
      %v3876 = vadd.f32 %v3258, %v3844
      %v3877 = vadd.f32 %v3259, %v3845
      %v3878 = vadd.f32 %v3268, %v3846
      %v3879 = vadd.f32 %v3269, %v3847
      %v3880 = vadd.f32 %v3278, %v3848
      %v3881 = vadd.f32 %v3279, %v3849
      %v3882 = vadd.f32 %v3288, %v3850
      %v3883 = vadd.f32 %v3289, %v3851
      %v3884 = vadd.f32 %v3298, %v3852
      %v3885 = vadd.f32 %v3299, %v3853
      %v3886 = vadd.f32 %v3308, %v3854
      %v3887 = vadd.f32 %v3309, %v3855
      %v3888 = vadd.f32 %v3318, %v3856
      %v3889 = vadd.f32 %v3319, %v3857
      %v3890 = vadd.f32 %v3328, %v3858
      %v3891 = vadd.f32 %v3329, %v3859
      %v3892 = vadd.f32 %v3338, %v3860
      %v3893 = vadd.f32 %v3339, %v3861
      %v3894 = vadd.f32 %v3348, %v3862
      %v3895 = vadd.f32 %v3349, %v3863
      %v3896 = vadd.f32 %v3358, %v3864
      %v3897 = vadd.f32 %v3359, %v3865
      %v3898 = vadd.f32 %v3368, %v3866
      %v3899 = vadd.f32 %v3369, %v3867
      %v3900 = vadd.f32 %v3378, %v3868
      %v3901 = vadd.f32 %v3379, %v3869
      %v3902 = vadd.f32 %v3388, %v3870
      %v3903 = vadd.f32 %v3389, %v3871
      %v3904 = vpack.c.bf16 %v3874, %v3872
      %v3905 = vpack.c.bf16 %v3875, %v3873
      %v3906 = vpack.c.bf16 %v3878, %v3876
      %v3907 = vpack.c.bf16 %v3879, %v3877
      %v3908 = vpack.c.bf16 %v3882, %v3880
      %v3909 = vpack.c.bf16 %v3883, %v3881
      %v3910 = vpack.c.bf16 %v3886, %v3884
      %v3911 = vpack.c.bf16 %v3887, %v3885
      %v3912 = vpack.c.bf16 %v3890, %v3888
      %v3913 = vpack.c.bf16 %v3891, %v3889
      %v3914 = vpack.c.bf16 %v3894, %v3892
      %v3915 = vpack.c.bf16 %v3895, %v3893
      %v3916 = vpack.c.bf16 %v3898, %v3896
      %v3917 = vpack.c.bf16 %v3899, %v3897
      %v3918 = vpack.c.bf16 %v3902, %v3900
      %v3919 = vpack.c.bf16 %v3903, %v3901
      %v3920 = vld [vmem:[%s13] sm:$0xff]
      %v3921 = vld [vmem:[%s13 + $0x8] sm:$0xff]
      %v3922 = vld [vmem:[%s13 + $0x10] sm:$0xff]
      %v3923 = vld [vmem:[%s13 + $0x18] sm:$0xff]
      %v3924 = vld [vmem:[%s13 + $0x20] sm:$0xff]
      %v3925 = vld [vmem:[%s13 + $0x28] sm:$0xff]
      %v3926 = vld [vmem:[%s13 + $0x30] sm:$0xff]
      %v3927 = vld [vmem:[%s13 + $0x38] sm:$0xff]
      %v3928 = vld [vmem:[%s13 + $0x40] sm:$0xff]
      %v3929 = vld [vmem:[%s13 + $0x48] sm:$0xff]
      %v3930 = vld [vmem:[%s13 + $0x50] sm:$0xff]
      %v3931 = vld [vmem:[%s13 + $0x58] sm:$0xff]
      %v3932 = vld [vmem:[%s13 + $0x60] sm:$0xff]
      %v3933 = vld [vmem:[%s13 + $0x68] sm:$0xff]
      %v3934 = vld [vmem:[%s13 + $0x70] sm:$0xff]
      %v3935 = vld [vmem:[%s13 + $0x78] sm:$0xff]
      %v3936 = vld [vmem:[%s13 + $0x80] sm:$0xff]
      %v3937 = vld [vmem:[%s13 + $0x88] sm:$0xff]
      %v3938 = vld [vmem:[%s13 + $0x90] sm:$0xff]
      %v3939 = vld [vmem:[%s13 + $0x98] sm:$0xff]
      %v3940 = vld [vmem:[%s13 + $0xa0] sm:$0xff]
      %v3941 = vld [vmem:[%s13 + $0xa8] sm:$0xff]
      %v3942 = vld [vmem:[%s13 + $0xb0] sm:$0xff]
      %v3943 = vld [vmem:[%s13 + $0xb8] sm:$0xff]
      %v3944 = vld [vmem:[%s13 + $0xc0] sm:$0xff]
      %v3945 = vld [vmem:[%s13 + $0xc8] sm:$0xff]
      %v3946 = vld [vmem:[%s13 + $0xd0] sm:$0xff]
      %v3947 = vld [vmem:[%s13 + $0xd8] sm:$0xff]
      %v3948 = vld [vmem:[%s13 + $0xe0] sm:$0xff]
      %v3949 = vld [vmem:[%s13 + $0xe8] sm:$0xff]
      %v3950 = vld [vmem:[%s13 + $0xf0] sm:$0xff]
      %v3951 = vld [vmem:[%s13 + $0xf8] sm:$0xff]
      %v3952 = vld [vmem:[%s14] sm:$0x3]
      %v3954 = vperm.slane %v3952, 0
      %v3955 = vperm.slane %v3952, 1
      %v3990 = vunpack.c.l.b16 %v3920
      %v3991 = vunpack.c.h.b16 %v3920
      %v3992 = vunpack.c.l.b16 %v3921
      %v3993 = vunpack.c.h.b16 %v3921
      %v3994 = vunpack.c.l.b16 %v3922
      %v3995 = vunpack.c.h.b16 %v3922
      %v3996 = vunpack.c.l.b16 %v3923
      %v3997 = vunpack.c.h.b16 %v3923
      %v3998 = vunpack.c.l.b16 %v3924
      %v3999 = vunpack.c.h.b16 %v3924
      %v4000 = vunpack.c.l.b16 %v3925
      %v4001 = vunpack.c.h.b16 %v3925
      %v4002 = vunpack.c.l.b16 %v3926
      %v4003 = vunpack.c.h.b16 %v3926
      %v4004 = vunpack.c.l.b16 %v3927
      %v4005 = vunpack.c.h.b16 %v3927
      %v4006 = vunpack.c.l.b16 %v3928
      %v4007 = vunpack.c.h.b16 %v3928
      %v4008 = vunpack.c.l.b16 %v3929
      %v4009 = vunpack.c.h.b16 %v3929
      %v4010 = vunpack.c.l.b16 %v3930
      %v4011 = vunpack.c.h.b16 %v3930
      %v4012 = vunpack.c.l.b16 %v3931
      %v4013 = vunpack.c.h.b16 %v3931
      %v4014 = vunpack.c.l.b16 %v3932
      %v4015 = vunpack.c.h.b16 %v3932
      %v4016 = vunpack.c.l.b16 %v3933
      %v4017 = vunpack.c.h.b16 %v3933
      %v4018 = vunpack.c.l.b16 %v3934
      %v4019 = vunpack.c.h.b16 %v3934
      %v4020 = vunpack.c.l.b16 %v3935
      %v4021 = vunpack.c.h.b16 %v3935
      %v4022 = vunpack.c.l.b16 %v3936
      %v4023 = vunpack.c.h.b16 %v3936
      %v4024 = vunpack.c.l.b16 %v3937
      %v4025 = vunpack.c.h.b16 %v3937
      %v4026 = vunpack.c.l.b16 %v3938
      %v4027 = vunpack.c.h.b16 %v3938
      %v4028 = vunpack.c.l.b16 %v3939
      %v4029 = vunpack.c.h.b16 %v3939
      %v4030 = vunpack.c.l.b16 %v3940
      %v4031 = vunpack.c.h.b16 %v3940
      %v4032 = vunpack.c.l.b16 %v3941
      %v4033 = vunpack.c.h.b16 %v3941
      %v4034 = vunpack.c.l.b16 %v3942
      %v4035 = vunpack.c.h.b16 %v3942
      %v4036 = vunpack.c.l.b16 %v3943
      %v4037 = vunpack.c.h.b16 %v3943
      %v4038 = vunpack.c.l.b16 %v3944
      %v4039 = vunpack.c.h.b16 %v3944
      %v4040 = vunpack.c.l.b16 %v3945
      %v4041 = vunpack.c.h.b16 %v3945
      %v4042 = vunpack.c.l.b16 %v3946
      %v4043 = vunpack.c.h.b16 %v3946
      %v4044 = vunpack.c.l.b16 %v3947
      %v4045 = vunpack.c.h.b16 %v3947
      %v4046 = vunpack.c.l.b16 %v3948
      %v4047 = vunpack.c.h.b16 %v3948
      %v4048 = vunpack.c.l.b16 %v3949
      %v4049 = vunpack.c.h.b16 %v3949
      %v4050 = vunpack.c.l.b16 %v3950
      %v4051 = vunpack.c.h.b16 %v3950
      %v4052 = vunpack.c.l.b16 %v3951
      %v4053 = vunpack.c.h.b16 %v3951
      %v4054 = vpack.c.b16 %v3992, %v3990
      %v4055 = vpack.c.b16 %v3993, %v3991
      %v4056 = vpack.c.b16 %v3996, %v3994
      %v4057 = vpack.c.b16 %v3997, %v3995
      %v4058 = vpack.c.b16 %v4000, %v3998
      %v4059 = vpack.c.b16 %v4001, %v3999
      %v4060 = vpack.c.b16 %v4004, %v4002
      %v4061 = vpack.c.b16 %v4005, %v4003
      %v4062 = vpack.c.b16 %v4008, %v4006
      %v4063 = vpack.c.b16 %v4009, %v4007
      %v4064 = vpack.c.b16 %v4012, %v4010
      %v4065 = vpack.c.b16 %v4013, %v4011
      %v4066 = vpack.c.b16 %v4016, %v4014
      %v4067 = vpack.c.b16 %v4017, %v4015
      %v4068 = vpack.c.b16 %v4020, %v4018
      %v4069 = vpack.c.b16 %v4021, %v4019
      %v4070 = vpack.c.b16 %v4024, %v4022
      %v4071 = vpack.c.b16 %v4025, %v4023
      %v4072 = vpack.c.b16 %v4028, %v4026
      %v4073 = vpack.c.b16 %v4029, %v4027
      %v4074 = vpack.c.b16 %v4032, %v4030
      %v4075 = vpack.c.b16 %v4033, %v4031
      %v4076 = vpack.c.b16 %v4036, %v4034
      %v4077 = vpack.c.b16 %v4037, %v4035
      %v4078 = vpack.c.b16 %v4040, %v4038
      %v4079 = vpack.c.b16 %v4041, %v4039
      %v4080 = vpack.c.b16 %v4044, %v4042
      %v4081 = vpack.c.b16 %v4045, %v4043
      %v4082 = vpack.c.b16 %v4048, %v4046
      %v4083 = vpack.c.b16 %v4049, %v4047
      %v4084 = vpack.c.b16 %v4052, %v4050
      %v4085 = vpack.c.b16 %v4053, %v4051
      %4118 = vmatpush.bf16.msra.mxu0 %v4068
      %4119 = vmatpush.bf16.msra.mxu0 %v4066
      %4120 = vmatpush.bf16.msra.mxu0 %v4064
      %4121 = vmatpush.bf16.msra.mxu0 %v4062
      %4122 = vmatpush.bf16.msra.mxu0 %v4060
      %4123 = vmatpush.bf16.msra.mxu0 %v4058
      %4124 = vmatpush.bf16.msra.mxu0 %v4056
      %4125 = vmatpush.bf16.msra.mxu0 %v4054
      %4126 = vmatmul.bf16.gmra.mxu0 %v3904
      %v4127 = vpop.f32.mrf.mxu0
      %v4128 = vadd.f32 %v3954, %v4127
      %v4129 = vpop.f32.mrf.mxu0
      %v4130 = vadd.f32 %v3954, %v4129
      %4131 = vmatmul.bf16.gmra.mxu0 %v3906
      %v4132 = vpop.f32.mrf.mxu0
      %v4133 = vadd.f32 %v3954, %v4132
      %v4134 = vpop.f32.mrf.mxu0
      %v4135 = vadd.f32 %v3954, %v4134
      %4136 = vmatmul.bf16.gmra.mxu0 %v3908
      %v4137 = vpop.f32.mrf.mxu0
      %v4138 = vadd.f32 %v3954, %v4137
      %v4139 = vpop.f32.mrf.mxu0
      %v4140 = vadd.f32 %v3954, %v4139
      %4141 = vmatmul.bf16.gmra.mxu0 %v3910
      %v4142 = vpop.f32.mrf.mxu0
      %v4143 = vadd.f32 %v3954, %v4142
      %v4144 = vpop.f32.mrf.mxu0
      %v4145 = vadd.f32 %v3954, %v4144
      %4146 = vmatmul.bf16.gmra.mxu0 %v3912
      %v4147 = vpop.f32.mrf.mxu0
      %v4148 = vadd.f32 %v3954, %v4147
      %v4149 = vpop.f32.mrf.mxu0
      %v4150 = vadd.f32 %v3954, %v4149
      %4151 = vmatmul.bf16.gmra.mxu0 %v3914
      %v4152 = vpop.f32.mrf.mxu0
      %v4153 = vadd.f32 %v3954, %v4152
      %v4154 = vpop.f32.mrf.mxu0
      %v4155 = vadd.f32 %v3954, %v4154
      %4156 = vmatmul.bf16.gmra.mxu0 %v3916
      %v4157 = vpop.f32.mrf.mxu0
      %v4158 = vadd.f32 %v3954, %v4157
      %v4159 = vpop.f32.mrf.mxu0
      %v4160 = vadd.f32 %v3954, %v4159
      %4161 = vmatmul.bf16.gmra.mxu0 %v3918
      %v4162 = vpop.f32.mrf.mxu0
      %v4163 = vadd.f32 %v3954, %v4162
      %v4164 = vpop.f32.mrf.mxu0
      %v4165 = vadd.f32 %v3954, %v4164
      %4166 = vdwg.mxu0
      %4167 = vmatpush.bf16.msra.mxu0 %v4084
      %4168 = vmatpush.bf16.msra.mxu0 %v4082
      %4169 = vmatpush.bf16.msra.mxu0 %v4080
      %4170 = vmatpush.bf16.msra.mxu0 %v4078
      %4171 = vmatpush.bf16.msra.mxu0 %v4076
      %4172 = vmatpush.bf16.msra.mxu0 %v4074
      %4173 = vmatpush.bf16.msra.mxu0 %v4072
      %4174 = vmatpush.bf16.msra.mxu0 %v4070
      %4175 = vmatmul.bf16.gmra.mxu0 %v3905
      %v4176 = vpop.f32.mrf.mxu0
      %v4177 = vadd.f32 %v4128, %v4176
      %v4178 = vpop.f32.mrf.mxu0
      %v4179 = vadd.f32 %v4130, %v4178
      %4180 = vmatmul.bf16.gmra.mxu0 %v3907
      %v4181 = vpop.f32.mrf.mxu0
      %v4182 = vadd.f32 %v4133, %v4181
      %v4183 = vpop.f32.mrf.mxu0
      %v4184 = vadd.f32 %v4135, %v4183
      %4185 = vmatmul.bf16.gmra.mxu0 %v3909
      %v4186 = vpop.f32.mrf.mxu0
      %v4187 = vadd.f32 %v4138, %v4186
      %v4188 = vpop.f32.mrf.mxu0
      %v4189 = vadd.f32 %v4140, %v4188
      %4190 = vmatmul.bf16.gmra.mxu0 %v3911
      %v4191 = vpop.f32.mrf.mxu0
      %v4192 = vadd.f32 %v4143, %v4191
      %v4193 = vpop.f32.mrf.mxu0
      %v4194 = vadd.f32 %v4145, %v4193
      %4195 = vmatmul.bf16.gmra.mxu0 %v3913
      %v4196 = vpop.f32.mrf.mxu0
      %v4197 = vadd.f32 %v4148, %v4196
      %v4198 = vpop.f32.mrf.mxu0
      %v4199 = vadd.f32 %v4150, %v4198
      %4200 = vmatmul.bf16.gmra.mxu0 %v3915
      %v4201 = vpop.f32.mrf.mxu0
      %v4202 = vadd.f32 %v4153, %v4201
      %v4203 = vpop.f32.mrf.mxu0
      %v4204 = vadd.f32 %v4155, %v4203
      %4205 = vmatmul.bf16.gmra.mxu0 %v3917
      %v4206 = vpop.f32.mrf.mxu0
      %v4207 = vadd.f32 %v4158, %v4206
      %v4208 = vpop.f32.mrf.mxu0
      %v4209 = vadd.f32 %v4160, %v4208
      %4210 = vmatmul.bf16.gmra.mxu0 %v3919
      %v4211 = vpop.f32.mrf.mxu0
      %v4212 = vadd.f32 %v4163, %v4211
      %v4213 = vpop.f32.mrf.mxu0
      %v4214 = vadd.f32 %v4165, %v4213
      %4215 = vdwg.mxu0
      %4216 = vmatpush.bf16.msra.mxu0 %v4069
      %4217 = vmatpush.bf16.msra.mxu0 %v4067
      %4218 = vmatpush.bf16.msra.mxu0 %v4065
      %4219 = vmatpush.bf16.msra.mxu0 %v4063
      %4220 = vmatpush.bf16.msra.mxu0 %v4061
      %4221 = vmatpush.bf16.msra.mxu0 %v4059
      %4222 = vmatpush.bf16.msra.mxu0 %v4057
      %4223 = vmatpush.bf16.msra.mxu0 %v4055
      %4224 = vmatmul.bf16.gmra.mxu0 %v3904
      %v4225 = vpop.f32.mrf.mxu0
      %v4226 = vadd.f32 %v3955, %v4225
      %v4227 = vpop.f32.mrf.mxu0
      %v4228 = vadd.f32 %v3955, %v4227
      %4229 = vmatmul.bf16.gmra.mxu0 %v3906
      %v4230 = vpop.f32.mrf.mxu0
      %v4231 = vadd.f32 %v3955, %v4230
      %v4232 = vpop.f32.mrf.mxu0
      %v4233 = vadd.f32 %v3955, %v4232
      %4234 = vmatmul.bf16.gmra.mxu0 %v3908
      %v4235 = vpop.f32.mrf.mxu0
      %v4236 = vadd.f32 %v3955, %v4235
      %v4237 = vpop.f32.mrf.mxu0
      %v4238 = vadd.f32 %v3955, %v4237
      %4239 = vmatmul.bf16.gmra.mxu0 %v3910
      %v4240 = vpop.f32.mrf.mxu0
      %v4241 = vadd.f32 %v3955, %v4240
      %v4242 = vpop.f32.mrf.mxu0
      %v4243 = vadd.f32 %v3955, %v4242
      %4244 = vmatmul.bf16.gmra.mxu0 %v3912
      %v4245 = vpop.f32.mrf.mxu0
      %v4246 = vadd.f32 %v3955, %v4245
      %v4247 = vpop.f32.mrf.mxu0
      %v4248 = vadd.f32 %v3955, %v4247
      %4249 = vmatmul.bf16.gmra.mxu0 %v3914
      %v4250 = vpop.f32.mrf.mxu0
      %v4251 = vadd.f32 %v3955, %v4250
      %v4252 = vpop.f32.mrf.mxu0
      %v4253 = vadd.f32 %v3955, %v4252
      %4254 = vmatmul.bf16.gmra.mxu0 %v3916
      %v4255 = vpop.f32.mrf.mxu0
      %v4256 = vadd.f32 %v3955, %v4255
      %v4257 = vpop.f32.mrf.mxu0
      %v4258 = vadd.f32 %v3955, %v4257
      %4259 = vmatmul.bf16.gmra.mxu0 %v3918
      %v4260 = vpop.f32.mrf.mxu0
      %v4261 = vadd.f32 %v3955, %v4260
      %v4262 = vpop.f32.mrf.mxu0
      %v4263 = vadd.f32 %v3955, %v4262
      %4264 = vdwg.mxu0
      %4265 = vmatpush.bf16.msra.mxu0 %v4085
      %4266 = vmatpush.bf16.msra.mxu0 %v4083
      %4267 = vmatpush.bf16.msra.mxu0 %v4081
      %4268 = vmatpush.bf16.msra.mxu0 %v4079
      %4269 = vmatpush.bf16.msra.mxu0 %v4077
      %4270 = vmatpush.bf16.msra.mxu0 %v4075
      %4271 = vmatpush.bf16.msra.mxu0 %v4073
      %4272 = vmatpush.bf16.msra.mxu0 %v4071
      %4273 = vmatmul.bf16.gmra.mxu0 %v3905
      %v4274 = vpop.f32.mrf.mxu0
      %v4275 = vadd.f32 %v4226, %v4274
      %v4276 = vpop.f32.mrf.mxu0
      %v4277 = vadd.f32 %v4228, %v4276
      %4278 = vmatmul.bf16.gmra.mxu0 %v3907
      %v4279 = vpop.f32.mrf.mxu0
      %v4280 = vadd.f32 %v4231, %v4279
      %v4281 = vpop.f32.mrf.mxu0
      %v4282 = vadd.f32 %v4233, %v4281
      %4283 = vmatmul.bf16.gmra.mxu0 %v3909
      %v4284 = vpop.f32.mrf.mxu0
      %v4285 = vadd.f32 %v4236, %v4284
      %v4286 = vpop.f32.mrf.mxu0
      %v4287 = vadd.f32 %v4238, %v4286
      %4288 = vmatmul.bf16.gmra.mxu0 %v3911
      %v4289 = vpop.f32.mrf.mxu0
      %v4290 = vadd.f32 %v4241, %v4289
      %v4291 = vpop.f32.mrf.mxu0
      %v4292 = vadd.f32 %v4243, %v4291
      %4293 = vmatmul.bf16.gmra.mxu0 %v3913
      %v4294 = vpop.f32.mrf.mxu0
      %v4295 = vadd.f32 %v4246, %v4294
      %v4296 = vpop.f32.mrf.mxu0
      %v4297 = vadd.f32 %v4248, %v4296
      %4298 = vmatmul.bf16.gmra.mxu0 %v3915
      %v4299 = vpop.f32.mrf.mxu0
      %v4300 = vadd.f32 %v4251, %v4299
      %v4301 = vpop.f32.mrf.mxu0
      %v4302 = vadd.f32 %v4253, %v4301
      %4303 = vmatmul.bf16.gmra.mxu0 %v3917
      %v4304 = vpop.f32.mrf.mxu0
      %v4305 = vadd.f32 %v4256, %v4304
      %v4306 = vpop.f32.mrf.mxu0
      %v4307 = vadd.f32 %v4258, %v4306
      %4308 = vmatmul.bf16.gmra.mxu0 %v3919
      %v4309 = vpop.f32.mrf.mxu0
      %v4310 = vadd.f32 %v4261, %v4309
      %v4311 = vpop.f32.mrf.mxu0
      %v4312 = vadd.f32 %v4263, %v4311
      %4313 = vdwg.mxu0
      %v4314 = vmul.f32 %v4177, 0.01
      %v4315 = vmul.f32 %v4275, 0.01
      %v4316 = vmul.f32 %v4179, 0.01
      %v4317 = vmul.f32 %v4277, 0.01
      %v4318 = vmul.f32 %v4182, 0.01
      %v4319 = vmul.f32 %v4280, 0.01
      %v4320 = vmul.f32 %v4184, 0.01
      %v4321 = vmul.f32 %v4282, 0.01
      %v4322 = vmul.f32 %v4187, 0.01
      %v4323 = vmul.f32 %v4285, 0.01
      %v4324 = vmul.f32 %v4189, 0.01
      %v4325 = vmul.f32 %v4287, 0.01
      %v4326 = vmul.f32 %v4192, 0.01
      %v4327 = vmul.f32 %v4290, 0.01
      %v4328 = vmul.f32 %v4194, 0.01
      %v4329 = vmul.f32 %v4292, 0.01
      %v4330 = vmul.f32 %v4197, 0.01
      %v4331 = vmul.f32 %v4295, 0.01
      %v4332 = vmul.f32 %v4199, 0.01
      %v4333 = vmul.f32 %v4297, 0.01
      %v4334 = vmul.f32 %v4202, 0.01
      %v4335 = vmul.f32 %v4300, 0.01
      %v4336 = vmul.f32 %v4204, 0.01
      %v4337 = vmul.f32 %v4302, 0.01
      %v4338 = vmul.f32 %v4207, 0.01
      %v4339 = vmul.f32 %v4305, 0.01
      %v4340 = vmul.f32 %v4209, 0.01
      %v4341 = vmul.f32 %v4307, 0.01
      %v4342 = vmul.f32 %v4212, 0.01
      %v4343 = vmul.f32 %v4310, 0.01
      %v4344 = vmul.f32 %v4214, 0.01
      %v4345 = vmul.f32 %v4312, 0.01
      %v4346 = vmax.f32 %v4177, %v4314
      %v4347 = vmax.f32 %v4275, %v4315
      %v4348 = vmax.f32 %v4179, %v4316
      %v4349 = vmax.f32 %v4277, %v4317
      %v4350 = vmax.f32 %v4182, %v4318
      %v4351 = vmax.f32 %v4280, %v4319
      %v4352 = vmax.f32 %v4184, %v4320
      %v4353 = vmax.f32 %v4282, %v4321
      %v4354 = vmax.f32 %v4187, %v4322
      %v4355 = vmax.f32 %v4285, %v4323
      %v4356 = vmax.f32 %v4189, %v4324
      %v4357 = vmax.f32 %v4287, %v4325
      %v4358 = vmax.f32 %v4192, %v4326
      %v4359 = vmax.f32 %v4290, %v4327
      %v4360 = vmax.f32 %v4194, %v4328
      %v4361 = vmax.f32 %v4292, %v4329
      %v4362 = vmax.f32 %v4197, %v4330
      %v4363 = vmax.f32 %v4295, %v4331
      %v4364 = vmax.f32 %v4199, %v4332
      %v4365 = vmax.f32 %v4297, %v4333
      %v4366 = vmax.f32 %v4202, %v4334
      %v4367 = vmax.f32 %v4300, %v4335
      %v4368 = vmax.f32 %v4204, %v4336
      %v4369 = vmax.f32 %v4302, %v4337
      %v4370 = vmax.f32 %v4207, %v4338
      %v4371 = vmax.f32 %v4305, %v4339
      %v4372 = vmax.f32 %v4209, %v4340
      %v4373 = vmax.f32 %v4307, %v4341
      %v4374 = vmax.f32 %v4212, %v4342
      %v4375 = vmax.f32 %v4310, %v4343
      %v4376 = vmax.f32 %v4214, %v4344
      %v4377 = vmax.f32 %v4312, %v4345
      %v4378 = vadd.f32 %v3872, %v4346
      %v4379 = vadd.f32 %v3873, %v4347
      %v4380 = vadd.f32 %v3874, %v4348
      %v4381 = vadd.f32 %v3875, %v4349
      %v4382 = vadd.f32 %v3876, %v4350
      %v4383 = vadd.f32 %v3877, %v4351
      %v4384 = vadd.f32 %v3878, %v4352
      %v4385 = vadd.f32 %v3879, %v4353
      %v4386 = vadd.f32 %v3880, %v4354
      %v4387 = vadd.f32 %v3881, %v4355
      %v4388 = vadd.f32 %v3882, %v4356
      %v4389 = vadd.f32 %v3883, %v4357
      %v4390 = vadd.f32 %v3884, %v4358
      %v4391 = vadd.f32 %v3885, %v4359
      %v4392 = vadd.f32 %v3886, %v4360
      %v4393 = vadd.f32 %v3887, %v4361
      %v4394 = vadd.f32 %v3888, %v4362
      %v4395 = vadd.f32 %v3889, %v4363
      %v4396 = vadd.f32 %v3890, %v4364
      %v4397 = vadd.f32 %v3891, %v4365
      %v4398 = vadd.f32 %v3892, %v4366
      %v4399 = vadd.f32 %v3893, %v4367
      %v4400 = vadd.f32 %v3894, %v4368
      %v4401 = vadd.f32 %v3895, %v4369
      %v4402 = vadd.f32 %v3896, %v4370
      %v4403 = vadd.f32 %v3897, %v4371
      %v4404 = vadd.f32 %v3898, %v4372
      %v4405 = vadd.f32 %v3899, %v4373
      %v4406 = vadd.f32 %v3900, %v4374
      %v4407 = vadd.f32 %v3901, %v4375
      %v4408 = vadd.f32 %v3902, %v4376
      %v4409 = vadd.f32 %v3903, %v4377
      %v4410 = vpack.c.bf16 %v4379, %v4378
      %v4411 = vpack.c.bf16 %v4381, %v4380
      %v4412 = vpack.c.bf16 %v4383, %v4382
      %v4413 = vpack.c.bf16 %v4385, %v4384
      %v4414 = vpack.c.bf16 %v4387, %v4386
      %v4415 = vpack.c.bf16 %v4389, %v4388
      %v4416 = vpack.c.bf16 %v4391, %v4390
      %v4417 = vpack.c.bf16 %v4393, %v4392
      %v4418 = vpack.c.bf16 %v4395, %v4394
      %v4419 = vpack.c.bf16 %v4397, %v4396
      %v4420 = vpack.c.bf16 %v4399, %v4398
      %v4421 = vpack.c.bf16 %v4401, %v4400
      %v4422 = vpack.c.bf16 %v4403, %v4402
      %v4423 = vpack.c.bf16 %v4405, %v4404
      %v4424 = vpack.c.bf16 %v4407, %v4406
      %v4425 = vpack.c.bf16 %v4409, %v4408
      %v4426 = vpack.c.bf16 %v3250, %v3240
      %v4427 = vpack.c.bf16 %v3251, %v3241
      %v4428 = vpack.c.bf16 %v3270, %v3260
      %v4429 = vpack.c.bf16 %v3271, %v3261
      %v4430 = vpack.c.bf16 %v3290, %v3280
      %v4431 = vpack.c.bf16 %v3291, %v3281
      %v4432 = vpack.c.bf16 %v3310, %v3300
      %v4433 = vpack.c.bf16 %v3311, %v3301
      %v4434 = vpack.c.bf16 %v3330, %v3320
      %v4435 = vpack.c.bf16 %v3331, %v3321
      %v4436 = vpack.c.bf16 %v3350, %v3340
      %v4437 = vpack.c.bf16 %v3351, %v3341
      %v4438 = vpack.c.bf16 %v3370, %v3360
      %v4439 = vpack.c.bf16 %v3371, %v3361
      %v4440 = vpack.c.bf16 %v3390, %v3380
      %v4441 = vpack.c.bf16 %v3391, %v3381
      %s4442 = scalar_lea.vmem %s11, 256
      %v4443 = vld [vmem:[%s4442] sm:$0xff]
      %v4444 = vld [vmem:[%s4442 + $0x8] sm:$0xff]
      %v4445 = vld [vmem:[%s4442 + $0x10] sm:$0xff]
      %v4446 = vld [vmem:[%s4442 + $0x18] sm:$0xff]
      %v4447 = vld [vmem:[%s4442 + $0x20] sm:$0xff]
      %v4448 = vld [vmem:[%s4442 + $0x28] sm:$0xff]
      %v4449 = vld [vmem:[%s4442 + $0x30] sm:$0xff]
      %v4450 = vld [vmem:[%s4442 + $0x38] sm:$0xff]
      %v4451 = vld [vmem:[%s4442 + $0x40] sm:$0xff]
      %v4452 = vld [vmem:[%s4442 + $0x48] sm:$0xff]
      %v4453 = vld [vmem:[%s4442 + $0x50] sm:$0xff]
      %v4454 = vld [vmem:[%s4442 + $0x58] sm:$0xff]
      %v4455 = vld [vmem:[%s4442 + $0x60] sm:$0xff]
      %v4456 = vld [vmem:[%s4442 + $0x68] sm:$0xff]
      %v4457 = vld [vmem:[%s4442 + $0x70] sm:$0xff]
      %v4458 = vld [vmem:[%s4442 + $0x78] sm:$0xff]
      %v4459 = vld [vmem:[%s4442 + $0x80] sm:$0xff]
      %v4460 = vld [vmem:[%s4442 + $0x88] sm:$0xff]
      %v4461 = vld [vmem:[%s4442 + $0x90] sm:$0xff]
      %v4462 = vld [vmem:[%s4442 + $0x98] sm:$0xff]
      %v4463 = vld [vmem:[%s4442 + $0xa0] sm:$0xff]
      %v4464 = vld [vmem:[%s4442 + $0xa8] sm:$0xff]
      %v4465 = vld [vmem:[%s4442 + $0xb0] sm:$0xff]
      %v4466 = vld [vmem:[%s4442 + $0xb8] sm:$0xff]
      %v4467 = vld [vmem:[%s4442 + $0xc0] sm:$0xff]
      %v4468 = vld [vmem:[%s4442 + $0xc8] sm:$0xff]
      %v4469 = vld [vmem:[%s4442 + $0xd0] sm:$0xff]
      %v4470 = vld [vmem:[%s4442 + $0xd8] sm:$0xff]
      %v4471 = vld [vmem:[%s4442 + $0xe0] sm:$0xff]
      %v4472 = vld [vmem:[%s4442 + $0xe8] sm:$0xff]
      %v4473 = vld [vmem:[%s4442 + $0xf0] sm:$0xff]
      %v4474 = vld [vmem:[%s4442 + $0xf8] sm:$0xff]
      %s4475 = scalar_lea.vmem %s12, 2
      %v4476 = vld [vmem:[%s4475] sm:$0x3]
      %v4478 = vperm.slane %v4476, 0
      %v4479 = vperm.slane %v4476, 1
      %v4514 = vunpack.c.l.b16 %v4443
      %v4515 = vunpack.c.h.b16 %v4443
      %v4516 = vunpack.c.l.b16 %v4444
      %v4517 = vunpack.c.h.b16 %v4444
      %v4518 = vunpack.c.l.b16 %v4445
      %v4519 = vunpack.c.h.b16 %v4445
      %v4520 = vunpack.c.l.b16 %v4446
      %v4521 = vunpack.c.h.b16 %v4446
      %v4522 = vunpack.c.l.b16 %v4447
      %v4523 = vunpack.c.h.b16 %v4447
      %v4524 = vunpack.c.l.b16 %v4448
      %v4525 = vunpack.c.h.b16 %v4448
      %v4526 = vunpack.c.l.b16 %v4449
      %v4527 = vunpack.c.h.b16 %v4449
      %v4528 = vunpack.c.l.b16 %v4450
      %v4529 = vunpack.c.h.b16 %v4450
      %v4530 = vunpack.c.l.b16 %v4451
      %v4531 = vunpack.c.h.b16 %v4451
      %v4532 = vunpack.c.l.b16 %v4452
      %v4533 = vunpack.c.h.b16 %v4452
      %v4534 = vunpack.c.l.b16 %v4453
      %v4535 = vunpack.c.h.b16 %v4453
      %v4536 = vunpack.c.l.b16 %v4454
      %v4537 = vunpack.c.h.b16 %v4454
      %v4538 = vunpack.c.l.b16 %v4455
      %v4539 = vunpack.c.h.b16 %v4455
      %v4540 = vunpack.c.l.b16 %v4456
      %v4541 = vunpack.c.h.b16 %v4456
      %v4542 = vunpack.c.l.b16 %v4457
      %v4543 = vunpack.c.h.b16 %v4457
      %v4544 = vunpack.c.l.b16 %v4458
      %v4545 = vunpack.c.h.b16 %v4458
      %v4546 = vunpack.c.l.b16 %v4459
      %v4547 = vunpack.c.h.b16 %v4459
      %v4548 = vunpack.c.l.b16 %v4460
      %v4549 = vunpack.c.h.b16 %v4460
      %v4550 = vunpack.c.l.b16 %v4461
      %v4551 = vunpack.c.h.b16 %v4461
      %v4552 = vunpack.c.l.b16 %v4462
      %v4553 = vunpack.c.h.b16 %v4462
      %v4554 = vunpack.c.l.b16 %v4463
      %v4555 = vunpack.c.h.b16 %v4463
      %v4556 = vunpack.c.l.b16 %v4464
      %v4557 = vunpack.c.h.b16 %v4464
      %v4558 = vunpack.c.l.b16 %v4465
      %v4559 = vunpack.c.h.b16 %v4465
      %v4560 = vunpack.c.l.b16 %v4466
      %v4561 = vunpack.c.h.b16 %v4466
      %v4562 = vunpack.c.l.b16 %v4467
      %v4563 = vunpack.c.h.b16 %v4467
      %v4564 = vunpack.c.l.b16 %v4468
      %v4565 = vunpack.c.h.b16 %v4468
      %v4566 = vunpack.c.l.b16 %v4469
      %v4567 = vunpack.c.h.b16 %v4469
      %v4568 = vunpack.c.l.b16 %v4470
      %v4569 = vunpack.c.h.b16 %v4470
      %v4570 = vunpack.c.l.b16 %v4471
      %v4571 = vunpack.c.h.b16 %v4471
      %v4572 = vunpack.c.l.b16 %v4472
      %v4573 = vunpack.c.h.b16 %v4472
      %v4574 = vunpack.c.l.b16 %v4473
      %v4575 = vunpack.c.h.b16 %v4473
      %v4576 = vunpack.c.l.b16 %v4474
      %v4577 = vunpack.c.h.b16 %v4474
      %v4578 = vpack.c.b16 %v4516, %v4514
      %v4579 = vpack.c.b16 %v4517, %v4515
      %v4580 = vpack.c.b16 %v4520, %v4518
      %v4581 = vpack.c.b16 %v4521, %v4519
      %v4582 = vpack.c.b16 %v4524, %v4522
      %v4583 = vpack.c.b16 %v4525, %v4523
      %v4584 = vpack.c.b16 %v4528, %v4526
      %v4585 = vpack.c.b16 %v4529, %v4527
      %v4586 = vpack.c.b16 %v4532, %v4530
      %v4587 = vpack.c.b16 %v4533, %v4531
      %v4588 = vpack.c.b16 %v4536, %v4534
      %v4589 = vpack.c.b16 %v4537, %v4535
      %v4590 = vpack.c.b16 %v4540, %v4538
      %v4591 = vpack.c.b16 %v4541, %v4539
      %v4592 = vpack.c.b16 %v4544, %v4542
      %v4593 = vpack.c.b16 %v4545, %v4543
      %v4594 = vpack.c.b16 %v4548, %v4546
      %v4595 = vpack.c.b16 %v4549, %v4547
      %v4596 = vpack.c.b16 %v4552, %v4550
      %v4597 = vpack.c.b16 %v4553, %v4551
      %v4598 = vpack.c.b16 %v4556, %v4554
      %v4599 = vpack.c.b16 %v4557, %v4555
      %v4600 = vpack.c.b16 %v4560, %v4558
      %v4601 = vpack.c.b16 %v4561, %v4559
      %v4602 = vpack.c.b16 %v4564, %v4562
      %v4603 = vpack.c.b16 %v4565, %v4563
      %v4604 = vpack.c.b16 %v4568, %v4566
      %v4605 = vpack.c.b16 %v4569, %v4567
      %v4606 = vpack.c.b16 %v4572, %v4570
      %v4607 = vpack.c.b16 %v4573, %v4571
      %v4608 = vpack.c.b16 %v4576, %v4574
      %v4609 = vpack.c.b16 %v4577, %v4575
      %4642 = vmatpush.bf16.msra.mxu0 %v4592
      %4643 = vmatpush.bf16.msra.mxu0 %v4590
      %4644 = vmatpush.bf16.msra.mxu0 %v4588
      %4645 = vmatpush.bf16.msra.mxu0 %v4586
      %4646 = vmatpush.bf16.msra.mxu0 %v4584
      %4647 = vmatpush.bf16.msra.mxu0 %v4582
      %4648 = vmatpush.bf16.msra.mxu0 %v4580
      %4649 = vmatpush.bf16.msra.mxu0 %v4578
      %4650 = vmatmul.bf16.gmra.mxu0 %v4426
      %v4651 = vpop.f32.mrf.mxu0
      %v4652 = vadd.f32 %v4478, %v4651
      %v4653 = vpop.f32.mrf.mxu0
      %v4654 = vadd.f32 %v4478, %v4653
      %4655 = vmatmul.bf16.gmra.mxu0 %v4428
      %v4656 = vpop.f32.mrf.mxu0
      %v4657 = vadd.f32 %v4478, %v4656
      %v4658 = vpop.f32.mrf.mxu0
      %v4659 = vadd.f32 %v4478, %v4658
      %4660 = vmatmul.bf16.gmra.mxu0 %v4430
      %v4661 = vpop.f32.mrf.mxu0
      %v4662 = vadd.f32 %v4478, %v4661
      %v4663 = vpop.f32.mrf.mxu0
      %v4664 = vadd.f32 %v4478, %v4663
      %4665 = vmatmul.bf16.gmra.mxu0 %v4432
      %v4666 = vpop.f32.mrf.mxu0
      %v4667 = vadd.f32 %v4478, %v4666
      %v4668 = vpop.f32.mrf.mxu0
      %v4669 = vadd.f32 %v4478, %v4668
      %4670 = vmatmul.bf16.gmra.mxu0 %v4434
      %v4671 = vpop.f32.mrf.mxu0
      %v4672 = vadd.f32 %v4478, %v4671
      %v4673 = vpop.f32.mrf.mxu0
      %v4674 = vadd.f32 %v4478, %v4673
      %4675 = vmatmul.bf16.gmra.mxu0 %v4436
      %v4676 = vpop.f32.mrf.mxu0
      %v4677 = vadd.f32 %v4478, %v4676
      %v4678 = vpop.f32.mrf.mxu0
      %v4679 = vadd.f32 %v4478, %v4678
      %4680 = vmatmul.bf16.gmra.mxu0 %v4438
      %v4681 = vpop.f32.mrf.mxu0
      %v4682 = vadd.f32 %v4478, %v4681
      %v4683 = vpop.f32.mrf.mxu0
      %v4684 = vadd.f32 %v4478, %v4683
      %4685 = vmatmul.bf16.gmra.mxu0 %v4440
      %v4686 = vpop.f32.mrf.mxu0
      %v4687 = vadd.f32 %v4478, %v4686
      %v4688 = vpop.f32.mrf.mxu0
      %v4689 = vadd.f32 %v4478, %v4688
      %4690 = vdwg.mxu0
      %4691 = vmatpush.bf16.msra.mxu0 %v4608
      %4692 = vmatpush.bf16.msra.mxu0 %v4606
      %4693 = vmatpush.bf16.msra.mxu0 %v4604
      %4694 = vmatpush.bf16.msra.mxu0 %v4602
      %4695 = vmatpush.bf16.msra.mxu0 %v4600
      %4696 = vmatpush.bf16.msra.mxu0 %v4598
      %4697 = vmatpush.bf16.msra.mxu0 %v4596
      %4698 = vmatpush.bf16.msra.mxu0 %v4594
      %4699 = vmatmul.bf16.gmra.mxu0 %v4427
      %v4700 = vpop.f32.mrf.mxu0
      %v4701 = vadd.f32 %v4652, %v4700
      %v4702 = vpop.f32.mrf.mxu0
      %v4703 = vadd.f32 %v4654, %v4702
      %4704 = vmatmul.bf16.gmra.mxu0 %v4429
      %v4705 = vpop.f32.mrf.mxu0
      %v4706 = vadd.f32 %v4657, %v4705
      %v4707 = vpop.f32.mrf.mxu0
      %v4708 = vadd.f32 %v4659, %v4707
      %4709 = vmatmul.bf16.gmra.mxu0 %v4431
      %v4710 = vpop.f32.mrf.mxu0
      %v4711 = vadd.f32 %v4662, %v4710
      %v4712 = vpop.f32.mrf.mxu0
      %v4713 = vadd.f32 %v4664, %v4712
      %4714 = vmatmul.bf16.gmra.mxu0 %v4433
      %v4715 = vpop.f32.mrf.mxu0
      %v4716 = vadd.f32 %v4667, %v4715
      %v4717 = vpop.f32.mrf.mxu0
      %v4718 = vadd.f32 %v4669, %v4717
      %4719 = vmatmul.bf16.gmra.mxu0 %v4435
      %v4720 = vpop.f32.mrf.mxu0
      %v4721 = vadd.f32 %v4672, %v4720
      %v4722 = vpop.f32.mrf.mxu0
      %v4723 = vadd.f32 %v4674, %v4722
      %4724 = vmatmul.bf16.gmra.mxu0 %v4437
      %v4725 = vpop.f32.mrf.mxu0
      %v4726 = vadd.f32 %v4677, %v4725
      %v4727 = vpop.f32.mrf.mxu0
      %v4728 = vadd.f32 %v4679, %v4727
      %4729 = vmatmul.bf16.gmra.mxu0 %v4439
      %v4730 = vpop.f32.mrf.mxu0
      %v4731 = vadd.f32 %v4682, %v4730
      %v4732 = vpop.f32.mrf.mxu0
      %v4733 = vadd.f32 %v4684, %v4732
      %4734 = vmatmul.bf16.gmra.mxu0 %v4441
      %v4735 = vpop.f32.mrf.mxu0
      %v4736 = vadd.f32 %v4687, %v4735
      %v4737 = vpop.f32.mrf.mxu0
      %v4738 = vadd.f32 %v4689, %v4737
      %4739 = vdwg.mxu0
      %4740 = vmatpush.bf16.msra.mxu0 %v4593
      %4741 = vmatpush.bf16.msra.mxu0 %v4591
      %4742 = vmatpush.bf16.msra.mxu0 %v4589
      %4743 = vmatpush.bf16.msra.mxu0 %v4587
      %4744 = vmatpush.bf16.msra.mxu0 %v4585
      %4745 = vmatpush.bf16.msra.mxu0 %v4583
      %4746 = vmatpush.bf16.msra.mxu0 %v4581
      %4747 = vmatpush.bf16.msra.mxu0 %v4579
      %4748 = vmatmul.bf16.gmra.mxu0 %v4426
      %v4749 = vpop.f32.mrf.mxu0
      %v4750 = vadd.f32 %v4479, %v4749
      %v4751 = vpop.f32.mrf.mxu0
      %v4752 = vadd.f32 %v4479, %v4751
      %4753 = vmatmul.bf16.gmra.mxu0 %v4428
      %v4754 = vpop.f32.mrf.mxu0
      %v4755 = vadd.f32 %v4479, %v4754
      %v4756 = vpop.f32.mrf.mxu0
      %v4757 = vadd.f32 %v4479, %v4756
      %4758 = vmatmul.bf16.gmra.mxu0 %v4430
      %v4759 = vpop.f32.mrf.mxu0
      %v4760 = vadd.f32 %v4479, %v4759
      %v4761 = vpop.f32.mrf.mxu0
      %v4762 = vadd.f32 %v4479, %v4761
      %4763 = vmatmul.bf16.gmra.mxu0 %v4432
      %v4764 = vpop.f32.mrf.mxu0
      %v4765 = vadd.f32 %v4479, %v4764
      %v4766 = vpop.f32.mrf.mxu0
      %v4767 = vadd.f32 %v4479, %v4766
      %4768 = vmatmul.bf16.gmra.mxu0 %v4434
      %v4769 = vpop.f32.mrf.mxu0
      %v4770 = vadd.f32 %v4479, %v4769
      %v4771 = vpop.f32.mrf.mxu0
      %v4772 = vadd.f32 %v4479, %v4771
      %4773 = vmatmul.bf16.gmra.mxu0 %v4436
      %v4774 = vpop.f32.mrf.mxu0
      %v4775 = vadd.f32 %v4479, %v4774
      %v4776 = vpop.f32.mrf.mxu0
      %v4777 = vadd.f32 %v4479, %v4776
      %4778 = vmatmul.bf16.gmra.mxu0 %v4438
      %v4779 = vpop.f32.mrf.mxu0
      %v4780 = vadd.f32 %v4479, %v4779
      %v4781 = vpop.f32.mrf.mxu0
      %v4782 = vadd.f32 %v4479, %v4781
      %4783 = vmatmul.bf16.gmra.mxu0 %v4440
      %v4784 = vpop.f32.mrf.mxu0
      %v4785 = vadd.f32 %v4479, %v4784
      %v4786 = vpop.f32.mrf.mxu0
      %v4787 = vadd.f32 %v4479, %v4786
      %4788 = vdwg.mxu0
      %4789 = vmatpush.bf16.msra.mxu0 %v4609
      %4790 = vmatpush.bf16.msra.mxu0 %v4607
      %4791 = vmatpush.bf16.msra.mxu0 %v4605
      %4792 = vmatpush.bf16.msra.mxu0 %v4603
      %4793 = vmatpush.bf16.msra.mxu0 %v4601
      %4794 = vmatpush.bf16.msra.mxu0 %v4599
      %4795 = vmatpush.bf16.msra.mxu0 %v4597
      %4796 = vmatpush.bf16.msra.mxu0 %v4595
      %4797 = vmatmul.bf16.gmra.mxu0 %v4427
      %v4798 = vpop.f32.mrf.mxu0
      %v4799 = vadd.f32 %v4750, %v4798
      %v4800 = vpop.f32.mrf.mxu0
      %v4801 = vadd.f32 %v4752, %v4800
      %4802 = vmatmul.bf16.gmra.mxu0 %v4429
      %v4803 = vpop.f32.mrf.mxu0
      %v4804 = vadd.f32 %v4755, %v4803
      %v4805 = vpop.f32.mrf.mxu0
      %v4806 = vadd.f32 %v4757, %v4805
      %4807 = vmatmul.bf16.gmra.mxu0 %v4431
      %v4808 = vpop.f32.mrf.mxu0
      %v4809 = vadd.f32 %v4760, %v4808
      %v4810 = vpop.f32.mrf.mxu0
      %v4811 = vadd.f32 %v4762, %v4810
      %4812 = vmatmul.bf16.gmra.mxu0 %v4433
      %v4813 = vpop.f32.mrf.mxu0
      %v4814 = vadd.f32 %v4765, %v4813
      %v4815 = vpop.f32.mrf.mxu0
      %v4816 = vadd.f32 %v4767, %v4815
      %4817 = vmatmul.bf16.gmra.mxu0 %v4435
      %v4818 = vpop.f32.mrf.mxu0
      %v4819 = vadd.f32 %v4770, %v4818
      %v4820 = vpop.f32.mrf.mxu0
      %v4821 = vadd.f32 %v4772, %v4820
      %4822 = vmatmul.bf16.gmra.mxu0 %v4437
      %v4823 = vpop.f32.mrf.mxu0
      %v4824 = vadd.f32 %v4775, %v4823
      %v4825 = vpop.f32.mrf.mxu0
      %v4826 = vadd.f32 %v4777, %v4825
      %4827 = vmatmul.bf16.gmra.mxu0 %v4439
      %v4828 = vpop.f32.mrf.mxu0
      %v4829 = vadd.f32 %v4780, %v4828
      %v4830 = vpop.f32.mrf.mxu0
      %v4831 = vadd.f32 %v4782, %v4830
      %4832 = vmatmul.bf16.gmra.mxu0 %v4441
      %v4833 = vpop.f32.mrf.mxu0
      %v4834 = vadd.f32 %v4785, %v4833
      %v4835 = vpop.f32.mrf.mxu0
      %v4836 = vadd.f32 %v4787, %v4835
      %4837 = vdwg.mxu0
      %v4838 = vmul.f32 %v4701, 0.01
      %v4839 = vmul.f32 %v4799, 0.01
      %v4840 = vmul.f32 %v4703, 0.01
      %v4841 = vmul.f32 %v4801, 0.01
      %v4842 = vmul.f32 %v4706, 0.01
      %v4843 = vmul.f32 %v4804, 0.01
      %v4844 = vmul.f32 %v4708, 0.01
      %v4845 = vmul.f32 %v4806, 0.01
      %v4846 = vmul.f32 %v4711, 0.01
      %v4847 = vmul.f32 %v4809, 0.01
      %v4848 = vmul.f32 %v4713, 0.01
      %v4849 = vmul.f32 %v4811, 0.01
      %v4850 = vmul.f32 %v4716, 0.01
      %v4851 = vmul.f32 %v4814, 0.01
      %v4852 = vmul.f32 %v4718, 0.01
      %v4853 = vmul.f32 %v4816, 0.01
      %v4854 = vmul.f32 %v4721, 0.01
      %v4855 = vmul.f32 %v4819, 0.01
      %v4856 = vmul.f32 %v4723, 0.01
      %v4857 = vmul.f32 %v4821, 0.01
      %v4858 = vmul.f32 %v4726, 0.01
      %v4859 = vmul.f32 %v4824, 0.01
      %v4860 = vmul.f32 %v4728, 0.01
      %v4861 = vmul.f32 %v4826, 0.01
      %v4862 = vmul.f32 %v4731, 0.01
      %v4863 = vmul.f32 %v4829, 0.01
      %v4864 = vmul.f32 %v4733, 0.01
      %v4865 = vmul.f32 %v4831, 0.01
      %v4866 = vmul.f32 %v4736, 0.01
      %v4867 = vmul.f32 %v4834, 0.01
      %v4868 = vmul.f32 %v4738, 0.01
      %v4869 = vmul.f32 %v4836, 0.01
      %v4870 = vmax.f32 %v4701, %v4838
      %v4871 = vmax.f32 %v4799, %v4839
      %v4872 = vmax.f32 %v4703, %v4840
      %v4873 = vmax.f32 %v4801, %v4841
      %v4874 = vmax.f32 %v4706, %v4842
      %v4875 = vmax.f32 %v4804, %v4843
      %v4876 = vmax.f32 %v4708, %v4844
      %v4877 = vmax.f32 %v4806, %v4845
      %v4878 = vmax.f32 %v4711, %v4846
      %v4879 = vmax.f32 %v4809, %v4847
      %v4880 = vmax.f32 %v4713, %v4848
      %v4881 = vmax.f32 %v4811, %v4849
      %v4882 = vmax.f32 %v4716, %v4850
      %v4883 = vmax.f32 %v4814, %v4851
      %v4884 = vmax.f32 %v4718, %v4852
      %v4885 = vmax.f32 %v4816, %v4853
      %v4886 = vmax.f32 %v4721, %v4854
      %v4887 = vmax.f32 %v4819, %v4855
      %v4888 = vmax.f32 %v4723, %v4856
      %v4889 = vmax.f32 %v4821, %v4857
      %v4890 = vmax.f32 %v4726, %v4858
      %v4891 = vmax.f32 %v4824, %v4859
      %v4892 = vmax.f32 %v4728, %v4860
      %v4893 = vmax.f32 %v4826, %v4861
      %v4894 = vmax.f32 %v4731, %v4862
      %v4895 = vmax.f32 %v4829, %v4863
      %v4896 = vmax.f32 %v4733, %v4864
      %v4897 = vmax.f32 %v4831, %v4865
      %v4898 = vmax.f32 %v4736, %v4866
      %v4899 = vmax.f32 %v4834, %v4867
      %v4900 = vmax.f32 %v4738, %v4868
      %v4901 = vmax.f32 %v4836, %v4869
      %v4902 = vadd.f32 %v3240, %v4870
      %v4903 = vadd.f32 %v3241, %v4871
      %v4904 = vadd.f32 %v3250, %v4872
      %v4905 = vadd.f32 %v3251, %v4873
      %v4906 = vadd.f32 %v3260, %v4874
      %v4907 = vadd.f32 %v3261, %v4875
      %v4908 = vadd.f32 %v3270, %v4876
      %v4909 = vadd.f32 %v3271, %v4877
      %v4910 = vadd.f32 %v3280, %v4878
      %v4911 = vadd.f32 %v3281, %v4879
      %v4912 = vadd.f32 %v3290, %v4880
      %v4913 = vadd.f32 %v3291, %v4881
      %v4914 = vadd.f32 %v3300, %v4882
      %v4915 = vadd.f32 %v3301, %v4883
      %v4916 = vadd.f32 %v3310, %v4884
      %v4917 = vadd.f32 %v3311, %v4885
      %v4918 = vadd.f32 %v3320, %v4886
      %v4919 = vadd.f32 %v3321, %v4887
      %v4920 = vadd.f32 %v3330, %v4888
      %v4921 = vadd.f32 %v3331, %v4889
      %v4922 = vadd.f32 %v3340, %v4890
      %v4923 = vadd.f32 %v3341, %v4891
      %v4924 = vadd.f32 %v3350, %v4892
      %v4925 = vadd.f32 %v3351, %v4893
      %v4926 = vadd.f32 %v3360, %v4894
      %v4927 = vadd.f32 %v3361, %v4895
      %v4928 = vadd.f32 %v3370, %v4896
      %v4929 = vadd.f32 %v3371, %v4897
      %v4930 = vadd.f32 %v3380, %v4898
      %v4931 = vadd.f32 %v3381, %v4899
      %v4932 = vadd.f32 %v3390, %v4900
      %v4933 = vadd.f32 %v3391, %v4901
      %v4934 = vpack.c.bf16 %v4904, %v4902
      %v4935 = vpack.c.bf16 %v4905, %v4903
      %v4936 = vpack.c.bf16 %v4908, %v4906
      %v4937 = vpack.c.bf16 %v4909, %v4907
      %v4938 = vpack.c.bf16 %v4912, %v4910
      %v4939 = vpack.c.bf16 %v4913, %v4911
      %v4940 = vpack.c.bf16 %v4916, %v4914
      %v4941 = vpack.c.bf16 %v4917, %v4915
      %v4942 = vpack.c.bf16 %v4920, %v4918
      %v4943 = vpack.c.bf16 %v4921, %v4919
      %v4944 = vpack.c.bf16 %v4924, %v4922
      %v4945 = vpack.c.bf16 %v4925, %v4923
      %v4946 = vpack.c.bf16 %v4928, %v4926
      %v4947 = vpack.c.bf16 %v4929, %v4927
      %v4948 = vpack.c.bf16 %v4932, %v4930
      %v4949 = vpack.c.bf16 %v4933, %v4931
      %s4950 = scalar_lea.vmem %s13, 256
      %v4951 = vld [vmem:[%s4950] sm:$0xff]
      %v4952 = vld [vmem:[%s4950 + $0x8] sm:$0xff]
      %v4953 = vld [vmem:[%s4950 + $0x10] sm:$0xff]
      %v4954 = vld [vmem:[%s4950 + $0x18] sm:$0xff]
      %v4955 = vld [vmem:[%s4950 + $0x20] sm:$0xff]
      %v4956 = vld [vmem:[%s4950 + $0x28] sm:$0xff]
      %v4957 = vld [vmem:[%s4950 + $0x30] sm:$0xff]
      %v4958 = vld [vmem:[%s4950 + $0x38] sm:$0xff]
      %v4959 = vld [vmem:[%s4950 + $0x40] sm:$0xff]
      %v4960 = vld [vmem:[%s4950 + $0x48] sm:$0xff]
      %v4961 = vld [vmem:[%s4950 + $0x50] sm:$0xff]
      %v4962 = vld [vmem:[%s4950 + $0x58] sm:$0xff]
      %v4963 = vld [vmem:[%s4950 + $0x60] sm:$0xff]
      %v4964 = vld [vmem:[%s4950 + $0x68] sm:$0xff]
      %v4965 = vld [vmem:[%s4950 + $0x70] sm:$0xff]
      %v4966 = vld [vmem:[%s4950 + $0x78] sm:$0xff]
      %v4967 = vld [vmem:[%s4950 + $0x80] sm:$0xff]
      %v4968 = vld [vmem:[%s4950 + $0x88] sm:$0xff]
      %v4969 = vld [vmem:[%s4950 + $0x90] sm:$0xff]
      %v4970 = vld [vmem:[%s4950 + $0x98] sm:$0xff]
      %v4971 = vld [vmem:[%s4950 + $0xa0] sm:$0xff]
      %v4972 = vld [vmem:[%s4950 + $0xa8] sm:$0xff]
      %v4973 = vld [vmem:[%s4950 + $0xb0] sm:$0xff]
      %v4974 = vld [vmem:[%s4950 + $0xb8] sm:$0xff]
      %v4975 = vld [vmem:[%s4950 + $0xc0] sm:$0xff]
      %v4976 = vld [vmem:[%s4950 + $0xc8] sm:$0xff]
      %v4977 = vld [vmem:[%s4950 + $0xd0] sm:$0xff]
      %v4978 = vld [vmem:[%s4950 + $0xd8] sm:$0xff]
      %v4979 = vld [vmem:[%s4950 + $0xe0] sm:$0xff]
      %v4980 = vld [vmem:[%s4950 + $0xe8] sm:$0xff]
      %v4981 = vld [vmem:[%s4950 + $0xf0] sm:$0xff]
      %v4982 = vld [vmem:[%s4950 + $0xf8] sm:$0xff]
      %s4983 = scalar_lea.vmem %s14, 2
      %v4984 = vld [vmem:[%s4983] sm:$0x3]
      %v4986 = vperm.slane %v4984, 0
      %v4987 = vperm.slane %v4984, 1
      %v5022 = vunpack.c.l.b16 %v4951
      %v5023 = vunpack.c.h.b16 %v4951
      %v5024 = vunpack.c.l.b16 %v4952
      %v5025 = vunpack.c.h.b16 %v4952
      %v5026 = vunpack.c.l.b16 %v4953
      %v5027 = vunpack.c.h.b16 %v4953
      %v5028 = vunpack.c.l.b16 %v4954
      %v5029 = vunpack.c.h.b16 %v4954
      %v5030 = vunpack.c.l.b16 %v4955
      %v5031 = vunpack.c.h.b16 %v4955
      %v5032 = vunpack.c.l.b16 %v4956
      %v5033 = vunpack.c.h.b16 %v4956
      %v5034 = vunpack.c.l.b16 %v4957
      %v5035 = vunpack.c.h.b16 %v4957
      %v5036 = vunpack.c.l.b16 %v4958
      %v5037 = vunpack.c.h.b16 %v4958
      %v5038 = vunpack.c.l.b16 %v4959
      %v5039 = vunpack.c.h.b16 %v4959
      %v5040 = vunpack.c.l.b16 %v4960
      %v5041 = vunpack.c.h.b16 %v4960
      %v5042 = vunpack.c.l.b16 %v4961
      %v5043 = vunpack.c.h.b16 %v4961
      %v5044 = vunpack.c.l.b16 %v4962
      %v5045 = vunpack.c.h.b16 %v4962
      %v5046 = vunpack.c.l.b16 %v4963
      %v5047 = vunpack.c.h.b16 %v4963
      %v5048 = vunpack.c.l.b16 %v4964
      %v5049 = vunpack.c.h.b16 %v4964
      %v5050 = vunpack.c.l.b16 %v4965
      %v5051 = vunpack.c.h.b16 %v4965
      %v5052 = vunpack.c.l.b16 %v4966
      %v5053 = vunpack.c.h.b16 %v4966
      %v5054 = vunpack.c.l.b16 %v4967
      %v5055 = vunpack.c.h.b16 %v4967
      %v5056 = vunpack.c.l.b16 %v4968
      %v5057 = vunpack.c.h.b16 %v4968
      %v5058 = vunpack.c.l.b16 %v4969
      %v5059 = vunpack.c.h.b16 %v4969
      %v5060 = vunpack.c.l.b16 %v4970
      %v5061 = vunpack.c.h.b16 %v4970
      %v5062 = vunpack.c.l.b16 %v4971
      %v5063 = vunpack.c.h.b16 %v4971
      %v5064 = vunpack.c.l.b16 %v4972
      %v5065 = vunpack.c.h.b16 %v4972
      %v5066 = vunpack.c.l.b16 %v4973
      %v5067 = vunpack.c.h.b16 %v4973
      %v5068 = vunpack.c.l.b16 %v4974
      %v5069 = vunpack.c.h.b16 %v4974
      %v5070 = vunpack.c.l.b16 %v4975
      %v5071 = vunpack.c.h.b16 %v4975
      %v5072 = vunpack.c.l.b16 %v4976
      %v5073 = vunpack.c.h.b16 %v4976
      %v5074 = vunpack.c.l.b16 %v4977
      %v5075 = vunpack.c.h.b16 %v4977
      %v5076 = vunpack.c.l.b16 %v4978
      %v5077 = vunpack.c.h.b16 %v4978
      %v5078 = vunpack.c.l.b16 %v4979
      %v5079 = vunpack.c.h.b16 %v4979
      %v5080 = vunpack.c.l.b16 %v4980
      %v5081 = vunpack.c.h.b16 %v4980
      %v5082 = vunpack.c.l.b16 %v4981
      %v5083 = vunpack.c.h.b16 %v4981
      %v5084 = vunpack.c.l.b16 %v4982
      %v5085 = vunpack.c.h.b16 %v4982
      %v5086 = vpack.c.b16 %v5024, %v5022
      %v5087 = vpack.c.b16 %v5025, %v5023
      %v5088 = vpack.c.b16 %v5028, %v5026
      %v5089 = vpack.c.b16 %v5029, %v5027
      %v5090 = vpack.c.b16 %v5032, %v5030
      %v5091 = vpack.c.b16 %v5033, %v5031
      %v5092 = vpack.c.b16 %v5036, %v5034
      %v5093 = vpack.c.b16 %v5037, %v5035
      %v5094 = vpack.c.b16 %v5040, %v5038
      %v5095 = vpack.c.b16 %v5041, %v5039
      %v5096 = vpack.c.b16 %v5044, %v5042
      %v5097 = vpack.c.b16 %v5045, %v5043
      %v5098 = vpack.c.b16 %v5048, %v5046
      %v5099 = vpack.c.b16 %v5049, %v5047
      %v5100 = vpack.c.b16 %v5052, %v5050
      %v5101 = vpack.c.b16 %v5053, %v5051
      %v5102 = vpack.c.b16 %v5056, %v5054
      %v5103 = vpack.c.b16 %v5057, %v5055
      %v5104 = vpack.c.b16 %v5060, %v5058
      %v5105 = vpack.c.b16 %v5061, %v5059
      %v5106 = vpack.c.b16 %v5064, %v5062
      %v5107 = vpack.c.b16 %v5065, %v5063
      %v5108 = vpack.c.b16 %v5068, %v5066
      %v5109 = vpack.c.b16 %v5069, %v5067
      %v5110 = vpack.c.b16 %v5072, %v5070
      %v5111 = vpack.c.b16 %v5073, %v5071
      %v5112 = vpack.c.b16 %v5076, %v5074
      %v5113 = vpack.c.b16 %v5077, %v5075
      %v5114 = vpack.c.b16 %v5080, %v5078
      %v5115 = vpack.c.b16 %v5081, %v5079
      %v5116 = vpack.c.b16 %v5084, %v5082
      %v5117 = vpack.c.b16 %v5085, %v5083
      %5150 = vmatpush.bf16.msra.mxu0 %v5100
      %5151 = vmatpush.bf16.msra.mxu0 %v5098
      %5152 = vmatpush.bf16.msra.mxu0 %v5096
      %5153 = vmatpush.bf16.msra.mxu0 %v5094
      %5154 = vmatpush.bf16.msra.mxu0 %v5092
      %5155 = vmatpush.bf16.msra.mxu0 %v5090
      %5156 = vmatpush.bf16.msra.mxu0 %v5088
      %5157 = vmatpush.bf16.msra.mxu0 %v5086
      %5158 = vmatmul.bf16.gmra.mxu0 %v4934
      %v5159 = vpop.f32.mrf.mxu0
      %v5160 = vadd.f32 %v4986, %v5159
      %v5161 = vpop.f32.mrf.mxu0
      %v5162 = vadd.f32 %v4986, %v5161
      %5163 = vmatmul.bf16.gmra.mxu0 %v4936
      %v5164 = vpop.f32.mrf.mxu0
      %v5165 = vadd.f32 %v4986, %v5164
      %v5166 = vpop.f32.mrf.mxu0
      %v5167 = vadd.f32 %v4986, %v5166
      %5168 = vmatmul.bf16.gmra.mxu0 %v4938
      %v5169 = vpop.f32.mrf.mxu0
      %v5170 = vadd.f32 %v4986, %v5169
      %v5171 = vpop.f32.mrf.mxu0
      %v5172 = vadd.f32 %v4986, %v5171
      %5173 = vmatmul.bf16.gmra.mxu0 %v4940
      %v5174 = vpop.f32.mrf.mxu0
      %v5175 = vadd.f32 %v4986, %v5174
      %v5176 = vpop.f32.mrf.mxu0
      %v5177 = vadd.f32 %v4986, %v5176
      %5178 = vmatmul.bf16.gmra.mxu0 %v4942
      %v5179 = vpop.f32.mrf.mxu0
      %v5180 = vadd.f32 %v4986, %v5179
      %v5181 = vpop.f32.mrf.mxu0
      %v5182 = vadd.f32 %v4986, %v5181
      %5183 = vmatmul.bf16.gmra.mxu0 %v4944
      %v5184 = vpop.f32.mrf.mxu0
      %v5185 = vadd.f32 %v4986, %v5184
      %v5186 = vpop.f32.mrf.mxu0
      %v5187 = vadd.f32 %v4986, %v5186
      %5188 = vmatmul.bf16.gmra.mxu0 %v4946
      %v5189 = vpop.f32.mrf.mxu0
      %v5190 = vadd.f32 %v4986, %v5189
      %v5191 = vpop.f32.mrf.mxu0
      %v5192 = vadd.f32 %v4986, %v5191
      %5193 = vmatmul.bf16.gmra.mxu0 %v4948
      %v5194 = vpop.f32.mrf.mxu0
      %v5195 = vadd.f32 %v4986, %v5194
      %v5196 = vpop.f32.mrf.mxu0
      %v5197 = vadd.f32 %v4986, %v5196
      %5198 = vdwg.mxu0
      %5199 = vmatpush.bf16.msra.mxu0 %v5116
      %5200 = vmatpush.bf16.msra.mxu0 %v5114
      %5201 = vmatpush.bf16.msra.mxu0 %v5112
      %5202 = vmatpush.bf16.msra.mxu0 %v5110
      %5203 = vmatpush.bf16.msra.mxu0 %v5108
      %5204 = vmatpush.bf16.msra.mxu0 %v5106
      %5205 = vmatpush.bf16.msra.mxu0 %v5104
      %5206 = vmatpush.bf16.msra.mxu0 %v5102
      %5207 = vmatmul.bf16.gmra.mxu0 %v4935
      %v5208 = vpop.f32.mrf.mxu0
      %v5209 = vadd.f32 %v5160, %v5208
      %v5210 = vpop.f32.mrf.mxu0
      %v5211 = vadd.f32 %v5162, %v5210
      %5212 = vmatmul.bf16.gmra.mxu0 %v4937
      %v5213 = vpop.f32.mrf.mxu0
      %v5214 = vadd.f32 %v5165, %v5213
      %v5215 = vpop.f32.mrf.mxu0
      %v5216 = vadd.f32 %v5167, %v5215
      %5217 = vmatmul.bf16.gmra.mxu0 %v4939
      %v5218 = vpop.f32.mrf.mxu0
      %v5219 = vadd.f32 %v5170, %v5218
      %v5220 = vpop.f32.mrf.mxu0
      %v5221 = vadd.f32 %v5172, %v5220
      %5222 = vmatmul.bf16.gmra.mxu0 %v4941
      %v5223 = vpop.f32.mrf.mxu0
      %v5224 = vadd.f32 %v5175, %v5223
      %v5225 = vpop.f32.mrf.mxu0
      %v5226 = vadd.f32 %v5177, %v5225
      %5227 = vmatmul.bf16.gmra.mxu0 %v4943
      %v5228 = vpop.f32.mrf.mxu0
      %v5229 = vadd.f32 %v5180, %v5228
      %v5230 = vpop.f32.mrf.mxu0
      %v5231 = vadd.f32 %v5182, %v5230
      %5232 = vmatmul.bf16.gmra.mxu0 %v4945
      %v5233 = vpop.f32.mrf.mxu0
      %v5234 = vadd.f32 %v5185, %v5233
      %v5235 = vpop.f32.mrf.mxu0
      %v5236 = vadd.f32 %v5187, %v5235
      %5237 = vmatmul.bf16.gmra.mxu0 %v4947
      %v5238 = vpop.f32.mrf.mxu0
      %v5239 = vadd.f32 %v5190, %v5238
      %v5240 = vpop.f32.mrf.mxu0
      %v5241 = vadd.f32 %v5192, %v5240
      %5242 = vmatmul.bf16.gmra.mxu0 %v4949
      %v5243 = vpop.f32.mrf.mxu0
      %v5244 = vadd.f32 %v5195, %v5243
      %v5245 = vpop.f32.mrf.mxu0
      %v5246 = vadd.f32 %v5197, %v5245
      %5247 = vdwg.mxu0
      %5248 = vmatpush.bf16.msra.mxu0 %v5101
      %5249 = vmatpush.bf16.msra.mxu0 %v5099
      %5250 = vmatpush.bf16.msra.mxu0 %v5097
      %5251 = vmatpush.bf16.msra.mxu0 %v5095
      %5252 = vmatpush.bf16.msra.mxu0 %v5093
      %5253 = vmatpush.bf16.msra.mxu0 %v5091
      %5254 = vmatpush.bf16.msra.mxu0 %v5089
      %5255 = vmatpush.bf16.msra.mxu0 %v5087
      %5256 = vmatmul.bf16.gmra.mxu0 %v4934
      %v5257 = vpop.f32.mrf.mxu0
      %v5258 = vadd.f32 %v4987, %v5257
      %v5259 = vpop.f32.mrf.mxu0
      %v5260 = vadd.f32 %v4987, %v5259
      %5261 = vmatmul.bf16.gmra.mxu0 %v4936
      %v5262 = vpop.f32.mrf.mxu0
      %v5263 = vadd.f32 %v4987, %v5262
      %v5264 = vpop.f32.mrf.mxu0
      %v5265 = vadd.f32 %v4987, %v5264
      %5266 = vmatmul.bf16.gmra.mxu0 %v4938
      %v5267 = vpop.f32.mrf.mxu0
      %v5268 = vadd.f32 %v4987, %v5267
      %v5269 = vpop.f32.mrf.mxu0
      %v5270 = vadd.f32 %v4987, %v5269
      %5271 = vmatmul.bf16.gmra.mxu0 %v4940
      %v5272 = vpop.f32.mrf.mxu0
      %v5273 = vadd.f32 %v4987, %v5272
      %v5274 = vpop.f32.mrf.mxu0
      %v5275 = vadd.f32 %v4987, %v5274
      %5276 = vmatmul.bf16.gmra.mxu0 %v4942
      %v5277 = vpop.f32.mrf.mxu0
      %v5278 = vadd.f32 %v4987, %v5277
      %v5279 = vpop.f32.mrf.mxu0
      %v5280 = vadd.f32 %v4987, %v5279
      %5281 = vmatmul.bf16.gmra.mxu0 %v4944
      %v5282 = vpop.f32.mrf.mxu0
      %v5283 = vadd.f32 %v4987, %v5282
      %v5284 = vpop.f32.mrf.mxu0
      %v5285 = vadd.f32 %v4987, %v5284
      %5286 = vmatmul.bf16.gmra.mxu0 %v4946
      %v5287 = vpop.f32.mrf.mxu0
      %v5288 = vadd.f32 %v4987, %v5287
      %v5289 = vpop.f32.mrf.mxu0
      %v5290 = vadd.f32 %v4987, %v5289
      %5291 = vmatmul.bf16.gmra.mxu0 %v4948
      %v5292 = vpop.f32.mrf.mxu0
      %v5293 = vadd.f32 %v4987, %v5292
      %v5294 = vpop.f32.mrf.mxu0
      %v5295 = vadd.f32 %v4987, %v5294
      %5296 = vdwg.mxu0
      %5297 = vmatpush.bf16.msra.mxu0 %v5117
      %5298 = vmatpush.bf16.msra.mxu0 %v5115
      %5299 = vmatpush.bf16.msra.mxu0 %v5113
      %5300 = vmatpush.bf16.msra.mxu0 %v5111
      %5301 = vmatpush.bf16.msra.mxu0 %v5109
      %5302 = vmatpush.bf16.msra.mxu0 %v5107
      %5303 = vmatpush.bf16.msra.mxu0 %v5105
      %5304 = vmatpush.bf16.msra.mxu0 %v5103
      %5305 = vmatmul.bf16.gmra.mxu0 %v4935
      %v5306 = vpop.f32.mrf.mxu0
      %v5307 = vadd.f32 %v5258, %v5306
      %v5308 = vpop.f32.mrf.mxu0
      %v5309 = vadd.f32 %v5260, %v5308
      %5310 = vmatmul.bf16.gmra.mxu0 %v4937
      %v5311 = vpop.f32.mrf.mxu0
      %v5312 = vadd.f32 %v5263, %v5311
      %v5313 = vpop.f32.mrf.mxu0
      %v5314 = vadd.f32 %v5265, %v5313
      %5315 = vmatmul.bf16.gmra.mxu0 %v4939
      %v5316 = vpop.f32.mrf.mxu0
      %v5317 = vadd.f32 %v5268, %v5316
      %v5318 = vpop.f32.mrf.mxu0
      %v5319 = vadd.f32 %v5270, %v5318
      %5320 = vmatmul.bf16.gmra.mxu0 %v4941
      %v5321 = vpop.f32.mrf.mxu0
      %v5322 = vadd.f32 %v5273, %v5321
      %v5323 = vpop.f32.mrf.mxu0
      %v5324 = vadd.f32 %v5275, %v5323
      %5325 = vmatmul.bf16.gmra.mxu0 %v4943
      %v5326 = vpop.f32.mrf.mxu0
      %v5327 = vadd.f32 %v5278, %v5326
      %v5328 = vpop.f32.mrf.mxu0
      %v5329 = vadd.f32 %v5280, %v5328
      %5330 = vmatmul.bf16.gmra.mxu0 %v4945
      %v5331 = vpop.f32.mrf.mxu0
      %v5332 = vadd.f32 %v5283, %v5331
      %v5333 = vpop.f32.mrf.mxu0
      %v5334 = vadd.f32 %v5285, %v5333
      %5335 = vmatmul.bf16.gmra.mxu0 %v4947
      %v5336 = vpop.f32.mrf.mxu0
      %v5337 = vadd.f32 %v5288, %v5336
      %v5338 = vpop.f32.mrf.mxu0
      %v5339 = vadd.f32 %v5290, %v5338
      %5340 = vmatmul.bf16.gmra.mxu0 %v4949
      %v5341 = vpop.f32.mrf.mxu0
      %v5342 = vadd.f32 %v5293, %v5341
      %v5343 = vpop.f32.mrf.mxu0
      %v5344 = vadd.f32 %v5295, %v5343
      %5345 = vdwg.mxu0
      %v5346 = vmul.f32 %v5209, 0.01
      %v5347 = vmul.f32 %v5307, 0.01
      %v5348 = vmul.f32 %v5211, 0.01
      %v5349 = vmul.f32 %v5309, 0.01
      %v5350 = vmul.f32 %v5214, 0.01
      %v5351 = vmul.f32 %v5312, 0.01
      %v5352 = vmul.f32 %v5216, 0.01
      %v5353 = vmul.f32 %v5314, 0.01
      %v5354 = vmul.f32 %v5219, 0.01
      %v5355 = vmul.f32 %v5317, 0.01
      %v5356 = vmul.f32 %v5221, 0.01
      %v5357 = vmul.f32 %v5319, 0.01
      %v5358 = vmul.f32 %v5224, 0.01
      %v5359 = vmul.f32 %v5322, 0.01
      %v5360 = vmul.f32 %v5226, 0.01
      %v5361 = vmul.f32 %v5324, 0.01
      %v5362 = vmul.f32 %v5229, 0.01
      %v5363 = vmul.f32 %v5327, 0.01
      %v5364 = vmul.f32 %v5231, 0.01
      %v5365 = vmul.f32 %v5329, 0.01
      %v5366 = vmul.f32 %v5234, 0.01
      %v5367 = vmul.f32 %v5332, 0.01
      %v5368 = vmul.f32 %v5236, 0.01
      %v5369 = vmul.f32 %v5334, 0.01
      %v5370 = vmul.f32 %v5239, 0.01
      %v5371 = vmul.f32 %v5337, 0.01
      %v5372 = vmul.f32 %v5241, 0.01
      %v5373 = vmul.f32 %v5339, 0.01
      %v5374 = vmul.f32 %v5244, 0.01
      %v5375 = vmul.f32 %v5342, 0.01
      %v5376 = vmul.f32 %v5246, 0.01
      %v5377 = vmul.f32 %v5344, 0.01
      %v5378 = vmax.f32 %v5209, %v5346
      %v5379 = vmax.f32 %v5307, %v5347
      %v5380 = vmax.f32 %v5211, %v5348
      %v5381 = vmax.f32 %v5309, %v5349
      %v5382 = vmax.f32 %v5214, %v5350
      %v5383 = vmax.f32 %v5312, %v5351
      %v5384 = vmax.f32 %v5216, %v5352
      %v5385 = vmax.f32 %v5314, %v5353
      %v5386 = vmax.f32 %v5219, %v5354
      %v5387 = vmax.f32 %v5317, %v5355
      %v5388 = vmax.f32 %v5221, %v5356
      %v5389 = vmax.f32 %v5319, %v5357
      %v5390 = vmax.f32 %v5224, %v5358
      %v5391 = vmax.f32 %v5322, %v5359
      %v5392 = vmax.f32 %v5226, %v5360
      %v5393 = vmax.f32 %v5324, %v5361
      %v5394 = vmax.f32 %v5229, %v5362
      %v5395 = vmax.f32 %v5327, %v5363
      %v5396 = vmax.f32 %v5231, %v5364
      %v5397 = vmax.f32 %v5329, %v5365
      %v5398 = vmax.f32 %v5234, %v5366
      %v5399 = vmax.f32 %v5332, %v5367
      %v5400 = vmax.f32 %v5236, %v5368
      %v5401 = vmax.f32 %v5334, %v5369
      %v5402 = vmax.f32 %v5239, %v5370
      %v5403 = vmax.f32 %v5337, %v5371
      %v5404 = vmax.f32 %v5241, %v5372
      %v5405 = vmax.f32 %v5339, %v5373
      %v5406 = vmax.f32 %v5244, %v5374
      %v5407 = vmax.f32 %v5342, %v5375
      %v5408 = vmax.f32 %v5246, %v5376
      %v5409 = vmax.f32 %v5344, %v5377
      %v5410 = vadd.f32 %v4902, %v5378
      %v5411 = vadd.f32 %v4903, %v5379
      %v5412 = vadd.f32 %v4904, %v5380
      %v5413 = vadd.f32 %v4905, %v5381
      %v5414 = vadd.f32 %v4906, %v5382
      %v5415 = vadd.f32 %v4907, %v5383
      %v5416 = vadd.f32 %v4908, %v5384
      %v5417 = vadd.f32 %v4909, %v5385
      %v5418 = vadd.f32 %v4910, %v5386
      %v5419 = vadd.f32 %v4911, %v5387
      %v5420 = vadd.f32 %v4912, %v5388
      %v5421 = vadd.f32 %v4913, %v5389
      %v5422 = vadd.f32 %v4914, %v5390
      %v5423 = vadd.f32 %v4915, %v5391
      %v5424 = vadd.f32 %v4916, %v5392
      %v5425 = vadd.f32 %v4917, %v5393
      %v5426 = vadd.f32 %v4918, %v5394
      %v5427 = vadd.f32 %v4919, %v5395
      %v5428 = vadd.f32 %v4920, %v5396
      %v5429 = vadd.f32 %v4921, %v5397
      %v5430 = vadd.f32 %v4922, %v5398
      %v5431 = vadd.f32 %v4923, %v5399
      %v5432 = vadd.f32 %v4924, %v5400
      %v5433 = vadd.f32 %v4925, %v5401
      %v5434 = vadd.f32 %v4926, %v5402
      %v5435 = vadd.f32 %v4927, %v5403
      %v5436 = vadd.f32 %v4928, %v5404
      %v5437 = vadd.f32 %v4929, %v5405
      %v5438 = vadd.f32 %v4930, %v5406
      %v5439 = vadd.f32 %v4931, %v5407
      %v5440 = vadd.f32 %v4932, %v5408
      %v5441 = vadd.f32 %v4933, %v5409
      %v5442 = vpack.c.bf16 %v5411, %v5410
      %v5443 = vpack.c.bf16 %v5413, %v5412
      %v5444 = vpack.c.bf16 %v5415, %v5414
      %v5445 = vpack.c.bf16 %v5417, %v5416
      %v5446 = vpack.c.bf16 %v5419, %v5418
      %v5447 = vpack.c.bf16 %v5421, %v5420
      %v5448 = vpack.c.bf16 %v5423, %v5422
      %v5449 = vpack.c.bf16 %v5425, %v5424
      %v5450 = vpack.c.bf16 %v5427, %v5426
      %v5451 = vpack.c.bf16 %v5429, %v5428
      %v5452 = vpack.c.bf16 %v5431, %v5430
      %v5453 = vpack.c.bf16 %v5433, %v5432
      %v5454 = vpack.c.bf16 %v5435, %v5434
      %v5455 = vpack.c.bf16 %v5437, %v5436
      %v5456 = vpack.c.bf16 %v5439, %v5438
      %v5457 = vpack.c.bf16 %v5441, %v5440
      %v5458 = vpack.c.bf16 %v3252, %v3242
      %v5459 = vpack.c.bf16 %v3253, %v3243
      %v5460 = vpack.c.bf16 %v3272, %v3262
      %v5461 = vpack.c.bf16 %v3273, %v3263
      %v5462 = vpack.c.bf16 %v3292, %v3282
      %v5463 = vpack.c.bf16 %v3293, %v3283
      %v5464 = vpack.c.bf16 %v3312, %v3302
      %v5465 = vpack.c.bf16 %v3313, %v3303
      %v5466 = vpack.c.bf16 %v3332, %v3322
      %v5467 = vpack.c.bf16 %v3333, %v3323
      %v5468 = vpack.c.bf16 %v3352, %v3342
      %v5469 = vpack.c.bf16 %v3353, %v3343
      %v5470 = vpack.c.bf16 %v3372, %v3362
      %v5471 = vpack.c.bf16 %v3373, %v3363
      %v5472 = vpack.c.bf16 %v3392, %v3382
      %v5473 = vpack.c.bf16 %v3393, %v3383
      %s5474 = scalar_lea.vmem %s11, 512
      %v5475 = vld [vmem:[%s5474] sm:$0xff]
      %v5476 = vld [vmem:[%s5474 + $0x8] sm:$0xff]
      %v5477 = vld [vmem:[%s5474 + $0x10] sm:$0xff]
      %v5478 = vld [vmem:[%s5474 + $0x18] sm:$0xff]
      %v5479 = vld [vmem:[%s5474 + $0x20] sm:$0xff]
      %v5480 = vld [vmem:[%s5474 + $0x28] sm:$0xff]
      %v5481 = vld [vmem:[%s5474 + $0x30] sm:$0xff]
      %v5482 = vld [vmem:[%s5474 + $0x38] sm:$0xff]
      %v5483 = vld [vmem:[%s5474 + $0x40] sm:$0xff]
      %v5484 = vld [vmem:[%s5474 + $0x48] sm:$0xff]
      %v5485 = vld [vmem:[%s5474 + $0x50] sm:$0xff]
      %v5486 = vld [vmem:[%s5474 + $0x58] sm:$0xff]
      %v5487 = vld [vmem:[%s5474 + $0x60] sm:$0xff]
      %v5488 = vld [vmem:[%s5474 + $0x68] sm:$0xff]
      %v5489 = vld [vmem:[%s5474 + $0x70] sm:$0xff]
      %v5490 = vld [vmem:[%s5474 + $0x78] sm:$0xff]
      %v5491 = vld [vmem:[%s5474 + $0x80] sm:$0xff]
      %v5492 = vld [vmem:[%s5474 + $0x88] sm:$0xff]
      %v5493 = vld [vmem:[%s5474 + $0x90] sm:$0xff]
      %v5494 = vld [vmem:[%s5474 + $0x98] sm:$0xff]
      %v5495 = vld [vmem:[%s5474 + $0xa0] sm:$0xff]
      %v5496 = vld [vmem:[%s5474 + $0xa8] sm:$0xff]
      %v5497 = vld [vmem:[%s5474 + $0xb0] sm:$0xff]
      %v5498 = vld [vmem:[%s5474 + $0xb8] sm:$0xff]
      %v5499 = vld [vmem:[%s5474 + $0xc0] sm:$0xff]
      %v5500 = vld [vmem:[%s5474 + $0xc8] sm:$0xff]
      %v5501 = vld [vmem:[%s5474 + $0xd0] sm:$0xff]
      %v5502 = vld [vmem:[%s5474 + $0xd8] sm:$0xff]
      %v5503 = vld [vmem:[%s5474 + $0xe0] sm:$0xff]
      %v5504 = vld [vmem:[%s5474 + $0xe8] sm:$0xff]
      %v5505 = vld [vmem:[%s5474 + $0xf0] sm:$0xff]
      %v5506 = vld [vmem:[%s5474 + $0xf8] sm:$0xff]
      %s5507 = scalar_lea.vmem %s12, 4
      %v5508 = vld [vmem:[%s5507] sm:$0x3]
      %v5510 = vperm.slane %v5508, 0
      %v5511 = vperm.slane %v5508, 1
      %v5546 = vunpack.c.l.b16 %v5475
      %v5547 = vunpack.c.h.b16 %v5475
      %v5548 = vunpack.c.l.b16 %v5476
      %v5549 = vunpack.c.h.b16 %v5476
      %v5550 = vunpack.c.l.b16 %v5477
      %v5551 = vunpack.c.h.b16 %v5477
      %v5552 = vunpack.c.l.b16 %v5478
      %v5553 = vunpack.c.h.b16 %v5478
      %v5554 = vunpack.c.l.b16 %v5479
      %v5555 = vunpack.c.h.b16 %v5479
      %v5556 = vunpack.c.l.b16 %v5480
      %v5557 = vunpack.c.h.b16 %v5480
      %v5558 = vunpack.c.l.b16 %v5481
      %v5559 = vunpack.c.h.b16 %v5481
      %v5560 = vunpack.c.l.b16 %v5482
      %v5561 = vunpack.c.h.b16 %v5482
      %v5562 = vunpack.c.l.b16 %v5483
      %v5563 = vunpack.c.h.b16 %v5483
      %v5564 = vunpack.c.l.b16 %v5484
      %v5565 = vunpack.c.h.b16 %v5484
      %v5566 = vunpack.c.l.b16 %v5485
      %v5567 = vunpack.c.h.b16 %v5485
      %v5568 = vunpack.c.l.b16 %v5486
      %v5569 = vunpack.c.h.b16 %v5486
      %v5570 = vunpack.c.l.b16 %v5487
      %v5571 = vunpack.c.h.b16 %v5487
      %v5572 = vunpack.c.l.b16 %v5488
      %v5573 = vunpack.c.h.b16 %v5488
      %v5574 = vunpack.c.l.b16 %v5489
      %v5575 = vunpack.c.h.b16 %v5489
      %v5576 = vunpack.c.l.b16 %v5490
      %v5577 = vunpack.c.h.b16 %v5490
      %v5578 = vunpack.c.l.b16 %v5491
      %v5579 = vunpack.c.h.b16 %v5491
      %v5580 = vunpack.c.l.b16 %v5492
      %v5581 = vunpack.c.h.b16 %v5492
      %v5582 = vunpack.c.l.b16 %v5493
      %v5583 = vunpack.c.h.b16 %v5493
      %v5584 = vunpack.c.l.b16 %v5494
      %v5585 = vunpack.c.h.b16 %v5494
      %v5586 = vunpack.c.l.b16 %v5495
      %v5587 = vunpack.c.h.b16 %v5495
      %v5588 = vunpack.c.l.b16 %v5496
      %v5589 = vunpack.c.h.b16 %v5496
      %v5590 = vunpack.c.l.b16 %v5497
      %v5591 = vunpack.c.h.b16 %v5497
      %v5592 = vunpack.c.l.b16 %v5498
      %v5593 = vunpack.c.h.b16 %v5498
      %v5594 = vunpack.c.l.b16 %v5499
      %v5595 = vunpack.c.h.b16 %v5499
      %v5596 = vunpack.c.l.b16 %v5500
      %v5597 = vunpack.c.h.b16 %v5500
      %v5598 = vunpack.c.l.b16 %v5501
      %v5599 = vunpack.c.h.b16 %v5501
      %v5600 = vunpack.c.l.b16 %v5502
      %v5601 = vunpack.c.h.b16 %v5502
      %v5602 = vunpack.c.l.b16 %v5503
      %v5603 = vunpack.c.h.b16 %v5503
      %v5604 = vunpack.c.l.b16 %v5504
      %v5605 = vunpack.c.h.b16 %v5504
      %v5606 = vunpack.c.l.b16 %v5505
      %v5607 = vunpack.c.h.b16 %v5505
      %v5608 = vunpack.c.l.b16 %v5506
      %v5609 = vunpack.c.h.b16 %v5506
      %v5610 = vpack.c.b16 %v5548, %v5546
      %v5611 = vpack.c.b16 %v5549, %v5547
      %v5612 = vpack.c.b16 %v5552, %v5550
      %v5613 = vpack.c.b16 %v5553, %v5551
      %v5614 = vpack.c.b16 %v5556, %v5554
      %v5615 = vpack.c.b16 %v5557, %v5555
      %v5616 = vpack.c.b16 %v5560, %v5558
      %v5617 = vpack.c.b16 %v5561, %v5559
      %v5618 = vpack.c.b16 %v5564, %v5562
      %v5619 = vpack.c.b16 %v5565, %v5563
      %v5620 = vpack.c.b16 %v5568, %v5566
      %v5621 = vpack.c.b16 %v5569, %v5567
      %v5622 = vpack.c.b16 %v5572, %v5570
      %v5623 = vpack.c.b16 %v5573, %v5571
      %v5624 = vpack.c.b16 %v5576, %v5574
      %v5625 = vpack.c.b16 %v5577, %v5575
      %v5626 = vpack.c.b16 %v5580, %v5578
      %v5627 = vpack.c.b16 %v5581, %v5579
      %v5628 = vpack.c.b16 %v5584, %v5582
      %v5629 = vpack.c.b16 %v5585, %v5583
      %v5630 = vpack.c.b16 %v5588, %v5586
      %v5631 = vpack.c.b16 %v5589, %v5587
      %v5632 = vpack.c.b16 %v5592, %v5590
      %v5633 = vpack.c.b16 %v5593, %v5591
      %v5634 = vpack.c.b16 %v5596, %v5594
      %v5635 = vpack.c.b16 %v5597, %v5595
      %v5636 = vpack.c.b16 %v5600, %v5598
      %v5637 = vpack.c.b16 %v5601, %v5599
      %v5638 = vpack.c.b16 %v5604, %v5602
      %v5639 = vpack.c.b16 %v5605, %v5603
      %v5640 = vpack.c.b16 %v5608, %v5606
      %v5641 = vpack.c.b16 %v5609, %v5607
      %5674 = vmatpush.bf16.msra.mxu0 %v5624
      %5675 = vmatpush.bf16.msra.mxu0 %v5622
      %5676 = vmatpush.bf16.msra.mxu0 %v5620
      %5677 = vmatpush.bf16.msra.mxu0 %v5618
      %5678 = vmatpush.bf16.msra.mxu0 %v5616
      %5679 = vmatpush.bf16.msra.mxu0 %v5614
      %5680 = vmatpush.bf16.msra.mxu0 %v5612
      %5681 = vmatpush.bf16.msra.mxu0 %v5610
      %5682 = vmatmul.bf16.gmra.mxu0 %v5458
      %v5683 = vpop.f32.mrf.mxu0
      %v5684 = vadd.f32 %v5510, %v5683
      %v5685 = vpop.f32.mrf.mxu0
      %v5686 = vadd.f32 %v5510, %v5685
      %5687 = vmatmul.bf16.gmra.mxu0 %v5460
      %v5688 = vpop.f32.mrf.mxu0
      %v5689 = vadd.f32 %v5510, %v5688
      %v5690 = vpop.f32.mrf.mxu0
      %v5691 = vadd.f32 %v5510, %v5690
      %5692 = vmatmul.bf16.gmra.mxu0 %v5462
      %v5693 = vpop.f32.mrf.mxu0
      %v5694 = vadd.f32 %v5510, %v5693
      %v5695 = vpop.f32.mrf.mxu0
      %v5696 = vadd.f32 %v5510, %v5695
      %5697 = vmatmul.bf16.gmra.mxu0 %v5464
      %v5698 = vpop.f32.mrf.mxu0
      %v5699 = vadd.f32 %v5510, %v5698
      %v5700 = vpop.f32.mrf.mxu0
      %v5701 = vadd.f32 %v5510, %v5700
      %5702 = vmatmul.bf16.gmra.mxu0 %v5466
      %v5703 = vpop.f32.mrf.mxu0
      %v5704 = vadd.f32 %v5510, %v5703
      %v5705 = vpop.f32.mrf.mxu0
      %v5706 = vadd.f32 %v5510, %v5705
      %5707 = vmatmul.bf16.gmra.mxu0 %v5468
      %v5708 = vpop.f32.mrf.mxu0
      %v5709 = vadd.f32 %v5510, %v5708
      %v5710 = vpop.f32.mrf.mxu0
      %v5711 = vadd.f32 %v5510, %v5710
      %5712 = vmatmul.bf16.gmra.mxu0 %v5470
      %v5713 = vpop.f32.mrf.mxu0
      %v5714 = vadd.f32 %v5510, %v5713
      %v5715 = vpop.f32.mrf.mxu0
      %v5716 = vadd.f32 %v5510, %v5715
      %5717 = vmatmul.bf16.gmra.mxu0 %v5472
      %v5718 = vpop.f32.mrf.mxu0
      %v5719 = vadd.f32 %v5510, %v5718
      %v5720 = vpop.f32.mrf.mxu0
      %v5721 = vadd.f32 %v5510, %v5720
      %5722 = vdwg.mxu0
      %5723 = vmatpush.bf16.msra.mxu0 %v5640
      %5724 = vmatpush.bf16.msra.mxu0 %v5638
      %5725 = vmatpush.bf16.msra.mxu0 %v5636
      %5726 = vmatpush.bf16.msra.mxu0 %v5634
      %5727 = vmatpush.bf16.msra.mxu0 %v5632
      %5728 = vmatpush.bf16.msra.mxu0 %v5630
      %5729 = vmatpush.bf16.msra.mxu0 %v5628
      %5730 = vmatpush.bf16.msra.mxu0 %v5626
      %5731 = vmatmul.bf16.gmra.mxu0 %v5459
      %v5732 = vpop.f32.mrf.mxu0
      %v5733 = vadd.f32 %v5684, %v5732
      %v5734 = vpop.f32.mrf.mxu0
      %v5735 = vadd.f32 %v5686, %v5734
      %5736 = vmatmul.bf16.gmra.mxu0 %v5461
      %v5737 = vpop.f32.mrf.mxu0
      %v5738 = vadd.f32 %v5689, %v5737
      %v5739 = vpop.f32.mrf.mxu0
      %v5740 = vadd.f32 %v5691, %v5739
      %5741 = vmatmul.bf16.gmra.mxu0 %v5463
      %v5742 = vpop.f32.mrf.mxu0
      %v5743 = vadd.f32 %v5694, %v5742
      %v5744 = vpop.f32.mrf.mxu0
      %v5745 = vadd.f32 %v5696, %v5744
      %5746 = vmatmul.bf16.gmra.mxu0 %v5465
      %v5747 = vpop.f32.mrf.mxu0
      %v5748 = vadd.f32 %v5699, %v5747
      %v5749 = vpop.f32.mrf.mxu0
      %v5750 = vadd.f32 %v5701, %v5749
      %5751 = vmatmul.bf16.gmra.mxu0 %v5467
      %v5752 = vpop.f32.mrf.mxu0
      %v5753 = vadd.f32 %v5704, %v5752
      %v5754 = vpop.f32.mrf.mxu0
      %v5755 = vadd.f32 %v5706, %v5754
      %5756 = vmatmul.bf16.gmra.mxu0 %v5469
      %v5757 = vpop.f32.mrf.mxu0
      %v5758 = vadd.f32 %v5709, %v5757
      %v5759 = vpop.f32.mrf.mxu0
      %v5760 = vadd.f32 %v5711, %v5759
      %5761 = vmatmul.bf16.gmra.mxu0 %v5471
      %v5762 = vpop.f32.mrf.mxu0
      %v5763 = vadd.f32 %v5714, %v5762
      %v5764 = vpop.f32.mrf.mxu0
      %v5765 = vadd.f32 %v5716, %v5764
      %5766 = vmatmul.bf16.gmra.mxu0 %v5473
      %v5767 = vpop.f32.mrf.mxu0
      %v5768 = vadd.f32 %v5719, %v5767
      %v5769 = vpop.f32.mrf.mxu0
      %v5770 = vadd.f32 %v5721, %v5769
      %5771 = vdwg.mxu0
      %5772 = vmatpush.bf16.msra.mxu0 %v5625
      %5773 = vmatpush.bf16.msra.mxu0 %v5623
      %5774 = vmatpush.bf16.msra.mxu0 %v5621
      %5775 = vmatpush.bf16.msra.mxu0 %v5619
      %5776 = vmatpush.bf16.msra.mxu0 %v5617
      %5777 = vmatpush.bf16.msra.mxu0 %v5615
      %5778 = vmatpush.bf16.msra.mxu0 %v5613
      %5779 = vmatpush.bf16.msra.mxu0 %v5611
      %5780 = vmatmul.bf16.gmra.mxu0 %v5458
      %v5781 = vpop.f32.mrf.mxu0
      %v5782 = vadd.f32 %v5511, %v5781
      %v5783 = vpop.f32.mrf.mxu0
      %v5784 = vadd.f32 %v5511, %v5783
      %5785 = vmatmul.bf16.gmra.mxu0 %v5460
      %v5786 = vpop.f32.mrf.mxu0
      %v5787 = vadd.f32 %v5511, %v5786
      %v5788 = vpop.f32.mrf.mxu0
      %v5789 = vadd.f32 %v5511, %v5788
      %5790 = vmatmul.bf16.gmra.mxu0 %v5462
      %v5791 = vpop.f32.mrf.mxu0
      %v5792 = vadd.f32 %v5511, %v5791
      %v5793 = vpop.f32.mrf.mxu0
      %v5794 = vadd.f32 %v5511, %v5793
      %5795 = vmatmul.bf16.gmra.mxu0 %v5464
      %v5796 = vpop.f32.mrf.mxu0
      %v5797 = vadd.f32 %v5511, %v5796
      %v5798 = vpop.f32.mrf.mxu0
      %v5799 = vadd.f32 %v5511, %v5798
      %5800 = vmatmul.bf16.gmra.mxu0 %v5466
      %v5801 = vpop.f32.mrf.mxu0
      %v5802 = vadd.f32 %v5511, %v5801
      %v5803 = vpop.f32.mrf.mxu0
      %v5804 = vadd.f32 %v5511, %v5803
      %5805 = vmatmul.bf16.gmra.mxu0 %v5468
      %v5806 = vpop.f32.mrf.mxu0
      %v5807 = vadd.f32 %v5511, %v5806
      %v5808 = vpop.f32.mrf.mxu0
      %v5809 = vadd.f32 %v5511, %v5808
      %5810 = vmatmul.bf16.gmra.mxu0 %v5470
      %v5811 = vpop.f32.mrf.mxu0
      %v5812 = vadd.f32 %v5511, %v5811
      %v5813 = vpop.f32.mrf.mxu0
      %v5814 = vadd.f32 %v5511, %v5813
      %5815 = vmatmul.bf16.gmra.mxu0 %v5472
      %v5816 = vpop.f32.mrf.mxu0
      %v5817 = vadd.f32 %v5511, %v5816
      %v5818 = vpop.f32.mrf.mxu0
      %v5819 = vadd.f32 %v5511, %v5818
      %5820 = vdwg.mxu0
      %5821 = vmatpush.bf16.msra.mxu0 %v5641
      %5822 = vmatpush.bf16.msra.mxu0 %v5639
      %5823 = vmatpush.bf16.msra.mxu0 %v5637
      %5824 = vmatpush.bf16.msra.mxu0 %v5635
      %5825 = vmatpush.bf16.msra.mxu0 %v5633
      %5826 = vmatpush.bf16.msra.mxu0 %v5631
      %5827 = vmatpush.bf16.msra.mxu0 %v5629
      %5828 = vmatpush.bf16.msra.mxu0 %v5627
      %5829 = vmatmul.bf16.gmra.mxu0 %v5459
      %v5830 = vpop.f32.mrf.mxu0
      %v5831 = vadd.f32 %v5782, %v5830
      %v5832 = vpop.f32.mrf.mxu0
      %v5833 = vadd.f32 %v5784, %v5832
      %5834 = vmatmul.bf16.gmra.mxu0 %v5461
      %v5835 = vpop.f32.mrf.mxu0
      %v5836 = vadd.f32 %v5787, %v5835
      %v5837 = vpop.f32.mrf.mxu0
      %v5838 = vadd.f32 %v5789, %v5837
      %5839 = vmatmul.bf16.gmra.mxu0 %v5463
      %v5840 = vpop.f32.mrf.mxu0
      %v5841 = vadd.f32 %v5792, %v5840
      %v5842 = vpop.f32.mrf.mxu0
      %v5843 = vadd.f32 %v5794, %v5842
      %5844 = vmatmul.bf16.gmra.mxu0 %v5465
      %v5845 = vpop.f32.mrf.mxu0
      %v5846 = vadd.f32 %v5797, %v5845
      %v5847 = vpop.f32.mrf.mxu0
      %v5848 = vadd.f32 %v5799, %v5847
      %5849 = vmatmul.bf16.gmra.mxu0 %v5467
      %v5850 = vpop.f32.mrf.mxu0
      %v5851 = vadd.f32 %v5802, %v5850
      %v5852 = vpop.f32.mrf.mxu0
      %v5853 = vadd.f32 %v5804, %v5852
      %5854 = vmatmul.bf16.gmra.mxu0 %v5469
      %v5855 = vpop.f32.mrf.mxu0
      %v5856 = vadd.f32 %v5807, %v5855
      %v5857 = vpop.f32.mrf.mxu0
      %v5858 = vadd.f32 %v5809, %v5857
      %5859 = vmatmul.bf16.gmra.mxu0 %v5471
      %v5860 = vpop.f32.mrf.mxu0
      %v5861 = vadd.f32 %v5812, %v5860
      %v5862 = vpop.f32.mrf.mxu0
      %v5863 = vadd.f32 %v5814, %v5862
      %5864 = vmatmul.bf16.gmra.mxu0 %v5473
      %v5865 = vpop.f32.mrf.mxu0
      %v5866 = vadd.f32 %v5817, %v5865
      %v5867 = vpop.f32.mrf.mxu0
      %v5868 = vadd.f32 %v5819, %v5867
      %5869 = vdwg.mxu0
      %v5870 = vmul.f32 %v5733, 0.01
      %v5871 = vmul.f32 %v5831, 0.01
      %v5872 = vmul.f32 %v5735, 0.01
      %v5873 = vmul.f32 %v5833, 0.01
      %v5874 = vmul.f32 %v5738, 0.01
      %v5875 = vmul.f32 %v5836, 0.01
      %v5876 = vmul.f32 %v5740, 0.01
      %v5877 = vmul.f32 %v5838, 0.01
      %v5878 = vmul.f32 %v5743, 0.01
      %v5879 = vmul.f32 %v5841, 0.01
      %v5880 = vmul.f32 %v5745, 0.01
      %v5881 = vmul.f32 %v5843, 0.01
      %v5882 = vmul.f32 %v5748, 0.01
      %v5883 = vmul.f32 %v5846, 0.01
      %v5884 = vmul.f32 %v5750, 0.01
      %v5885 = vmul.f32 %v5848, 0.01
      %v5886 = vmul.f32 %v5753, 0.01
      %v5887 = vmul.f32 %v5851, 0.01
      %v5888 = vmul.f32 %v5755, 0.01
      %v5889 = vmul.f32 %v5853, 0.01
      %v5890 = vmul.f32 %v5758, 0.01
      %v5891 = vmul.f32 %v5856, 0.01
      %v5892 = vmul.f32 %v5760, 0.01
      %v5893 = vmul.f32 %v5858, 0.01
      %v5894 = vmul.f32 %v5763, 0.01
      %v5895 = vmul.f32 %v5861, 0.01
      %v5896 = vmul.f32 %v5765, 0.01
      %v5897 = vmul.f32 %v5863, 0.01
      %v5898 = vmul.f32 %v5768, 0.01
      %v5899 = vmul.f32 %v5866, 0.01
      %v5900 = vmul.f32 %v5770, 0.01
      %v5901 = vmul.f32 %v5868, 0.01
      %v5902 = vmax.f32 %v5733, %v5870
      %v5903 = vmax.f32 %v5831, %v5871
      %v5904 = vmax.f32 %v5735, %v5872
      %v5905 = vmax.f32 %v5833, %v5873
      %v5906 = vmax.f32 %v5738, %v5874
      %v5907 = vmax.f32 %v5836, %v5875
      %v5908 = vmax.f32 %v5740, %v5876
      %v5909 = vmax.f32 %v5838, %v5877
      %v5910 = vmax.f32 %v5743, %v5878
      %v5911 = vmax.f32 %v5841, %v5879
      %v5912 = vmax.f32 %v5745, %v5880
      %v5913 = vmax.f32 %v5843, %v5881
      %v5914 = vmax.f32 %v5748, %v5882
      %v5915 = vmax.f32 %v5846, %v5883
      %v5916 = vmax.f32 %v5750, %v5884
      %v5917 = vmax.f32 %v5848, %v5885
      %v5918 = vmax.f32 %v5753, %v5886
      %v5919 = vmax.f32 %v5851, %v5887
      %v5920 = vmax.f32 %v5755, %v5888
      %v5921 = vmax.f32 %v5853, %v5889
      %v5922 = vmax.f32 %v5758, %v5890
      %v5923 = vmax.f32 %v5856, %v5891
      %v5924 = vmax.f32 %v5760, %v5892
      %v5925 = vmax.f32 %v5858, %v5893
      %v5926 = vmax.f32 %v5763, %v5894
      %v5927 = vmax.f32 %v5861, %v5895
      %v5928 = vmax.f32 %v5765, %v5896
      %v5929 = vmax.f32 %v5863, %v5897
      %v5930 = vmax.f32 %v5768, %v5898
      %v5931 = vmax.f32 %v5866, %v5899
      %v5932 = vmax.f32 %v5770, %v5900
      %v5933 = vmax.f32 %v5868, %v5901
      %v5934 = vadd.f32 %v3242, %v5902
      %v5935 = vadd.f32 %v3243, %v5903
      %v5936 = vadd.f32 %v3252, %v5904
      %v5937 = vadd.f32 %v3253, %v5905
      %v5938 = vadd.f32 %v3262, %v5906
      %v5939 = vadd.f32 %v3263, %v5907
      %v5940 = vadd.f32 %v3272, %v5908
      %v5941 = vadd.f32 %v3273, %v5909
      %v5942 = vadd.f32 %v3282, %v5910
      %v5943 = vadd.f32 %v3283, %v5911
      %v5944 = vadd.f32 %v3292, %v5912
      %v5945 = vadd.f32 %v3293, %v5913
      %v5946 = vadd.f32 %v3302, %v5914
      %v5947 = vadd.f32 %v3303, %v5915
      %v5948 = vadd.f32 %v3312, %v5916
      %v5949 = vadd.f32 %v3313, %v5917
      %v5950 = vadd.f32 %v3322, %v5918
      %v5951 = vadd.f32 %v3323, %v5919
      %v5952 = vadd.f32 %v3332, %v5920
      %v5953 = vadd.f32 %v3333, %v5921
      %v5954 = vadd.f32 %v3342, %v5922
      %v5955 = vadd.f32 %v3343, %v5923
      %v5956 = vadd.f32 %v3352, %v5924
      %v5957 = vadd.f32 %v3353, %v5925
      %v5958 = vadd.f32 %v3362, %v5926
      %v5959 = vadd.f32 %v3363, %v5927
      %v5960 = vadd.f32 %v3372, %v5928
      %v5961 = vadd.f32 %v3373, %v5929
      %v5962 = vadd.f32 %v3382, %v5930
      %v5963 = vadd.f32 %v3383, %v5931
      %v5964 = vadd.f32 %v3392, %v5932
      %v5965 = vadd.f32 %v3393, %v5933
      %v5966 = vpack.c.bf16 %v5936, %v5934
      %v5967 = vpack.c.bf16 %v5937, %v5935
      %v5968 = vpack.c.bf16 %v5940, %v5938
      %v5969 = vpack.c.bf16 %v5941, %v5939
      %v5970 = vpack.c.bf16 %v5944, %v5942
      %v5971 = vpack.c.bf16 %v5945, %v5943
      %v5972 = vpack.c.bf16 %v5948, %v5946
      %v5973 = vpack.c.bf16 %v5949, %v5947
      %v5974 = vpack.c.bf16 %v5952, %v5950
      %v5975 = vpack.c.bf16 %v5953, %v5951
      %v5976 = vpack.c.bf16 %v5956, %v5954
      %v5977 = vpack.c.bf16 %v5957, %v5955
      %v5978 = vpack.c.bf16 %v5960, %v5958
      %v5979 = vpack.c.bf16 %v5961, %v5959
      %v5980 = vpack.c.bf16 %v5964, %v5962
      %v5981 = vpack.c.bf16 %v5965, %v5963
      %s5982 = scalar_lea.vmem %s13, 512
      %v5983 = vld [vmem:[%s5982] sm:$0xff]
      %v5984 = vld [vmem:[%s5982 + $0x8] sm:$0xff]
      %v5985 = vld [vmem:[%s5982 + $0x10] sm:$0xff]
      %v5986 = vld [vmem:[%s5982 + $0x18] sm:$0xff]
      %v5987 = vld [vmem:[%s5982 + $0x20] sm:$0xff]
      %v5988 = vld [vmem:[%s5982 + $0x28] sm:$0xff]
      %v5989 = vld [vmem:[%s5982 + $0x30] sm:$0xff]
      %v5990 = vld [vmem:[%s5982 + $0x38] sm:$0xff]
      %v5991 = vld [vmem:[%s5982 + $0x40] sm:$0xff]
      %v5992 = vld [vmem:[%s5982 + $0x48] sm:$0xff]
      %v5993 = vld [vmem:[%s5982 + $0x50] sm:$0xff]
      %v5994 = vld [vmem:[%s5982 + $0x58] sm:$0xff]
      %v5995 = vld [vmem:[%s5982 + $0x60] sm:$0xff]
      %v5996 = vld [vmem:[%s5982 + $0x68] sm:$0xff]
      %v5997 = vld [vmem:[%s5982 + $0x70] sm:$0xff]
      %v5998 = vld [vmem:[%s5982 + $0x78] sm:$0xff]
      %v5999 = vld [vmem:[%s5982 + $0x80] sm:$0xff]
      %v6000 = vld [vmem:[%s5982 + $0x88] sm:$0xff]
      %v6001 = vld [vmem:[%s5982 + $0x90] sm:$0xff]
      %v6002 = vld [vmem:[%s5982 + $0x98] sm:$0xff]
      %v6003 = vld [vmem:[%s5982 + $0xa0] sm:$0xff]
      %v6004 = vld [vmem:[%s5982 + $0xa8] sm:$0xff]
      %v6005 = vld [vmem:[%s5982 + $0xb0] sm:$0xff]
      %v6006 = vld [vmem:[%s5982 + $0xb8] sm:$0xff]
      %v6007 = vld [vmem:[%s5982 + $0xc0] sm:$0xff]
      %v6008 = vld [vmem:[%s5982 + $0xc8] sm:$0xff]
      %v6009 = vld [vmem:[%s5982 + $0xd0] sm:$0xff]
      %v6010 = vld [vmem:[%s5982 + $0xd8] sm:$0xff]
      %v6011 = vld [vmem:[%s5982 + $0xe0] sm:$0xff]
      %v6012 = vld [vmem:[%s5982 + $0xe8] sm:$0xff]
      %v6013 = vld [vmem:[%s5982 + $0xf0] sm:$0xff]
      %v6014 = vld [vmem:[%s5982 + $0xf8] sm:$0xff]
      %s6015 = scalar_lea.vmem %s14, 4
      %v6016 = vld [vmem:[%s6015] sm:$0x3]
      %v6018 = vperm.slane %v6016, 0
      %v6019 = vperm.slane %v6016, 1
      %v6054 = vunpack.c.l.b16 %v5983
      %v6055 = vunpack.c.h.b16 %v5983
      %v6056 = vunpack.c.l.b16 %v5984
      %v6057 = vunpack.c.h.b16 %v5984
      %v6058 = vunpack.c.l.b16 %v5985
      %v6059 = vunpack.c.h.b16 %v5985
      %v6060 = vunpack.c.l.b16 %v5986
      %v6061 = vunpack.c.h.b16 %v5986
      %v6062 = vunpack.c.l.b16 %v5987
      %v6063 = vunpack.c.h.b16 %v5987
      %v6064 = vunpack.c.l.b16 %v5988
      %v6065 = vunpack.c.h.b16 %v5988
      %v6066 = vunpack.c.l.b16 %v5989
      %v6067 = vunpack.c.h.b16 %v5989
      %v6068 = vunpack.c.l.b16 %v5990
      %v6069 = vunpack.c.h.b16 %v5990
      %v6070 = vunpack.c.l.b16 %v5991
      %v6071 = vunpack.c.h.b16 %v5991
      %v6072 = vunpack.c.l.b16 %v5992
      %v6073 = vunpack.c.h.b16 %v5992
      %v6074 = vunpack.c.l.b16 %v5993
      %v6075 = vunpack.c.h.b16 %v5993
      %v6076 = vunpack.c.l.b16 %v5994
      %v6077 = vunpack.c.h.b16 %v5994
      %v6078 = vunpack.c.l.b16 %v5995
      %v6079 = vunpack.c.h.b16 %v5995
      %v6080 = vunpack.c.l.b16 %v5996
      %v6081 = vunpack.c.h.b16 %v5996
      %v6082 = vunpack.c.l.b16 %v5997
      %v6083 = vunpack.c.h.b16 %v5997
      %v6084 = vunpack.c.l.b16 %v5998
      %v6085 = vunpack.c.h.b16 %v5998
      %v6086 = vunpack.c.l.b16 %v5999
      %v6087 = vunpack.c.h.b16 %v5999
      %v6088 = vunpack.c.l.b16 %v6000
      %v6089 = vunpack.c.h.b16 %v6000
      %v6090 = vunpack.c.l.b16 %v6001
      %v6091 = vunpack.c.h.b16 %v6001
      %v6092 = vunpack.c.l.b16 %v6002
      %v6093 = vunpack.c.h.b16 %v6002
      %v6094 = vunpack.c.l.b16 %v6003
      %v6095 = vunpack.c.h.b16 %v6003
      %v6096 = vunpack.c.l.b16 %v6004
      %v6097 = vunpack.c.h.b16 %v6004
      %v6098 = vunpack.c.l.b16 %v6005
      %v6099 = vunpack.c.h.b16 %v6005
      %v6100 = vunpack.c.l.b16 %v6006
      %v6101 = vunpack.c.h.b16 %v6006
      %v6102 = vunpack.c.l.b16 %v6007
      %v6103 = vunpack.c.h.b16 %v6007
      %v6104 = vunpack.c.l.b16 %v6008
      %v6105 = vunpack.c.h.b16 %v6008
      %v6106 = vunpack.c.l.b16 %v6009
      %v6107 = vunpack.c.h.b16 %v6009
      %v6108 = vunpack.c.l.b16 %v6010
      %v6109 = vunpack.c.h.b16 %v6010
      %v6110 = vunpack.c.l.b16 %v6011
      %v6111 = vunpack.c.h.b16 %v6011
      %v6112 = vunpack.c.l.b16 %v6012
      %v6113 = vunpack.c.h.b16 %v6012
      %v6114 = vunpack.c.l.b16 %v6013
      %v6115 = vunpack.c.h.b16 %v6013
      %v6116 = vunpack.c.l.b16 %v6014
      %v6117 = vunpack.c.h.b16 %v6014
      %v6118 = vpack.c.b16 %v6056, %v6054
      %v6119 = vpack.c.b16 %v6057, %v6055
      %v6120 = vpack.c.b16 %v6060, %v6058
      %v6121 = vpack.c.b16 %v6061, %v6059
      %v6122 = vpack.c.b16 %v6064, %v6062
      %v6123 = vpack.c.b16 %v6065, %v6063
      %v6124 = vpack.c.b16 %v6068, %v6066
      %v6125 = vpack.c.b16 %v6069, %v6067
      %v6126 = vpack.c.b16 %v6072, %v6070
      %v6127 = vpack.c.b16 %v6073, %v6071
      %v6128 = vpack.c.b16 %v6076, %v6074
      %v6129 = vpack.c.b16 %v6077, %v6075
      %v6130 = vpack.c.b16 %v6080, %v6078
      %v6131 = vpack.c.b16 %v6081, %v6079
      %v6132 = vpack.c.b16 %v6084, %v6082
      %v6133 = vpack.c.b16 %v6085, %v6083
      %v6134 = vpack.c.b16 %v6088, %v6086
      %v6135 = vpack.c.b16 %v6089, %v6087
      %v6136 = vpack.c.b16 %v6092, %v6090
      %v6137 = vpack.c.b16 %v6093, %v6091
      %v6138 = vpack.c.b16 %v6096, %v6094
      %v6139 = vpack.c.b16 %v6097, %v6095
      %v6140 = vpack.c.b16 %v6100, %v6098
      %v6141 = vpack.c.b16 %v6101, %v6099
      %v6142 = vpack.c.b16 %v6104, %v6102
      %v6143 = vpack.c.b16 %v6105, %v6103
      %v6144 = vpack.c.b16 %v6108, %v6106
      %v6145 = vpack.c.b16 %v6109, %v6107
      %v6146 = vpack.c.b16 %v6112, %v6110
      %v6147 = vpack.c.b16 %v6113, %v6111
      %v6148 = vpack.c.b16 %v6116, %v6114
      %v6149 = vpack.c.b16 %v6117, %v6115
      %6182 = vmatpush.bf16.msra.mxu0 %v6132
      %6183 = vmatpush.bf16.msra.mxu0 %v6130
      %6184 = vmatpush.bf16.msra.mxu0 %v6128
      %6185 = vmatpush.bf16.msra.mxu0 %v6126
      %6186 = vmatpush.bf16.msra.mxu0 %v6124
      %6187 = vmatpush.bf16.msra.mxu0 %v6122
      %6188 = vmatpush.bf16.msra.mxu0 %v6120
      %6189 = vmatpush.bf16.msra.mxu0 %v6118
      %6190 = vmatmul.bf16.gmra.mxu0 %v5966
      %v6191 = vpop.f32.mrf.mxu0
      %v6192 = vadd.f32 %v6018, %v6191
      %v6193 = vpop.f32.mrf.mxu0
      %v6194 = vadd.f32 %v6018, %v6193
      %6195 = vmatmul.bf16.gmra.mxu0 %v5968
      %v6196 = vpop.f32.mrf.mxu0
      %v6197 = vadd.f32 %v6018, %v6196
      %v6198 = vpop.f32.mrf.mxu0
      %v6199 = vadd.f32 %v6018, %v6198
      %6200 = vmatmul.bf16.gmra.mxu0 %v5970
      %v6201 = vpop.f32.mrf.mxu0
      %v6202 = vadd.f32 %v6018, %v6201
      %v6203 = vpop.f32.mrf.mxu0
      %v6204 = vadd.f32 %v6018, %v6203
      %6205 = vmatmul.bf16.gmra.mxu0 %v5972
      %v6206 = vpop.f32.mrf.mxu0
      %v6207 = vadd.f32 %v6018, %v6206
      %v6208 = vpop.f32.mrf.mxu0
      %v6209 = vadd.f32 %v6018, %v6208
      %6210 = vmatmul.bf16.gmra.mxu0 %v5974
      %v6211 = vpop.f32.mrf.mxu0
      %v6212 = vadd.f32 %v6018, %v6211
      %v6213 = vpop.f32.mrf.mxu0
      %v6214 = vadd.f32 %v6018, %v6213
      %6215 = vmatmul.bf16.gmra.mxu0 %v5976
      %v6216 = vpop.f32.mrf.mxu0
      %v6217 = vadd.f32 %v6018, %v6216
      %v6218 = vpop.f32.mrf.mxu0
      %v6219 = vadd.f32 %v6018, %v6218
      %6220 = vmatmul.bf16.gmra.mxu0 %v5978
      %v6221 = vpop.f32.mrf.mxu0
      %v6222 = vadd.f32 %v6018, %v6221
      %v6223 = vpop.f32.mrf.mxu0
      %v6224 = vadd.f32 %v6018, %v6223
      %6225 = vmatmul.bf16.gmra.mxu0 %v5980
      %v6226 = vpop.f32.mrf.mxu0
      %v6227 = vadd.f32 %v6018, %v6226
      %v6228 = vpop.f32.mrf.mxu0
      %v6229 = vadd.f32 %v6018, %v6228
      %6230 = vdwg.mxu0
      %6231 = vmatpush.bf16.msra.mxu0 %v6148
      %6232 = vmatpush.bf16.msra.mxu0 %v6146
      %6233 = vmatpush.bf16.msra.mxu0 %v6144
      %6234 = vmatpush.bf16.msra.mxu0 %v6142
      %6235 = vmatpush.bf16.msra.mxu0 %v6140
      %6236 = vmatpush.bf16.msra.mxu0 %v6138
      %6237 = vmatpush.bf16.msra.mxu0 %v6136
      %6238 = vmatpush.bf16.msra.mxu0 %v6134
      %6239 = vmatmul.bf16.gmra.mxu0 %v5967
      %v6240 = vpop.f32.mrf.mxu0
      %v6241 = vadd.f32 %v6192, %v6240
      %v6242 = vpop.f32.mrf.mxu0
      %v6243 = vadd.f32 %v6194, %v6242
      %6244 = vmatmul.bf16.gmra.mxu0 %v5969
      %v6245 = vpop.f32.mrf.mxu0
      %v6246 = vadd.f32 %v6197, %v6245
      %v6247 = vpop.f32.mrf.mxu0
      %v6248 = vadd.f32 %v6199, %v6247
      %6249 = vmatmul.bf16.gmra.mxu0 %v5971
      %v6250 = vpop.f32.mrf.mxu0
      %v6251 = vadd.f32 %v6202, %v6250
      %v6252 = vpop.f32.mrf.mxu0
      %v6253 = vadd.f32 %v6204, %v6252
      %6254 = vmatmul.bf16.gmra.mxu0 %v5973
      %v6255 = vpop.f32.mrf.mxu0
      %v6256 = vadd.f32 %v6207, %v6255
      %v6257 = vpop.f32.mrf.mxu0
      %v6258 = vadd.f32 %v6209, %v6257
      %6259 = vmatmul.bf16.gmra.mxu0 %v5975
      %v6260 = vpop.f32.mrf.mxu0
      %v6261 = vadd.f32 %v6212, %v6260
      %v6262 = vpop.f32.mrf.mxu0
      %v6263 = vadd.f32 %v6214, %v6262
      %6264 = vmatmul.bf16.gmra.mxu0 %v5977
      %v6265 = vpop.f32.mrf.mxu0
      %v6266 = vadd.f32 %v6217, %v6265
      %v6267 = vpop.f32.mrf.mxu0
      %v6268 = vadd.f32 %v6219, %v6267
      %6269 = vmatmul.bf16.gmra.mxu0 %v5979
      %v6270 = vpop.f32.mrf.mxu0
      %v6271 = vadd.f32 %v6222, %v6270
      %v6272 = vpop.f32.mrf.mxu0
      %v6273 = vadd.f32 %v6224, %v6272
      %6274 = vmatmul.bf16.gmra.mxu0 %v5981
      %v6275 = vpop.f32.mrf.mxu0
      %v6276 = vadd.f32 %v6227, %v6275
      %v6277 = vpop.f32.mrf.mxu0
      %v6278 = vadd.f32 %v6229, %v6277
      %6279 = vdwg.mxu0
      %6280 = vmatpush.bf16.msra.mxu0 %v6133
      %6281 = vmatpush.bf16.msra.mxu0 %v6131
      %6282 = vmatpush.bf16.msra.mxu0 %v6129
      %6283 = vmatpush.bf16.msra.mxu0 %v6127
      %6284 = vmatpush.bf16.msra.mxu0 %v6125
      %6285 = vmatpush.bf16.msra.mxu0 %v6123
      %6286 = vmatpush.bf16.msra.mxu0 %v6121
      %6287 = vmatpush.bf16.msra.mxu0 %v6119
      %6288 = vmatmul.bf16.gmra.mxu0 %v5966
      %v6289 = vpop.f32.mrf.mxu0
      %v6290 = vadd.f32 %v6019, %v6289
      %v6291 = vpop.f32.mrf.mxu0
      %v6292 = vadd.f32 %v6019, %v6291
      %6293 = vmatmul.bf16.gmra.mxu0 %v5968
      %v6294 = vpop.f32.mrf.mxu0
      %v6295 = vadd.f32 %v6019, %v6294
      %v6296 = vpop.f32.mrf.mxu0
      %v6297 = vadd.f32 %v6019, %v6296
      %6298 = vmatmul.bf16.gmra.mxu0 %v5970
      %v6299 = vpop.f32.mrf.mxu0
      %v6300 = vadd.f32 %v6019, %v6299
      %v6301 = vpop.f32.mrf.mxu0
      %v6302 = vadd.f32 %v6019, %v6301
      %6303 = vmatmul.bf16.gmra.mxu0 %v5972
      %v6304 = vpop.f32.mrf.mxu0
      %v6305 = vadd.f32 %v6019, %v6304
      %v6306 = vpop.f32.mrf.mxu0
      %v6307 = vadd.f32 %v6019, %v6306
      %6308 = vmatmul.bf16.gmra.mxu0 %v5974
      %v6309 = vpop.f32.mrf.mxu0
      %v6310 = vadd.f32 %v6019, %v6309
      %v6311 = vpop.f32.mrf.mxu0
      %v6312 = vadd.f32 %v6019, %v6311
      %6313 = vmatmul.bf16.gmra.mxu0 %v5976
      %v6314 = vpop.f32.mrf.mxu0
      %v6315 = vadd.f32 %v6019, %v6314
      %v6316 = vpop.f32.mrf.mxu0
      %v6317 = vadd.f32 %v6019, %v6316
      %6318 = vmatmul.bf16.gmra.mxu0 %v5978
      %v6319 = vpop.f32.mrf.mxu0
      %v6320 = vadd.f32 %v6019, %v6319
      %v6321 = vpop.f32.mrf.mxu0
      %v6322 = vadd.f32 %v6019, %v6321
      %6323 = vmatmul.bf16.gmra.mxu0 %v5980
      %v6324 = vpop.f32.mrf.mxu0
      %v6325 = vadd.f32 %v6019, %v6324
      %v6326 = vpop.f32.mrf.mxu0
      %v6327 = vadd.f32 %v6019, %v6326
      %6328 = vdwg.mxu0
      %6329 = vmatpush.bf16.msra.mxu0 %v6149
      %6330 = vmatpush.bf16.msra.mxu0 %v6147
      %6331 = vmatpush.bf16.msra.mxu0 %v6145
      %6332 = vmatpush.bf16.msra.mxu0 %v6143
      %6333 = vmatpush.bf16.msra.mxu0 %v6141
      %6334 = vmatpush.bf16.msra.mxu0 %v6139
      %6335 = vmatpush.bf16.msra.mxu0 %v6137
      %6336 = vmatpush.bf16.msra.mxu0 %v6135
      %6337 = vmatmul.bf16.gmra.mxu0 %v5967
      %v6338 = vpop.f32.mrf.mxu0
      %v6339 = vadd.f32 %v6290, %v6338
      %v6340 = vpop.f32.mrf.mxu0
      %v6341 = vadd.f32 %v6292, %v6340
      %6342 = vmatmul.bf16.gmra.mxu0 %v5969
      %v6343 = vpop.f32.mrf.mxu0
      %v6344 = vadd.f32 %v6295, %v6343
      %v6345 = vpop.f32.mrf.mxu0
      %v6346 = vadd.f32 %v6297, %v6345
      %6347 = vmatmul.bf16.gmra.mxu0 %v5971
      %v6348 = vpop.f32.mrf.mxu0
      %v6349 = vadd.f32 %v6300, %v6348
      %v6350 = vpop.f32.mrf.mxu0
      %v6351 = vadd.f32 %v6302, %v6350
      %6352 = vmatmul.bf16.gmra.mxu0 %v5973
      %v6353 = vpop.f32.mrf.mxu0
      %v6354 = vadd.f32 %v6305, %v6353
      %v6355 = vpop.f32.mrf.mxu0
      %v6356 = vadd.f32 %v6307, %v6355
      %6357 = vmatmul.bf16.gmra.mxu0 %v5975
      %v6358 = vpop.f32.mrf.mxu0
      %v6359 = vadd.f32 %v6310, %v6358
      %v6360 = vpop.f32.mrf.mxu0
      %v6361 = vadd.f32 %v6312, %v6360
      %6362 = vmatmul.bf16.gmra.mxu0 %v5977
      %v6363 = vpop.f32.mrf.mxu0
      %v6364 = vadd.f32 %v6315, %v6363
      %v6365 = vpop.f32.mrf.mxu0
      %v6366 = vadd.f32 %v6317, %v6365
      %6367 = vmatmul.bf16.gmra.mxu0 %v5979
      %v6368 = vpop.f32.mrf.mxu0
      %v6369 = vadd.f32 %v6320, %v6368
      %v6370 = vpop.f32.mrf.mxu0
      %v6371 = vadd.f32 %v6322, %v6370
      %6372 = vmatmul.bf16.gmra.mxu0 %v5981
      %v6373 = vpop.f32.mrf.mxu0
      %v6374 = vadd.f32 %v6325, %v6373
      %v6375 = vpop.f32.mrf.mxu0
      %v6376 = vadd.f32 %v6327, %v6375
      %6377 = vdwg.mxu0
      %v6378 = vmul.f32 %v6241, 0.01
      %v6379 = vmul.f32 %v6339, 0.01
      %v6380 = vmul.f32 %v6243, 0.01
      %v6381 = vmul.f32 %v6341, 0.01
      %v6382 = vmul.f32 %v6246, 0.01
      %v6383 = vmul.f32 %v6344, 0.01
      %v6384 = vmul.f32 %v6248, 0.01
      %v6385 = vmul.f32 %v6346, 0.01
      %v6386 = vmul.f32 %v6251, 0.01
      %v6387 = vmul.f32 %v6349, 0.01
      %v6388 = vmul.f32 %v6253, 0.01
      %v6389 = vmul.f32 %v6351, 0.01
      %v6390 = vmul.f32 %v6256, 0.01
      %v6391 = vmul.f32 %v6354, 0.01
      %v6392 = vmul.f32 %v6258, 0.01
      %v6393 = vmul.f32 %v6356, 0.01
      %v6394 = vmul.f32 %v6261, 0.01
      %v6395 = vmul.f32 %v6359, 0.01
      %v6396 = vmul.f32 %v6263, 0.01
      %v6397 = vmul.f32 %v6361, 0.01
      %v6398 = vmul.f32 %v6266, 0.01
      %v6399 = vmul.f32 %v6364, 0.01
      %v6400 = vmul.f32 %v6268, 0.01
      %v6401 = vmul.f32 %v6366, 0.01
      %v6402 = vmul.f32 %v6271, 0.01
      %v6403 = vmul.f32 %v6369, 0.01
      %v6404 = vmul.f32 %v6273, 0.01
      %v6405 = vmul.f32 %v6371, 0.01
      %v6406 = vmul.f32 %v6276, 0.01
      %v6407 = vmul.f32 %v6374, 0.01
      %v6408 = vmul.f32 %v6278, 0.01
      %v6409 = vmul.f32 %v6376, 0.01
      %v6410 = vmax.f32 %v6241, %v6378
      %v6411 = vmax.f32 %v6339, %v6379
      %v6412 = vmax.f32 %v6243, %v6380
      %v6413 = vmax.f32 %v6341, %v6381
      %v6414 = vmax.f32 %v6246, %v6382
      %v6415 = vmax.f32 %v6344, %v6383
      %v6416 = vmax.f32 %v6248, %v6384
      %v6417 = vmax.f32 %v6346, %v6385
      %v6418 = vmax.f32 %v6251, %v6386
      %v6419 = vmax.f32 %v6349, %v6387
      %v6420 = vmax.f32 %v6253, %v6388
      %v6421 = vmax.f32 %v6351, %v6389
      %v6422 = vmax.f32 %v6256, %v6390
      %v6423 = vmax.f32 %v6354, %v6391
      %v6424 = vmax.f32 %v6258, %v6392
      %v6425 = vmax.f32 %v6356, %v6393
      %v6426 = vmax.f32 %v6261, %v6394
      %v6427 = vmax.f32 %v6359, %v6395
      %v6428 = vmax.f32 %v6263, %v6396
      %v6429 = vmax.f32 %v6361, %v6397
      %v6430 = vmax.f32 %v6266, %v6398
      %v6431 = vmax.f32 %v6364, %v6399
      %v6432 = vmax.f32 %v6268, %v6400
      %v6433 = vmax.f32 %v6366, %v6401
      %v6434 = vmax.f32 %v6271, %v6402
      %v6435 = vmax.f32 %v6369, %v6403
      %v6436 = vmax.f32 %v6273, %v6404
      %v6437 = vmax.f32 %v6371, %v6405
      %v6438 = vmax.f32 %v6276, %v6406
      %v6439 = vmax.f32 %v6374, %v6407
      %v6440 = vmax.f32 %v6278, %v6408
      %v6441 = vmax.f32 %v6376, %v6409
      %v6442 = vadd.f32 %v5934, %v6410
      %v6443 = vadd.f32 %v5935, %v6411
      %v6444 = vadd.f32 %v5936, %v6412
      %v6445 = vadd.f32 %v5937, %v6413
      %v6446 = vadd.f32 %v5938, %v6414
      %v6447 = vadd.f32 %v5939, %v6415
      %v6448 = vadd.f32 %v5940, %v6416
      %v6449 = vadd.f32 %v5941, %v6417
      %v6450 = vadd.f32 %v5942, %v6418
      %v6451 = vadd.f32 %v5943, %v6419
      %v6452 = vadd.f32 %v5944, %v6420
      %v6453 = vadd.f32 %v5945, %v6421
      %v6454 = vadd.f32 %v5946, %v6422
      %v6455 = vadd.f32 %v5947, %v6423
      %v6456 = vadd.f32 %v5948, %v6424
      %v6457 = vadd.f32 %v5949, %v6425
      %v6458 = vadd.f32 %v5950, %v6426
      %v6459 = vadd.f32 %v5951, %v6427
      %v6460 = vadd.f32 %v5952, %v6428
      %v6461 = vadd.f32 %v5953, %v6429
      %v6462 = vadd.f32 %v5954, %v6430
      %v6463 = vadd.f32 %v5955, %v6431
      %v6464 = vadd.f32 %v5956, %v6432
      %v6465 = vadd.f32 %v5957, %v6433
      %v6466 = vadd.f32 %v5958, %v6434
      %v6467 = vadd.f32 %v5959, %v6435
      %v6468 = vadd.f32 %v5960, %v6436
      %v6469 = vadd.f32 %v5961, %v6437
      %v6470 = vadd.f32 %v5962, %v6438
      %v6471 = vadd.f32 %v5963, %v6439
      %v6472 = vadd.f32 %v5964, %v6440
      %v6473 = vadd.f32 %v5965, %v6441
      %v6474 = vpack.c.bf16 %v6443, %v6442
      %v6475 = vpack.c.bf16 %v6445, %v6444
      %v6476 = vpack.c.bf16 %v6447, %v6446
      %v6477 = vpack.c.bf16 %v6449, %v6448
      %v6478 = vpack.c.bf16 %v6451, %v6450
      %v6479 = vpack.c.bf16 %v6453, %v6452
      %v6480 = vpack.c.bf16 %v6455, %v6454
      %v6481 = vpack.c.bf16 %v6457, %v6456
      %v6482 = vpack.c.bf16 %v6459, %v6458
      %v6483 = vpack.c.bf16 %v6461, %v6460
      %v6484 = vpack.c.bf16 %v6463, %v6462
      %v6485 = vpack.c.bf16 %v6465, %v6464
      %v6486 = vpack.c.bf16 %v6467, %v6466
      %v6487 = vpack.c.bf16 %v6469, %v6468
      %v6488 = vpack.c.bf16 %v6471, %v6470
      %v6489 = vpack.c.bf16 %v6473, %v6472
      %v6490 = vpack.c.bf16 %v3254, %v3244
      %v6491 = vpack.c.bf16 %v3255, %v3245
      %v6492 = vpack.c.bf16 %v3274, %v3264
      %v6493 = vpack.c.bf16 %v3275, %v3265
      %v6494 = vpack.c.bf16 %v3294, %v3284
      %v6495 = vpack.c.bf16 %v3295, %v3285
      %v6496 = vpack.c.bf16 %v3314, %v3304
      %v6497 = vpack.c.bf16 %v3315, %v3305
      %v6498 = vpack.c.bf16 %v3334, %v3324
      %v6499 = vpack.c.bf16 %v3335, %v3325
      %v6500 = vpack.c.bf16 %v3354, %v3344
      %v6501 = vpack.c.bf16 %v3355, %v3345
      %v6502 = vpack.c.bf16 %v3374, %v3364
      %v6503 = vpack.c.bf16 %v3375, %v3365
      %v6504 = vpack.c.bf16 %v3394, %v3384
      %v6505 = vpack.c.bf16 %v3395, %v3385
      %s6506 = scalar_lea.vmem %s11, 768
      %v6507 = vld [vmem:[%s6506] sm:$0xff]
      %v6508 = vld [vmem:[%s6506 + $0x8] sm:$0xff]
      %v6509 = vld [vmem:[%s6506 + $0x10] sm:$0xff]
      %v6510 = vld [vmem:[%s6506 + $0x18] sm:$0xff]
      %v6511 = vld [vmem:[%s6506 + $0x20] sm:$0xff]
      %v6512 = vld [vmem:[%s6506 + $0x28] sm:$0xff]
      %v6513 = vld [vmem:[%s6506 + $0x30] sm:$0xff]
      %v6514 = vld [vmem:[%s6506 + $0x38] sm:$0xff]
      %v6515 = vld [vmem:[%s6506 + $0x40] sm:$0xff]
      %v6516 = vld [vmem:[%s6506 + $0x48] sm:$0xff]
      %v6517 = vld [vmem:[%s6506 + $0x50] sm:$0xff]
      %v6518 = vld [vmem:[%s6506 + $0x58] sm:$0xff]
      %v6519 = vld [vmem:[%s6506 + $0x60] sm:$0xff]
      %v6520 = vld [vmem:[%s6506 + $0x68] sm:$0xff]
      %v6521 = vld [vmem:[%s6506 + $0x70] sm:$0xff]
      %v6522 = vld [vmem:[%s6506 + $0x78] sm:$0xff]
      %v6523 = vld [vmem:[%s6506 + $0x80] sm:$0xff]
      %v6524 = vld [vmem:[%s6506 + $0x88] sm:$0xff]
      %v6525 = vld [vmem:[%s6506 + $0x90] sm:$0xff]
      %v6526 = vld [vmem:[%s6506 + $0x98] sm:$0xff]
      %v6527 = vld [vmem:[%s6506 + $0xa0] sm:$0xff]
      %v6528 = vld [vmem:[%s6506 + $0xa8] sm:$0xff]
      %v6529 = vld [vmem:[%s6506 + $0xb0] sm:$0xff]
      %v6530 = vld [vmem:[%s6506 + $0xb8] sm:$0xff]
      %v6531 = vld [vmem:[%s6506 + $0xc0] sm:$0xff]
      %v6532 = vld [vmem:[%s6506 + $0xc8] sm:$0xff]
      %v6533 = vld [vmem:[%s6506 + $0xd0] sm:$0xff]
      %v6534 = vld [vmem:[%s6506 + $0xd8] sm:$0xff]
      %v6535 = vld [vmem:[%s6506 + $0xe0] sm:$0xff]
      %v6536 = vld [vmem:[%s6506 + $0xe8] sm:$0xff]
      %v6537 = vld [vmem:[%s6506 + $0xf0] sm:$0xff]
      %v6538 = vld [vmem:[%s6506 + $0xf8] sm:$0xff]
      %s6539 = scalar_lea.vmem %s12, 6
      %v6540 = vld [vmem:[%s6539] sm:$0x3]
      %v6542 = vperm.slane %v6540, 0
      %v6543 = vperm.slane %v6540, 1
      %v6578 = vunpack.c.l.b16 %v6507
      %v6579 = vunpack.c.h.b16 %v6507
      %v6580 = vunpack.c.l.b16 %v6508
      %v6581 = vunpack.c.h.b16 %v6508
      %v6582 = vunpack.c.l.b16 %v6509
      %v6583 = vunpack.c.h.b16 %v6509
      %v6584 = vunpack.c.l.b16 %v6510
      %v6585 = vunpack.c.h.b16 %v6510
      %v6586 = vunpack.c.l.b16 %v6511
      %v6587 = vunpack.c.h.b16 %v6511
      %v6588 = vunpack.c.l.b16 %v6512
      %v6589 = vunpack.c.h.b16 %v6512
      %v6590 = vunpack.c.l.b16 %v6513
      %v6591 = vunpack.c.h.b16 %v6513
      %v6592 = vunpack.c.l.b16 %v6514
      %v6593 = vunpack.c.h.b16 %v6514
      %v6594 = vunpack.c.l.b16 %v6515
      %v6595 = vunpack.c.h.b16 %v6515
      %v6596 = vunpack.c.l.b16 %v6516
      %v6597 = vunpack.c.h.b16 %v6516
      %v6598 = vunpack.c.l.b16 %v6517
      %v6599 = vunpack.c.h.b16 %v6517
      %v6600 = vunpack.c.l.b16 %v6518
      %v6601 = vunpack.c.h.b16 %v6518
      %v6602 = vunpack.c.l.b16 %v6519
      %v6603 = vunpack.c.h.b16 %v6519
      %v6604 = vunpack.c.l.b16 %v6520
      %v6605 = vunpack.c.h.b16 %v6520
      %v6606 = vunpack.c.l.b16 %v6521
      %v6607 = vunpack.c.h.b16 %v6521
      %v6608 = vunpack.c.l.b16 %v6522
      %v6609 = vunpack.c.h.b16 %v6522
      %v6610 = vunpack.c.l.b16 %v6523
      %v6611 = vunpack.c.h.b16 %v6523
      %v6612 = vunpack.c.l.b16 %v6524
      %v6613 = vunpack.c.h.b16 %v6524
      %v6614 = vunpack.c.l.b16 %v6525
      %v6615 = vunpack.c.h.b16 %v6525
      %v6616 = vunpack.c.l.b16 %v6526
      %v6617 = vunpack.c.h.b16 %v6526
      %v6618 = vunpack.c.l.b16 %v6527
      %v6619 = vunpack.c.h.b16 %v6527
      %v6620 = vunpack.c.l.b16 %v6528
      %v6621 = vunpack.c.h.b16 %v6528
      %v6622 = vunpack.c.l.b16 %v6529
      %v6623 = vunpack.c.h.b16 %v6529
      %v6624 = vunpack.c.l.b16 %v6530
      %v6625 = vunpack.c.h.b16 %v6530
      %v6626 = vunpack.c.l.b16 %v6531
      %v6627 = vunpack.c.h.b16 %v6531
      %v6628 = vunpack.c.l.b16 %v6532
      %v6629 = vunpack.c.h.b16 %v6532
      %v6630 = vunpack.c.l.b16 %v6533
      %v6631 = vunpack.c.h.b16 %v6533
      %v6632 = vunpack.c.l.b16 %v6534
      %v6633 = vunpack.c.h.b16 %v6534
      %v6634 = vunpack.c.l.b16 %v6535
      %v6635 = vunpack.c.h.b16 %v6535
      %v6636 = vunpack.c.l.b16 %v6536
      %v6637 = vunpack.c.h.b16 %v6536
      %v6638 = vunpack.c.l.b16 %v6537
      %v6639 = vunpack.c.h.b16 %v6537
      %v6640 = vunpack.c.l.b16 %v6538
      %v6641 = vunpack.c.h.b16 %v6538
      %v6642 = vpack.c.b16 %v6580, %v6578
      %v6643 = vpack.c.b16 %v6581, %v6579
      %v6644 = vpack.c.b16 %v6584, %v6582
      %v6645 = vpack.c.b16 %v6585, %v6583
      %v6646 = vpack.c.b16 %v6588, %v6586
      %v6647 = vpack.c.b16 %v6589, %v6587
      %v6648 = vpack.c.b16 %v6592, %v6590
      %v6649 = vpack.c.b16 %v6593, %v6591
      %v6650 = vpack.c.b16 %v6596, %v6594
      %v6651 = vpack.c.b16 %v6597, %v6595
      %v6652 = vpack.c.b16 %v6600, %v6598
      %v6653 = vpack.c.b16 %v6601, %v6599
      %v6654 = vpack.c.b16 %v6604, %v6602
      %v6655 = vpack.c.b16 %v6605, %v6603
      %v6656 = vpack.c.b16 %v6608, %v6606
      %v6657 = vpack.c.b16 %v6609, %v6607
      %v6658 = vpack.c.b16 %v6612, %v6610
      %v6659 = vpack.c.b16 %v6613, %v6611
      %v6660 = vpack.c.b16 %v6616, %v6614
      %v6661 = vpack.c.b16 %v6617, %v6615
      %v6662 = vpack.c.b16 %v6620, %v6618
      %v6663 = vpack.c.b16 %v6621, %v6619
      %v6664 = vpack.c.b16 %v6624, %v6622
      %v6665 = vpack.c.b16 %v6625, %v6623
      %v6666 = vpack.c.b16 %v6628, %v6626
      %v6667 = vpack.c.b16 %v6629, %v6627
      %v6668 = vpack.c.b16 %v6632, %v6630
      %v6669 = vpack.c.b16 %v6633, %v6631
      %v6670 = vpack.c.b16 %v6636, %v6634
      %v6671 = vpack.c.b16 %v6637, %v6635
      %v6672 = vpack.c.b16 %v6640, %v6638
      %v6673 = vpack.c.b16 %v6641, %v6639
      %6706 = vmatpush.bf16.msra.mxu0 %v6656
      %6707 = vmatpush.bf16.msra.mxu0 %v6654
      %6708 = vmatpush.bf16.msra.mxu0 %v6652
      %6709 = vmatpush.bf16.msra.mxu0 %v6650
      %6710 = vmatpush.bf16.msra.mxu0 %v6648
      %6711 = vmatpush.bf16.msra.mxu0 %v6646
      %6712 = vmatpush.bf16.msra.mxu0 %v6644
      %6713 = vmatpush.bf16.msra.mxu0 %v6642
      %6714 = vmatmul.bf16.gmra.mxu0 %v6490
      %v6715 = vpop.f32.mrf.mxu0
      %v6716 = vadd.f32 %v6542, %v6715
      %v6717 = vpop.f32.mrf.mxu0
      %v6718 = vadd.f32 %v6542, %v6717
      %6719 = vmatmul.bf16.gmra.mxu0 %v6492
      %v6720 = vpop.f32.mrf.mxu0
      %v6721 = vadd.f32 %v6542, %v6720
      %v6722 = vpop.f32.mrf.mxu0
      %v6723 = vadd.f32 %v6542, %v6722
      %6724 = vmatmul.bf16.gmra.mxu0 %v6494
      %v6725 = vpop.f32.mrf.mxu0
      %v6726 = vadd.f32 %v6542, %v6725
      %v6727 = vpop.f32.mrf.mxu0
      %v6728 = vadd.f32 %v6542, %v6727
      %6729 = vmatmul.bf16.gmra.mxu0 %v6496
      %v6730 = vpop.f32.mrf.mxu0
      %v6731 = vadd.f32 %v6542, %v6730
      %v6732 = vpop.f32.mrf.mxu0
      %v6733 = vadd.f32 %v6542, %v6732
      %6734 = vmatmul.bf16.gmra.mxu0 %v6498
      %v6735 = vpop.f32.mrf.mxu0
      %v6736 = vadd.f32 %v6542, %v6735
      %v6737 = vpop.f32.mrf.mxu0
      %v6738 = vadd.f32 %v6542, %v6737
      %6739 = vmatmul.bf16.gmra.mxu0 %v6500
      %v6740 = vpop.f32.mrf.mxu0
      %v6741 = vadd.f32 %v6542, %v6740
      %v6742 = vpop.f32.mrf.mxu0
      %v6743 = vadd.f32 %v6542, %v6742
      %6744 = vmatmul.bf16.gmra.mxu0 %v6502
      %v6745 = vpop.f32.mrf.mxu0
      %v6746 = vadd.f32 %v6542, %v6745
      %v6747 = vpop.f32.mrf.mxu0
      %v6748 = vadd.f32 %v6542, %v6747
      %6749 = vmatmul.bf16.gmra.mxu0 %v6504
      %v6750 = vpop.f32.mrf.mxu0
      %v6751 = vadd.f32 %v6542, %v6750
      %v6752 = vpop.f32.mrf.mxu0
      %v6753 = vadd.f32 %v6542, %v6752
      %6754 = vdwg.mxu0
      %6755 = vmatpush.bf16.msra.mxu0 %v6672
      %6756 = vmatpush.bf16.msra.mxu0 %v6670
      %6757 = vmatpush.bf16.msra.mxu0 %v6668
      %6758 = vmatpush.bf16.msra.mxu0 %v6666
      %6759 = vmatpush.bf16.msra.mxu0 %v6664
      %6760 = vmatpush.bf16.msra.mxu0 %v6662
      %6761 = vmatpush.bf16.msra.mxu0 %v6660
      %6762 = vmatpush.bf16.msra.mxu0 %v6658
      %6763 = vmatmul.bf16.gmra.mxu0 %v6491
      %v6764 = vpop.f32.mrf.mxu0
      %v6765 = vadd.f32 %v6716, %v6764
      %v6766 = vpop.f32.mrf.mxu0
      %v6767 = vadd.f32 %v6718, %v6766
      %6768 = vmatmul.bf16.gmra.mxu0 %v6493
      %v6769 = vpop.f32.mrf.mxu0
      %v6770 = vadd.f32 %v6721, %v6769
      %v6771 = vpop.f32.mrf.mxu0
      %v6772 = vadd.f32 %v6723, %v6771
      %6773 = vmatmul.bf16.gmra.mxu0 %v6495
      %v6774 = vpop.f32.mrf.mxu0
      %v6775 = vadd.f32 %v6726, %v6774
      %v6776 = vpop.f32.mrf.mxu0
      %v6777 = vadd.f32 %v6728, %v6776
      %6778 = vmatmul.bf16.gmra.mxu0 %v6497
      %v6779 = vpop.f32.mrf.mxu0
      %v6780 = vadd.f32 %v6731, %v6779
      %v6781 = vpop.f32.mrf.mxu0
      %v6782 = vadd.f32 %v6733, %v6781
      %6783 = vmatmul.bf16.gmra.mxu0 %v6499
      %v6784 = vpop.f32.mrf.mxu0
      %v6785 = vadd.f32 %v6736, %v6784
      %v6786 = vpop.f32.mrf.mxu0
      %v6787 = vadd.f32 %v6738, %v6786
      %6788 = vmatmul.bf16.gmra.mxu0 %v6501
      %v6789 = vpop.f32.mrf.mxu0
      %v6790 = vadd.f32 %v6741, %v6789
      %v6791 = vpop.f32.mrf.mxu0
      %v6792 = vadd.f32 %v6743, %v6791
      %6793 = vmatmul.bf16.gmra.mxu0 %v6503
      %v6794 = vpop.f32.mrf.mxu0
      %v6795 = vadd.f32 %v6746, %v6794
      %v6796 = vpop.f32.mrf.mxu0
      %v6797 = vadd.f32 %v6748, %v6796
      %6798 = vmatmul.bf16.gmra.mxu0 %v6505
      %v6799 = vpop.f32.mrf.mxu0
      %v6800 = vadd.f32 %v6751, %v6799
      %v6801 = vpop.f32.mrf.mxu0
      %v6802 = vadd.f32 %v6753, %v6801
      %6803 = vdwg.mxu0
      %6804 = vmatpush.bf16.msra.mxu0 %v6657
      %6805 = vmatpush.bf16.msra.mxu0 %v6655
      %6806 = vmatpush.bf16.msra.mxu0 %v6653
      %6807 = vmatpush.bf16.msra.mxu0 %v6651
      %6808 = vmatpush.bf16.msra.mxu0 %v6649
      %6809 = vmatpush.bf16.msra.mxu0 %v6647
      %6810 = vmatpush.bf16.msra.mxu0 %v6645
      %6811 = vmatpush.bf16.msra.mxu0 %v6643
      %6812 = vmatmul.bf16.gmra.mxu0 %v6490
      %v6813 = vpop.f32.mrf.mxu0
      %v6814 = vadd.f32 %v6543, %v6813
      %v6815 = vpop.f32.mrf.mxu0
      %v6816 = vadd.f32 %v6543, %v6815
      %6817 = vmatmul.bf16.gmra.mxu0 %v6492
      %v6818 = vpop.f32.mrf.mxu0
      %v6819 = vadd.f32 %v6543, %v6818
      %v6820 = vpop.f32.mrf.mxu0
      %v6821 = vadd.f32 %v6543, %v6820
      %6822 = vmatmul.bf16.gmra.mxu0 %v6494
      %v6823 = vpop.f32.mrf.mxu0
      %v6824 = vadd.f32 %v6543, %v6823
      %v6825 = vpop.f32.mrf.mxu0
      %v6826 = vadd.f32 %v6543, %v6825
      %6827 = vmatmul.bf16.gmra.mxu0 %v6496
      %v6828 = vpop.f32.mrf.mxu0
      %v6829 = vadd.f32 %v6543, %v6828
      %v6830 = vpop.f32.mrf.mxu0
      %v6831 = vadd.f32 %v6543, %v6830
      %6832 = vmatmul.bf16.gmra.mxu0 %v6498
      %v6833 = vpop.f32.mrf.mxu0
      %v6834 = vadd.f32 %v6543, %v6833
      %v6835 = vpop.f32.mrf.mxu0
      %v6836 = vadd.f32 %v6543, %v6835
      %6837 = vmatmul.bf16.gmra.mxu0 %v6500
      %v6838 = vpop.f32.mrf.mxu0
      %v6839 = vadd.f32 %v6543, %v6838
      %v6840 = vpop.f32.mrf.mxu0
      %v6841 = vadd.f32 %v6543, %v6840
      %6842 = vmatmul.bf16.gmra.mxu0 %v6502
      %v6843 = vpop.f32.mrf.mxu0
      %v6844 = vadd.f32 %v6543, %v6843
      %v6845 = vpop.f32.mrf.mxu0
      %v6846 = vadd.f32 %v6543, %v6845
      %6847 = vmatmul.bf16.gmra.mxu0 %v6504
      %v6848 = vpop.f32.mrf.mxu0
      %v6849 = vadd.f32 %v6543, %v6848
      %v6850 = vpop.f32.mrf.mxu0
      %v6851 = vadd.f32 %v6543, %v6850
      %6852 = vdwg.mxu0
      %6853 = vmatpush.bf16.msra.mxu0 %v6673
      %6854 = vmatpush.bf16.msra.mxu0 %v6671
      %6855 = vmatpush.bf16.msra.mxu0 %v6669
      %6856 = vmatpush.bf16.msra.mxu0 %v6667
      %6857 = vmatpush.bf16.msra.mxu0 %v6665
      %6858 = vmatpush.bf16.msra.mxu0 %v6663
      %6859 = vmatpush.bf16.msra.mxu0 %v6661
      %6860 = vmatpush.bf16.msra.mxu0 %v6659
      %6861 = vmatmul.bf16.gmra.mxu0 %v6491
      %v6862 = vpop.f32.mrf.mxu0
      %v6863 = vadd.f32 %v6814, %v6862
      %v6864 = vpop.f32.mrf.mxu0
      %v6865 = vadd.f32 %v6816, %v6864
      %6866 = vmatmul.bf16.gmra.mxu0 %v6493
      %v6867 = vpop.f32.mrf.mxu0
      %v6868 = vadd.f32 %v6819, %v6867
      %v6869 = vpop.f32.mrf.mxu0
      %v6870 = vadd.f32 %v6821, %v6869
      %6871 = vmatmul.bf16.gmra.mxu0 %v6495
      %v6872 = vpop.f32.mrf.mxu0
      %v6873 = vadd.f32 %v6824, %v6872
      %v6874 = vpop.f32.mrf.mxu0
      %v6875 = vadd.f32 %v6826, %v6874
      %6876 = vmatmul.bf16.gmra.mxu0 %v6497
      %v6877 = vpop.f32.mrf.mxu0
      %v6878 = vadd.f32 %v6829, %v6877
      %v6879 = vpop.f32.mrf.mxu0
      %v6880 = vadd.f32 %v6831, %v6879
      %6881 = vmatmul.bf16.gmra.mxu0 %v6499
      %v6882 = vpop.f32.mrf.mxu0
      %v6883 = vadd.f32 %v6834, %v6882
      %v6884 = vpop.f32.mrf.mxu0
      %v6885 = vadd.f32 %v6836, %v6884
      %6886 = vmatmul.bf16.gmra.mxu0 %v6501
      %v6887 = vpop.f32.mrf.mxu0
      %v6888 = vadd.f32 %v6839, %v6887
      %v6889 = vpop.f32.mrf.mxu0
      %v6890 = vadd.f32 %v6841, %v6889
      %6891 = vmatmul.bf16.gmra.mxu0 %v6503
      %v6892 = vpop.f32.mrf.mxu0
      %v6893 = vadd.f32 %v6844, %v6892
      %v6894 = vpop.f32.mrf.mxu0
      %v6895 = vadd.f32 %v6846, %v6894
      %6896 = vmatmul.bf16.gmra.mxu0 %v6505
      %v6897 = vpop.f32.mrf.mxu0
      %v6898 = vadd.f32 %v6849, %v6897
      %v6899 = vpop.f32.mrf.mxu0
      %v6900 = vadd.f32 %v6851, %v6899
      %6901 = vdwg.mxu0
      %v6902 = vmul.f32 %v6765, 0.01
      %v6903 = vmul.f32 %v6863, 0.01
      %v6904 = vmul.f32 %v6767, 0.01
      %v6905 = vmul.f32 %v6865, 0.01
      %v6906 = vmul.f32 %v6770, 0.01
      %v6907 = vmul.f32 %v6868, 0.01
      %v6908 = vmul.f32 %v6772, 0.01
      %v6909 = vmul.f32 %v6870, 0.01
      %v6910 = vmul.f32 %v6775, 0.01
      %v6911 = vmul.f32 %v6873, 0.01
      %v6912 = vmul.f32 %v6777, 0.01
      %v6913 = vmul.f32 %v6875, 0.01
      %v6914 = vmul.f32 %v6780, 0.01
      %v6915 = vmul.f32 %v6878, 0.01
      %v6916 = vmul.f32 %v6782, 0.01
      %v6917 = vmul.f32 %v6880, 0.01
      %v6918 = vmul.f32 %v6785, 0.01
      %v6919 = vmul.f32 %v6883, 0.01
      %v6920 = vmul.f32 %v6787, 0.01
      %v6921 = vmul.f32 %v6885, 0.01
      %v6922 = vmul.f32 %v6790, 0.01
      %v6923 = vmul.f32 %v6888, 0.01
      %v6924 = vmul.f32 %v6792, 0.01
      %v6925 = vmul.f32 %v6890, 0.01
      %v6926 = vmul.f32 %v6795, 0.01
      %v6927 = vmul.f32 %v6893, 0.01
      %v6928 = vmul.f32 %v6797, 0.01
      %v6929 = vmul.f32 %v6895, 0.01
      %v6930 = vmul.f32 %v6800, 0.01
      %v6931 = vmul.f32 %v6898, 0.01
      %v6932 = vmul.f32 %v6802, 0.01
      %v6933 = vmul.f32 %v6900, 0.01
      %v6934 = vmax.f32 %v6765, %v6902
      %v6935 = vmax.f32 %v6863, %v6903
      %v6936 = vmax.f32 %v6767, %v6904
      %v6937 = vmax.f32 %v6865, %v6905
      %v6938 = vmax.f32 %v6770, %v6906
      %v6939 = vmax.f32 %v6868, %v6907
      %v6940 = vmax.f32 %v6772, %v6908
      %v6941 = vmax.f32 %v6870, %v6909
      %v6942 = vmax.f32 %v6775, %v6910
      %v6943 = vmax.f32 %v6873, %v6911
      %v6944 = vmax.f32 %v6777, %v6912
      %v6945 = vmax.f32 %v6875, %v6913
      %v6946 = vmax.f32 %v6780, %v6914
      %v6947 = vmax.f32 %v6878, %v6915
      %v6948 = vmax.f32 %v6782, %v6916
      %v6949 = vmax.f32 %v6880, %v6917
      %v6950 = vmax.f32 %v6785, %v6918
      %v6951 = vmax.f32 %v6883, %v6919
      %v6952 = vmax.f32 %v6787, %v6920
      %v6953 = vmax.f32 %v6885, %v6921
      %v6954 = vmax.f32 %v6790, %v6922
      %v6955 = vmax.f32 %v6888, %v6923
      %v6956 = vmax.f32 %v6792, %v6924
      %v6957 = vmax.f32 %v6890, %v6925
      %v6958 = vmax.f32 %v6795, %v6926
      %v6959 = vmax.f32 %v6893, %v6927
      %v6960 = vmax.f32 %v6797, %v6928
      %v6961 = vmax.f32 %v6895, %v6929
      %v6962 = vmax.f32 %v6800, %v6930
      %v6963 = vmax.f32 %v6898, %v6931
      %v6964 = vmax.f32 %v6802, %v6932
      %v6965 = vmax.f32 %v6900, %v6933
      %v6966 = vadd.f32 %v3244, %v6934
      %v6967 = vadd.f32 %v3245, %v6935
      %v6968 = vadd.f32 %v3254, %v6936
      %v6969 = vadd.f32 %v3255, %v6937
      %v6970 = vadd.f32 %v3264, %v6938
      %v6971 = vadd.f32 %v3265, %v6939
      %v6972 = vadd.f32 %v3274, %v6940
      %v6973 = vadd.f32 %v3275, %v6941
      %v6974 = vadd.f32 %v3284, %v6942
      %v6975 = vadd.f32 %v3285, %v6943
      %v6976 = vadd.f32 %v3294, %v6944
      %v6977 = vadd.f32 %v3295, %v6945
      %v6978 = vadd.f32 %v3304, %v6946
      %v6979 = vadd.f32 %v3305, %v6947
      %v6980 = vadd.f32 %v3314, %v6948
      %v6981 = vadd.f32 %v3315, %v6949
      %v6982 = vadd.f32 %v3324, %v6950
      %v6983 = vadd.f32 %v3325, %v6951
      %v6984 = vadd.f32 %v3334, %v6952
      %v6985 = vadd.f32 %v3335, %v6953
      %v6986 = vadd.f32 %v3344, %v6954
      %v6987 = vadd.f32 %v3345, %v6955
      %v6988 = vadd.f32 %v3354, %v6956
      %v6989 = vadd.f32 %v3355, %v6957
      %v6990 = vadd.f32 %v3364, %v6958
      %v6991 = vadd.f32 %v3365, %v6959
      %v6992 = vadd.f32 %v3374, %v6960
      %v6993 = vadd.f32 %v3375, %v6961
      %v6994 = vadd.f32 %v3384, %v6962
      %v6995 = vadd.f32 %v3385, %v6963
      %v6996 = vadd.f32 %v3394, %v6964
      %v6997 = vadd.f32 %v3395, %v6965
      %v6998 = vpack.c.bf16 %v6968, %v6966
      %v6999 = vpack.c.bf16 %v6969, %v6967
      %v7000 = vpack.c.bf16 %v6972, %v6970
      %v7001 = vpack.c.bf16 %v6973, %v6971
      %v7002 = vpack.c.bf16 %v6976, %v6974
      %v7003 = vpack.c.bf16 %v6977, %v6975
      %v7004 = vpack.c.bf16 %v6980, %v6978
      %v7005 = vpack.c.bf16 %v6981, %v6979
      %v7006 = vpack.c.bf16 %v6984, %v6982
      %v7007 = vpack.c.bf16 %v6985, %v6983
      %v7008 = vpack.c.bf16 %v6988, %v6986
      %v7009 = vpack.c.bf16 %v6989, %v6987
      %v7010 = vpack.c.bf16 %v6992, %v6990
      %v7011 = vpack.c.bf16 %v6993, %v6991
      %v7012 = vpack.c.bf16 %v6996, %v6994
      %v7013 = vpack.c.bf16 %v6997, %v6995
      %s7014 = scalar_lea.vmem %s13, 768
      %v7015 = vld [vmem:[%s7014] sm:$0xff]
      %v7016 = vld [vmem:[%s7014 + $0x8] sm:$0xff]
      %v7017 = vld [vmem:[%s7014 + $0x10] sm:$0xff]
      %v7018 = vld [vmem:[%s7014 + $0x18] sm:$0xff]
      %v7019 = vld [vmem:[%s7014 + $0x20] sm:$0xff]
      %v7020 = vld [vmem:[%s7014 + $0x28] sm:$0xff]
      %v7021 = vld [vmem:[%s7014 + $0x30] sm:$0xff]
      %v7022 = vld [vmem:[%s7014 + $0x38] sm:$0xff]
      %v7023 = vld [vmem:[%s7014 + $0x40] sm:$0xff]
      %v7024 = vld [vmem:[%s7014 + $0x48] sm:$0xff]
      %v7025 = vld [vmem:[%s7014 + $0x50] sm:$0xff]
      %v7026 = vld [vmem:[%s7014 + $0x58] sm:$0xff]
      %v7027 = vld [vmem:[%s7014 + $0x60] sm:$0xff]
      %v7028 = vld [vmem:[%s7014 + $0x68] sm:$0xff]
      %v7029 = vld [vmem:[%s7014 + $0x70] sm:$0xff]
      %v7030 = vld [vmem:[%s7014 + $0x78] sm:$0xff]
      %v7031 = vld [vmem:[%s7014 + $0x80] sm:$0xff]
      %v7032 = vld [vmem:[%s7014 + $0x88] sm:$0xff]
      %v7033 = vld [vmem:[%s7014 + $0x90] sm:$0xff]
      %v7034 = vld [vmem:[%s7014 + $0x98] sm:$0xff]
      %v7035 = vld [vmem:[%s7014 + $0xa0] sm:$0xff]
      %v7036 = vld [vmem:[%s7014 + $0xa8] sm:$0xff]
      %v7037 = vld [vmem:[%s7014 + $0xb0] sm:$0xff]
      %v7038 = vld [vmem:[%s7014 + $0xb8] sm:$0xff]
      %v7039 = vld [vmem:[%s7014 + $0xc0] sm:$0xff]
      %v7040 = vld [vmem:[%s7014 + $0xc8] sm:$0xff]
      %v7041 = vld [vmem:[%s7014 + $0xd0] sm:$0xff]
      %v7042 = vld [vmem:[%s7014 + $0xd8] sm:$0xff]
      %v7043 = vld [vmem:[%s7014 + $0xe0] sm:$0xff]
      %v7044 = vld [vmem:[%s7014 + $0xe8] sm:$0xff]
      %v7045 = vld [vmem:[%s7014 + $0xf0] sm:$0xff]
      %v7046 = vld [vmem:[%s7014 + $0xf8] sm:$0xff]
      %s7047 = scalar_lea.vmem %s14, 6
      %v7048 = vld [vmem:[%s7047] sm:$0x3]
      %v7050 = vperm.slane %v7048, 0
      %v7051 = vperm.slane %v7048, 1
      %v7086 = vunpack.c.l.b16 %v7015
      %v7087 = vunpack.c.h.b16 %v7015
      %v7088 = vunpack.c.l.b16 %v7016
      %v7089 = vunpack.c.h.b16 %v7016
      %v7090 = vunpack.c.l.b16 %v7017
      %v7091 = vunpack.c.h.b16 %v7017
      %v7092 = vunpack.c.l.b16 %v7018
      %v7093 = vunpack.c.h.b16 %v7018
      %v7094 = vunpack.c.l.b16 %v7019
      %v7095 = vunpack.c.h.b16 %v7019
      %v7096 = vunpack.c.l.b16 %v7020
      %v7097 = vunpack.c.h.b16 %v7020
      %v7098 = vunpack.c.l.b16 %v7021
      %v7099 = vunpack.c.h.b16 %v7021
      %v7100 = vunpack.c.l.b16 %v7022
      %v7101 = vunpack.c.h.b16 %v7022
      %v7102 = vunpack.c.l.b16 %v7023
      %v7103 = vunpack.c.h.b16 %v7023
      %v7104 = vunpack.c.l.b16 %v7024
      %v7105 = vunpack.c.h.b16 %v7024
      %v7106 = vunpack.c.l.b16 %v7025
      %v7107 = vunpack.c.h.b16 %v7025
      %v7108 = vunpack.c.l.b16 %v7026
      %v7109 = vunpack.c.h.b16 %v7026
      %v7110 = vunpack.c.l.b16 %v7027
      %v7111 = vunpack.c.h.b16 %v7027
      %v7112 = vunpack.c.l.b16 %v7028
      %v7113 = vunpack.c.h.b16 %v7028
      %v7114 = vunpack.c.l.b16 %v7029
      %v7115 = vunpack.c.h.b16 %v7029
      %v7116 = vunpack.c.l.b16 %v7030
      %v7117 = vunpack.c.h.b16 %v7030
      %v7118 = vunpack.c.l.b16 %v7031
      %v7119 = vunpack.c.h.b16 %v7031
      %v7120 = vunpack.c.l.b16 %v7032
      %v7121 = vunpack.c.h.b16 %v7032
      %v7122 = vunpack.c.l.b16 %v7033
      %v7123 = vunpack.c.h.b16 %v7033
      %v7124 = vunpack.c.l.b16 %v7034
      %v7125 = vunpack.c.h.b16 %v7034
      %v7126 = vunpack.c.l.b16 %v7035
      %v7127 = vunpack.c.h.b16 %v7035
      %v7128 = vunpack.c.l.b16 %v7036
      %v7129 = vunpack.c.h.b16 %v7036
      %v7130 = vunpack.c.l.b16 %v7037
      %v7131 = vunpack.c.h.b16 %v7037
      %v7132 = vunpack.c.l.b16 %v7038
      %v7133 = vunpack.c.h.b16 %v7038
      %v7134 = vunpack.c.l.b16 %v7039
      %v7135 = vunpack.c.h.b16 %v7039
      %v7136 = vunpack.c.l.b16 %v7040
      %v7137 = vunpack.c.h.b16 %v7040
      %v7138 = vunpack.c.l.b16 %v7041
      %v7139 = vunpack.c.h.b16 %v7041
      %v7140 = vunpack.c.l.b16 %v7042
      %v7141 = vunpack.c.h.b16 %v7042
      %v7142 = vunpack.c.l.b16 %v7043
      %v7143 = vunpack.c.h.b16 %v7043
      %v7144 = vunpack.c.l.b16 %v7044
      %v7145 = vunpack.c.h.b16 %v7044
      %v7146 = vunpack.c.l.b16 %v7045
      %v7147 = vunpack.c.h.b16 %v7045
      %v7148 = vunpack.c.l.b16 %v7046
      %v7149 = vunpack.c.h.b16 %v7046
      %v7150 = vpack.c.b16 %v7088, %v7086
      %v7151 = vpack.c.b16 %v7089, %v7087
      %v7152 = vpack.c.b16 %v7092, %v7090
      %v7153 = vpack.c.b16 %v7093, %v7091
      %v7154 = vpack.c.b16 %v7096, %v7094
      %v7155 = vpack.c.b16 %v7097, %v7095
      %v7156 = vpack.c.b16 %v7100, %v7098
      %v7157 = vpack.c.b16 %v7101, %v7099
      %v7158 = vpack.c.b16 %v7104, %v7102
      %v7159 = vpack.c.b16 %v7105, %v7103
      %v7160 = vpack.c.b16 %v7108, %v7106
      %v7161 = vpack.c.b16 %v7109, %v7107
      %v7162 = vpack.c.b16 %v7112, %v7110
      %v7163 = vpack.c.b16 %v7113, %v7111
      %v7164 = vpack.c.b16 %v7116, %v7114
      %v7165 = vpack.c.b16 %v7117, %v7115
      %v7166 = vpack.c.b16 %v7120, %v7118
      %v7167 = vpack.c.b16 %v7121, %v7119
      %v7168 = vpack.c.b16 %v7124, %v7122
      %v7169 = vpack.c.b16 %v7125, %v7123
      %v7170 = vpack.c.b16 %v7128, %v7126
      %v7171 = vpack.c.b16 %v7129, %v7127
      %v7172 = vpack.c.b16 %v7132, %v7130
      %v7173 = vpack.c.b16 %v7133, %v7131
      %v7174 = vpack.c.b16 %v7136, %v7134
      %v7175 = vpack.c.b16 %v7137, %v7135
      %v7176 = vpack.c.b16 %v7140, %v7138
      %v7177 = vpack.c.b16 %v7141, %v7139
      %v7178 = vpack.c.b16 %v7144, %v7142
      %v7179 = vpack.c.b16 %v7145, %v7143
      %v7180 = vpack.c.b16 %v7148, %v7146
      %v7181 = vpack.c.b16 %v7149, %v7147
      %7214 = vmatpush.bf16.msra.mxu0 %v7164
      %7215 = vmatpush.bf16.msra.mxu0 %v7162
      %7216 = vmatpush.bf16.msra.mxu0 %v7160
      %7217 = vmatpush.bf16.msra.mxu0 %v7158
      %7218 = vmatpush.bf16.msra.mxu0 %v7156
      %7219 = vmatpush.bf16.msra.mxu0 %v7154
      %7220 = vmatpush.bf16.msra.mxu0 %v7152
      %7221 = vmatpush.bf16.msra.mxu0 %v7150
      %7222 = vmatmul.bf16.gmra.mxu0 %v6998
      %v7223 = vpop.f32.mrf.mxu0
      %v7224 = vadd.f32 %v7050, %v7223
      %v7225 = vpop.f32.mrf.mxu0
      %v7226 = vadd.f32 %v7050, %v7225
      %7227 = vmatmul.bf16.gmra.mxu0 %v7000
      %v7228 = vpop.f32.mrf.mxu0
      %v7229 = vadd.f32 %v7050, %v7228
      %v7230 = vpop.f32.mrf.mxu0
      %v7231 = vadd.f32 %v7050, %v7230
      %7232 = vmatmul.bf16.gmra.mxu0 %v7002
      %v7233 = vpop.f32.mrf.mxu0
      %v7234 = vadd.f32 %v7050, %v7233
      %v7235 = vpop.f32.mrf.mxu0
      %v7236 = vadd.f32 %v7050, %v7235
      %7237 = vmatmul.bf16.gmra.mxu0 %v7004
      %v7238 = vpop.f32.mrf.mxu0
      %v7239 = vadd.f32 %v7050, %v7238
      %v7240 = vpop.f32.mrf.mxu0
      %v7241 = vadd.f32 %v7050, %v7240
      %7242 = vmatmul.bf16.gmra.mxu0 %v7006
      %v7243 = vpop.f32.mrf.mxu0
      %v7244 = vadd.f32 %v7050, %v7243
      %v7245 = vpop.f32.mrf.mxu0
      %v7246 = vadd.f32 %v7050, %v7245
      %7247 = vmatmul.bf16.gmra.mxu0 %v7008
      %v7248 = vpop.f32.mrf.mxu0
      %v7249 = vadd.f32 %v7050, %v7248
      %v7250 = vpop.f32.mrf.mxu0
      %v7251 = vadd.f32 %v7050, %v7250
      %7252 = vmatmul.bf16.gmra.mxu0 %v7010
      %v7253 = vpop.f32.mrf.mxu0
      %v7254 = vadd.f32 %v7050, %v7253
      %v7255 = vpop.f32.mrf.mxu0
      %v7256 = vadd.f32 %v7050, %v7255
      %7257 = vmatmul.bf16.gmra.mxu0 %v7012
      %v7258 = vpop.f32.mrf.mxu0
      %v7259 = vadd.f32 %v7050, %v7258
      %v7260 = vpop.f32.mrf.mxu0
      %v7261 = vadd.f32 %v7050, %v7260
      %7262 = vdwg.mxu0
      %7263 = vmatpush.bf16.msra.mxu0 %v7180
      %7264 = vmatpush.bf16.msra.mxu0 %v7178
      %7265 = vmatpush.bf16.msra.mxu0 %v7176
      %7266 = vmatpush.bf16.msra.mxu0 %v7174
      %7267 = vmatpush.bf16.msra.mxu0 %v7172
      %7268 = vmatpush.bf16.msra.mxu0 %v7170
      %7269 = vmatpush.bf16.msra.mxu0 %v7168
      %7270 = vmatpush.bf16.msra.mxu0 %v7166
      %7271 = vmatmul.bf16.gmra.mxu0 %v6999
      %v7272 = vpop.f32.mrf.mxu0
      %v7273 = vadd.f32 %v7224, %v7272
      %v7274 = vpop.f32.mrf.mxu0
      %v7275 = vadd.f32 %v7226, %v7274
      %7276 = vmatmul.bf16.gmra.mxu0 %v7001
      %v7277 = vpop.f32.mrf.mxu0
      %v7278 = vadd.f32 %v7229, %v7277
      %v7279 = vpop.f32.mrf.mxu0
      %v7280 = vadd.f32 %v7231, %v7279
      %7281 = vmatmul.bf16.gmra.mxu0 %v7003
      %v7282 = vpop.f32.mrf.mxu0
      %v7283 = vadd.f32 %v7234, %v7282
      %v7284 = vpop.f32.mrf.mxu0
      %v7285 = vadd.f32 %v7236, %v7284
      %7286 = vmatmul.bf16.gmra.mxu0 %v7005
      %v7287 = vpop.f32.mrf.mxu0
      %v7288 = vadd.f32 %v7239, %v7287
      %v7289 = vpop.f32.mrf.mxu0
      %v7290 = vadd.f32 %v7241, %v7289
      %7291 = vmatmul.bf16.gmra.mxu0 %v7007
      %v7292 = vpop.f32.mrf.mxu0
      %v7293 = vadd.f32 %v7244, %v7292
      %v7294 = vpop.f32.mrf.mxu0
      %v7295 = vadd.f32 %v7246, %v7294
      %7296 = vmatmul.bf16.gmra.mxu0 %v7009
      %v7297 = vpop.f32.mrf.mxu0
      %v7298 = vadd.f32 %v7249, %v7297
      %v7299 = vpop.f32.mrf.mxu0
      %v7300 = vadd.f32 %v7251, %v7299
      %7301 = vmatmul.bf16.gmra.mxu0 %v7011
      %v7302 = vpop.f32.mrf.mxu0
      %v7303 = vadd.f32 %v7254, %v7302
      %v7304 = vpop.f32.mrf.mxu0
      %v7305 = vadd.f32 %v7256, %v7304
      %7306 = vmatmul.bf16.gmra.mxu0 %v7013
      %v7307 = vpop.f32.mrf.mxu0
      %v7308 = vadd.f32 %v7259, %v7307
      %v7309 = vpop.f32.mrf.mxu0
      %v7310 = vadd.f32 %v7261, %v7309
      %7311 = vdwg.mxu0
      %7312 = vmatpush.bf16.msra.mxu0 %v7165
      %7313 = vmatpush.bf16.msra.mxu0 %v7163
      %7314 = vmatpush.bf16.msra.mxu0 %v7161
      %7315 = vmatpush.bf16.msra.mxu0 %v7159
      %7316 = vmatpush.bf16.msra.mxu0 %v7157
      %7317 = vmatpush.bf16.msra.mxu0 %v7155
      %7318 = vmatpush.bf16.msra.mxu0 %v7153
      %7319 = vmatpush.bf16.msra.mxu0 %v7151
      %7320 = vmatmul.bf16.gmra.mxu0 %v6998
      %v7321 = vpop.f32.mrf.mxu0
      %v7322 = vadd.f32 %v7051, %v7321
      %v7323 = vpop.f32.mrf.mxu0
      %v7324 = vadd.f32 %v7051, %v7323
      %7325 = vmatmul.bf16.gmra.mxu0 %v7000
      %v7326 = vpop.f32.mrf.mxu0
      %v7327 = vadd.f32 %v7051, %v7326
      %v7328 = vpop.f32.mrf.mxu0
      %v7329 = vadd.f32 %v7051, %v7328
      %7330 = vmatmul.bf16.gmra.mxu0 %v7002
      %v7331 = vpop.f32.mrf.mxu0
      %v7332 = vadd.f32 %v7051, %v7331
      %v7333 = vpop.f32.mrf.mxu0
      %v7334 = vadd.f32 %v7051, %v7333
      %7335 = vmatmul.bf16.gmra.mxu0 %v7004
      %v7336 = vpop.f32.mrf.mxu0
      %v7337 = vadd.f32 %v7051, %v7336
      %v7338 = vpop.f32.mrf.mxu0
      %v7339 = vadd.f32 %v7051, %v7338
      %7340 = vmatmul.bf16.gmra.mxu0 %v7006
      %v7341 = vpop.f32.mrf.mxu0
      %v7342 = vadd.f32 %v7051, %v7341
      %v7343 = vpop.f32.mrf.mxu0
      %v7344 = vadd.f32 %v7051, %v7343
      %7345 = vmatmul.bf16.gmra.mxu0 %v7008
      %v7346 = vpop.f32.mrf.mxu0
      %v7347 = vadd.f32 %v7051, %v7346
      %v7348 = vpop.f32.mrf.mxu0
      %v7349 = vadd.f32 %v7051, %v7348
      %7350 = vmatmul.bf16.gmra.mxu0 %v7010
      %v7351 = vpop.f32.mrf.mxu0
      %v7352 = vadd.f32 %v7051, %v7351
      %v7353 = vpop.f32.mrf.mxu0
      %v7354 = vadd.f32 %v7051, %v7353
      %7355 = vmatmul.bf16.gmra.mxu0 %v7012
      %v7356 = vpop.f32.mrf.mxu0
      %v7357 = vadd.f32 %v7051, %v7356
      %v7358 = vpop.f32.mrf.mxu0
      %v7359 = vadd.f32 %v7051, %v7358
      %7360 = vdwg.mxu0
      %7361 = vmatpush.bf16.msra.mxu0 %v7181
      %7362 = vmatpush.bf16.msra.mxu0 %v7179
      %7363 = vmatpush.bf16.msra.mxu0 %v7177
      %7364 = vmatpush.bf16.msra.mxu0 %v7175
      %7365 = vmatpush.bf16.msra.mxu0 %v7173
      %7366 = vmatpush.bf16.msra.mxu0 %v7171
      %7367 = vmatpush.bf16.msra.mxu0 %v7169
      %7368 = vmatpush.bf16.msra.mxu0 %v7167
      %7369 = vmatmul.bf16.gmra.mxu0 %v6999
      %v7370 = vpop.f32.mrf.mxu0
      %v7371 = vadd.f32 %v7322, %v7370
      %v7372 = vpop.f32.mrf.mxu0
      %v7373 = vadd.f32 %v7324, %v7372
      %7374 = vmatmul.bf16.gmra.mxu0 %v7001
      %v7375 = vpop.f32.mrf.mxu0
      %v7376 = vadd.f32 %v7327, %v7375
      %v7377 = vpop.f32.mrf.mxu0
      %v7378 = vadd.f32 %v7329, %v7377
      %7379 = vmatmul.bf16.gmra.mxu0 %v7003
      %v7380 = vpop.f32.mrf.mxu0
      %v7381 = vadd.f32 %v7332, %v7380
      %v7382 = vpop.f32.mrf.mxu0
      %v7383 = vadd.f32 %v7334, %v7382
      %7384 = vmatmul.bf16.gmra.mxu0 %v7005
      %v7385 = vpop.f32.mrf.mxu0
      %v7386 = vadd.f32 %v7337, %v7385
      %v7387 = vpop.f32.mrf.mxu0
      %v7388 = vadd.f32 %v7339, %v7387
      %7389 = vmatmul.bf16.gmra.mxu0 %v7007
      %v7390 = vpop.f32.mrf.mxu0
      %v7391 = vadd.f32 %v7342, %v7390
      %v7392 = vpop.f32.mrf.mxu0
      %v7393 = vadd.f32 %v7344, %v7392
      %7394 = vmatmul.bf16.gmra.mxu0 %v7009
      %v7395 = vpop.f32.mrf.mxu0
      %v7396 = vadd.f32 %v7347, %v7395
      %v7397 = vpop.f32.mrf.mxu0
      %v7398 = vadd.f32 %v7349, %v7397
      %7399 = vmatmul.bf16.gmra.mxu0 %v7011
      %v7400 = vpop.f32.mrf.mxu0
      %v7401 = vadd.f32 %v7352, %v7400
      %v7402 = vpop.f32.mrf.mxu0
      %v7403 = vadd.f32 %v7354, %v7402
      %7404 = vmatmul.bf16.gmra.mxu0 %v7013
      %v7405 = vpop.f32.mrf.mxu0
      %v7406 = vadd.f32 %v7357, %v7405
      %v7407 = vpop.f32.mrf.mxu0
      %v7408 = vadd.f32 %v7359, %v7407
      %7409 = vdwg.mxu0
      %v7410 = vmul.f32 %v7273, 0.01
      %v7411 = vmul.f32 %v7371, 0.01
      %v7412 = vmul.f32 %v7275, 0.01
      %v7413 = vmul.f32 %v7373, 0.01
      %v7414 = vmul.f32 %v7278, 0.01
      %v7415 = vmul.f32 %v7376, 0.01
      %v7416 = vmul.f32 %v7280, 0.01
      %v7417 = vmul.f32 %v7378, 0.01
      %v7418 = vmul.f32 %v7283, 0.01
      %v7419 = vmul.f32 %v7381, 0.01
      %v7420 = vmul.f32 %v7285, 0.01
      %v7421 = vmul.f32 %v7383, 0.01
      %v7422 = vmul.f32 %v7288, 0.01
      %v7423 = vmul.f32 %v7386, 0.01
      %v7424 = vmul.f32 %v7290, 0.01
      %v7425 = vmul.f32 %v7388, 0.01
      %v7426 = vmul.f32 %v7293, 0.01
      %v7427 = vmul.f32 %v7391, 0.01
      %v7428 = vmul.f32 %v7295, 0.01
      %v7429 = vmul.f32 %v7393, 0.01
      %v7430 = vmul.f32 %v7298, 0.01
      %v7431 = vmul.f32 %v7396, 0.01
      %v7432 = vmul.f32 %v7300, 0.01
      %v7433 = vmul.f32 %v7398, 0.01
      %v7434 = vmul.f32 %v7303, 0.01
      %v7435 = vmul.f32 %v7401, 0.01
      %v7436 = vmul.f32 %v7305, 0.01
      %v7437 = vmul.f32 %v7403, 0.01
      %v7438 = vmul.f32 %v7308, 0.01
      %v7439 = vmul.f32 %v7406, 0.01
      %v7440 = vmul.f32 %v7310, 0.01
      %v7441 = vmul.f32 %v7408, 0.01
      %v7442 = vmax.f32 %v7273, %v7410
      %v7443 = vmax.f32 %v7371, %v7411
      %v7444 = vmax.f32 %v7275, %v7412
      %v7445 = vmax.f32 %v7373, %v7413
      %v7446 = vmax.f32 %v7278, %v7414
      %v7447 = vmax.f32 %v7376, %v7415
      %v7448 = vmax.f32 %v7280, %v7416
      %v7449 = vmax.f32 %v7378, %v7417
      %v7450 = vmax.f32 %v7283, %v7418
      %v7451 = vmax.f32 %v7381, %v7419
      %v7452 = vmax.f32 %v7285, %v7420
      %v7453 = vmax.f32 %v7383, %v7421
      %v7454 = vmax.f32 %v7288, %v7422
      %v7455 = vmax.f32 %v7386, %v7423
      %v7456 = vmax.f32 %v7290, %v7424
      %v7457 = vmax.f32 %v7388, %v7425
      %v7458 = vmax.f32 %v7293, %v7426
      %v7459 = vmax.f32 %v7391, %v7427
      %v7460 = vmax.f32 %v7295, %v7428
      %v7461 = vmax.f32 %v7393, %v7429
      %v7462 = vmax.f32 %v7298, %v7430
      %v7463 = vmax.f32 %v7396, %v7431
      %v7464 = vmax.f32 %v7300, %v7432
      %v7465 = vmax.f32 %v7398, %v7433
      %v7466 = vmax.f32 %v7303, %v7434
      %v7467 = vmax.f32 %v7401, %v7435
      %v7468 = vmax.f32 %v7305, %v7436
      %v7469 = vmax.f32 %v7403, %v7437
      %v7470 = vmax.f32 %v7308, %v7438
      %v7471 = vmax.f32 %v7406, %v7439
      %v7472 = vmax.f32 %v7310, %v7440
      %v7473 = vmax.f32 %v7408, %v7441
      %v7474 = vadd.f32 %v6966, %v7442
      %v7475 = vadd.f32 %v6967, %v7443
      %v7476 = vadd.f32 %v6968, %v7444
      %v7477 = vadd.f32 %v6969, %v7445
      %v7478 = vadd.f32 %v6970, %v7446
      %v7479 = vadd.f32 %v6971, %v7447
      %v7480 = vadd.f32 %v6972, %v7448
      %v7481 = vadd.f32 %v6973, %v7449
      %v7482 = vadd.f32 %v6974, %v7450
      %v7483 = vadd.f32 %v6975, %v7451
      %v7484 = vadd.f32 %v6976, %v7452
      %v7485 = vadd.f32 %v6977, %v7453
      %v7486 = vadd.f32 %v6978, %v7454
      %v7487 = vadd.f32 %v6979, %v7455
      %v7488 = vadd.f32 %v6980, %v7456
      %v7489 = vadd.f32 %v6981, %v7457
      %v7490 = vadd.f32 %v6982, %v7458
      %v7491 = vadd.f32 %v6983, %v7459
      %v7492 = vadd.f32 %v6984, %v7460
      %v7493 = vadd.f32 %v6985, %v7461
      %v7494 = vadd.f32 %v6986, %v7462
      %v7495 = vadd.f32 %v6987, %v7463
      %v7496 = vadd.f32 %v6988, %v7464
      %v7497 = vadd.f32 %v6989, %v7465
      %v7498 = vadd.f32 %v6990, %v7466
      %v7499 = vadd.f32 %v6991, %v7467
      %v7500 = vadd.f32 %v6992, %v7468
      %v7501 = vadd.f32 %v6993, %v7469
      %v7502 = vadd.f32 %v6994, %v7470
      %v7503 = vadd.f32 %v6995, %v7471
      %v7504 = vadd.f32 %v6996, %v7472
      %v7505 = vadd.f32 %v6997, %v7473
      %v7506 = vpack.c.bf16 %v7475, %v7474
      %v7507 = vpack.c.bf16 %v7477, %v7476
      %v7508 = vpack.c.bf16 %v7479, %v7478
      %v7509 = vpack.c.bf16 %v7481, %v7480
      %v7510 = vpack.c.bf16 %v7483, %v7482
      %v7511 = vpack.c.bf16 %v7485, %v7484
      %v7512 = vpack.c.bf16 %v7487, %v7486
      %v7513 = vpack.c.bf16 %v7489, %v7488
      %v7514 = vpack.c.bf16 %v7491, %v7490
      %v7515 = vpack.c.bf16 %v7493, %v7492
      %v7516 = vpack.c.bf16 %v7495, %v7494
      %v7517 = vpack.c.bf16 %v7497, %v7496
      %v7518 = vpack.c.bf16 %v7499, %v7498
      %v7519 = vpack.c.bf16 %v7501, %v7500
      %v7520 = vpack.c.bf16 %v7503, %v7502
      %v7521 = vpack.c.bf16 %v7505, %v7504
      %v7522 = vpack.c.bf16 %v3256, %v3246
      %v7523 = vpack.c.bf16 %v3257, %v3247
      %v7524 = vpack.c.bf16 %v3276, %v3266
      %v7525 = vpack.c.bf16 %v3277, %v3267
      %v7526 = vpack.c.bf16 %v3296, %v3286
      %v7527 = vpack.c.bf16 %v3297, %v3287
      %v7528 = vpack.c.bf16 %v3316, %v3306
      %v7529 = vpack.c.bf16 %v3317, %v3307
      %v7530 = vpack.c.bf16 %v3336, %v3326
      %v7531 = vpack.c.bf16 %v3337, %v3327
      %v7532 = vpack.c.bf16 %v3356, %v3346
      %v7533 = vpack.c.bf16 %v3357, %v3347
      %v7534 = vpack.c.bf16 %v3376, %v3366
      %v7535 = vpack.c.bf16 %v3377, %v3367
      %v7536 = vpack.c.bf16 %v3396, %v3386
      %v7537 = vpack.c.bf16 %v3397, %v3387
      %s7538 = scalar_lea.vmem %s11, 1024
      %v7539 = vld [vmem:[%s7538] sm:$0xff]
      %v7540 = vld [vmem:[%s7538 + $0x8] sm:$0xff]
      %v7541 = vld [vmem:[%s7538 + $0x10] sm:$0xff]
      %v7542 = vld [vmem:[%s7538 + $0x18] sm:$0xff]
      %v7543 = vld [vmem:[%s7538 + $0x20] sm:$0xff]
      %v7544 = vld [vmem:[%s7538 + $0x28] sm:$0xff]
      %v7545 = vld [vmem:[%s7538 + $0x30] sm:$0xff]
      %v7546 = vld [vmem:[%s7538 + $0x38] sm:$0xff]
      %v7547 = vld [vmem:[%s7538 + $0x40] sm:$0xff]
      %v7548 = vld [vmem:[%s7538 + $0x48] sm:$0xff]
      %v7549 = vld [vmem:[%s7538 + $0x50] sm:$0xff]
      %v7550 = vld [vmem:[%s7538 + $0x58] sm:$0xff]
      %v7551 = vld [vmem:[%s7538 + $0x60] sm:$0xff]
      %v7552 = vld [vmem:[%s7538 + $0x68] sm:$0xff]
      %v7553 = vld [vmem:[%s7538 + $0x70] sm:$0xff]
      %v7554 = vld [vmem:[%s7538 + $0x78] sm:$0xff]
      %v7555 = vld [vmem:[%s7538 + $0x80] sm:$0xff]
      %v7556 = vld [vmem:[%s7538 + $0x88] sm:$0xff]
      %v7557 = vld [vmem:[%s7538 + $0x90] sm:$0xff]
      %v7558 = vld [vmem:[%s7538 + $0x98] sm:$0xff]
      %v7559 = vld [vmem:[%s7538 + $0xa0] sm:$0xff]
      %v7560 = vld [vmem:[%s7538 + $0xa8] sm:$0xff]
      %v7561 = vld [vmem:[%s7538 + $0xb0] sm:$0xff]
      %v7562 = vld [vmem:[%s7538 + $0xb8] sm:$0xff]
      %v7563 = vld [vmem:[%s7538 + $0xc0] sm:$0xff]
      %v7564 = vld [vmem:[%s7538 + $0xc8] sm:$0xff]
      %v7565 = vld [vmem:[%s7538 + $0xd0] sm:$0xff]
      %v7566 = vld [vmem:[%s7538 + $0xd8] sm:$0xff]
      %v7567 = vld [vmem:[%s7538 + $0xe0] sm:$0xff]
      %v7568 = vld [vmem:[%s7538 + $0xe8] sm:$0xff]
      %v7569 = vld [vmem:[%s7538 + $0xf0] sm:$0xff]
      %v7570 = vld [vmem:[%s7538 + $0xf8] sm:$0xff]
      %s7571 = scalar_lea.vmem %s12, 8
      %v7572 = vld [vmem:[%s7571] sm:$0x3]
      %v7574 = vperm.slane %v7572, 0
      %v7575 = vperm.slane %v7572, 1
      %v7610 = vunpack.c.l.b16 %v7539
      %v7611 = vunpack.c.h.b16 %v7539
      %v7612 = vunpack.c.l.b16 %v7540
      %v7613 = vunpack.c.h.b16 %v7540
      %v7614 = vunpack.c.l.b16 %v7541
      %v7615 = vunpack.c.h.b16 %v7541
      %v7616 = vunpack.c.l.b16 %v7542
      %v7617 = vunpack.c.h.b16 %v7542
      %v7618 = vunpack.c.l.b16 %v7543
      %v7619 = vunpack.c.h.b16 %v7543
      %v7620 = vunpack.c.l.b16 %v7544
      %v7621 = vunpack.c.h.b16 %v7544
      %v7622 = vunpack.c.l.b16 %v7545
      %v7623 = vunpack.c.h.b16 %v7545
      %v7624 = vunpack.c.l.b16 %v7546
      %v7625 = vunpack.c.h.b16 %v7546
      %v7626 = vunpack.c.l.b16 %v7547
      %v7627 = vunpack.c.h.b16 %v7547
      %v7628 = vunpack.c.l.b16 %v7548
      %v7629 = vunpack.c.h.b16 %v7548
      %v7630 = vunpack.c.l.b16 %v7549
      %v7631 = vunpack.c.h.b16 %v7549
      %v7632 = vunpack.c.l.b16 %v7550
      %v7633 = vunpack.c.h.b16 %v7550
      %v7634 = vunpack.c.l.b16 %v7551
      %v7635 = vunpack.c.h.b16 %v7551
      %v7636 = vunpack.c.l.b16 %v7552
      %v7637 = vunpack.c.h.b16 %v7552
      %v7638 = vunpack.c.l.b16 %v7553
      %v7639 = vunpack.c.h.b16 %v7553
      %v7640 = vunpack.c.l.b16 %v7554
      %v7641 = vunpack.c.h.b16 %v7554
      %v7642 = vunpack.c.l.b16 %v7555
      %v7643 = vunpack.c.h.b16 %v7555
      %v7644 = vunpack.c.l.b16 %v7556
      %v7645 = vunpack.c.h.b16 %v7556
      %v7646 = vunpack.c.l.b16 %v7557
      %v7647 = vunpack.c.h.b16 %v7557
      %v7648 = vunpack.c.l.b16 %v7558
      %v7649 = vunpack.c.h.b16 %v7558
      %v7650 = vunpack.c.l.b16 %v7559
      %v7651 = vunpack.c.h.b16 %v7559
      %v7652 = vunpack.c.l.b16 %v7560
      %v7653 = vunpack.c.h.b16 %v7560
      %v7654 = vunpack.c.l.b16 %v7561
      %v7655 = vunpack.c.h.b16 %v7561
      %v7656 = vunpack.c.l.b16 %v7562
      %v7657 = vunpack.c.h.b16 %v7562
      %v7658 = vunpack.c.l.b16 %v7563
      %v7659 = vunpack.c.h.b16 %v7563
      %v7660 = vunpack.c.l.b16 %v7564
      %v7661 = vunpack.c.h.b16 %v7564
      %v7662 = vunpack.c.l.b16 %v7565
      %v7663 = vunpack.c.h.b16 %v7565
      %v7664 = vunpack.c.l.b16 %v7566
      %v7665 = vunpack.c.h.b16 %v7566
      %v7666 = vunpack.c.l.b16 %v7567
      %v7667 = vunpack.c.h.b16 %v7567
      %v7668 = vunpack.c.l.b16 %v7568
      %v7669 = vunpack.c.h.b16 %v7568
      %v7670 = vunpack.c.l.b16 %v7569
      %v7671 = vunpack.c.h.b16 %v7569
      %v7672 = vunpack.c.l.b16 %v7570
      %v7673 = vunpack.c.h.b16 %v7570
      %v7674 = vpack.c.b16 %v7612, %v7610
      %v7675 = vpack.c.b16 %v7613, %v7611
      %v7676 = vpack.c.b16 %v7616, %v7614
      %v7677 = vpack.c.b16 %v7617, %v7615
      %v7678 = vpack.c.b16 %v7620, %v7618
      %v7679 = vpack.c.b16 %v7621, %v7619
      %v7680 = vpack.c.b16 %v7624, %v7622
      %v7681 = vpack.c.b16 %v7625, %v7623
      %v7682 = vpack.c.b16 %v7628, %v7626
      %v7683 = vpack.c.b16 %v7629, %v7627
      %v7684 = vpack.c.b16 %v7632, %v7630
      %v7685 = vpack.c.b16 %v7633, %v7631
      %v7686 = vpack.c.b16 %v7636, %v7634
      %v7687 = vpack.c.b16 %v7637, %v7635
      %v7688 = vpack.c.b16 %v7640, %v7638
      %v7689 = vpack.c.b16 %v7641, %v7639
      %v7690 = vpack.c.b16 %v7644, %v7642
      %v7691 = vpack.c.b16 %v7645, %v7643
      %v7692 = vpack.c.b16 %v7648, %v7646
      %v7693 = vpack.c.b16 %v7649, %v7647
      %v7694 = vpack.c.b16 %v7652, %v7650
      %v7695 = vpack.c.b16 %v7653, %v7651
      %v7696 = vpack.c.b16 %v7656, %v7654
      %v7697 = vpack.c.b16 %v7657, %v7655
      %v7698 = vpack.c.b16 %v7660, %v7658
      %v7699 = vpack.c.b16 %v7661, %v7659
      %v7700 = vpack.c.b16 %v7664, %v7662
      %v7701 = vpack.c.b16 %v7665, %v7663
      %v7702 = vpack.c.b16 %v7668, %v7666
      %v7703 = vpack.c.b16 %v7669, %v7667
      %v7704 = vpack.c.b16 %v7672, %v7670
      %v7705 = vpack.c.b16 %v7673, %v7671
      %7738 = vmatpush.bf16.msra.mxu0 %v7688
      %7739 = vmatpush.bf16.msra.mxu0 %v7686
      %7740 = vmatpush.bf16.msra.mxu0 %v7684
      %7741 = vmatpush.bf16.msra.mxu0 %v7682
      %7742 = vmatpush.bf16.msra.mxu0 %v7680
      %7743 = vmatpush.bf16.msra.mxu0 %v7678
      %7744 = vmatpush.bf16.msra.mxu0 %v7676
      %7745 = vmatpush.bf16.msra.mxu0 %v7674
      %7746 = vmatmul.bf16.gmra.mxu0 %v7522
      %v7747 = vpop.f32.mrf.mxu0
      %v7748 = vadd.f32 %v7574, %v7747
      %v7749 = vpop.f32.mrf.mxu0
      %v7750 = vadd.f32 %v7574, %v7749
      %7751 = vmatmul.bf16.gmra.mxu0 %v7524
      %v7752 = vpop.f32.mrf.mxu0
      %v7753 = vadd.f32 %v7574, %v7752
      %v7754 = vpop.f32.mrf.mxu0
      %v7755 = vadd.f32 %v7574, %v7754
      %7756 = vmatmul.bf16.gmra.mxu0 %v7526
      %v7757 = vpop.f32.mrf.mxu0
      %v7758 = vadd.f32 %v7574, %v7757
      %v7759 = vpop.f32.mrf.mxu0
      %v7760 = vadd.f32 %v7574, %v7759
      %7761 = vmatmul.bf16.gmra.mxu0 %v7528
      %v7762 = vpop.f32.mrf.mxu0
      %v7763 = vadd.f32 %v7574, %v7762
      %v7764 = vpop.f32.mrf.mxu0
      %v7765 = vadd.f32 %v7574, %v7764
      %7766 = vmatmul.bf16.gmra.mxu0 %v7530
      %v7767 = vpop.f32.mrf.mxu0
      %v7768 = vadd.f32 %v7574, %v7767
      %v7769 = vpop.f32.mrf.mxu0
      %v7770 = vadd.f32 %v7574, %v7769
      %7771 = vmatmul.bf16.gmra.mxu0 %v7532
      %v7772 = vpop.f32.mrf.mxu0
      %v7773 = vadd.f32 %v7574, %v7772
      %v7774 = vpop.f32.mrf.mxu0
      %v7775 = vadd.f32 %v7574, %v7774
      %7776 = vmatmul.bf16.gmra.mxu0 %v7534
      %v7777 = vpop.f32.mrf.mxu0
      %v7778 = vadd.f32 %v7574, %v7777
      %v7779 = vpop.f32.mrf.mxu0
      %v7780 = vadd.f32 %v7574, %v7779
      %7781 = vmatmul.bf16.gmra.mxu0 %v7536
      %v7782 = vpop.f32.mrf.mxu0
      %v7783 = vadd.f32 %v7574, %v7782
      %v7784 = vpop.f32.mrf.mxu0
      %v7785 = vadd.f32 %v7574, %v7784
      %7786 = vdwg.mxu0
      %7787 = vmatpush.bf16.msra.mxu0 %v7704
      %7788 = vmatpush.bf16.msra.mxu0 %v7702
      %7789 = vmatpush.bf16.msra.mxu0 %v7700
      %7790 = vmatpush.bf16.msra.mxu0 %v7698
      %7791 = vmatpush.bf16.msra.mxu0 %v7696
      %7792 = vmatpush.bf16.msra.mxu0 %v7694
      %7793 = vmatpush.bf16.msra.mxu0 %v7692
      %7794 = vmatpush.bf16.msra.mxu0 %v7690
      %7795 = vmatmul.bf16.gmra.mxu0 %v7523
      %v7796 = vpop.f32.mrf.mxu0
      %v7797 = vadd.f32 %v7748, %v7796
      %v7798 = vpop.f32.mrf.mxu0
      %v7799 = vadd.f32 %v7750, %v7798
      %7800 = vmatmul.bf16.gmra.mxu0 %v7525
      %v7801 = vpop.f32.mrf.mxu0
      %v7802 = vadd.f32 %v7753, %v7801
      %v7803 = vpop.f32.mrf.mxu0
      %v7804 = vadd.f32 %v7755, %v7803
      %7805 = vmatmul.bf16.gmra.mxu0 %v7527
      %v7806 = vpop.f32.mrf.mxu0
      %v7807 = vadd.f32 %v7758, %v7806
      %v7808 = vpop.f32.mrf.mxu0
      %v7809 = vadd.f32 %v7760, %v7808
      %7810 = vmatmul.bf16.gmra.mxu0 %v7529
      %v7811 = vpop.f32.mrf.mxu0
      %v7812 = vadd.f32 %v7763, %v7811
      %v7813 = vpop.f32.mrf.mxu0
      %v7814 = vadd.f32 %v7765, %v7813
      %7815 = vmatmul.bf16.gmra.mxu0 %v7531
      %v7816 = vpop.f32.mrf.mxu0
      %v7817 = vadd.f32 %v7768, %v7816
      %v7818 = vpop.f32.mrf.mxu0
      %v7819 = vadd.f32 %v7770, %v7818
      %7820 = vmatmul.bf16.gmra.mxu0 %v7533
      %v7821 = vpop.f32.mrf.mxu0
      %v7822 = vadd.f32 %v7773, %v7821
      %v7823 = vpop.f32.mrf.mxu0
      %v7824 = vadd.f32 %v7775, %v7823
      %7825 = vmatmul.bf16.gmra.mxu0 %v7535
      %v7826 = vpop.f32.mrf.mxu0
      %v7827 = vadd.f32 %v7778, %v7826
      %v7828 = vpop.f32.mrf.mxu0
      %v7829 = vadd.f32 %v7780, %v7828
      %7830 = vmatmul.bf16.gmra.mxu0 %v7537
      %v7831 = vpop.f32.mrf.mxu0
      %v7832 = vadd.f32 %v7783, %v7831
      %v7833 = vpop.f32.mrf.mxu0
      %v7834 = vadd.f32 %v7785, %v7833
      %7835 = vdwg.mxu0
      %7836 = vmatpush.bf16.msra.mxu0 %v7689
      %7837 = vmatpush.bf16.msra.mxu0 %v7687
      %7838 = vmatpush.bf16.msra.mxu0 %v7685
      %7839 = vmatpush.bf16.msra.mxu0 %v7683
      %7840 = vmatpush.bf16.msra.mxu0 %v7681
      %7841 = vmatpush.bf16.msra.mxu0 %v7679
      %7842 = vmatpush.bf16.msra.mxu0 %v7677
      %7843 = vmatpush.bf16.msra.mxu0 %v7675
      %7844 = vmatmul.bf16.gmra.mxu0 %v7522
      %v7845 = vpop.f32.mrf.mxu0
      %v7846 = vadd.f32 %v7575, %v7845
      %v7847 = vpop.f32.mrf.mxu0
      %v7848 = vadd.f32 %v7575, %v7847
      %7849 = vmatmul.bf16.gmra.mxu0 %v7524
      %v7850 = vpop.f32.mrf.mxu0
      %v7851 = vadd.f32 %v7575, %v7850
      %v7852 = vpop.f32.mrf.mxu0
      %v7853 = vadd.f32 %v7575, %v7852
      %7854 = vmatmul.bf16.gmra.mxu0 %v7526
      %v7855 = vpop.f32.mrf.mxu0
      %v7856 = vadd.f32 %v7575, %v7855
      %v7857 = vpop.f32.mrf.mxu0
      %v7858 = vadd.f32 %v7575, %v7857
      %7859 = vmatmul.bf16.gmra.mxu0 %v7528
      %v7860 = vpop.f32.mrf.mxu0
      %v7861 = vadd.f32 %v7575, %v7860
      %v7862 = vpop.f32.mrf.mxu0
      %v7863 = vadd.f32 %v7575, %v7862
      %7864 = vmatmul.bf16.gmra.mxu0 %v7530
      %v7865 = vpop.f32.mrf.mxu0
      %v7866 = vadd.f32 %v7575, %v7865
      %v7867 = vpop.f32.mrf.mxu0
      %v7868 = vadd.f32 %v7575, %v7867
      %7869 = vmatmul.bf16.gmra.mxu0 %v7532
      %v7870 = vpop.f32.mrf.mxu0
      %v7871 = vadd.f32 %v7575, %v7870
      %v7872 = vpop.f32.mrf.mxu0
      %v7873 = vadd.f32 %v7575, %v7872
      %7874 = vmatmul.bf16.gmra.mxu0 %v7534
      %v7875 = vpop.f32.mrf.mxu0
      %v7876 = vadd.f32 %v7575, %v7875
      %v7877 = vpop.f32.mrf.mxu0
      %v7878 = vadd.f32 %v7575, %v7877
      %7879 = vmatmul.bf16.gmra.mxu0 %v7536
      %v7880 = vpop.f32.mrf.mxu0
      %v7881 = vadd.f32 %v7575, %v7880
      %v7882 = vpop.f32.mrf.mxu0
      %v7883 = vadd.f32 %v7575, %v7882
      %7884 = vdwg.mxu0
      %7885 = vmatpush.bf16.msra.mxu0 %v7705
      %7886 = vmatpush.bf16.msra.mxu0 %v7703
      %7887 = vmatpush.bf16.msra.mxu0 %v7701
      %7888 = vmatpush.bf16.msra.mxu0 %v7699
      %7889 = vmatpush.bf16.msra.mxu0 %v7697
      %7890 = vmatpush.bf16.msra.mxu0 %v7695
      %7891 = vmatpush.bf16.msra.mxu0 %v7693
      %7892 = vmatpush.bf16.msra.mxu0 %v7691
      %7893 = vmatmul.bf16.gmra.mxu0 %v7523
      %v7894 = vpop.f32.mrf.mxu0
      %v7895 = vadd.f32 %v7846, %v7894
      %v7896 = vpop.f32.mrf.mxu0
      %v7897 = vadd.f32 %v7848, %v7896
      %7898 = vmatmul.bf16.gmra.mxu0 %v7525
      %v7899 = vpop.f32.mrf.mxu0
      %v7900 = vadd.f32 %v7851, %v7899
      %v7901 = vpop.f32.mrf.mxu0
      %v7902 = vadd.f32 %v7853, %v7901
      %7903 = vmatmul.bf16.gmra.mxu0 %v7527
      %v7904 = vpop.f32.mrf.mxu0
      %v7905 = vadd.f32 %v7856, %v7904
      %v7906 = vpop.f32.mrf.mxu0
      %v7907 = vadd.f32 %v7858, %v7906
      %7908 = vmatmul.bf16.gmra.mxu0 %v7529
      %v7909 = vpop.f32.mrf.mxu0
      %v7910 = vadd.f32 %v7861, %v7909
      %v7911 = vpop.f32.mrf.mxu0
      %v7912 = vadd.f32 %v7863, %v7911
      %7913 = vmatmul.bf16.gmra.mxu0 %v7531
      %v7914 = vpop.f32.mrf.mxu0
      %v7915 = vadd.f32 %v7866, %v7914
      %v7916 = vpop.f32.mrf.mxu0
      %v7917 = vadd.f32 %v7868, %v7916
      %7918 = vmatmul.bf16.gmra.mxu0 %v7533
      %v7919 = vpop.f32.mrf.mxu0
      %v7920 = vadd.f32 %v7871, %v7919
      %v7921 = vpop.f32.mrf.mxu0
      %v7922 = vadd.f32 %v7873, %v7921
      %7923 = vmatmul.bf16.gmra.mxu0 %v7535
      %v7924 = vpop.f32.mrf.mxu0
      %v7925 = vadd.f32 %v7876, %v7924
      %v7926 = vpop.f32.mrf.mxu0
      %v7927 = vadd.f32 %v7878, %v7926
      %7928 = vmatmul.bf16.gmra.mxu0 %v7537
      %v7929 = vpop.f32.mrf.mxu0
      %v7930 = vadd.f32 %v7881, %v7929
      %v7931 = vpop.f32.mrf.mxu0
      %v7932 = vadd.f32 %v7883, %v7931
      %7933 = vdwg.mxu0
      %v7934 = vmul.f32 %v7797, 0.01
      %v7935 = vmul.f32 %v7895, 0.01
      %v7936 = vmul.f32 %v7799, 0.01
      %v7937 = vmul.f32 %v7897, 0.01
      %v7938 = vmul.f32 %v7802, 0.01
      %v7939 = vmul.f32 %v7900, 0.01
      %v7940 = vmul.f32 %v7804, 0.01
      %v7941 = vmul.f32 %v7902, 0.01
      %v7942 = vmul.f32 %v7807, 0.01
      %v7943 = vmul.f32 %v7905, 0.01
      %v7944 = vmul.f32 %v7809, 0.01
      %v7945 = vmul.f32 %v7907, 0.01
      %v7946 = vmul.f32 %v7812, 0.01
      %v7947 = vmul.f32 %v7910, 0.01
      %v7948 = vmul.f32 %v7814, 0.01
      %v7949 = vmul.f32 %v7912, 0.01
      %v7950 = vmul.f32 %v7817, 0.01
      %v7951 = vmul.f32 %v7915, 0.01
      %v7952 = vmul.f32 %v7819, 0.01
      %v7953 = vmul.f32 %v7917, 0.01
      %v7954 = vmul.f32 %v7822, 0.01
      %v7955 = vmul.f32 %v7920, 0.01
      %v7956 = vmul.f32 %v7824, 0.01
      %v7957 = vmul.f32 %v7922, 0.01
      %v7958 = vmul.f32 %v7827, 0.01
      %v7959 = vmul.f32 %v7925, 0.01
      %v7960 = vmul.f32 %v7829, 0.01
      %v7961 = vmul.f32 %v7927, 0.01
      %v7962 = vmul.f32 %v7832, 0.01
      %v7963 = vmul.f32 %v7930, 0.01
      %v7964 = vmul.f32 %v7834, 0.01
      %v7965 = vmul.f32 %v7932, 0.01
      %v7966 = vmax.f32 %v7797, %v7934
      %v7967 = vmax.f32 %v7895, %v7935
      %v7968 = vmax.f32 %v7799, %v7936
      %v7969 = vmax.f32 %v7897, %v7937
      %v7970 = vmax.f32 %v7802, %v7938
      %v7971 = vmax.f32 %v7900, %v7939
      %v7972 = vmax.f32 %v7804, %v7940
      %v7973 = vmax.f32 %v7902, %v7941
      %v7974 = vmax.f32 %v7807, %v7942
      %v7975 = vmax.f32 %v7905, %v7943
      %v7976 = vmax.f32 %v7809, %v7944
      %v7977 = vmax.f32 %v7907, %v7945
      %v7978 = vmax.f32 %v7812, %v7946
      %v7979 = vmax.f32 %v7910, %v7947
      %v7980 = vmax.f32 %v7814, %v7948
      %v7981 = vmax.f32 %v7912, %v7949
      %v7982 = vmax.f32 %v7817, %v7950
      %v7983 = vmax.f32 %v7915, %v7951
      %v7984 = vmax.f32 %v7819, %v7952
      %v7985 = vmax.f32 %v7917, %v7953
      %v7986 = vmax.f32 %v7822, %v7954
      %v7987 = vmax.f32 %v7920, %v7955
      %v7988 = vmax.f32 %v7824, %v7956
      %v7989 = vmax.f32 %v7922, %v7957
      %v7990 = vmax.f32 %v7827, %v7958
      %v7991 = vmax.f32 %v7925, %v7959
      %v7992 = vmax.f32 %v7829, %v7960
      %v7993 = vmax.f32 %v7927, %v7961
      %v7994 = vmax.f32 %v7832, %v7962
      %v7995 = vmax.f32 %v7930, %v7963
      %v7996 = vmax.f32 %v7834, %v7964
      %v7997 = vmax.f32 %v7932, %v7965
      %v7998 = vadd.f32 %v3246, %v7966
      %v7999 = vadd.f32 %v3247, %v7967
      %v8000 = vadd.f32 %v3256, %v7968
      %v8001 = vadd.f32 %v3257, %v7969
      %v8002 = vadd.f32 %v3266, %v7970
      %v8003 = vadd.f32 %v3267, %v7971
      %v8004 = vadd.f32 %v3276, %v7972
      %v8005 = vadd.f32 %v3277, %v7973
      %v8006 = vadd.f32 %v3286, %v7974
      %v8007 = vadd.f32 %v3287, %v7975
      %v8008 = vadd.f32 %v3296, %v7976
      %v8009 = vadd.f32 %v3297, %v7977
      %v8010 = vadd.f32 %v3306, %v7978
      %v8011 = vadd.f32 %v3307, %v7979
      %v8012 = vadd.f32 %v3316, %v7980
      %v8013 = vadd.f32 %v3317, %v7981
      %v8014 = vadd.f32 %v3326, %v7982
      %v8015 = vadd.f32 %v3327, %v7983
      %v8016 = vadd.f32 %v3336, %v7984
      %v8017 = vadd.f32 %v3337, %v7985
      %v8018 = vadd.f32 %v3346, %v7986
      %v8019 = vadd.f32 %v3347, %v7987
      %v8020 = vadd.f32 %v3356, %v7988
      %v8021 = vadd.f32 %v3357, %v7989
      %v8022 = vadd.f32 %v3366, %v7990
      %v8023 = vadd.f32 %v3367, %v7991
      %v8024 = vadd.f32 %v3376, %v7992
      %v8025 = vadd.f32 %v3377, %v7993
      %v8026 = vadd.f32 %v3386, %v7994
      %v8027 = vadd.f32 %v3387, %v7995
      %v8028 = vadd.f32 %v3396, %v7996
      %v8029 = vadd.f32 %v3397, %v7997
      %v8030 = vpack.c.bf16 %v8000, %v7998
      %v8031 = vpack.c.bf16 %v8001, %v7999
      %v8032 = vpack.c.bf16 %v8004, %v8002
      %v8033 = vpack.c.bf16 %v8005, %v8003
      %v8034 = vpack.c.bf16 %v8008, %v8006
      %v8035 = vpack.c.bf16 %v8009, %v8007
      %v8036 = vpack.c.bf16 %v8012, %v8010
      %v8037 = vpack.c.bf16 %v8013, %v8011
      %v8038 = vpack.c.bf16 %v8016, %v8014
      %v8039 = vpack.c.bf16 %v8017, %v8015
      %v8040 = vpack.c.bf16 %v8020, %v8018
      %v8041 = vpack.c.bf16 %v8021, %v8019
      %v8042 = vpack.c.bf16 %v8024, %v8022
      %v8043 = vpack.c.bf16 %v8025, %v8023
      %v8044 = vpack.c.bf16 %v8028, %v8026
      %v8045 = vpack.c.bf16 %v8029, %v8027
      %s8046 = scalar_lea.vmem %s13, 1024
      %v8047 = vld [vmem:[%s8046] sm:$0xff]
      %v8048 = vld [vmem:[%s8046 + $0x8] sm:$0xff]
      %v8049 = vld [vmem:[%s8046 + $0x10] sm:$0xff]
      %v8050 = vld [vmem:[%s8046 + $0x18] sm:$0xff]
      %v8051 = vld [vmem:[%s8046 + $0x20] sm:$0xff]
      %v8052 = vld [vmem:[%s8046 + $0x28] sm:$0xff]
      %v8053 = vld [vmem:[%s8046 + $0x30] sm:$0xff]
      %v8054 = vld [vmem:[%s8046 + $0x38] sm:$0xff]
      %v8055 = vld [vmem:[%s8046 + $0x40] sm:$0xff]
      %v8056 = vld [vmem:[%s8046 + $0x48] sm:$0xff]
      %v8057 = vld [vmem:[%s8046 + $0x50] sm:$0xff]
      %v8058 = vld [vmem:[%s8046 + $0x58] sm:$0xff]
      %v8059 = vld [vmem:[%s8046 + $0x60] sm:$0xff]
      %v8060 = vld [vmem:[%s8046 + $0x68] sm:$0xff]
      %v8061 = vld [vmem:[%s8046 + $0x70] sm:$0xff]
      %v8062 = vld [vmem:[%s8046 + $0x78] sm:$0xff]
      %v8063 = vld [vmem:[%s8046 + $0x80] sm:$0xff]
      %v8064 = vld [vmem:[%s8046 + $0x88] sm:$0xff]
      %v8065 = vld [vmem:[%s8046 + $0x90] sm:$0xff]
      %v8066 = vld [vmem:[%s8046 + $0x98] sm:$0xff]
      %v8067 = vld [vmem:[%s8046 + $0xa0] sm:$0xff]
      %v8068 = vld [vmem:[%s8046 + $0xa8] sm:$0xff]
      %v8069 = vld [vmem:[%s8046 + $0xb0] sm:$0xff]
      %v8070 = vld [vmem:[%s8046 + $0xb8] sm:$0xff]
      %v8071 = vld [vmem:[%s8046 + $0xc0] sm:$0xff]
      %v8072 = vld [vmem:[%s8046 + $0xc8] sm:$0xff]
      %v8073 = vld [vmem:[%s8046 + $0xd0] sm:$0xff]
      %v8074 = vld [vmem:[%s8046 + $0xd8] sm:$0xff]
      %v8075 = vld [vmem:[%s8046 + $0xe0] sm:$0xff]
      %v8076 = vld [vmem:[%s8046 + $0xe8] sm:$0xff]
      %v8077 = vld [vmem:[%s8046 + $0xf0] sm:$0xff]
      %v8078 = vld [vmem:[%s8046 + $0xf8] sm:$0xff]
      %s8079 = scalar_lea.vmem %s14, 8
      %v8080 = vld [vmem:[%s8079] sm:$0x3]
      %v8082 = vperm.slane %v8080, 0
      %v8083 = vperm.slane %v8080, 1
      %v8118 = vunpack.c.l.b16 %v8047
      %v8119 = vunpack.c.h.b16 %v8047
      %v8120 = vunpack.c.l.b16 %v8048
      %v8121 = vunpack.c.h.b16 %v8048
      %v8122 = vunpack.c.l.b16 %v8049
      %v8123 = vunpack.c.h.b16 %v8049
      %v8124 = vunpack.c.l.b16 %v8050
      %v8125 = vunpack.c.h.b16 %v8050
      %v8126 = vunpack.c.l.b16 %v8051
      %v8127 = vunpack.c.h.b16 %v8051
      %v8128 = vunpack.c.l.b16 %v8052
      %v8129 = vunpack.c.h.b16 %v8052
      %v8130 = vunpack.c.l.b16 %v8053
      %v8131 = vunpack.c.h.b16 %v8053
      %v8132 = vunpack.c.l.b16 %v8054
      %v8133 = vunpack.c.h.b16 %v8054
      %v8134 = vunpack.c.l.b16 %v8055
      %v8135 = vunpack.c.h.b16 %v8055
      %v8136 = vunpack.c.l.b16 %v8056
      %v8137 = vunpack.c.h.b16 %v8056
      %v8138 = vunpack.c.l.b16 %v8057
      %v8139 = vunpack.c.h.b16 %v8057
      %v8140 = vunpack.c.l.b16 %v8058
      %v8141 = vunpack.c.h.b16 %v8058
      %v8142 = vunpack.c.l.b16 %v8059
      %v8143 = vunpack.c.h.b16 %v8059
      %v8144 = vunpack.c.l.b16 %v8060
      %v8145 = vunpack.c.h.b16 %v8060
      %v8146 = vunpack.c.l.b16 %v8061
      %v8147 = vunpack.c.h.b16 %v8061
      %v8148 = vunpack.c.l.b16 %v8062
      %v8149 = vunpack.c.h.b16 %v8062
      %v8150 = vunpack.c.l.b16 %v8063
      %v8151 = vunpack.c.h.b16 %v8063
      %v8152 = vunpack.c.l.b16 %v8064
      %v8153 = vunpack.c.h.b16 %v8064
      %v8154 = vunpack.c.l.b16 %v8065
      %v8155 = vunpack.c.h.b16 %v8065
      %v8156 = vunpack.c.l.b16 %v8066
      %v8157 = vunpack.c.h.b16 %v8066
      %v8158 = vunpack.c.l.b16 %v8067
      %v8159 = vunpack.c.h.b16 %v8067
      %v8160 = vunpack.c.l.b16 %v8068
      %v8161 = vunpack.c.h.b16 %v8068
      %v8162 = vunpack.c.l.b16 %v8069
      %v8163 = vunpack.c.h.b16 %v8069
      %v8164 = vunpack.c.l.b16 %v8070
      %v8165 = vunpack.c.h.b16 %v8070
      %v8166 = vunpack.c.l.b16 %v8071
      %v8167 = vunpack.c.h.b16 %v8071
      %v8168 = vunpack.c.l.b16 %v8072
      %v8169 = vunpack.c.h.b16 %v8072
      %v8170 = vunpack.c.l.b16 %v8073
      %v8171 = vunpack.c.h.b16 %v8073
      %v8172 = vunpack.c.l.b16 %v8074
      %v8173 = vunpack.c.h.b16 %v8074
      %v8174 = vunpack.c.l.b16 %v8075
      %v8175 = vunpack.c.h.b16 %v8075
      %v8176 = vunpack.c.l.b16 %v8076
      %v8177 = vunpack.c.h.b16 %v8076
      %v8178 = vunpack.c.l.b16 %v8077
      %v8179 = vunpack.c.h.b16 %v8077
      %v8180 = vunpack.c.l.b16 %v8078
      %v8181 = vunpack.c.h.b16 %v8078
      %v8182 = vpack.c.b16 %v8120, %v8118
      %v8183 = vpack.c.b16 %v8121, %v8119
      %v8184 = vpack.c.b16 %v8124, %v8122
      %v8185 = vpack.c.b16 %v8125, %v8123
      %v8186 = vpack.c.b16 %v8128, %v8126
      %v8187 = vpack.c.b16 %v8129, %v8127
      %v8188 = vpack.c.b16 %v8132, %v8130
      %v8189 = vpack.c.b16 %v8133, %v8131
      %v8190 = vpack.c.b16 %v8136, %v8134
      %v8191 = vpack.c.b16 %v8137, %v8135
      %v8192 = vpack.c.b16 %v8140, %v8138
      %v8193 = vpack.c.b16 %v8141, %v8139
      %v8194 = vpack.c.b16 %v8144, %v8142
      %v8195 = vpack.c.b16 %v8145, %v8143
      %v8196 = vpack.c.b16 %v8148, %v8146
      %v8197 = vpack.c.b16 %v8149, %v8147
      %v8198 = vpack.c.b16 %v8152, %v8150
      %v8199 = vpack.c.b16 %v8153, %v8151
      %v8200 = vpack.c.b16 %v8156, %v8154
      %v8201 = vpack.c.b16 %v8157, %v8155
      %v8202 = vpack.c.b16 %v8160, %v8158
      %v8203 = vpack.c.b16 %v8161, %v8159
      %v8204 = vpack.c.b16 %v8164, %v8162
      %v8205 = vpack.c.b16 %v8165, %v8163
      %v8206 = vpack.c.b16 %v8168, %v8166
      %v8207 = vpack.c.b16 %v8169, %v8167
      %v8208 = vpack.c.b16 %v8172, %v8170
      %v8209 = vpack.c.b16 %v8173, %v8171
      %v8210 = vpack.c.b16 %v8176, %v8174
      %v8211 = vpack.c.b16 %v8177, %v8175
      %v8212 = vpack.c.b16 %v8180, %v8178
      %v8213 = vpack.c.b16 %v8181, %v8179
      %8246 = vmatpush.bf16.msra.mxu0 %v8196
      %8247 = vmatpush.bf16.msra.mxu0 %v8194
      %8248 = vmatpush.bf16.msra.mxu0 %v8192
      %8249 = vmatpush.bf16.msra.mxu0 %v8190
      %8250 = vmatpush.bf16.msra.mxu0 %v8188
      %8251 = vmatpush.bf16.msra.mxu0 %v8186
      %8252 = vmatpush.bf16.msra.mxu0 %v8184
      %8253 = vmatpush.bf16.msra.mxu0 %v8182
      %8254 = vmatmul.bf16.gmra.mxu0 %v8030
      %v8255 = vpop.f32.mrf.mxu0
      %v8256 = vadd.f32 %v8082, %v8255
      %v8257 = vpop.f32.mrf.mxu0
      %v8258 = vadd.f32 %v8082, %v8257
      %8259 = vmatmul.bf16.gmra.mxu0 %v8032
      %v8260 = vpop.f32.mrf.mxu0
      %v8261 = vadd.f32 %v8082, %v8260
      %v8262 = vpop.f32.mrf.mxu0
      %v8263 = vadd.f32 %v8082, %v8262
      %8264 = vmatmul.bf16.gmra.mxu0 %v8034
      %v8265 = vpop.f32.mrf.mxu0
      %v8266 = vadd.f32 %v8082, %v8265
      %v8267 = vpop.f32.mrf.mxu0
      %v8268 = vadd.f32 %v8082, %v8267
      %8269 = vmatmul.bf16.gmra.mxu0 %v8036
      %v8270 = vpop.f32.mrf.mxu0
      %v8271 = vadd.f32 %v8082, %v8270
      %v8272 = vpop.f32.mrf.mxu0
      %v8273 = vadd.f32 %v8082, %v8272
      %8274 = vmatmul.bf16.gmra.mxu0 %v8038
      %v8275 = vpop.f32.mrf.mxu0
      %v8276 = vadd.f32 %v8082, %v8275
      %v8277 = vpop.f32.mrf.mxu0
      %v8278 = vadd.f32 %v8082, %v8277
      %8279 = vmatmul.bf16.gmra.mxu0 %v8040
      %v8280 = vpop.f32.mrf.mxu0
      %v8281 = vadd.f32 %v8082, %v8280
      %v8282 = vpop.f32.mrf.mxu0
      %v8283 = vadd.f32 %v8082, %v8282
      %8284 = vmatmul.bf16.gmra.mxu0 %v8042
      %v8285 = vpop.f32.mrf.mxu0
      %v8286 = vadd.f32 %v8082, %v8285
      %v8287 = vpop.f32.mrf.mxu0
      %v8288 = vadd.f32 %v8082, %v8287
      %8289 = vmatmul.bf16.gmra.mxu0 %v8044
      %v8290 = vpop.f32.mrf.mxu0
      %v8291 = vadd.f32 %v8082, %v8290
      %v8292 = vpop.f32.mrf.mxu0
      %v8293 = vadd.f32 %v8082, %v8292
      %8294 = vdwg.mxu0
      %8295 = vmatpush.bf16.msra.mxu0 %v8212
      %8296 = vmatpush.bf16.msra.mxu0 %v8210
      %8297 = vmatpush.bf16.msra.mxu0 %v8208
      %8298 = vmatpush.bf16.msra.mxu0 %v8206
      %8299 = vmatpush.bf16.msra.mxu0 %v8204
      %8300 = vmatpush.bf16.msra.mxu0 %v8202
      %8301 = vmatpush.bf16.msra.mxu0 %v8200
      %8302 = vmatpush.bf16.msra.mxu0 %v8198
      %8303 = vmatmul.bf16.gmra.mxu0 %v8031
      %v8304 = vpop.f32.mrf.mxu0
      %v8305 = vadd.f32 %v8256, %v8304
      %v8306 = vpop.f32.mrf.mxu0
      %v8307 = vadd.f32 %v8258, %v8306
      %8308 = vmatmul.bf16.gmra.mxu0 %v8033
      %v8309 = vpop.f32.mrf.mxu0
      %v8310 = vadd.f32 %v8261, %v8309
      %v8311 = vpop.f32.mrf.mxu0
      %v8312 = vadd.f32 %v8263, %v8311
      %8313 = vmatmul.bf16.gmra.mxu0 %v8035
      %v8314 = vpop.f32.mrf.mxu0
      %v8315 = vadd.f32 %v8266, %v8314
      %v8316 = vpop.f32.mrf.mxu0
      %v8317 = vadd.f32 %v8268, %v8316
      %8318 = vmatmul.bf16.gmra.mxu0 %v8037
      %v8319 = vpop.f32.mrf.mxu0
      %v8320 = vadd.f32 %v8271, %v8319
      %v8321 = vpop.f32.mrf.mxu0
      %v8322 = vadd.f32 %v8273, %v8321
      %8323 = vmatmul.bf16.gmra.mxu0 %v8039
      %v8324 = vpop.f32.mrf.mxu0
      %v8325 = vadd.f32 %v8276, %v8324
      %v8326 = vpop.f32.mrf.mxu0
      %v8327 = vadd.f32 %v8278, %v8326
      %8328 = vmatmul.bf16.gmra.mxu0 %v8041
      %v8329 = vpop.f32.mrf.mxu0
      %v8330 = vadd.f32 %v8281, %v8329
      %v8331 = vpop.f32.mrf.mxu0
      %v8332 = vadd.f32 %v8283, %v8331
      %8333 = vmatmul.bf16.gmra.mxu0 %v8043
      %v8334 = vpop.f32.mrf.mxu0
      %v8335 = vadd.f32 %v8286, %v8334
      %v8336 = vpop.f32.mrf.mxu0
      %v8337 = vadd.f32 %v8288, %v8336
      %8338 = vmatmul.bf16.gmra.mxu0 %v8045
      %v8339 = vpop.f32.mrf.mxu0
      %v8340 = vadd.f32 %v8291, %v8339
      %v8341 = vpop.f32.mrf.mxu0
      %v8342 = vadd.f32 %v8293, %v8341
      %8343 = vdwg.mxu0
      %8344 = vmatpush.bf16.msra.mxu0 %v8197
      %8345 = vmatpush.bf16.msra.mxu0 %v8195
      %8346 = vmatpush.bf16.msra.mxu0 %v8193
      %8347 = vmatpush.bf16.msra.mxu0 %v8191
      %8348 = vmatpush.bf16.msra.mxu0 %v8189
      %8349 = vmatpush.bf16.msra.mxu0 %v8187
      %8350 = vmatpush.bf16.msra.mxu0 %v8185
      %8351 = vmatpush.bf16.msra.mxu0 %v8183
      %8352 = vmatmul.bf16.gmra.mxu0 %v8030
      %v8353 = vpop.f32.mrf.mxu0
      %v8354 = vadd.f32 %v8083, %v8353
      %v8355 = vpop.f32.mrf.mxu0
      %v8356 = vadd.f32 %v8083, %v8355
      %8357 = vmatmul.bf16.gmra.mxu0 %v8032
      %v8358 = vpop.f32.mrf.mxu0
      %v8359 = vadd.f32 %v8083, %v8358
      %v8360 = vpop.f32.mrf.mxu0
      %v8361 = vadd.f32 %v8083, %v8360
      %8362 = vmatmul.bf16.gmra.mxu0 %v8034
      %v8363 = vpop.f32.mrf.mxu0
      %v8364 = vadd.f32 %v8083, %v8363
      %v8365 = vpop.f32.mrf.mxu0
      %v8366 = vadd.f32 %v8083, %v8365
      %8367 = vmatmul.bf16.gmra.mxu0 %v8036
      %v8368 = vpop.f32.mrf.mxu0
      %v8369 = vadd.f32 %v8083, %v8368
      %v8370 = vpop.f32.mrf.mxu0
      %v8371 = vadd.f32 %v8083, %v8370
      %8372 = vmatmul.bf16.gmra.mxu0 %v8038
      %v8373 = vpop.f32.mrf.mxu0
      %v8374 = vadd.f32 %v8083, %v8373
      %v8375 = vpop.f32.mrf.mxu0
      %v8376 = vadd.f32 %v8083, %v8375
      %8377 = vmatmul.bf16.gmra.mxu0 %v8040
      %v8378 = vpop.f32.mrf.mxu0
      %v8379 = vadd.f32 %v8083, %v8378
      %v8380 = vpop.f32.mrf.mxu0
      %v8381 = vadd.f32 %v8083, %v8380
      %8382 = vmatmul.bf16.gmra.mxu0 %v8042
      %v8383 = vpop.f32.mrf.mxu0
      %v8384 = vadd.f32 %v8083, %v8383
      %v8385 = vpop.f32.mrf.mxu0
      %v8386 = vadd.f32 %v8083, %v8385
      %8387 = vmatmul.bf16.gmra.mxu0 %v8044
      %v8388 = vpop.f32.mrf.mxu0
      %v8389 = vadd.f32 %v8083, %v8388
      %v8390 = vpop.f32.mrf.mxu0
      %v8391 = vadd.f32 %v8083, %v8390
      %8392 = vdwg.mxu0
      %8393 = vmatpush.bf16.msra.mxu0 %v8213
      %8394 = vmatpush.bf16.msra.mxu0 %v8211
      %8395 = vmatpush.bf16.msra.mxu0 %v8209
      %8396 = vmatpush.bf16.msra.mxu0 %v8207
      %8397 = vmatpush.bf16.msra.mxu0 %v8205
      %8398 = vmatpush.bf16.msra.mxu0 %v8203
      %8399 = vmatpush.bf16.msra.mxu0 %v8201
      %8400 = vmatpush.bf16.msra.mxu0 %v8199
      %8401 = vmatmul.bf16.gmra.mxu0 %v8031
      %v8402 = vpop.f32.mrf.mxu0
      %v8403 = vadd.f32 %v8354, %v8402
      %v8404 = vpop.f32.mrf.mxu0
      %v8405 = vadd.f32 %v8356, %v8404
      %8406 = vmatmul.bf16.gmra.mxu0 %v8033
      %v8407 = vpop.f32.mrf.mxu0
      %v8408 = vadd.f32 %v8359, %v8407
      %v8409 = vpop.f32.mrf.mxu0
      %v8410 = vadd.f32 %v8361, %v8409
      %8411 = vmatmul.bf16.gmra.mxu0 %v8035
      %v8412 = vpop.f32.mrf.mxu0
      %v8413 = vadd.f32 %v8364, %v8412
      %v8414 = vpop.f32.mrf.mxu0
      %v8415 = vadd.f32 %v8366, %v8414
      %8416 = vmatmul.bf16.gmra.mxu0 %v8037
      %v8417 = vpop.f32.mrf.mxu0
      %v8418 = vadd.f32 %v8369, %v8417
      %v8419 = vpop.f32.mrf.mxu0
      %v8420 = vadd.f32 %v8371, %v8419
      %8421 = vmatmul.bf16.gmra.mxu0 %v8039
      %v8422 = vpop.f32.mrf.mxu0
      %v8423 = vadd.f32 %v8374, %v8422
      %v8424 = vpop.f32.mrf.mxu0
      %v8425 = vadd.f32 %v8376, %v8424
      %8426 = vmatmul.bf16.gmra.mxu0 %v8041
      %v8427 = vpop.f32.mrf.mxu0
      %v8428 = vadd.f32 %v8379, %v8427
      %v8429 = vpop.f32.mrf.mxu0
      %v8430 = vadd.f32 %v8381, %v8429
      %8431 = vmatmul.bf16.gmra.mxu0 %v8043
      %v8432 = vpop.f32.mrf.mxu0
      %v8433 = vadd.f32 %v8384, %v8432
      %v8434 = vpop.f32.mrf.mxu0
      %v8435 = vadd.f32 %v8386, %v8434
      %8436 = vmatmul.bf16.gmra.mxu0 %v8045
      %v8437 = vpop.f32.mrf.mxu0
      %v8438 = vadd.f32 %v8389, %v8437
      %v8439 = vpop.f32.mrf.mxu0
      %v8440 = vadd.f32 %v8391, %v8439
      %8441 = vdwg.mxu0
      %v8442 = vmul.f32 %v8305, 0.01
      %v8443 = vmul.f32 %v8403, 0.01
      %v8444 = vmul.f32 %v8307, 0.01
      %v8445 = vmul.f32 %v8405, 0.01
      %v8446 = vmul.f32 %v8310, 0.01
      %v8447 = vmul.f32 %v8408, 0.01
      %v8448 = vmul.f32 %v8312, 0.01
      %v8449 = vmul.f32 %v8410, 0.01
      %v8450 = vmul.f32 %v8315, 0.01
      %v8451 = vmul.f32 %v8413, 0.01
      %v8452 = vmul.f32 %v8317, 0.01
      %v8453 = vmul.f32 %v8415, 0.01
      %v8454 = vmul.f32 %v8320, 0.01
      %v8455 = vmul.f32 %v8418, 0.01
      %v8456 = vmul.f32 %v8322, 0.01
      %v8457 = vmul.f32 %v8420, 0.01
      %v8458 = vmul.f32 %v8325, 0.01
      %v8459 = vmul.f32 %v8423, 0.01
      %v8460 = vmul.f32 %v8327, 0.01
      %v8461 = vmul.f32 %v8425, 0.01
      %v8462 = vmul.f32 %v8330, 0.01
      %v8463 = vmul.f32 %v8428, 0.01
      %v8464 = vmul.f32 %v8332, 0.01
      %v8465 = vmul.f32 %v8430, 0.01
      %v8466 = vmul.f32 %v8335, 0.01
      %v8467 = vmul.f32 %v8433, 0.01
      %v8468 = vmul.f32 %v8337, 0.01
      %v8469 = vmul.f32 %v8435, 0.01
      %v8470 = vmul.f32 %v8340, 0.01
      %v8471 = vmul.f32 %v8438, 0.01
      %v8472 = vmul.f32 %v8342, 0.01
      %v8473 = vmul.f32 %v8440, 0.01
      %v8474 = vmax.f32 %v8305, %v8442
      %v8475 = vmax.f32 %v8403, %v8443
      %v8476 = vmax.f32 %v8307, %v8444
      %v8477 = vmax.f32 %v8405, %v8445
      %v8478 = vmax.f32 %v8310, %v8446
      %v8479 = vmax.f32 %v8408, %v8447
      %v8480 = vmax.f32 %v8312, %v8448
      %v8481 = vmax.f32 %v8410, %v8449
      %v8482 = vmax.f32 %v8315, %v8450
      %v8483 = vmax.f32 %v8413, %v8451
      %v8484 = vmax.f32 %v8317, %v8452
      %v8485 = vmax.f32 %v8415, %v8453
      %v8486 = vmax.f32 %v8320, %v8454
      %v8487 = vmax.f32 %v8418, %v8455
      %v8488 = vmax.f32 %v8322, %v8456
      %v8489 = vmax.f32 %v8420, %v8457
      %v8490 = vmax.f32 %v8325, %v8458
      %v8491 = vmax.f32 %v8423, %v8459
      %v8492 = vmax.f32 %v8327, %v8460
      %v8493 = vmax.f32 %v8425, %v8461
      %v8494 = vmax.f32 %v8330, %v8462
      %v8495 = vmax.f32 %v8428, %v8463
      %v8496 = vmax.f32 %v8332, %v8464
      %v8497 = vmax.f32 %v8430, %v8465
      %v8498 = vmax.f32 %v8335, %v8466
      %v8499 = vmax.f32 %v8433, %v8467
      %v8500 = vmax.f32 %v8337, %v8468
      %v8501 = vmax.f32 %v8435, %v8469
      %v8502 = vmax.f32 %v8340, %v8470
      %v8503 = vmax.f32 %v8438, %v8471
      %v8504 = vmax.f32 %v8342, %v8472
      %v8505 = vmax.f32 %v8440, %v8473
      %v8506 = vadd.f32 %v7998, %v8474
      %v8507 = vadd.f32 %v7999, %v8475
      %v8508 = vadd.f32 %v8000, %v8476
      %v8509 = vadd.f32 %v8001, %v8477
      %v8510 = vadd.f32 %v8002, %v8478
      %v8511 = vadd.f32 %v8003, %v8479
      %v8512 = vadd.f32 %v8004, %v8480
      %v8513 = vadd.f32 %v8005, %v8481
      %v8514 = vadd.f32 %v8006, %v8482
      %v8515 = vadd.f32 %v8007, %v8483
      %v8516 = vadd.f32 %v8008, %v8484
      %v8517 = vadd.f32 %v8009, %v8485
      %v8518 = vadd.f32 %v8010, %v8486
      %v8519 = vadd.f32 %v8011, %v8487
      %v8520 = vadd.f32 %v8012, %v8488
      %v8521 = vadd.f32 %v8013, %v8489
      %v8522 = vadd.f32 %v8014, %v8490
      %v8523 = vadd.f32 %v8015, %v8491
      %v8524 = vadd.f32 %v8016, %v8492
      %v8525 = vadd.f32 %v8017, %v8493
      %v8526 = vadd.f32 %v8018, %v8494
      %v8527 = vadd.f32 %v8019, %v8495
      %v8528 = vadd.f32 %v8020, %v8496
      %v8529 = vadd.f32 %v8021, %v8497
      %v8530 = vadd.f32 %v8022, %v8498
      %v8531 = vadd.f32 %v8023, %v8499
      %v8532 = vadd.f32 %v8024, %v8500
      %v8533 = vadd.f32 %v8025, %v8501
      %v8534 = vadd.f32 %v8026, %v8502
      %v8535 = vadd.f32 %v8027, %v8503
      %v8536 = vadd.f32 %v8028, %v8504
      %v8537 = vadd.f32 %v8029, %v8505
      %v8538 = vpack.c.bf16 %v8507, %v8506
      %v8539 = vpack.c.bf16 %v8509, %v8508
      %v8540 = vpack.c.bf16 %v8511, %v8510
      %v8541 = vpack.c.bf16 %v8513, %v8512
      %v8542 = vpack.c.bf16 %v8515, %v8514
      %v8543 = vpack.c.bf16 %v8517, %v8516
      %v8544 = vpack.c.bf16 %v8519, %v8518
      %v8545 = vpack.c.bf16 %v8521, %v8520
      %v8546 = vpack.c.bf16 %v8523, %v8522
      %v8547 = vpack.c.bf16 %v8525, %v8524
      %v8548 = vpack.c.bf16 %v8527, %v8526
      %v8549 = vpack.c.bf16 %v8529, %v8528
      %v8550 = vpack.c.bf16 %v8531, %v8530
      %v8551 = vpack.c.bf16 %v8533, %v8532
      %v8552 = vpack.c.bf16 %v8535, %v8534
      %v8553 = vpack.c.bf16 %v8537, %v8536
      %v8570 = vunpack.c.l.b16 %v4410
      %v8571 = vunpack.c.h.b16 %v4410
      %v8572 = vunpack.c.l.b16 %v4411
      %v8573 = vunpack.c.h.b16 %v4411
      %v8574 = vunpack.c.l.b16 %v4412
      %v8575 = vunpack.c.h.b16 %v4412
      %v8576 = vunpack.c.l.b16 %v4413
      %v8577 = vunpack.c.h.b16 %v4413
      %v8578 = vunpack.c.l.b16 %v4414
      %v8579 = vunpack.c.h.b16 %v4414
      %v8580 = vunpack.c.l.b16 %v4415
      %v8581 = vunpack.c.h.b16 %v4415
      %v8582 = vunpack.c.l.b16 %v4416
      %v8583 = vunpack.c.h.b16 %v4416
      %v8584 = vunpack.c.l.b16 %v4417
      %v8585 = vunpack.c.h.b16 %v4417
      %v8586 = vunpack.c.l.b16 %v4418
      %v8587 = vunpack.c.h.b16 %v4418
      %v8588 = vunpack.c.l.b16 %v4419
      %v8589 = vunpack.c.h.b16 %v4419
      %v8590 = vunpack.c.l.b16 %v4420
      %v8591 = vunpack.c.h.b16 %v4420
      %v8592 = vunpack.c.l.b16 %v4421
      %v8593 = vunpack.c.h.b16 %v4421
      %v8594 = vunpack.c.l.b16 %v4422
      %v8595 = vunpack.c.h.b16 %v4422
      %v8596 = vunpack.c.l.b16 %v4423
      %v8597 = vunpack.c.h.b16 %v4423
      %v8598 = vunpack.c.l.b16 %v4424
      %v8599 = vunpack.c.h.b16 %v4424
      %v8600 = vunpack.c.l.b16 %v4425
      %v8601 = vunpack.c.h.b16 %v4425
      %v8602 = vpack.c.b16 %v8572, %v8570
      %v8603 = vpack.c.b16 %v8573, %v8571
      %v8604 = vpack.c.b16 %v8576, %v8574
      %v8605 = vpack.c.b16 %v8577, %v8575
      %v8606 = vpack.c.b16 %v8580, %v8578
      %v8607 = vpack.c.b16 %v8581, %v8579
      %v8608 = vpack.c.b16 %v8584, %v8582
      %v8609 = vpack.c.b16 %v8585, %v8583
      %v8610 = vpack.c.b16 %v8588, %v8586
      %v8611 = vpack.c.b16 %v8589, %v8587
      %v8612 = vpack.c.b16 %v8592, %v8590
      %v8613 = vpack.c.b16 %v8593, %v8591
      %v8614 = vpack.c.b16 %v8596, %v8594
      %v8615 = vpack.c.b16 %v8597, %v8595
      %v8616 = vpack.c.b16 %v8600, %v8598
      %v8617 = vpack.c.b16 %v8601, %v8599
      %v8650 = vunpack.c.l.b16 %v5442
      %v8651 = vunpack.c.h.b16 %v5442
      %v8652 = vunpack.c.l.b16 %v5443
      %v8653 = vunpack.c.h.b16 %v5443
      %v8654 = vunpack.c.l.b16 %v5444
      %v8655 = vunpack.c.h.b16 %v5444
      %v8656 = vunpack.c.l.b16 %v5445
      %v8657 = vunpack.c.h.b16 %v5445
      %v8658 = vunpack.c.l.b16 %v5446
      %v8659 = vunpack.c.h.b16 %v5446
      %v8660 = vunpack.c.l.b16 %v5447
      %v8661 = vunpack.c.h.b16 %v5447
      %v8662 = vunpack.c.l.b16 %v5448
      %v8663 = vunpack.c.h.b16 %v5448
      %v8664 = vunpack.c.l.b16 %v5449
      %v8665 = vunpack.c.h.b16 %v5449
      %v8666 = vunpack.c.l.b16 %v5450
      %v8667 = vunpack.c.h.b16 %v5450
      %v8668 = vunpack.c.l.b16 %v5451
      %v8669 = vunpack.c.h.b16 %v5451
      %v8670 = vunpack.c.l.b16 %v5452
      %v8671 = vunpack.c.h.b16 %v5452
      %v8672 = vunpack.c.l.b16 %v5453
      %v8673 = vunpack.c.h.b16 %v5453
      %v8674 = vunpack.c.l.b16 %v5454
      %v8675 = vunpack.c.h.b16 %v5454
      %v8676 = vunpack.c.l.b16 %v5455
      %v8677 = vunpack.c.h.b16 %v5455
      %v8678 = vunpack.c.l.b16 %v5456
      %v8679 = vunpack.c.h.b16 %v5456
      %v8680 = vunpack.c.l.b16 %v5457
      %v8681 = vunpack.c.h.b16 %v5457
      %v8682 = vpack.c.b16 %v8652, %v8650
      %v8683 = vpack.c.b16 %v8653, %v8651
      %v8684 = vpack.c.b16 %v8656, %v8654
      %v8685 = vpack.c.b16 %v8657, %v8655
      %v8686 = vpack.c.b16 %v8660, %v8658
      %v8687 = vpack.c.b16 %v8661, %v8659
      %v8688 = vpack.c.b16 %v8664, %v8662
      %v8689 = vpack.c.b16 %v8665, %v8663
      %v8690 = vpack.c.b16 %v8668, %v8666
      %v8691 = vpack.c.b16 %v8669, %v8667
      %v8692 = vpack.c.b16 %v8672, %v8670
      %v8693 = vpack.c.b16 %v8673, %v8671
      %v8694 = vpack.c.b16 %v8676, %v8674
      %v8695 = vpack.c.b16 %v8677, %v8675
      %v8696 = vpack.c.b16 %v8680, %v8678
      %v8697 = vpack.c.b16 %v8681, %v8679
      %v8730 = vunpack.c.l.b16 %v6474
      %v8731 = vunpack.c.h.b16 %v6474
      %v8732 = vunpack.c.l.b16 %v6475
      %v8733 = vunpack.c.h.b16 %v6475
      %v8734 = vunpack.c.l.b16 %v6476
      %v8735 = vunpack.c.h.b16 %v6476
      %v8736 = vunpack.c.l.b16 %v6477
      %v8737 = vunpack.c.h.b16 %v6477
      %v8738 = vunpack.c.l.b16 %v6478
      %v8739 = vunpack.c.h.b16 %v6478
      %v8740 = vunpack.c.l.b16 %v6479
      %v8741 = vunpack.c.h.b16 %v6479
      %v8742 = vunpack.c.l.b16 %v6480
      %v8743 = vunpack.c.h.b16 %v6480
      %v8744 = vunpack.c.l.b16 %v6481
      %v8745 = vunpack.c.h.b16 %v6481
      %v8746 = vunpack.c.l.b16 %v6482
      %v8747 = vunpack.c.h.b16 %v6482
      %v8748 = vunpack.c.l.b16 %v6483
      %v8749 = vunpack.c.h.b16 %v6483
      %v8750 = vunpack.c.l.b16 %v6484
      %v8751 = vunpack.c.h.b16 %v6484
      %v8752 = vunpack.c.l.b16 %v6485
      %v8753 = vunpack.c.h.b16 %v6485
      %v8754 = vunpack.c.l.b16 %v6486
      %v8755 = vunpack.c.h.b16 %v6486
      %v8756 = vunpack.c.l.b16 %v6487
      %v8757 = vunpack.c.h.b16 %v6487
      %v8758 = vunpack.c.l.b16 %v6488
      %v8759 = vunpack.c.h.b16 %v6488
      %v8760 = vunpack.c.l.b16 %v6489
      %v8761 = vunpack.c.h.b16 %v6489
      %v8762 = vpack.c.b16 %v8732, %v8730
      %v8763 = vpack.c.b16 %v8733, %v8731
      %v8764 = vpack.c.b16 %v8736, %v8734
      %v8765 = vpack.c.b16 %v8737, %v8735
      %v8766 = vpack.c.b16 %v8740, %v8738
      %v8767 = vpack.c.b16 %v8741, %v8739
      %v8768 = vpack.c.b16 %v8744, %v8742
      %v8769 = vpack.c.b16 %v8745, %v8743
      %v8770 = vpack.c.b16 %v8748, %v8746
      %v8771 = vpack.c.b16 %v8749, %v8747
      %v8772 = vpack.c.b16 %v8752, %v8750
      %v8773 = vpack.c.b16 %v8753, %v8751
      %v8774 = vpack.c.b16 %v8756, %v8754
      %v8775 = vpack.c.b16 %v8757, %v8755
      %v8776 = vpack.c.b16 %v8760, %v8758
      %v8777 = vpack.c.b16 %v8761, %v8759
      %v8810 = vunpack.c.l.b16 %v7506
      %v8811 = vunpack.c.h.b16 %v7506
      %v8812 = vunpack.c.l.b16 %v7507
      %v8813 = vunpack.c.h.b16 %v7507
      %v8814 = vunpack.c.l.b16 %v7508
      %v8815 = vunpack.c.h.b16 %v7508
      %v8816 = vunpack.c.l.b16 %v7509
      %v8817 = vunpack.c.h.b16 %v7509
      %v8818 = vunpack.c.l.b16 %v7510
      %v8819 = vunpack.c.h.b16 %v7510
      %v8820 = vunpack.c.l.b16 %v7511
      %v8821 = vunpack.c.h.b16 %v7511
      %v8822 = vunpack.c.l.b16 %v7512
      %v8823 = vunpack.c.h.b16 %v7512
      %v8824 = vunpack.c.l.b16 %v7513
      %v8825 = vunpack.c.h.b16 %v7513
      %v8826 = vunpack.c.l.b16 %v7514
      %v8827 = vunpack.c.h.b16 %v7514
      %v8828 = vunpack.c.l.b16 %v7515
      %v8829 = vunpack.c.h.b16 %v7515
      %v8830 = vunpack.c.l.b16 %v7516
      %v8831 = vunpack.c.h.b16 %v7516
      %v8832 = vunpack.c.l.b16 %v7517
      %v8833 = vunpack.c.h.b16 %v7517
      %v8834 = vunpack.c.l.b16 %v7518
      %v8835 = vunpack.c.h.b16 %v7518
      %v8836 = vunpack.c.l.b16 %v7519
      %v8837 = vunpack.c.h.b16 %v7519
      %v8838 = vunpack.c.l.b16 %v7520
      %v8839 = vunpack.c.h.b16 %v7520
      %v8840 = vunpack.c.l.b16 %v7521
      %v8841 = vunpack.c.h.b16 %v7521
      %v8842 = vpack.c.b16 %v8812, %v8810
      %v8843 = vpack.c.b16 %v8813, %v8811
      %v8844 = vpack.c.b16 %v8816, %v8814
      %v8845 = vpack.c.b16 %v8817, %v8815
      %v8846 = vpack.c.b16 %v8820, %v8818
      %v8847 = vpack.c.b16 %v8821, %v8819
      %v8848 = vpack.c.b16 %v8824, %v8822
      %v8849 = vpack.c.b16 %v8825, %v8823
      %v8850 = vpack.c.b16 %v8828, %v8826
      %v8851 = vpack.c.b16 %v8829, %v8827
      %v8852 = vpack.c.b16 %v8832, %v8830
      %v8853 = vpack.c.b16 %v8833, %v8831
      %v8854 = vpack.c.b16 %v8836, %v8834
      %v8855 = vpack.c.b16 %v8837, %v8835
      %v8856 = vpack.c.b16 %v8840, %v8838
      %v8857 = vpack.c.b16 %v8841, %v8839
      %v8890 = vunpack.c.l.b16 %v8538
      %v8891 = vunpack.c.h.b16 %v8538
      %v8892 = vunpack.c.l.b16 %v8539
      %v8893 = vunpack.c.h.b16 %v8539
      %v8894 = vunpack.c.l.b16 %v8540
      %v8895 = vunpack.c.h.b16 %v8540
      %v8896 = vunpack.c.l.b16 %v8541
      %v8897 = vunpack.c.h.b16 %v8541
      %v8898 = vunpack.c.l.b16 %v8542
      %v8899 = vunpack.c.h.b16 %v8542
      %v8900 = vunpack.c.l.b16 %v8543
      %v8901 = vunpack.c.h.b16 %v8543
      %v8902 = vunpack.c.l.b16 %v8544
      %v8903 = vunpack.c.h.b16 %v8544
      %v8904 = vunpack.c.l.b16 %v8545
      %v8905 = vunpack.c.h.b16 %v8545
      %v8906 = vunpack.c.l.b16 %v8546
      %v8907 = vunpack.c.h.b16 %v8546
      %v8908 = vunpack.c.l.b16 %v8547
      %v8909 = vunpack.c.h.b16 %v8547
      %v8910 = vunpack.c.l.b16 %v8548
      %v8911 = vunpack.c.h.b16 %v8548
      %v8912 = vunpack.c.l.b16 %v8549
      %v8913 = vunpack.c.h.b16 %v8549
      %v8914 = vunpack.c.l.b16 %v8550
      %v8915 = vunpack.c.h.b16 %v8550
      %v8916 = vunpack.c.l.b16 %v8551
      %v8917 = vunpack.c.h.b16 %v8551
      %v8918 = vunpack.c.l.b16 %v8552
      %v8919 = vunpack.c.h.b16 %v8552
      %v8920 = vunpack.c.l.b16 %v8553
      %v8921 = vunpack.c.h.b16 %v8553
      %v8922 = vpack.c.b16 %v8892, %v8890
      %v8923 = vpack.c.b16 %v8893, %v8891
      %v8924 = vpack.c.b16 %v8896, %v8894
      %v8925 = vpack.c.b16 %v8897, %v8895
      %v8926 = vpack.c.b16 %v8900, %v8898
      %v8927 = vpack.c.b16 %v8901, %v8899
      %v8928 = vpack.c.b16 %v8904, %v8902
      %v8929 = vpack.c.b16 %v8905, %v8903
      %v8930 = vpack.c.b16 %v8908, %v8906
      %v8931 = vpack.c.b16 %v8909, %v8907
      %v8932 = vpack.c.b16 %v8912, %v8910
      %v8933 = vpack.c.b16 %v8913, %v8911
      %v8934 = vpack.c.b16 %v8916, %v8914
      %v8935 = vpack.c.b16 %v8917, %v8915
      %v8936 = vpack.c.b16 %v8920, %v8918
      %v8937 = vpack.c.b16 %v8921, %v8919
      %v8954 = vld [vmem:[%s15] sm:$0xf]
      %v8955 = vld [vmem:[%s15 + $0x4] sm:$0xf]
      %v8956 = vld [vmem:[%s15 + $0x8] sm:$0xf]
      %v8957 = vld [vmem:[%s15 + $0xc] sm:$0xf]
      %v8958 = vld [vmem:[%s15 + $0x10] sm:$0xf]
      %v8959 = vld [vmem:[%s15 + $0x14] sm:$0xf]
      %v8960 = vld [vmem:[%s15 + $0x18] sm:$0xf]
      %v8961 = vld [vmem:[%s15 + $0x1c] sm:$0xf]
      %v8962 = vld [vmem:[%s15 + $0x20] sm:$0xf]
      %v8963 = vld [vmem:[%s15 + $0x24] sm:$0xf]
      %v8964 = vld [vmem:[%s15 + $0x28] sm:$0xf]
      %v8965 = vld [vmem:[%s15 + $0x2c] sm:$0xf]
      %v8966 = vld [vmem:[%s15 + $0x30] sm:$0xf]
      %v8967 = vld [vmem:[%s15 + $0x34] sm:$0xf]
      %v8968 = vld [vmem:[%s15 + $0x38] sm:$0xf]
      %v8969 = vld [vmem:[%s15 + $0x3c] sm:$0xf]
      %v8970 = vld [vmem:[%s15 + $0x40] sm:$0xf]
      %v8971 = vld [vmem:[%s15 + $0x44] sm:$0xf]
      %v8972 = vld [vmem:[%s15 + $0x48] sm:$0xf]
      %v8973 = vld [vmem:[%s15 + $0x4c] sm:$0xf]
      %v8974 = vld [vmem:[%s15 + $0x50] sm:$0xf]
      %v8975 = vld [vmem:[%s15 + $0x54] sm:$0xf]
      %v8976 = vld [vmem:[%s15 + $0x58] sm:$0xf]
      %v8977 = vld [vmem:[%s15 + $0x5c] sm:$0xf]
      %v8978 = vld [vmem:[%s15 + $0x60] sm:$0xf]
      %v8979 = vld [vmem:[%s15 + $0x64] sm:$0xf]
      %v8980 = vld [vmem:[%s15 + $0x68] sm:$0xf]
      %v8981 = vld [vmem:[%s15 + $0x6c] sm:$0xf]
      %v8982 = vld [vmem:[%s15 + $0x70] sm:$0xf]
      %v8983 = vld [vmem:[%s15 + $0x74] sm:$0xf]
      %v8984 = vld [vmem:[%s15 + $0x78] sm:$0xf]
      %v8985 = vld [vmem:[%s15 + $0x7c] sm:$0xf]
      %v8986 = vld [vmem:[%s15 + $0x80] sm:$0xf]
      %v8987 = vld [vmem:[%s15 + $0x84] sm:$0xf]
      %v8988 = vld [vmem:[%s15 + $0x88] sm:$0xf]
      %v8989 = vld [vmem:[%s15 + $0x8c] sm:$0xf]
      %v8990 = vld [vmem:[%s15 + $0x90] sm:$0xf]
      %v8991 = vld [vmem:[%s15 + $0x94] sm:$0xf]
      %v8992 = vld [vmem:[%s15 + $0x98] sm:$0xf]
      %v8993 = vld [vmem:[%s15 + $0x9c] sm:$0xf]
      %v8994 = vld [vmem:[%s15 + $0xa0] sm:$0xf]
      %v8995 = vld [vmem:[%s15 + $0xa4] sm:$0xf]
      %v8996 = vld [vmem:[%s15 + $0xa8] sm:$0xf]
      %v8997 = vld [vmem:[%s15 + $0xac] sm:$0xf]
      %v8998 = vld [vmem:[%s15 + $0xb0] sm:$0xf]
      %v8999 = vld [vmem:[%s15 + $0xb4] sm:$0xf]
      %v9000 = vld [vmem:[%s15 + $0xb8] sm:$0xf]
      %v9001 = vld [vmem:[%s15 + $0xbc] sm:$0xf]
      %v9002 = vld [vmem:[%s15 + $0xc0] sm:$0xf]
      %v9003 = vld [vmem:[%s15 + $0xc4] sm:$0xf]
      %v9004 = vld [vmem:[%s15 + $0xc8] sm:$0xf]
      %v9005 = vld [vmem:[%s15 + $0xcc] sm:$0xf]
      %v9006 = vld [vmem:[%s15 + $0xd0] sm:$0xf]
      %v9007 = vld [vmem:[%s15 + $0xd4] sm:$0xf]
      %v9008 = vld [vmem:[%s15 + $0xd8] sm:$0xf]
      %v9009 = vld [vmem:[%s15 + $0xdc] sm:$0xf]
      %v9010 = vld [vmem:[%s15 + $0xe0] sm:$0xf]
      %v9011 = vld [vmem:[%s15 + $0xe4] sm:$0xf]
      %v9012 = vld [vmem:[%s15 + $0xe8] sm:$0xf]
      %v9013 = vld [vmem:[%s15 + $0xec] sm:$0xf]
      %v9014 = vld [vmem:[%s15 + $0xf0] sm:$0xf]
      %v9015 = vld [vmem:[%s15 + $0xf4] sm:$0xf]
      %v9016 = vld [vmem:[%s15 + $0xf8] sm:$0xf]
      %v9017 = vld [vmem:[%s15 + $0xfc] sm:$0xf]
      %v9018 = vld [vmem:[%s15 + $0x100] sm:$0xf]
      %v9019 = vld [vmem:[%s15 + $0x104] sm:$0xf]
      %v9020 = vld [vmem:[%s15 + $0x108] sm:$0xf]
      %v9021 = vld [vmem:[%s15 + $0x10c] sm:$0xf]
      %v9022 = vld [vmem:[%s15 + $0x110] sm:$0xf]
      %v9023 = vld [vmem:[%s15 + $0x114] sm:$0xf]
      %v9024 = vld [vmem:[%s15 + $0x118] sm:$0xf]
      %v9025 = vld [vmem:[%s15 + $0x11c] sm:$0xf]
      %v9026 = vld [vmem:[%s15 + $0x120] sm:$0xf]
      %v9027 = vld [vmem:[%s15 + $0x124] sm:$0xf]
      %v9028 = vld [vmem:[%s15 + $0x128] sm:$0xf]
      %v9029 = vld [vmem:[%s15 + $0x12c] sm:$0xf]
      %v9030 = vld [vmem:[%s15 + $0x130] sm:$0xf]
      %v9031 = vld [vmem:[%s15 + $0x134] sm:$0xf]
      %v9032 = vld [vmem:[%s15 + $0x138] sm:$0xf]
      %v9033 = vld [vmem:[%s15 + $0x13c] sm:$0xf]
      %v9034 = vld [vmem:[%s15 + $0x140] sm:$0xf]
      %v9035 = vld [vmem:[%s15 + $0x144] sm:$0xf]
      %v9036 = vld [vmem:[%s15 + $0x148] sm:$0xf]
      %v9037 = vld [vmem:[%s15 + $0x14c] sm:$0xf]
      %v9038 = vld [vmem:[%s15 + $0x150] sm:$0xf]
      %v9039 = vld [vmem:[%s15 + $0x154] sm:$0xf]
      %v9040 = vld [vmem:[%s15 + $0x158] sm:$0xf]
      %v9041 = vld [vmem:[%s15 + $0x15c] sm:$0xf]
      %v9042 = vld [vmem:[%s15 + $0x160] sm:$0xf]
      %v9043 = vld [vmem:[%s15 + $0x164] sm:$0xf]
      %v9044 = vld [vmem:[%s15 + $0x168] sm:$0xf]
      %v9045 = vld [vmem:[%s15 + $0x16c] sm:$0xf]
      %v9046 = vld [vmem:[%s15 + $0x170] sm:$0xf]
      %v9047 = vld [vmem:[%s15 + $0x174] sm:$0xf]
      %v9048 = vld [vmem:[%s15 + $0x178] sm:$0xf]
      %v9049 = vld [vmem:[%s15 + $0x17c] sm:$0xf]
      %v9050 = vld [vmem:[%s15 + $0x180] sm:$0xf]
      %v9051 = vld [vmem:[%s15 + $0x184] sm:$0xf]
      %v9052 = vld [vmem:[%s15 + $0x188] sm:$0xf]
      %v9053 = vld [vmem:[%s15 + $0x18c] sm:$0xf]
      %v9054 = vld [vmem:[%s15 + $0x190] sm:$0xf]
      %v9055 = vld [vmem:[%s15 + $0x194] sm:$0xf]
      %v9056 = vld [vmem:[%s15 + $0x198] sm:$0xf]
      %v9057 = vld [vmem:[%s15 + $0x19c] sm:$0xf]
      %v9058 = vld [vmem:[%s15 + $0x1a0] sm:$0xf]
      %v9059 = vld [vmem:[%s15 + $0x1a4] sm:$0xf]
      %v9060 = vld [vmem:[%s15 + $0x1a8] sm:$0xf]
      %v9061 = vld [vmem:[%s15 + $0x1ac] sm:$0xf]
      %v9062 = vld [vmem:[%s15 + $0x1b0] sm:$0xf]
      %v9063 = vld [vmem:[%s15 + $0x1b4] sm:$0xf]
      %v9064 = vld [vmem:[%s15 + $0x1b8] sm:$0xf]
      %v9065 = vld [vmem:[%s15 + $0x1bc] sm:$0xf]
      %v9066 = vld [vmem:[%s15 + $0x1c0] sm:$0xf]
      %v9067 = vld [vmem:[%s15 + $0x1c4] sm:$0xf]
      %v9068 = vld [vmem:[%s15 + $0x1c8] sm:$0xf]
      %v9069 = vld [vmem:[%s15 + $0x1cc] sm:$0xf]
      %v9070 = vld [vmem:[%s15 + $0x1d0] sm:$0xf]
      %v9071 = vld [vmem:[%s15 + $0x1d4] sm:$0xf]
      %v9072 = vld [vmem:[%s15 + $0x1d8] sm:$0xf]
      %v9073 = vld [vmem:[%s15 + $0x1dc] sm:$0xf]
      %v9074 = vld [vmem:[%s15 + $0x1e0] sm:$0xf]
      %v9075 = vld [vmem:[%s15 + $0x1e4] sm:$0xf]
      %v9076 = vld [vmem:[%s15 + $0x1e8] sm:$0xf]
      %v9077 = vld [vmem:[%s15 + $0x1ec] sm:$0xf]
      %v9078 = vld [vmem:[%s15 + $0x1f0] sm:$0xf]
      %v9079 = vld [vmem:[%s15 + $0x1f4] sm:$0xf]
      %v9080 = vld [vmem:[%s15 + $0x1f8] sm:$0xf]
      %v9081 = vld [vmem:[%s15 + $0x1fc] sm:$0xf]
      %v9082 = vld [vmem:[%s15 + $0x200] sm:$0xf]
      %v9083 = vld [vmem:[%s15 + $0x204] sm:$0xf]
      %v9084 = vld [vmem:[%s15 + $0x208] sm:$0xf]
      %v9085 = vld [vmem:[%s15 + $0x20c] sm:$0xf]
      %v9086 = vld [vmem:[%s15 + $0x210] sm:$0xf]
      %v9087 = vld [vmem:[%s15 + $0x214] sm:$0xf]
      %v9088 = vld [vmem:[%s15 + $0x218] sm:$0xf]
      %v9089 = vld [vmem:[%s15 + $0x21c] sm:$0xf]
      %v9090 = vld [vmem:[%s15 + $0x220] sm:$0xf]
      %v9091 = vld [vmem:[%s15 + $0x224] sm:$0xf]
      %v9092 = vld [vmem:[%s15 + $0x228] sm:$0xf]
      %v9093 = vld [vmem:[%s15 + $0x22c] sm:$0xf]
      %v9094 = vld [vmem:[%s15 + $0x230] sm:$0xf]
      %v9095 = vld [vmem:[%s15 + $0x234] sm:$0xf]
      %v9096 = vld [vmem:[%s15 + $0x238] sm:$0xf]
      %v9097 = vld [vmem:[%s15 + $0x23c] sm:$0xf]
      %v9098 = vld [vmem:[%s15 + $0x240] sm:$0xf]
      %v9099 = vld [vmem:[%s15 + $0x244] sm:$0xf]
      %v9100 = vld [vmem:[%s15 + $0x248] sm:$0xf]
      %v9101 = vld [vmem:[%s15 + $0x24c] sm:$0xf]
      %v9102 = vld [vmem:[%s15 + $0x250] sm:$0xf]
      %v9103 = vld [vmem:[%s15 + $0x254] sm:$0xf]
      %v9104 = vld [vmem:[%s15 + $0x258] sm:$0xf]
      %v9105 = vld [vmem:[%s15 + $0x25c] sm:$0xf]
      %v9106 = vld [vmem:[%s15 + $0x260] sm:$0xf]
      %v9107 = vld [vmem:[%s15 + $0x264] sm:$0xf]
      %v9108 = vld [vmem:[%s15 + $0x268] sm:$0xf]
      %v9109 = vld [vmem:[%s15 + $0x26c] sm:$0xf]
      %v9110 = vld [vmem:[%s15 + $0x270] sm:$0xf]
      %v9111 = vld [vmem:[%s15 + $0x274] sm:$0xf]
      %v9112 = vld [vmem:[%s15 + $0x278] sm:$0xf]
      %v9113 = vld [vmem:[%s15 + $0x27c] sm:$0xf]
      %v9114 = vld [vmem:[%s16] sm:$0x1]
      %v9116 = vperm.slane %v9114, 0
      %v9278 = vunpack.c.l.b16 %v8954
      %v9279 = vunpack.c.l.b16 %v8955
      %v9280 = vunpack.c.l.b16 %v8956
      %v9281 = vunpack.c.l.b16 %v8957
      %v9282 = vunpack.c.l.b16 %v8958
      %v9283 = vunpack.c.l.b16 %v8959
      %v9284 = vunpack.c.l.b16 %v8960
      %v9285 = vunpack.c.l.b16 %v8961
      %v9286 = vunpack.c.l.b16 %v8962
      %v9287 = vunpack.c.l.b16 %v8963
      %v9288 = vunpack.c.l.b16 %v8964
      %v9289 = vunpack.c.l.b16 %v8965
      %v9290 = vunpack.c.l.b16 %v8966
      %v9291 = vunpack.c.l.b16 %v8967
      %v9292 = vunpack.c.l.b16 %v8968
      %v9293 = vunpack.c.l.b16 %v8969
      %v9294 = vunpack.c.l.b16 %v8970
      %v9295 = vunpack.c.l.b16 %v8971
      %v9296 = vunpack.c.l.b16 %v8972
      %v9297 = vunpack.c.l.b16 %v8973
      %v9298 = vunpack.c.l.b16 %v8974
      %v9299 = vunpack.c.l.b16 %v8975
      %v9300 = vunpack.c.l.b16 %v8976
      %v9301 = vunpack.c.l.b16 %v8977
      %v9302 = vunpack.c.l.b16 %v8978
      %v9303 = vunpack.c.l.b16 %v8979
      %v9304 = vunpack.c.l.b16 %v8980
      %v9305 = vunpack.c.l.b16 %v8981
      %v9306 = vunpack.c.l.b16 %v8982
      %v9307 = vunpack.c.l.b16 %v8983
      %v9308 = vunpack.c.l.b16 %v8984
      %v9309 = vunpack.c.l.b16 %v8985
      %v9310 = vunpack.c.l.b16 %v8986
      %v9311 = vunpack.c.l.b16 %v8987
      %v9312 = vunpack.c.l.b16 %v8988
      %v9313 = vunpack.c.l.b16 %v8989
      %v9314 = vunpack.c.l.b16 %v8990
      %v9315 = vunpack.c.l.b16 %v8991
      %v9316 = vunpack.c.l.b16 %v8992
      %v9317 = vunpack.c.l.b16 %v8993
      %v9318 = vunpack.c.l.b16 %v8994
      %v9319 = vunpack.c.l.b16 %v8995
      %v9320 = vunpack.c.l.b16 %v8996
      %v9321 = vunpack.c.l.b16 %v8997
      %v9322 = vunpack.c.l.b16 %v8998
      %v9323 = vunpack.c.l.b16 %v8999
      %v9324 = vunpack.c.l.b16 %v9000
      %v9325 = vunpack.c.l.b16 %v9001
      %v9326 = vunpack.c.l.b16 %v9002
      %v9327 = vunpack.c.l.b16 %v9003
      %v9328 = vunpack.c.l.b16 %v9004
      %v9329 = vunpack.c.l.b16 %v9005
      %v9330 = vunpack.c.l.b16 %v9006
      %v9331 = vunpack.c.l.b16 %v9007
      %v9332 = vunpack.c.l.b16 %v9008
      %v9333 = vunpack.c.l.b16 %v9009
      %v9334 = vunpack.c.l.b16 %v9010
      %v9335 = vunpack.c.l.b16 %v9011
      %v9336 = vunpack.c.l.b16 %v9012
      %v9337 = vunpack.c.l.b16 %v9013
      %v9338 = vunpack.c.l.b16 %v9014
      %v9339 = vunpack.c.l.b16 %v9015
      %v9340 = vunpack.c.l.b16 %v9016
      %v9341 = vunpack.c.l.b16 %v9017
      %v9342 = vunpack.c.l.b16 %v9018
      %v9343 = vunpack.c.l.b16 %v9019
      %v9344 = vunpack.c.l.b16 %v9020
      %v9345 = vunpack.c.l.b16 %v9021
      %v9346 = vunpack.c.l.b16 %v9022
      %v9347 = vunpack.c.l.b16 %v9023
      %v9348 = vunpack.c.l.b16 %v9024
      %v9349 = vunpack.c.l.b16 %v9025
      %v9350 = vunpack.c.l.b16 %v9026
      %v9351 = vunpack.c.l.b16 %v9027
      %v9352 = vunpack.c.l.b16 %v9028
      %v9353 = vunpack.c.l.b16 %v9029
      %v9354 = vunpack.c.l.b16 %v9030
      %v9355 = vunpack.c.l.b16 %v9031
      %v9356 = vunpack.c.l.b16 %v9032
      %v9357 = vunpack.c.l.b16 %v9033
      %v9358 = vunpack.c.l.b16 %v9034
      %v9359 = vunpack.c.l.b16 %v9035
      %v9360 = vunpack.c.l.b16 %v9036
      %v9361 = vunpack.c.l.b16 %v9037
      %v9362 = vunpack.c.l.b16 %v9038
      %v9363 = vunpack.c.l.b16 %v9039
      %v9364 = vunpack.c.l.b16 %v9040
      %v9365 = vunpack.c.l.b16 %v9041
      %v9366 = vunpack.c.l.b16 %v9042
      %v9367 = vunpack.c.l.b16 %v9043
      %v9368 = vunpack.c.l.b16 %v9044
      %v9369 = vunpack.c.l.b16 %v9045
      %v9370 = vunpack.c.l.b16 %v9046
      %v9371 = vunpack.c.l.b16 %v9047
      %v9372 = vunpack.c.l.b16 %v9048
      %v9373 = vunpack.c.l.b16 %v9049
      %v9374 = vunpack.c.l.b16 %v9050
      %v9375 = vunpack.c.l.b16 %v9051
      %v9376 = vunpack.c.l.b16 %v9052
      %v9377 = vunpack.c.l.b16 %v9053
      %v9378 = vunpack.c.l.b16 %v9054
      %v9379 = vunpack.c.l.b16 %v9055
      %v9380 = vunpack.c.l.b16 %v9056
      %v9381 = vunpack.c.l.b16 %v9057
      %v9382 = vunpack.c.l.b16 %v9058
      %v9383 = vunpack.c.l.b16 %v9059
      %v9384 = vunpack.c.l.b16 %v9060
      %v9385 = vunpack.c.l.b16 %v9061
      %v9386 = vunpack.c.l.b16 %v9062
      %v9387 = vunpack.c.l.b16 %v9063
      %v9388 = vunpack.c.l.b16 %v9064
      %v9389 = vunpack.c.l.b16 %v9065
      %v9390 = vunpack.c.l.b16 %v9066
      %v9391 = vunpack.c.l.b16 %v9067
      %v9392 = vunpack.c.l.b16 %v9068
      %v9393 = vunpack.c.l.b16 %v9069
      %v9394 = vunpack.c.l.b16 %v9070
      %v9395 = vunpack.c.l.b16 %v9071
      %v9396 = vunpack.c.l.b16 %v9072
      %v9397 = vunpack.c.l.b16 %v9073
      %v9398 = vunpack.c.l.b16 %v9074
      %v9399 = vunpack.c.l.b16 %v9075
      %v9400 = vunpack.c.l.b16 %v9076
      %v9401 = vunpack.c.l.b16 %v9077
      %v9402 = vunpack.c.l.b16 %v9078
      %v9403 = vunpack.c.l.b16 %v9079
      %v9404 = vunpack.c.l.b16 %v9080
      %v9405 = vunpack.c.l.b16 %v9081
      %v9406 = vunpack.c.l.b16 %v9082
      %v9407 = vunpack.c.l.b16 %v9083
      %v9408 = vunpack.c.l.b16 %v9084
      %v9409 = vunpack.c.l.b16 %v9085
      %v9410 = vunpack.c.l.b16 %v9086
      %v9411 = vunpack.c.l.b16 %v9087
      %v9412 = vunpack.c.l.b16 %v9088
      %v9413 = vunpack.c.l.b16 %v9089
      %v9414 = vunpack.c.l.b16 %v9090
      %v9415 = vunpack.c.l.b16 %v9091
      %v9416 = vunpack.c.l.b16 %v9092
      %v9417 = vunpack.c.l.b16 %v9093
      %v9418 = vunpack.c.l.b16 %v9094
      %v9419 = vunpack.c.l.b16 %v9095
      %v9420 = vunpack.c.l.b16 %v9096
      %v9421 = vunpack.c.l.b16 %v9097
      %v9422 = vunpack.c.l.b16 %v9098
      %v9423 = vunpack.c.l.b16 %v9099
      %v9424 = vunpack.c.l.b16 %v9100
      %v9425 = vunpack.c.l.b16 %v9101
      %v9426 = vunpack.c.l.b16 %v9102
      %v9427 = vunpack.c.l.b16 %v9103
      %v9428 = vunpack.c.l.b16 %v9104
      %v9429 = vunpack.c.l.b16 %v9105
      %v9430 = vunpack.c.l.b16 %v9106
      %v9431 = vunpack.c.l.b16 %v9107
      %v9432 = vunpack.c.l.b16 %v9108
      %v9433 = vunpack.c.l.b16 %v9109
      %v9434 = vunpack.c.l.b16 %v9110
      %v9435 = vunpack.c.l.b16 %v9111
      %v9436 = vunpack.c.l.b16 %v9112
      %v9437 = vunpack.c.l.b16 %v9113
      %v9438 = vpack.c.b16 %v9279, %v9278
      %v9439 = vpack.c.b16 %v9281, %v9280
      %v9440 = vpack.c.b16 %v9283, %v9282
      %v9441 = vpack.c.b16 %v9285, %v9284
      %v9442 = vpack.c.b16 %v9287, %v9286
      %v9443 = vpack.c.b16 %v9289, %v9288
      %v9444 = vpack.c.b16 %v9291, %v9290
      %v9445 = vpack.c.b16 %v9293, %v9292
      %v9446 = vpack.c.b16 %v9295, %v9294
      %v9447 = vpack.c.b16 %v9297, %v9296
      %v9448 = vpack.c.b16 %v9299, %v9298
      %v9449 = vpack.c.b16 %v9301, %v9300
      %v9450 = vpack.c.b16 %v9303, %v9302
      %v9451 = vpack.c.b16 %v9305, %v9304
      %v9452 = vpack.c.b16 %v9307, %v9306
      %v9453 = vpack.c.b16 %v9309, %v9308
      %v9454 = vpack.c.b16 %v9311, %v9310
      %v9455 = vpack.c.b16 %v9313, %v9312
      %v9456 = vpack.c.b16 %v9315, %v9314
      %v9457 = vpack.c.b16 %v9317, %v9316
      %v9458 = vpack.c.b16 %v9319, %v9318
      %v9459 = vpack.c.b16 %v9321, %v9320
      %v9460 = vpack.c.b16 %v9323, %v9322
      %v9461 = vpack.c.b16 %v9325, %v9324
      %v9462 = vpack.c.b16 %v9327, %v9326
      %v9463 = vpack.c.b16 %v9329, %v9328
      %v9464 = vpack.c.b16 %v9331, %v9330
      %v9465 = vpack.c.b16 %v9333, %v9332
      %v9466 = vpack.c.b16 %v9335, %v9334
      %v9467 = vpack.c.b16 %v9337, %v9336
      %v9468 = vpack.c.b16 %v9339, %v9338
      %v9469 = vpack.c.b16 %v9341, %v9340
      %v9470 = vpack.c.b16 %v9343, %v9342
      %v9471 = vpack.c.b16 %v9345, %v9344
      %v9472 = vpack.c.b16 %v9347, %v9346
      %v9473 = vpack.c.b16 %v9349, %v9348
      %v9474 = vpack.c.b16 %v9351, %v9350
      %v9475 = vpack.c.b16 %v9353, %v9352
      %v9476 = vpack.c.b16 %v9355, %v9354
      %v9477 = vpack.c.b16 %v9357, %v9356
      %v9478 = vpack.c.b16 %v9359, %v9358
      %v9479 = vpack.c.b16 %v9361, %v9360
      %v9480 = vpack.c.b16 %v9363, %v9362
      %v9481 = vpack.c.b16 %v9365, %v9364
      %v9482 = vpack.c.b16 %v9367, %v9366
      %v9483 = vpack.c.b16 %v9369, %v9368
      %v9484 = vpack.c.b16 %v9371, %v9370
      %v9485 = vpack.c.b16 %v9373, %v9372
      %v9486 = vpack.c.b16 %v9375, %v9374
      %v9487 = vpack.c.b16 %v9377, %v9376
      %v9488 = vpack.c.b16 %v9379, %v9378
      %v9489 = vpack.c.b16 %v9381, %v9380
      %v9490 = vpack.c.b16 %v9383, %v9382
      %v9491 = vpack.c.b16 %v9385, %v9384
      %v9492 = vpack.c.b16 %v9387, %v9386
      %v9493 = vpack.c.b16 %v9389, %v9388
      %v9494 = vpack.c.b16 %v9391, %v9390
      %v9495 = vpack.c.b16 %v9393, %v9392
      %v9496 = vpack.c.b16 %v9395, %v9394
      %v9497 = vpack.c.b16 %v9397, %v9396
      %v9498 = vpack.c.b16 %v9399, %v9398
      %v9499 = vpack.c.b16 %v9401, %v9400
      %v9500 = vpack.c.b16 %v9403, %v9402
      %v9501 = vpack.c.b16 %v9405, %v9404
      %v9502 = vpack.c.b16 %v9407, %v9406
      %v9503 = vpack.c.b16 %v9409, %v9408
      %v9504 = vpack.c.b16 %v9411, %v9410
      %v9505 = vpack.c.b16 %v9413, %v9412
      %v9506 = vpack.c.b16 %v9415, %v9414
      %v9507 = vpack.c.b16 %v9417, %v9416
      %v9508 = vpack.c.b16 %v9419, %v9418
      %v9509 = vpack.c.b16 %v9421, %v9420
      %v9510 = vpack.c.b16 %v9423, %v9422
      %v9511 = vpack.c.b16 %v9425, %v9424
      %v9512 = vpack.c.b16 %v9427, %v9426
      %v9513 = vpack.c.b16 %v9429, %v9428
      %v9514 = vpack.c.b16 %v9431, %v9430
      %v9515 = vpack.c.b16 %v9433, %v9432
      %v9516 = vpack.c.b16 %v9435, %v9434
      %v9517 = vpack.c.b16 %v9437, %v9436
      %9598 = vmatpush.bf16.msra.mxu0 %v9445
      %9599 = vmatpush.bf16.msra.mxu0 %v9444
      %9600 = vmatpush.bf16.msra.mxu0 %v9443
      %9601 = vmatpush.bf16.msra.mxu0 %v9442
      %9602 = vmatpush.bf16.msra.mxu0 %v9441
      %9603 = vmatpush.bf16.msra.mxu0 %v9440
      %9604 = vmatpush.bf16.msra.mxu0 %v9439
      %9605 = vmatpush.bf16.msra.mxu0 %v9438
      %9606 = vmatmul.bf16.gmra.mxu0 %v8602
      %v9607 = vpop.f32.mrf.mxu0
      %v9608 = vadd.f32 %v9116, %v9607
      %v9609 = vpop.f32.mrf.mxu0
      %v9610 = vadd.f32 %v9116, %v9609
      %9611 = vmatmul.bf16.gmra.mxu0 %v8604
      %v9612 = vpop.f32.mrf.mxu0
      %v9613 = vadd.f32 %v9116, %v9612
      %v9614 = vpop.f32.mrf.mxu0
      %v9615 = vadd.f32 %v9116, %v9614
      %9616 = vmatmul.bf16.gmra.mxu0 %v8606
      %v9617 = vpop.f32.mrf.mxu0
      %v9618 = vadd.f32 %v9116, %v9617
      %v9619 = vpop.f32.mrf.mxu0
      %v9620 = vadd.f32 %v9116, %v9619
      %9621 = vmatmul.bf16.gmra.mxu0 %v8608
      %v9622 = vpop.f32.mrf.mxu0
      %v9623 = vadd.f32 %v9116, %v9622
      %v9624 = vpop.f32.mrf.mxu0
      %v9625 = vadd.f32 %v9116, %v9624
      %9626 = vmatmul.bf16.gmra.mxu0 %v8610
      %v9627 = vpop.f32.mrf.mxu0
      %v9628 = vadd.f32 %v9116, %v9627
      %v9629 = vpop.f32.mrf.mxu0
      %v9630 = vadd.f32 %v9116, %v9629
      %9631 = vmatmul.bf16.gmra.mxu0 %v8612
      %v9632 = vpop.f32.mrf.mxu0
      %v9633 = vadd.f32 %v9116, %v9632
      %v9634 = vpop.f32.mrf.mxu0
      %v9635 = vadd.f32 %v9116, %v9634
      %9636 = vmatmul.bf16.gmra.mxu0 %v8614
      %v9637 = vpop.f32.mrf.mxu0
      %v9638 = vadd.f32 %v9116, %v9637
      %v9639 = vpop.f32.mrf.mxu0
      %v9640 = vadd.f32 %v9116, %v9639
      %9641 = vmatmul.bf16.gmra.mxu0 %v8616
      %v9642 = vpop.f32.mrf.mxu0
      %v9643 = vadd.f32 %v9116, %v9642
      %v9644 = vpop.f32.mrf.mxu0
      %v9645 = vadd.f32 %v9116, %v9644
      %9646 = vdwg.mxu0
      %9647 = vmatpush.bf16.msra.mxu0 %v9453
      %9648 = vmatpush.bf16.msra.mxu0 %v9452
      %9649 = vmatpush.bf16.msra.mxu0 %v9451
      %9650 = vmatpush.bf16.msra.mxu0 %v9450
      %9651 = vmatpush.bf16.msra.mxu0 %v9449
      %9652 = vmatpush.bf16.msra.mxu0 %v9448
      %9653 = vmatpush.bf16.msra.mxu0 %v9447
      %9654 = vmatpush.bf16.msra.mxu0 %v9446
      %9655 = vmatmul.bf16.gmra.mxu0 %v8603
      %v9656 = vpop.f32.mrf.mxu0
      %v9657 = vadd.f32 %v9608, %v9656
      %v9658 = vpop.f32.mrf.mxu0
      %v9659 = vadd.f32 %v9610, %v9658
      %9660 = vmatmul.bf16.gmra.mxu0 %v8605
      %v9661 = vpop.f32.mrf.mxu0
      %v9662 = vadd.f32 %v9613, %v9661
      %v9663 = vpop.f32.mrf.mxu0
      %v9664 = vadd.f32 %v9615, %v9663
      %9665 = vmatmul.bf16.gmra.mxu0 %v8607
      %v9666 = vpop.f32.mrf.mxu0
      %v9667 = vadd.f32 %v9618, %v9666
      %v9668 = vpop.f32.mrf.mxu0
      %v9669 = vadd.f32 %v9620, %v9668
      %9670 = vmatmul.bf16.gmra.mxu0 %v8609
      %v9671 = vpop.f32.mrf.mxu0
      %v9672 = vadd.f32 %v9623, %v9671
      %v9673 = vpop.f32.mrf.mxu0
      %v9674 = vadd.f32 %v9625, %v9673
      %9675 = vmatmul.bf16.gmra.mxu0 %v8611
      %v9676 = vpop.f32.mrf.mxu0
      %v9677 = vadd.f32 %v9628, %v9676
      %v9678 = vpop.f32.mrf.mxu0
      %v9679 = vadd.f32 %v9630, %v9678
      %9680 = vmatmul.bf16.gmra.mxu0 %v8613
      %v9681 = vpop.f32.mrf.mxu0
      %v9682 = vadd.f32 %v9633, %v9681
      %v9683 = vpop.f32.mrf.mxu0
      %v9684 = vadd.f32 %v9635, %v9683
      %9685 = vmatmul.bf16.gmra.mxu0 %v8615
      %v9686 = vpop.f32.mrf.mxu0
      %v9687 = vadd.f32 %v9638, %v9686
      %v9688 = vpop.f32.mrf.mxu0
      %v9689 = vadd.f32 %v9640, %v9688
      %9690 = vmatmul.bf16.gmra.mxu0 %v8617
      %v9691 = vpop.f32.mrf.mxu0
      %v9692 = vadd.f32 %v9643, %v9691
      %v9693 = vpop.f32.mrf.mxu0
      %v9694 = vadd.f32 %v9645, %v9693
      %9695 = vdwg.mxu0
      %9696 = vmatpush.bf16.msra.mxu0 %v9461
      %9697 = vmatpush.bf16.msra.mxu0 %v9460
      %9698 = vmatpush.bf16.msra.mxu0 %v9459
      %9699 = vmatpush.bf16.msra.mxu0 %v9458
      %9700 = vmatpush.bf16.msra.mxu0 %v9457
      %9701 = vmatpush.bf16.msra.mxu0 %v9456
      %9702 = vmatpush.bf16.msra.mxu0 %v9455
      %9703 = vmatpush.bf16.msra.mxu0 %v9454
      %9704 = vmatmul.bf16.gmra.mxu0 %v8682
      %v9705 = vpop.f32.mrf.mxu0
      %v9706 = vadd.f32 %v9657, %v9705
      %v9707 = vpop.f32.mrf.mxu0
      %v9708 = vadd.f32 %v9659, %v9707
      %9709 = vmatmul.bf16.gmra.mxu0 %v8684
      %v9710 = vpop.f32.mrf.mxu0
      %v9711 = vadd.f32 %v9662, %v9710
      %v9712 = vpop.f32.mrf.mxu0
      %v9713 = vadd.f32 %v9664, %v9712
      %9714 = vmatmul.bf16.gmra.mxu0 %v8686
      %v9715 = vpop.f32.mrf.mxu0
      %v9716 = vadd.f32 %v9667, %v9715
      %v9717 = vpop.f32.mrf.mxu0
      %v9718 = vadd.f32 %v9669, %v9717
      %9719 = vmatmul.bf16.gmra.mxu0 %v8688
      %v9720 = vpop.f32.mrf.mxu0
      %v9721 = vadd.f32 %v9672, %v9720
      %v9722 = vpop.f32.mrf.mxu0
      %v9723 = vadd.f32 %v9674, %v9722
      %9724 = vmatmul.bf16.gmra.mxu0 %v8690
      %v9725 = vpop.f32.mrf.mxu0
      %v9726 = vadd.f32 %v9677, %v9725
      %v9727 = vpop.f32.mrf.mxu0
      %v9728 = vadd.f32 %v9679, %v9727
      %9729 = vmatmul.bf16.gmra.mxu0 %v8692
      %v9730 = vpop.f32.mrf.mxu0
      %v9731 = vadd.f32 %v9682, %v9730
      %v9732 = vpop.f32.mrf.mxu0
      %v9733 = vadd.f32 %v9684, %v9732
      %9734 = vmatmul.bf16.gmra.mxu0 %v8694
      %v9735 = vpop.f32.mrf.mxu0
      %v9736 = vadd.f32 %v9687, %v9735
      %v9737 = vpop.f32.mrf.mxu0
      %v9738 = vadd.f32 %v9689, %v9737
      %9739 = vmatmul.bf16.gmra.mxu0 %v8696
      %v9740 = vpop.f32.mrf.mxu0
      %v9741 = vadd.f32 %v9692, %v9740
      %v9742 = vpop.f32.mrf.mxu0
      %v9743 = vadd.f32 %v9694, %v9742
      %9744 = vdwg.mxu0
      %9745 = vmatpush.bf16.msra.mxu0 %v9469
      %9746 = vmatpush.bf16.msra.mxu0 %v9468
      %9747 = vmatpush.bf16.msra.mxu0 %v9467
      %9748 = vmatpush.bf16.msra.mxu0 %v9466
      %9749 = vmatpush.bf16.msra.mxu0 %v9465
      %9750 = vmatpush.bf16.msra.mxu0 %v9464
      %9751 = vmatpush.bf16.msra.mxu0 %v9463
      %9752 = vmatpush.bf16.msra.mxu0 %v9462
      %9753 = vmatmul.bf16.gmra.mxu0 %v8683
      %v9754 = vpop.f32.mrf.mxu0
      %v9755 = vadd.f32 %v9706, %v9754
      %v9756 = vpop.f32.mrf.mxu0
      %v9757 = vadd.f32 %v9708, %v9756
      %9758 = vmatmul.bf16.gmra.mxu0 %v8685
      %v9759 = vpop.f32.mrf.mxu0
      %v9760 = vadd.f32 %v9711, %v9759
      %v9761 = vpop.f32.mrf.mxu0
      %v9762 = vadd.f32 %v9713, %v9761
      %9763 = vmatmul.bf16.gmra.mxu0 %v8687
      %v9764 = vpop.f32.mrf.mxu0
      %v9765 = vadd.f32 %v9716, %v9764
      %v9766 = vpop.f32.mrf.mxu0
      %v9767 = vadd.f32 %v9718, %v9766
      %9768 = vmatmul.bf16.gmra.mxu0 %v8689
      %v9769 = vpop.f32.mrf.mxu0
      %v9770 = vadd.f32 %v9721, %v9769
      %v9771 = vpop.f32.mrf.mxu0
      %v9772 = vadd.f32 %v9723, %v9771
      %9773 = vmatmul.bf16.gmra.mxu0 %v8691
      %v9774 = vpop.f32.mrf.mxu0
      %v9775 = vadd.f32 %v9726, %v9774
      %v9776 = vpop.f32.mrf.mxu0
      %v9777 = vadd.f32 %v9728, %v9776
      %9778 = vmatmul.bf16.gmra.mxu0 %v8693
      %v9779 = vpop.f32.mrf.mxu0
      %v9780 = vadd.f32 %v9731, %v9779
      %v9781 = vpop.f32.mrf.mxu0
      %v9782 = vadd.f32 %v9733, %v9781
      %9783 = vmatmul.bf16.gmra.mxu0 %v8695
      %v9784 = vpop.f32.mrf.mxu0
      %v9785 = vadd.f32 %v9736, %v9784
      %v9786 = vpop.f32.mrf.mxu0
      %v9787 = vadd.f32 %v9738, %v9786
      %9788 = vmatmul.bf16.gmra.mxu0 %v8697
      %v9789 = vpop.f32.mrf.mxu0
      %v9790 = vadd.f32 %v9741, %v9789
      %v9791 = vpop.f32.mrf.mxu0
      %v9792 = vadd.f32 %v9743, %v9791
      %9793 = vdwg.mxu0
      %9794 = vmatpush.bf16.msra.mxu0 %v9477
      %9795 = vmatpush.bf16.msra.mxu0 %v9476
      %9796 = vmatpush.bf16.msra.mxu0 %v9475
      %9797 = vmatpush.bf16.msra.mxu0 %v9474
      %9798 = vmatpush.bf16.msra.mxu0 %v9473
      %9799 = vmatpush.bf16.msra.mxu0 %v9472
      %9800 = vmatpush.bf16.msra.mxu0 %v9471
      %9801 = vmatpush.bf16.msra.mxu0 %v9470
      %9802 = vmatmul.bf16.gmra.mxu0 %v8762
      %v9803 = vpop.f32.mrf.mxu0
      %v9804 = vadd.f32 %v9755, %v9803
      %v9805 = vpop.f32.mrf.mxu0
      %v9806 = vadd.f32 %v9757, %v9805
      %9807 = vmatmul.bf16.gmra.mxu0 %v8764
      %v9808 = vpop.f32.mrf.mxu0
      %v9809 = vadd.f32 %v9760, %v9808
      %v9810 = vpop.f32.mrf.mxu0
      %v9811 = vadd.f32 %v9762, %v9810
      %9812 = vmatmul.bf16.gmra.mxu0 %v8766
      %v9813 = vpop.f32.mrf.mxu0
      %v9814 = vadd.f32 %v9765, %v9813
      %v9815 = vpop.f32.mrf.mxu0
      %v9816 = vadd.f32 %v9767, %v9815
      %9817 = vmatmul.bf16.gmra.mxu0 %v8768
      %v9818 = vpop.f32.mrf.mxu0
      %v9819 = vadd.f32 %v9770, %v9818
      %v9820 = vpop.f32.mrf.mxu0
      %v9821 = vadd.f32 %v9772, %v9820
      %9822 = vmatmul.bf16.gmra.mxu0 %v8770
      %v9823 = vpop.f32.mrf.mxu0
      %v9824 = vadd.f32 %v9775, %v9823
      %v9825 = vpop.f32.mrf.mxu0
      %v9826 = vadd.f32 %v9777, %v9825
      %9827 = vmatmul.bf16.gmra.mxu0 %v8772
      %v9828 = vpop.f32.mrf.mxu0
      %v9829 = vadd.f32 %v9780, %v9828
      %v9830 = vpop.f32.mrf.mxu0
      %v9831 = vadd.f32 %v9782, %v9830
      %9832 = vmatmul.bf16.gmra.mxu0 %v8774
      %v9833 = vpop.f32.mrf.mxu0
      %v9834 = vadd.f32 %v9785, %v9833
      %v9835 = vpop.f32.mrf.mxu0
      %v9836 = vadd.f32 %v9787, %v9835
      %9837 = vmatmul.bf16.gmra.mxu0 %v8776
      %v9838 = vpop.f32.mrf.mxu0
      %v9839 = vadd.f32 %v9790, %v9838
      %v9840 = vpop.f32.mrf.mxu0
      %v9841 = vadd.f32 %v9792, %v9840
      %9842 = vdwg.mxu0
      %9843 = vmatpush.bf16.msra.mxu0 %v9485
      %9844 = vmatpush.bf16.msra.mxu0 %v9484
      %9845 = vmatpush.bf16.msra.mxu0 %v9483
      %9846 = vmatpush.bf16.msra.mxu0 %v9482
      %9847 = vmatpush.bf16.msra.mxu0 %v9481
      %9848 = vmatpush.bf16.msra.mxu0 %v9480
      %9849 = vmatpush.bf16.msra.mxu0 %v9479
      %9850 = vmatpush.bf16.msra.mxu0 %v9478
      %9851 = vmatmul.bf16.gmra.mxu0 %v8763
      %v9852 = vpop.f32.mrf.mxu0
      %v9853 = vadd.f32 %v9804, %v9852
      %v9854 = vpop.f32.mrf.mxu0
      %v9855 = vadd.f32 %v9806, %v9854
      %9856 = vmatmul.bf16.gmra.mxu0 %v8765
      %v9857 = vpop.f32.mrf.mxu0
      %v9858 = vadd.f32 %v9809, %v9857
      %v9859 = vpop.f32.mrf.mxu0
      %v9860 = vadd.f32 %v9811, %v9859
      %9861 = vmatmul.bf16.gmra.mxu0 %v8767
      %v9862 = vpop.f32.mrf.mxu0
      %v9863 = vadd.f32 %v9814, %v9862
      %v9864 = vpop.f32.mrf.mxu0
      %v9865 = vadd.f32 %v9816, %v9864
      %9866 = vmatmul.bf16.gmra.mxu0 %v8769
      %v9867 = vpop.f32.mrf.mxu0
      %v9868 = vadd.f32 %v9819, %v9867
      %v9869 = vpop.f32.mrf.mxu0
      %v9870 = vadd.f32 %v9821, %v9869
      %9871 = vmatmul.bf16.gmra.mxu0 %v8771
      %v9872 = vpop.f32.mrf.mxu0
      %v9873 = vadd.f32 %v9824, %v9872
      %v9874 = vpop.f32.mrf.mxu0
      %v9875 = vadd.f32 %v9826, %v9874
      %9876 = vmatmul.bf16.gmra.mxu0 %v8773
      %v9877 = vpop.f32.mrf.mxu0
      %v9878 = vadd.f32 %v9829, %v9877
      %v9879 = vpop.f32.mrf.mxu0
      %v9880 = vadd.f32 %v9831, %v9879
      %9881 = vmatmul.bf16.gmra.mxu0 %v8775
      %v9882 = vpop.f32.mrf.mxu0
      %v9883 = vadd.f32 %v9834, %v9882
      %v9884 = vpop.f32.mrf.mxu0
      %v9885 = vadd.f32 %v9836, %v9884
      %9886 = vmatmul.bf16.gmra.mxu0 %v8777
      %v9887 = vpop.f32.mrf.mxu0
      %v9888 = vadd.f32 %v9839, %v9887
      %v9889 = vpop.f32.mrf.mxu0
      %v9890 = vadd.f32 %v9841, %v9889
      %9891 = vdwg.mxu0
      %9892 = vmatpush.bf16.msra.mxu0 %v9493
      %9893 = vmatpush.bf16.msra.mxu0 %v9492
      %9894 = vmatpush.bf16.msra.mxu0 %v9491
      %9895 = vmatpush.bf16.msra.mxu0 %v9490
      %9896 = vmatpush.bf16.msra.mxu0 %v9489
      %9897 = vmatpush.bf16.msra.mxu0 %v9488
      %9898 = vmatpush.bf16.msra.mxu0 %v9487
      %9899 = vmatpush.bf16.msra.mxu0 %v9486
      %9900 = vmatmul.bf16.gmra.mxu0 %v8842
      %v9901 = vpop.f32.mrf.mxu0
      %v9902 = vadd.f32 %v9853, %v9901
      %v9903 = vpop.f32.mrf.mxu0
      %v9904 = vadd.f32 %v9855, %v9903
      %9905 = vmatmul.bf16.gmra.mxu0 %v8844
      %v9906 = vpop.f32.mrf.mxu0
      %v9907 = vadd.f32 %v9858, %v9906
      %v9908 = vpop.f32.mrf.mxu0
      %v9909 = vadd.f32 %v9860, %v9908
      %9910 = vmatmul.bf16.gmra.mxu0 %v8846
      %v9911 = vpop.f32.mrf.mxu0
      %v9912 = vadd.f32 %v9863, %v9911
      %v9913 = vpop.f32.mrf.mxu0
      %v9914 = vadd.f32 %v9865, %v9913
      %9915 = vmatmul.bf16.gmra.mxu0 %v8848
      %v9916 = vpop.f32.mrf.mxu0
      %v9917 = vadd.f32 %v9868, %v9916
      %v9918 = vpop.f32.mrf.mxu0
      %v9919 = vadd.f32 %v9870, %v9918
      %9920 = vmatmul.bf16.gmra.mxu0 %v8850
      %v9921 = vpop.f32.mrf.mxu0
      %v9922 = vadd.f32 %v9873, %v9921
      %v9923 = vpop.f32.mrf.mxu0
      %v9924 = vadd.f32 %v9875, %v9923
      %9925 = vmatmul.bf16.gmra.mxu0 %v8852
      %v9926 = vpop.f32.mrf.mxu0
      %v9927 = vadd.f32 %v9878, %v9926
      %v9928 = vpop.f32.mrf.mxu0
      %v9929 = vadd.f32 %v9880, %v9928
      %9930 = vmatmul.bf16.gmra.mxu0 %v8854
      %v9931 = vpop.f32.mrf.mxu0
      %v9932 = vadd.f32 %v9883, %v9931
      %v9933 = vpop.f32.mrf.mxu0
      %v9934 = vadd.f32 %v9885, %v9933
      %9935 = vmatmul.bf16.gmra.mxu0 %v8856
      %v9936 = vpop.f32.mrf.mxu0
      %v9937 = vadd.f32 %v9888, %v9936
      %v9938 = vpop.f32.mrf.mxu0
      %v9939 = vadd.f32 %v9890, %v9938
      %9940 = vdwg.mxu0
      %9941 = vmatpush.bf16.msra.mxu0 %v9501
      %9942 = vmatpush.bf16.msra.mxu0 %v9500
      %9943 = vmatpush.bf16.msra.mxu0 %v9499
      %9944 = vmatpush.bf16.msra.mxu0 %v9498
      %9945 = vmatpush.bf16.msra.mxu0 %v9497
      %9946 = vmatpush.bf16.msra.mxu0 %v9496
      %9947 = vmatpush.bf16.msra.mxu0 %v9495
      %9948 = vmatpush.bf16.msra.mxu0 %v9494
      %9949 = vmatmul.bf16.gmra.mxu0 %v8843
      %v9950 = vpop.f32.mrf.mxu0
      %v9951 = vadd.f32 %v9902, %v9950
      %v9952 = vpop.f32.mrf.mxu0
      %v9953 = vadd.f32 %v9904, %v9952
      %9954 = vmatmul.bf16.gmra.mxu0 %v8845
      %v9955 = vpop.f32.mrf.mxu0
      %v9956 = vadd.f32 %v9907, %v9955
      %v9957 = vpop.f32.mrf.mxu0
      %v9958 = vadd.f32 %v9909, %v9957
      %9959 = vmatmul.bf16.gmra.mxu0 %v8847
      %v9960 = vpop.f32.mrf.mxu0
      %v9961 = vadd.f32 %v9912, %v9960
      %v9962 = vpop.f32.mrf.mxu0
      %v9963 = vadd.f32 %v9914, %v9962
      %9964 = vmatmul.bf16.gmra.mxu0 %v8849
      %v9965 = vpop.f32.mrf.mxu0
      %v9966 = vadd.f32 %v9917, %v9965
      %v9967 = vpop.f32.mrf.mxu0
      %v9968 = vadd.f32 %v9919, %v9967
      %9969 = vmatmul.bf16.gmra.mxu0 %v8851
      %v9970 = vpop.f32.mrf.mxu0
      %v9971 = vadd.f32 %v9922, %v9970
      %v9972 = vpop.f32.mrf.mxu0
      %v9973 = vadd.f32 %v9924, %v9972
      %9974 = vmatmul.bf16.gmra.mxu0 %v8853
      %v9975 = vpop.f32.mrf.mxu0
      %v9976 = vadd.f32 %v9927, %v9975
      %v9977 = vpop.f32.mrf.mxu0
      %v9978 = vadd.f32 %v9929, %v9977
      %9979 = vmatmul.bf16.gmra.mxu0 %v8855
      %v9980 = vpop.f32.mrf.mxu0
      %v9981 = vadd.f32 %v9932, %v9980
      %v9982 = vpop.f32.mrf.mxu0
      %v9983 = vadd.f32 %v9934, %v9982
      %9984 = vmatmul.bf16.gmra.mxu0 %v8857
      %v9985 = vpop.f32.mrf.mxu0
      %v9986 = vadd.f32 %v9937, %v9985
      %v9987 = vpop.f32.mrf.mxu0
      %v9988 = vadd.f32 %v9939, %v9987
      %9989 = vdwg.mxu0
      %9990 = vmatpush.bf16.msra.mxu0 %v9509
      %9991 = vmatpush.bf16.msra.mxu0 %v9508
      %9992 = vmatpush.bf16.msra.mxu0 %v9507
      %9993 = vmatpush.bf16.msra.mxu0 %v9506
      %9994 = vmatpush.bf16.msra.mxu0 %v9505
      %9995 = vmatpush.bf16.msra.mxu0 %v9504
      %9996 = vmatpush.bf16.msra.mxu0 %v9503
      %9997 = vmatpush.bf16.msra.mxu0 %v9502
      %9998 = vmatmul.bf16.gmra.mxu0 %v8922
      %v9999 = vpop.f32.mrf.mxu0
      %v10000 = vadd.f32 %v9951, %v9999
      %v10001 = vpop.f32.mrf.mxu0
      %v10002 = vadd.f32 %v9953, %v10001
      %10003 = vmatmul.bf16.gmra.mxu0 %v8924
      %v10004 = vpop.f32.mrf.mxu0
      %v10005 = vadd.f32 %v9956, %v10004
      %v10006 = vpop.f32.mrf.mxu0
      %v10007 = vadd.f32 %v9958, %v10006
      %10008 = vmatmul.bf16.gmra.mxu0 %v8926
      %v10009 = vpop.f32.mrf.mxu0
      %v10010 = vadd.f32 %v9961, %v10009
      %v10011 = vpop.f32.mrf.mxu0
      %v10012 = vadd.f32 %v9963, %v10011
      %10013 = vmatmul.bf16.gmra.mxu0 %v8928
      %v10014 = vpop.f32.mrf.mxu0
      %v10015 = vadd.f32 %v9966, %v10014
      %v10016 = vpop.f32.mrf.mxu0
      %v10017 = vadd.f32 %v9968, %v10016
      %10018 = vmatmul.bf16.gmra.mxu0 %v8930
      %v10019 = vpop.f32.mrf.mxu0
      %v10020 = vadd.f32 %v9971, %v10019
      %v10021 = vpop.f32.mrf.mxu0
      %v10022 = vadd.f32 %v9973, %v10021
      %10023 = vmatmul.bf16.gmra.mxu0 %v8932
      %v10024 = vpop.f32.mrf.mxu0
      %v10025 = vadd.f32 %v9976, %v10024
      %v10026 = vpop.f32.mrf.mxu0
      %v10027 = vadd.f32 %v9978, %v10026
      %10028 = vmatmul.bf16.gmra.mxu0 %v8934
      %v10029 = vpop.f32.mrf.mxu0
      %v10030 = vadd.f32 %v9981, %v10029
      %v10031 = vpop.f32.mrf.mxu0
      %v10032 = vadd.f32 %v9983, %v10031
      %10033 = vmatmul.bf16.gmra.mxu0 %v8936
      %v10034 = vpop.f32.mrf.mxu0
      %v10035 = vadd.f32 %v9986, %v10034
      %v10036 = vpop.f32.mrf.mxu0
      %v10037 = vadd.f32 %v9988, %v10036
      %10038 = vdwg.mxu0
      %10039 = vmatpush.bf16.msra.mxu0 %v9517
      %10040 = vmatpush.bf16.msra.mxu0 %v9516
      %10041 = vmatpush.bf16.msra.mxu0 %v9515
      %10042 = vmatpush.bf16.msra.mxu0 %v9514
      %10043 = vmatpush.bf16.msra.mxu0 %v9513
      %10044 = vmatpush.bf16.msra.mxu0 %v9512
      %10045 = vmatpush.bf16.msra.mxu0 %v9511
      %10046 = vmatpush.bf16.msra.mxu0 %v9510
      %10047 = vmatmul.bf16.gmra.mxu0 %v8923
      %v10048 = vpop.f32.mrf.mxu0
      %v10049 = vadd.f32 %v10000, %v10048
      %v10050 = vpop.f32.mrf.mxu0
      %v10051 = vadd.f32 %v10002, %v10050
      %10052 = vmatmul.bf16.gmra.mxu0 %v8925
      %v10053 = vpop.f32.mrf.mxu0
      %v10054 = vadd.f32 %v10005, %v10053
      %v10055 = vpop.f32.mrf.mxu0
      %v10056 = vadd.f32 %v10007, %v10055
      %10057 = vmatmul.bf16.gmra.mxu0 %v8927
      %v10058 = vpop.f32.mrf.mxu0
      %v10059 = vadd.f32 %v10010, %v10058
      %v10060 = vpop.f32.mrf.mxu0
      %v10061 = vadd.f32 %v10012, %v10060
      %10062 = vmatmul.bf16.gmra.mxu0 %v8929
      %v10063 = vpop.f32.mrf.mxu0
      %v10064 = vadd.f32 %v10015, %v10063
      %v10065 = vpop.f32.mrf.mxu0
      %v10066 = vadd.f32 %v10017, %v10065
      %10067 = vmatmul.bf16.gmra.mxu0 %v8931
      %v10068 = vpop.f32.mrf.mxu0
      %v10069 = vadd.f32 %v10020, %v10068
      %v10070 = vpop.f32.mrf.mxu0
      %v10071 = vadd.f32 %v10022, %v10070
      %10072 = vmatmul.bf16.gmra.mxu0 %v8933
      %v10073 = vpop.f32.mrf.mxu0
      %v10074 = vadd.f32 %v10025, %v10073
      %v10075 = vpop.f32.mrf.mxu0
      %v10076 = vadd.f32 %v10027, %v10075
      %10077 = vmatmul.bf16.gmra.mxu0 %v8935
      %v10078 = vpop.f32.mrf.mxu0
      %v10079 = vadd.f32 %v10030, %v10078
      %v10080 = vpop.f32.mrf.mxu0
      %v10081 = vadd.f32 %v10032, %v10080
      %10082 = vmatmul.bf16.gmra.mxu0 %v8937
      %v10083 = vpop.f32.mrf.mxu0
      %v10084 = vadd.f32 %v10035, %v10083
      %v10085 = vpop.f32.mrf.mxu0
      %v10086 = vadd.f32 %v10037, %v10085
      %10087 = vdwg.mxu0
      %10088 = vst [vmem:[%s550] sm:$0xff] %v10049
      %10089 = vst [vmem:[%s550 + $0x8] sm:$0xff] %v10051
      %10090 = vst [vmem:[%s550 + $0x10] sm:$0xff] %v10054
      %10091 = vst [vmem:[%s550 + $0x18] sm:$0xff] %v10056
      %10092 = vst [vmem:[%s550 + $0x20] sm:$0xff] %v10059
      %10093 = vst [vmem:[%s550 + $0x28] sm:$0xff] %v10061
      %10094 = vst [vmem:[%s550 + $0x30] sm:$0xff] %v10064
      %10095 = vst [vmem:[%s550 + $0x38] sm:$0xff] %v10066
      %10096 = vst [vmem:[%s550 + $0x40] sm:$0xff] %v10069
      %10097 = vst [vmem:[%s550 + $0x48] sm:$0xff] %v10071
      %10098 = vst [vmem:[%s550 + $0x50] sm:$0xff] %v10074
      %10099 = vst [vmem:[%s550 + $0x58] sm:$0xff] %v10076
      %10100 = vst [vmem:[%s550 + $0x60] sm:$0xff] %v10079
      %10101 = vst [vmem:[%s550 + $0x68] sm:$0xff] %v10081
      %10102 = vst [vmem:[%s550 + $0x70] sm:$0xff] %v10084
      %10103 = vst [vmem:[%s550 + $0x78] sm:$0xff] %v10086
      %s10104 = smul.u32 16, %s28
      %p10105 = scmp.lt.s32.totalorder %s10104, 31
      %s10106 = scalar_select %p10105, %s10104, 31
      %s10107 = smul.addr %s10106, 8
      %s10108 = scalar_lea.vmem %s17, %s10107
      // Predicated region
      $region89: #{sae_forward.1} parent=87 // pred_check
        %p10109 = pneg %p408
      $region90: #{sae_forward.1} parent=87 // pred_check_branch
        %10111 = sbr.rel (%p10109) target = $region92
      $region91: #{sae_forward.1} parent=87 // pred_region
        %s10112 = smul.u32 16, %s28
      $region92: #{sae_forward.1} parent=87 // pred_fallthru
        _
    $region88: #{sae_forward.1} parent=5 // pred_fallthru
      _
    %p10113 = scmp.le.s32.totalorder 2, %s23
    // Predicated region
    $region93: #{sae_forward.1} parent=5 // pred_check
      %p10114 = pneg %p10113
    $region94: #{sae_forward.1} parent=5 // pred_check_branch
      %10116 = sbr.rel (%p10114) target = $region96
    $region95: #{sae_forward.1} parent=5 // pred_region
      %s10117 = ssub.s32 %s23, 2
      // Predicated region
      $region97: #{sae_forward.1} parent=95 // pred_check
        %p10118 = pneg %p414
      $region98: #{sae_forward.1} parent=95 // pred_check_branch
        %10120 = sbr.rel (%p10118) target = $region100
      $region99: #{sae_forward.1} parent=95 // pred_region
        %s10121 = smul.u32 16, %s29
        %p10122 = scmp.lt.s32.totalorder %s10121, 31
        %s10123 = scalar_select %p10122, %s10121, 31
        %s10124 = smul.addr %s10123, 8
        %s10125 = scalar_lea.vmem %s17, %s10124
      $region100: #{sae_forward.1} parent=95 // pred_fallthru
        _
    $region96: #{sae_forward.1} parent=5 // pred_fallthru
      _
  $region6: #{sae_forward.1} parent=0 // loop_footer
    %s27 = sadd.s32 1, %s23
  $region7: #{sae_forward.1} parent=0 // loop_footer_branch
    %22 = sbr.rel target = $region3
  $region8: #{sae_forward.1} parent=0 // loop_exit
    _

</llo_original>
